<compile_context>
chip_gen: v5e
topology: v5e:2x2
jax: 0.10.0
libtpu: 0.0.40
codegen_flags: <defaults>
</compile_context>

<pallas_src>
import functools

import jax
import jax.numpy as jnp
from jax.experimental import pallas as pl
from jax.experimental.pallas import tpu as pltpu


def _round_up(x, m):
    return (x + m - 1) // m * m


def _conv_out_len(L, K, stride, dilation, padding):
    return (L + 2 * padding - dilation * (K - 1) - 1) // stride + 1


# ---------------------------------------------------------------------------
# Pallas kernels
# ---------------------------------------------------------------------------

def _nin_stats_kernel(xg_ref, w1_ref, w2_ref, w3_ref, o_ref, sum_ref, sq_ref,
                      *, l_valid, n_shifts):
    """Fused NIN block for one batch element.

    The k=7 / stride=4 / dilation=2 conv is computed as `n_shifts` row-shifted
    matmuls on the stride-4 grouped input (in-kernel im2col), then 1x1 conv +
    ReLU twice.  BN batch statistics (sum / sum-of-squares over valid rows,
    f32) are fused into the epilogue; the activation is stored in bf16.
    """
    lp = o_ref.shape[1]
    xg = xg_ref.at[0]                                             # (lgi, kg) view
    h = jnp.dot(xg[pl.ds(0, lp), :], w1_ref[0],
                preferred_element_type=jnp.float32)
    for r in range(1, n_shifts):
        h = h + jnp.dot(xg[pl.ds(r, lp), :], w1_ref[r],
                        preferred_element_type=jnp.float32)
    h = jnp.maximum(h, 0.0)
    h = jnp.maximum(jnp.dot(h.astype(w2_ref.dtype), w2_ref[...],
                            preferred_element_type=jnp.float32), 0.0)
    h = jnp.maximum(jnp.dot(h.astype(w3_ref.dtype), w3_ref[...],
                            preferred_element_type=jnp.float32), 0.0)
    rows = jax.lax.broadcasted_iota(jnp.int32, h.shape, 0)
    hm = jnp.where(rows < l_valid, h, 0.0)                        # drop padded rows
    sum_ref[0] = jnp.sum(hm, axis=0, keepdims=True)
    sq_ref[0] = jnp.sum(hm * hm, axis=0, keepdims=True)
    o_ref[0] = h.astype(o_ref.dtype)                              # bf16 store


def _conv_bias_stats_kernel(xg_ref, w_ref, b_ref, o_ref, sum_ref, sq_ref,
                            *, l_valid, n_shifts):
    """Single conv (+bias) as row-shifted matmuls on the grouped input; BN stats fused."""
    lp = o_ref.shape[1]
    xg = xg_ref.at[0]
    h = jnp.dot(xg[pl.ds(0, lp), :], w_ref[0],
                preferred_element_type=jnp.float32)
    for r in range(1, n_shifts):
        h = h + jnp.dot(xg[pl.ds(r, lp), :], w_ref[r],
                        preferred_element_type=jnp.float32)
    h = h + b_ref[...]
    rows = jax.lax.broadcasted_iota(jnp.int32, h.shape, 0)
    hm = jnp.where(rows < l_valid, h, 0.0)                        # bias rows masked
    sum_ref[0] = jnp.sum(hm, axis=0, keepdims=True)
    sq_ref[0] = jnp.sum(hm * hm, axis=0, keepdims=True)
    o_ref[0] = h.astype(o_ref.dtype)


def _bn_relu_pool_kernel(h_ref, scale_ref, shift_ref, o_ref,
                         *, l_valid, l_pool, pool_pad):
    """Fused BN scale/shift + ReLU + AvgPool1d(k=4, s=2, count_include_pad) with
    the stride-2 downsample folded in.

    The wrapper views h (lp rows, C channels) as row pairs (lg = lp/2, 2C):
    block a holds even rows y[2i], block b odd rows y[2i+1].  Pool output i is
    then a sum of ya/yb and their single-row shifts, so there is no scratch
    buffer, no zero fill and no overlapping misaligned window reads.
    """
    lg = h_ref.shape[1]
    c = h_ref.shape[2] // 2
    h2 = h_ref.at[0]                                              # (lg, 2C) view
    scale = scale_ref[...]                                        # (1, C) f32
    shift = shift_ref[...]
    rows = jax.lax.broadcasted_iota(jnp.int32, (lg, c), 0)
    ga = h2[:, pl.ds(0, c)].astype(jnp.float32)
    gb = h2[:, pl.ds(c, c)].astype(jnp.float32)
    ya = jnp.maximum(ga * scale + shift, 0.0)                     # y[2i]
    yb = jnp.maximum(gb * scale + shift, 0.0)                     # y[2i+1]
    ya = jnp.where(2 * rows < l_valid, ya, 0.0)
    yb = jnp.where(2 * rows + 1 < l_valid, yb, 0.0)
    zero_row = jnp.zeros_like(ya[:1])
    # TODO(synk): pltpu.roll would place these single-row shifts on the XLU.
    ya_next = jnp.concatenate([ya[1:], zero_row], axis=0)         # y[2i+2]
    if pool_pad == 0:
        yb_next = jnp.concatenate([yb[1:], zero_row], axis=0)     # y[2i+3]
        s = ya + yb + ya_next + yb_next
    else:  # pool_pad == 1: window starts one element earlier
        yb_prev = jnp.concatenate([zero_row, yb[:-1]], axis=0)    # y[2i-1]
        s = yb_prev + ya + yb + ya_next
    s = jnp.where(rows < l_pool, s * 0.25, 0.0)                   # /4 + zero tail rows
    o_ref[0] = s.astype(o_ref.dtype)


# ---------------------------------------------------------------------------
# XLA-side glue (pad / row-major reshape only - no im2col gather, no slices)
# ---------------------------------------------------------------------------

def _grouped_input(x_nlc, padding, lgi, kg):
    """(N, rows, Cin) -> (N, lgi, kg) bf16: stride-4 grouping of the zero-padded
    input so the conv becomes a few row-shifted matmuls inside the kernel."""
    N, rows, Cin = x_nlc.shape
    l_total = 4 * lgi
    assert l_total >= padding + rows
    xp = jnp.pad(x_nlc, ((0, 0), (padding, l_total - padding - rows), (0, 0)))
    xg = xp.reshape(N, lgi, 4 * Cin)
    if kg > 4 * Cin:
        xg = jnp.pad(xg, ((0, 0), (0, 0), (0, kg - 4 * Cin)))
    return xg.astype(jnp.bfloat16)


def _grouped_conv_weight(w, dilation, kg):
    """PyTorch (Cout, Cin, K) conv weight -> (S, kg, Cout) bf16 shifted-matmul
    weights for the stride-4 grouped layout: tap j lands at group shift
    r = dilation*j // 4, lane block p = dilation*j % 4."""
    Cout, Cin, K = w.shape
    S = (dilation * (K - 1)) // 4 + 1
    wt = jnp.transpose(w, (2, 1, 0))                              # (K, Cin, Cout)
    zero = jnp.zeros((Cin, Cout), w.dtype)
    shifts = []
    for r in range(S):
        blocks = []
        for p in range(4):
            j, rem = divmod(4 * r + p, dilation)
            blocks.append(wt[j] if rem == 0 and j < K else zero)
        shifts.append(jnp.concatenate(blocks, axis=0))            # (4*Cin, Cout)
    v = jnp.stack(shifts, axis=0)                                 # (S, 4*Cin, Cout)
    if kg > 4 * Cin:
        v = jnp.pad(v, ((0, 0), (0, kg - 4 * Cin), (0, 0)))
    return v.astype(jnp.bfloat16)


def _conv_geometry(l_in, K, dilation, padding):
    l_conv = _conv_out_len(l_in, K, 4, dilation, padding)
    lp = _round_up(l_conv + 2, 16)   # +2: pool stage always has a spare row pair
    lgi = lp + 8                     # shifted reads [r, r+lp) stay in bounds (r<=3)
    return l_conv, lp, lgi


# ---------------------------------------------------------------------------
# Stage wrappers
# ---------------------------------------------------------------------------

def nin_stage(x_nlc, l_in, w1, w2, w3, *, dilation, padding):
    N, _, Cin = x_nlc.shape
    C1, C2, C3 = w1.shape[0], w2.shape[0], w3.shape[0]
    K = w1.shape[2]
    l_conv, lp, lgi = _conv_geometry(l_in, K, dilation, padding)
    kg = max(4 * Cin, 8)
    xg = _grouped_input(x_nlc, padding, lgi, kg)
    v1 = _grouped_conv_weight(w1, dilation, kg)                   # (S, kg, C1)
    S = v1.shape[0]
    w2m = jnp.transpose(w2[:, :, 0]).astype(jnp.bfloat16)         # (C1, C2)
    w3m = jnp.transpose(w3[:, :, 0]).astype(jnp.bfloat16)         # (C2, C3)
    h, sums, sqs = pl.pallas_call(
        functools.partial(_nin_stats_kernel, l_valid=l_conv, n_shifts=S),
        out_shape=(jax.ShapeDtypeStruct((N, lp, C3), jnp.bfloat16),
                   jax.ShapeDtypeStruct((N, 1, C3), jnp.float32),
                   jax.ShapeDtypeStruct((N, 1, C3), jnp.float32)),
        grid_spec=pltpu.PrefetchScalarGridSpec(
            num_scalar_prefetch=0, grid=(N,),
            in_specs=[pl.BlockSpec((1, lgi, kg), lambda n: (n, 0, 0)),
                      pl.BlockSpec((S, kg, C1), lambda n: (0, 0, 0)),
                      pl.BlockSpec((C1, C2), lambda n: (0, 0)),
                      pl.BlockSpec((C2, C3), lambda n: (0, 0))],
            out_specs=[pl.BlockSpec((1, lp, C3), lambda n: (n, 0, 0)),
                       pl.BlockSpec((1, 1, C3), lambda n: (n, 0, 0)),
                       pl.BlockSpec((1, 1, C3), lambda n: (n, 0, 0))]),
        compiler_params=pltpu.CompilerParams(
            dimension_semantics=("parallel",)),
    )(xg, v1, w2m, w3m)
    return h, sums, sqs, l_conv


def conv_stage(x_nlc, l_in, w, b, *, dilation, padding):
    N, _, Cin = x_nlc.shape
    Cout, _, K = w.shape
    l_conv, lp, lgi = _conv_geometry(l_in, K, dilation, padding)
    kg = max(4 * Cin, 8)
    xg = _grouped_input(x_nlc, padding, lgi, kg)
    v = _grouped_conv_weight(w, dilation, kg)                     # (S, kg, Cout)
    S = v.shape[0]
    bm = b.reshape(1, Cout).astype(jnp.float32)
    h, sums, sqs = pl.pallas_call(
        functools.partial(_conv_bias_stats_kernel, l_valid=l_conv, n_shifts=S),
        out_shape=(jax.ShapeDtypeStruct((N, lp, Cout), jnp.bfloat16),
                   jax.ShapeDtypeStruct((N, 1, Cout), jnp.float32),
                   jax.ShapeDtypeStruct((N, 1, Cout), jnp.float32)),
        grid_spec=pltpu.PrefetchScalarGridSpec(
            num_scalar_prefetch=0, grid=(N,),
            in_specs=[pl.BlockSpec((1, lgi, kg), lambda n: (n, 0, 0)),
                      pl.BlockSpec((S, kg, Cout), lambda n: (0, 0, 0)),
                      pl.BlockSpec((1, Cout), lambda n: (0, 0))],
            out_specs=[pl.BlockSpec((1, lp, Cout), lambda n: (n, 0, 0)),
                       pl.BlockSpec((1, 1, Cout), lambda n: (n, 0, 0)),
                       pl.BlockSpec((1, 1, Cout), lambda n: (n, 0, 0))]),
        compiler_params=pltpu.CompilerParams(
            dimension_semantics=("parallel",)),
    )(xg, v, bm)
    return h, sums, sqs, l_conv


def bn_relu_pool(h, sums, sqs, gamma, beta, *, l_valid, pool_pad,
                 out_dtype=jnp.bfloat16, eps=1e-5):
    """Training-mode BatchNorm1d (batch stats) + ReLU + AvgPool1d(4, 2, pool_pad),
    stride-2 downsample fused.  Rows >= l_pool of the output are zeroed so they
    double as the next conv's right-side zero padding."""
    N, lp, C = h.shape
    lg = lp // 2
    l_pool = (l_valid + 2 * pool_pad - 4) // 2 + 1
    count = N * l_valid
    mean = jnp.sum(sums, axis=0)[0] / count                       # (C,)
    # Note: E[x^2]-E[x]^2 in f32 (clamped); fine at this scale.
    var = jnp.maximum(jnp.sum(sqs, axis=0)[0] / count - mean * mean, 0.0)
    inv = gamma / jnp.sqrt(var + eps)
    scale = inv.reshape(1, C).astype(jnp.float32)
    shift = (beta - mean * inv).reshape(1, C).astype(jnp.float32)
    hg = h.reshape(N, lg, 2 * C)                                  # free row-major regroup
    out = pl.pallas_call(
        functools.partial(_bn_relu_pool_kernel, l_valid=l_valid,
                          l_pool=l_pool, pool_pad=pool_pad),
        out_shape=jax.ShapeDtypeStruct((N, lg, C), out_dtype),
        grid_spec=pltpu.PrefetchScalarGridSpec(
            num_scalar_prefetch=0, grid=(N,),
            in_specs=[pl.BlockSpec((1, lg, 2 * C), lambda n: (n, 0, 0)),
                      pl.BlockSpec((1, C), lambda n: (0, 0)),
                      pl.BlockSpec((1, C), lambda n: (0, 0))],
            out_specs=pl.BlockSpec((1, lg, C), lambda n: (n, 0, 0))),
        compiler_params=pltpu.CompilerParams(
            dimension_semantics=("parallel",)),
    )(hg, scale, shift)
    return out, l_pool


# ---------------------------------------------------------------------------
# Model
# ---------------------------------------------------------------------------

def cnn_frontend(x_ncl, p):
    x = jnp.transpose(x_ncl, (0, 2, 1))                           # NCL -> NLC
    l_in = x.shape[1]

    # stage 1: NIN(1->64, k=7, s=4, dil=2, pad=3) -> BN -> ReLU -> AvgPool(4,2,1)
    h, s, q, l1 = nin_stage(x, l_in, p['nin1_w1'], p['nin1_w2'], p['nin1_w3'],
                            dilation=2, padding=3)
    x, l_in = bn_relu_pool(h, s, q, p['bn1_g'], p['bn1_b'],
                           l_valid=l1, pool_pad=1)

    # stage 2: NIN(64->128, k=7, s=4, dil=2, pad=3) -> BN -> ReLU -> AvgPool(4,2)
    h, s, q, l2 = nin_stage(x, l_in, p['nin2_w1'], p['nin2_w2'], p['nin2_w3'],
                            dilation=2, padding=3)
    x, l_in = bn_relu_pool(h, s, q, p['bn2_g'], p['bn2_b'],
                           l_valid=l2, pool_pad=0)

    # stage 3: Conv1d(128->128, k=7, s=4, bias) -> BN -> ReLU -> AvgPool(4,2)
    h, s, q, l3 = conv_stage(x, l_in, p['nin3_w'], p['nin3_b'],
                             dilation=1, padding=0)
    x, l_in = bn_relu_pool(h, s, q, p['bn3_g'], p['bn3_b'],
                           l_valid=l3, pool_pad=0, out_dtype=jnp.float32)

    x = x[:, :l_in, :]                                            # drop zero tail rows
    return jnp.transpose(x, (0, 2, 1))                            # NLC -> NCL


def init_params(key):
    def conv_w(k, cout, cin, ksz):
        fan_in = cin * ksz
        return jax.random.normal(k, (cout, cin, ksz), jnp.float32) * (2.0 / fan_in) ** 0.5

    ks = jax.random.split(key, 8)
    return dict(
        nin1_w1=conv_w(ks[0], 64, 1, 7),
        nin1_w2=conv_w(ks[1], 64, 64, 1),
        nin1_w3=conv_w(ks[2], 64, 64, 1),
        bn1_g=jnp.ones((64,), jnp.float32), bn1_b=jnp.zeros((64,), jnp.float32),
        nin2_w1=conv_w(ks[3], 128, 64, 7),
        nin2_w2=conv_w(ks[4], 128, 128, 1),
        nin2_w3=conv_w(ks[5], 128, 128, 1),
        bn2_g=jnp.ones((128,), jnp.float32), bn2_b=jnp.zeros((128,), jnp.float32),
        nin3_w=conv_w(ks[6], 128, 128, 7),
        nin3_b=jax.random.normal(ks[7], (128,), jnp.float32) * 0.01,
        bn3_g=jnp.ones((128,), jnp.float32), bn3_b=jnp.zeros((128,), jnp.float32),
    )


if __name__ == "__main__":
    key = jax.random.PRNGKey(0)
    kx, kparams = jax.random.split(key)
    # Input L must survive the heavy downsampling (three stride-4 convs + pools).
    N, Cin, L = 2, 1, 2048
    x = jax.random.normal(kx, (N, Cin, L), jnp.float32)
    params = init_params(kparams)

    out = jax.jit(cnn_frontend)(x, params)
    out = jax.block_until_ready(out)
    assert out.shape == (2, 128, 2), out.shape
    print("KERNEL_OK")
</pallas_src>

<mosaic_0001>
module attributes {stable_mosaic.version = 11 : i64} {
  func.func @_nin_stats_kernel(%arg0: i32, %arg1: memref<1x536x8xbf16, #tpu.memory_space<vmem>>, %arg2: memref<4x8x64xbf16, #tpu.memory_space<vmem>>, %arg3: memref<64x64xbf16, #tpu.memory_space<vmem>>, %arg4: memref<64x64xbf16, #tpu.memory_space<vmem>>, %arg5: memref<1x528x64xbf16, #tpu.memory_space<vmem>>, %arg6: memref<1x1x64xf32, #tpu.memory_space<vmem>>, %arg7: memref<1x1x64xf32, #tpu.memory_space<vmem>>) attributes {dimension_semantics = [#tpu.dimension_semantics<parallel>], iteration_bounds = array<i64: 2>, scalar_prefetch = 0 : i64, scratch_operands = 0 : i64, tpu.core_type = #tpu.core_type<tc>, window_params = [{transform_indices = @transform_0, window_bounds = array<i64: 1, 536, 8>}, {pipeline_mode = #tpu.pipeline_mode<synchronous>, transform_indices = @transform_1, window_bounds = array<i64: 4, 8, 64>}, {pipeline_mode = #tpu.pipeline_mode<synchronous>, transform_indices = @transform_2, window_bounds = array<i64: 64, 64>}, {pipeline_mode = #tpu.pipeline_mode<synchronous>, transform_indices = @transform_3, window_bounds = array<i64: 64, 64>}, {transform_indices = @transform_4, window_bounds = array<i64: 1, 528, 64>}, {transform_indices = @transform_5, window_bounds = array<i64: 1, 1, 64>}, {transform_indices = @transform_6, window_bounds = array<i64: 1, 1, 64>}]} {
    %c0_i32 = arith.constant 0 : i32
    %c0_i32_0 = arith.constant 0 : i32
    %c0_i32_1 = arith.constant 0 : i32
    %0 = tpu.memref_slice %arg1[%c0_i32, %c0_i32_0, %c0_i32_1] : memref<1x536x8xbf16, #tpu.memory_space<vmem>> -> memref<1x536x8xbf16, #tpu.memory_space<vmem>>
    %1 = tpu.memref_squeeze %0 : memref<1x536x8xbf16, #tpu.memory_space<vmem>> -> memref<536x8xbf16, #tpu.memory_space<vmem>>
    %c0 = arith.constant 0 : index
    %c0_2 = arith.constant 0 : index
    %2 = vector.load %1[%c0, %c0_2] : memref<536x8xbf16, #tpu.memory_space<vmem>>, vector<528x8xbf16>
    %c0_3 = arith.constant 0 : index
    %c0_4 = arith.constant 0 : index
    %c0_5 = arith.constant 0 : index
    %3 = vector.load %arg2[%c0_3, %c0_4, %c0_5] : memref<4x8x64xbf16, #tpu.memory_space<vmem>>, vector<1x8x64xbf16>
    %4 = vector.shape_cast %3 : vector<1x8x64xbf16> to vector<8x64xbf16>
    %cst = arith.constant dense<0.000000e+00> : vector<528x64xf32>
    %5 = tpu.matmul %2, %4, %cst {dimension_numbers = #tpu.dot_dimension_numbers<[1], [0], [0], [1], [0, 0, 1, 1], [], []>} : vector<528x8xbf16>, vector<8x64xbf16>, vector<528x64xf32> -> vector<528x64xf32>
    %c0_i32_6 = arith.constant 0 : i32
    %c0_i32_7 = arith.constant 0 : i32
    %c0_i32_8 = arith.constant 0 : i32
    %6 = tpu.memref_slice %arg1[%c0_i32_6, %c0_i32_7, %c0_i32_8] : memref<1x536x8xbf16, #tpu.memory_space<vmem>> -> memref<1x536x8xbf16, #tpu.memory_space<vmem>>
    %7 = tpu.memref_squeeze %6 : memref<1x536x8xbf16, #tpu.memory_space<vmem>> -> memref<536x8xbf16, #tpu.memory_space<vmem>>
    %c1 = arith.constant 1 : index
    %c0_9 = arith.constant 0 : index
    %8 = vector.load %7[%c1, %c0_9] : memref<536x8xbf16, #tpu.memory_space<vmem>>, vector<528x8xbf16>
    %c1_10 = arith.constant 1 : index
    %c0_11 = arith.constant 0 : index
    %c0_12 = arith.constant 0 : index
    %9 = vector.load %arg2[%c1_10, %c0_11, %c0_12] : memref<4x8x64xbf16, #tpu.memory_space<vmem>>, vector<1x8x64xbf16>
    %10 = vector.shape_cast %9 : vector<1x8x64xbf16> to vector<8x64xbf16>
    %cst_13 = arith.constant dense<0.000000e+00> : vector<528x64xf32>
    %11 = tpu.matmul %8, %10, %cst_13 {dimension_numbers = #tpu.dot_dimension_numbers<[1], [0], [0], [1], [0, 0, 1, 1], [], []>} : vector<528x8xbf16>, vector<8x64xbf16>, vector<528x64xf32> -> vector<528x64xf32>
    %12 = arith.addf %5, %11 : vector<528x64xf32>
    %c0_i32_14 = arith.constant 0 : i32
    %c0_i32_15 = arith.constant 0 : i32
    %c0_i32_16 = arith.constant 0 : i32
    %13 = tpu.memref_slice %arg1[%c0_i32_14, %c0_i32_15, %c0_i32_16] : memref<1x536x8xbf16, #tpu.memory_space<vmem>> -> memref<1x536x8xbf16, #tpu.memory_space<vmem>>
    %14 = tpu.memref_squeeze %13 : memref<1x536x8xbf16, #tpu.memory_space<vmem>> -> memref<536x8xbf16, #tpu.memory_space<vmem>>
    %c2 = arith.constant 2 : index
    %c0_17 = arith.constant 0 : index
    %15 = vector.load %14[%c2, %c0_17] : memref<536x8xbf16, #tpu.memory_space<vmem>>, vector<528x8xbf16>
    %c2_18 = arith.constant 2 : index
    %c0_19 = arith.constant 0 : index
    %c0_20 = arith.constant 0 : index
    %16 = vector.load %arg2[%c2_18, %c0_19, %c0_20] : memref<4x8x64xbf16, #tpu.memory_space<vmem>>, vector<1x8x64xbf16>
    %17 = vector.shape_cast %16 : vector<1x8x64xbf16> to vector<8x64xbf16>
    %cst_21 = arith.constant dense<0.000000e+00> : vector<528x64xf32>
    %18 = tpu.matmul %15, %17, %cst_21 {dimension_numbers = #tpu.dot_dimension_numbers<[1], [0], [0], [1], [0, 0, 1, 1], [], []>} : vector<528x8xbf16>, vector<8x64xbf16>, vector<528x64xf32> -> vector<528x64xf32>
    %19 = arith.addf %12, %18 : vector<528x64xf32>
    %c0_i32_22 = arith.constant 0 : i32
    %c0_i32_23 = arith.constant 0 : i32
    %c0_i32_24 = arith.constant 0 : i32
    %20 = tpu.memref_slice %arg1[%c0_i32_22, %c0_i32_23, %c0_i32_24] : memref<1x536x8xbf16, #tpu.memory_space<vmem>> -> memref<1x536x8xbf16, #tpu.memory_space<vmem>>
    %21 = tpu.memref_squeeze %20 : memref<1x536x8xbf16, #tpu.memory_space<vmem>> -> memref<536x8xbf16, #tpu.memory_space<vmem>>
    %c3 = arith.constant 3 : index
    %c0_25 = arith.constant 0 : index
    %22 = vector.load %21[%c3, %c0_25] : memref<536x8xbf16, #tpu.memory_space<vmem>>, vector<528x8xbf16>
    %c3_26 = arith.constant 3 : index
    %c0_27 = arith.constant 0 : index
    %c0_28 = arith.constant 0 : index
    %23 = vector.load %arg2[%c3_26, %c0_27, %c0_28] : memref<4x8x64xbf16, #tpu.memory_space<vmem>>, vector<1x8x64xbf16>
    %24 = vector.shape_cast %23 : vector<1x8x64xbf16> to vector<8x64xbf16>
    %cst_29 = arith.constant dense<0.000000e+00> : vector<528x64xf32>
    %25 = tpu.matmul %22, %24, %cst_29 {dimension_numbers = #tpu.dot_dimension_numbers<[1], [0], [0], [1], [0, 0, 1, 1], [], []>} : vector<528x8xbf16>, vector<8x64xbf16>, vector<528x64xf32> -> vector<528x64xf32>
    %26 = arith.addf %19, %25 : vector<528x64xf32>
    %cst_30 = arith.constant 0.000000e+00 : f32
    %27 = vector.broadcast %cst_30 : f32 to vector<528x64xf32>
    %28 = arith.maximumf %26, %27 : vector<528x64xf32>
    %29 = arith.truncf %28 : vector<528x64xf32> to vector<528x64xbf16>
    %c0_31 = arith.constant 0 : index
    %c0_32 = arith.constant 0 : index
    %30 = vector.load %arg3[%c0_31, %c0_32] : memref<64x64xbf16, #tpu.memory_space<vmem>>, vector<64x64xbf16>
    %cst_33 = arith.constant dense<0.000000e+00> : vector<528x64xf32>
    %31 = tpu.matmul %29, %30, %cst_33 {dimension_numbers = #tpu.dot_dimension_numbers<[1], [0], [0], [1], [0, 0, 1, 1], [], []>} : vector<528x64xbf16>, vector<64x64xbf16>, vector<528x64xf32> -> vector<528x64xf32>
    %cst_34 = arith.constant 0.000000e+00 : f32
    %32 = vector.broadcast %cst_34 : f32 to vector<528x64xf32>
    %33 = arith.maximumf %31, %32 : vector<528x64xf32>
    %34 = arith.truncf %33 : vector<528x64xf32> to vector<528x64xbf16>
    %c0_35 = arith.constant 0 : index
    %c0_36 = arith.constant 0 : index
    %35 = vector.load %arg4[%c0_35, %c0_36] : memref<64x64xbf16, #tpu.memory_space<vmem>>, vector<64x64xbf16>
    %cst_37 = arith.constant dense<0.000000e+00> : vector<528x64xf32>
    %36 = tpu.matmul %34, %35, %cst_37 {dimension_numbers = #tpu.dot_dimension_numbers<[1], [0], [0], [1], [0, 0, 1, 1], [], []>} : vector<528x64xbf16>, vector<64x64xbf16>, vector<528x64xf32> -> vector<528x64xf32>
    %cst_38 = arith.constant 0.000000e+00 : f32
    %37 = vector.broadcast %cst_38 : f32 to vector<528x64xf32>
    %38 = arith.maximumf %36, %37 : vector<528x64xf32>
    %39 = tpu.iota {dimensions = array<i32: 0>} : vector<528x64xi32>
    %c511_i32 = arith.constant 511 : i32
    %40 = vector.broadcast %c511_i32 : i32 to vector<528x64xi32>
    %41 = arith.cmpi slt, %39, %40 : vector<528x64xi32>
    %cst_39 = arith.constant 0.000000e+00 : f32
    %42 = vector.broadcast %cst_39 : f32 to vector<528x64xf32>
    %43 = arith.select %41, %38, %42 : vector<528x64xi1>, vector<528x64xf32>
    %cst_40 = arith.constant dense<0.000000e+00> : vector<64xf32>
    %44 = vector.multi_reduction <add>, %43, %cst_40 [0] : vector<528x64xf32> to vector<64xf32>
    %45 = vector.shape_cast %44 : vector<64xf32> to vector<1x64xf32>
    %c0_41 = arith.constant 0 : index
    %c0_42 = arith.constant 0 : index
    %c0_43 = arith.constant 0 : index
    %46 = vector.load %arg6[%c0_41, %c0_42, %c0_43] : memref<1x1x64xf32, #tpu.memory_space<vmem>>, vector<1x1x64xf32>
    %47 = vector.shape_cast %46 : vector<1x1x64xf32> to vector<1x64xf32>
    %48 = vector.shape_cast %45 : vector<1x64xf32> to vector<1x1x64xf32>
    tpu.vector_store %arg6[%c0_41, %c0_42, %c0_43], %48 {strides = array<i32>} : memref<1x1x64xf32, #tpu.memory_space<vmem>>, vector<1x1x64xf32>,
    %49 = arith.mulf %43, %43 : vector<528x64xf32>
    %cst_44 = arith.constant dense<0.000000e+00> : vector<64xf32>
    %50 = vector.multi_reduction <add>, %49, %cst_44 [0] : vector<528x64xf32> to vector<64xf32>
    %51 = vector.shape_cast %50 : vector<64xf32> to vector<1x64xf32>
    %c0_45 = arith.constant 0 : index
    %c0_46 = arith.constant 0 : index
    %c0_47 = arith.constant 0 : index
    %52 = vector.load %arg7[%c0_45, %c0_46, %c0_47] : memref<1x1x64xf32, #tpu.memory_space<vmem>>, vector<1x1x64xf32>
    %53 = vector.shape_cast %52 : vector<1x1x64xf32> to vector<1x64xf32>
    %54 = vector.shape_cast %51 : vector<1x64xf32> to vector<1x1x64xf32>
    tpu.vector_store %arg7[%c0_45, %c0_46, %c0_47], %54 {strides = array<i32>} : memref<1x1x64xf32, #tpu.memory_space<vmem>>, vector<1x1x64xf32>,
    %55 = arith.truncf %38 : vector<528x64xf32> to vector<528x64xbf16>
    %c0_48 = arith.constant 0 : index
    %c0_49 = arith.constant 0 : index
    %c0_50 = arith.constant 0 : index
    %56 = vector.load %arg5[%c0_48, %c0_49, %c0_50] : memref<1x528x64xbf16, #tpu.memory_space<vmem>>, vector<1x528x64xbf16>
    %57 = vector.shape_cast %56 : vector<1x528x64xbf16> to vector<528x64xbf16>
    %58 = vector.shape_cast %55 : vector<528x64xbf16> to vector<1x528x64xbf16>
    tpu.vector_store %arg5[%c0_48, %c0_49, %c0_50], %58 {strides = array<i32>} : memref<1x528x64xbf16, #tpu.memory_space<vmem>>, vector<1x528x64xbf16>,
    return
  }
  func.func @transform_0(%arg0: i32) -> (i32, i32, i32) {
    %c0_i32 = arith.constant 0 : i32
    %c0_i32_0 = arith.constant 0 : i32
    %c0_i32_1 = arith.constant 0 : i32
    return %arg0, %c0_i32, %c0_i32_0 : i32, i32, i32
  }
  func.func @transform_1(%arg0: i32) -> (i32, i32, i32) {
    %c0_i32 = arith.constant 0 : i32
    %c0_i32_0 = arith.constant 0 : i32
    %c0_i32_1 = arith.constant 0 : i32
    %c0_i32_2 = arith.constant 0 : i32
    return %c0_i32, %c0_i32_0, %c0_i32_1 : i32, i32, i32
  }
  func.func @transform_2(%arg0: i32) -> (i32, i32) {
    %c0_i32 = arith.constant 0 : i32
    %c0_i32_0 = arith.constant 0 : i32
    %c0_i32_1 = arith.constant 0 : i32
    return %c0_i32, %c0_i32_0 : i32, i32
  }
  func.func @transform_3(%arg0: i32) -> (i32, i32) {
    %c0_i32 = arith.constant 0 : i32
    %c0_i32_0 = arith.constant 0 : i32
    %c0_i32_1 = arith.constant 0 : i32
    return %c0_i32, %c0_i32_0 : i32, i32
  }
  func.func @transform_4(%arg0: i32) -> (i32, i32, i32) {
    %c0_i32 = arith.constant 0 : i32
    %c0_i32_0 = arith.constant 0 : i32
    %c0_i32_1 = arith.constant 0 : i32
    return %arg0, %c0_i32, %c0_i32_0 : i32, i32, i32
  }
  func.func @transform_5(%arg0: i32) -> (i32, i32, i32) {
    %c0_i32 = arith.constant 0 : i32
    %c0_i32_0 = arith.constant 0 : i32
    %c0_i32_1 = arith.constant 0 : i32
    return %arg0, %c0_i32, %c0_i32_0 : i32, i32, i32
  }
  func.func @transform_6(%arg0: i32) -> (i32, i32, i32) {
    %c0_i32 = arith.constant 0 : i32
    %c0_i32_0 = arith.constant 0 : i32
    %c0_i32_1 = arith.constant 0 : i32
    return %arg0, %c0_i32, %c0_i32_0 : i32, i32, i32
  }
}

module attributes {stable_mosaic.version = 11 : i64} {
  func.func @_bn_relu_pool_kernel(%arg0: i32, %arg1: memref<1x264x128xbf16, #tpu.memory_space<vmem>>, %arg2: memref<1x64xf32, #tpu.memory_space<vmem>>, %arg3: memref<1x64xf32, #tpu.memory_space<vmem>>, %arg4: memref<1x264x64xbf16, #tpu.memory_space<vmem>>) attributes {dimension_semantics = [#tpu.dimension_semantics<parallel>], iteration_bounds = array<i64: 2>, scalar_prefetch = 0 : i64, scratch_operands = 0 : i64, tpu.core_type = #tpu.core_type<tc>, window_params = [{transform_indices = @transform_0, window_bounds = array<i64: 1, 264, 128>}, {pipeline_mode = #tpu.pipeline_mode<synchronous>, transform_indices = @transform_1, window_bounds = array<i64: 1, 64>}, {pipeline_mode = #tpu.pipeline_mode<synchronous>, transform_indices = @transform_2, window_bounds = array<i64: 1, 64>}, {transform_indices = @transform_3, window_bounds = array<i64: 1, 264, 64>}]} {
    %c0 = arith.constant 0 : index
    %c0_0 = arith.constant 0 : index
    %0 = vector.load %arg2[%c0, %c0_0] : memref<1x64xf32, #tpu.memory_space<vmem>>, vector<1x64xf32>
    %c0_1 = arith.constant 0 : index
    %c0_2 = arith.constant 0 : index
    %1 = vector.load %arg3[%c0_1, %c0_2] : memref<1x64xf32, #tpu.memory_space<vmem>>, vector<1x64xf32>
    %2 = tpu.iota {dimensions = array<i32: 0>} : vector<264x64xi32>
    %c0_i32 = arith.constant 0 : i32
    %c0_i32_3 = arith.constant 0 : i32
    %c0_i32_4 = arith.constant 0 : i32
    %3 = tpu.memref_slice %arg1[%c0_i32, %c0_i32_3, %c0_i32_4] : memref<1x264x128xbf16, #tpu.memory_space<vmem>> -> memref<1x264x128xbf16, #tpu.memory_space<vmem>>
    %4 = tpu.memref_squeeze %3 : memref<1x264x128xbf16, #tpu.memory_space<vmem>> -> memref<264x128xbf16, #tpu.memory_space<vmem>>
    %c0_5 = arith.constant 0 : index
    %c0_6 = arith.constant 0 : index
    %5 = vector.load %4[%c0_5, %c0_6] : memref<264x128xbf16, #tpu.memory_space<vmem>>, vector<264x64xbf16>
    %6 = arith.extf %5 : vector<264x64xbf16> to vector<264x64xf32>
    %c0_i32_7 = arith.constant 0 : i32
    %c0_i32_8 = arith.constant 0 : i32
    %c0_i32_9 = arith.constant 0 : i32
    %7 = tpu.memref_slice %arg1[%c0_i32_7, %c0_i32_8, %c0_i32_9] : memref<1x264x128xbf16, #tpu.memory_space<vmem>> -> memref<1x264x128xbf16, #tpu.memory_space<vmem>>
    %8 = tpu.memref_squeeze %7 : memref<1x264x128xbf16, #tpu.memory_space<vmem>> -> memref<264x128xbf16, #tpu.memory_space<vmem>>
    %c0_10 = arith.constant 0 : index
    %c64 = arith.constant 64 : index
    %9 = vector.load %8[%c0_10, %c64] : memref<264x128xbf16, #tpu.memory_space<vmem>>, vector<264x64xbf16>
    %10 = arith.extf %9 : vector<264x64xbf16> to vector<264x64xf32>
    %11 = vector.broadcast %0 : vector<1x64xf32> to vector<264x64xf32>
    %12 = arith.mulf %6, %11 : vector<264x64xf32>
    %13 = vector.broadcast %1 : vector<1x64xf32> to vector<264x64xf32>
    %14 = arith.addf %12, %13 : vector<264x64xf32>
    %cst = arith.constant 0.000000e+00 : f32
    %15 = vector.broadcast %cst : f32 to vector<264x64xf32>
    %16 = arith.maximumf %14, %15 : vector<264x64xf32>
    %17 = vector.broadcast %0 : vector<1x64xf32> to vector<264x64xf32>
    %18 = arith.mulf %10, %17 : vector<264x64xf32>
    %19 = vector.broadcast %1 : vector<1x64xf32> to vector<264x64xf32>
    %20 = arith.addf %18, %19 : vector<264x64xf32>
    %cst_11 = arith.constant 0.000000e+00 : f32
    %21 = vector.broadcast %cst_11 : f32 to vector<264x64xf32>
    %22 = arith.maximumf %20, %21 : vector<264x64xf32>
    %c2_i32 = arith.constant 2 : i32
    %23 = vector.broadcast %c2_i32 : i32 to vector<264x64xi32>
    %24 = arith.muli %23, %2 : vector<264x64xi32>
    %c511_i32 = arith.constant 511 : i32
    %25 = vector.broadcast %c511_i32 : i32 to vector<264x64xi32>
    %26 = arith.cmpi slt, %24, %25 : vector<264x64xi32>
    %cst_12 = arith.constant 0.000000e+00 : f32
    %27 = vector.broadcast %cst_12 : f32 to vector<264x64xf32>
    %28 = arith.select %26, %16, %27 : vector<264x64xi1>, vector<264x64xf32>
    %c2_i32_13 = arith.constant 2 : i32
    %29 = vector.broadcast %c2_i32_13 : i32 to vector<264x64xi32>
    %30 = arith.muli %29, %2 : vector<264x64xi32>
    %c1_i32 = arith.constant 1 : i32
    %31 = vector.broadcast %c1_i32 : i32 to vector<264x64xi32>
    %32 = arith.addi %30, %31 : vector<264x64xi32>
    %c511_i32_14 = arith.constant 511 : i32
    %33 = vector.broadcast %c511_i32_14 : i32 to vector<264x64xi32>
    %34 = arith.cmpi slt, %32, %33 : vector<264x64xi32>
    %cst_15 = arith.constant 0.000000e+00 : f32
    %35 = vector.broadcast %cst_15 : f32 to vector<264x64xf32>
    %36 = arith.select %34, %22, %35 : vector<264x64xi1>, vector<264x64xf32>
    %cst_16 = arith.constant 0.000000e+00 : f32
    %37 = vector.broadcast %cst_16 : f32 to vector<1x64xf32>
    %38 = vector.extract_strided_slice %28 {offsets = [1, 0], sizes = [263, 64], strides = [1, 1]} : vector<264x64xf32> to vector<263x64xf32>
    %39 = tpu.concatenate %38, %37 in 0 : vector<263x64xf32>, vector<1x64xf32> -> vector<264x64xf32>
    %40 = vector.extract_strided_slice %36 {offsets = [0, 0], sizes = [263, 64], strides = [1, 1]} : vector<264x64xf32> to vector<263x64xf32>
    %41 = tpu.concatenate %37, %40 in 0 : vector<1x64xf32>, vector<263x64xf32> -> vector<264x64xf32>
    %42 = arith.addf %41, %28 : vector<264x64xf32>
    %43 = arith.addf %42, %36 : vector<264x64xf32>
    %44 = arith.addf %43, %39 : vector<264x64xf32>
    %c255_i32 = arith.constant 255 : i32
    %45 = vector.broadcast %c255_i32 : i32 to vector<264x64xi32>
    %46 = arith.cmpi slt, %2, %45 : vector<264x64xi32>
    %cst_17 = arith.constant 2.500000e-01 : f32
    %47 = vector.broadcast %cst_17 : f32 to vector<264x64xf32>
    %48 = arith.mulf %44, %47 : vector<264x64xf32>
    %cst_18 = arith.constant 0.000000e+00 : f32
    %49 = vector.broadcast %cst_18 : f32 to vector<264x64xf32>
    %50 = arith.select %46, %48, %49 : vector<264x64xi1>, vector<264x64xf32>
    %51 = arith.truncf %50 : vector<264x64xf32> to vector<264x64xbf16>
    %c0_19 = arith.constant 0 : index
    %c0_20 = arith.constant 0 : index
    %c0_21 = arith.constant 0 : index
    %52 = vector.load %arg4[%c0_19, %c0_20, %c0_21] : memref<1x264x64xbf16, #tpu.memory_space<vmem>>, vector<1x264x64xbf16>
    %53 = vector.shape_cast %52 : vector<1x264x64xbf16> to vector<264x64xbf16>
    %54 = vector.shape_cast %51 : vector<264x64xbf16> to vector<1x264x64xbf16>
    tpu.vector_store %arg4[%c0_19, %c0_20, %c0_21], %54 {strides = array<i32>} : memref<1x264x64xbf16, #tpu.memory_space<vmem>>, vector<1x264x64xbf16>,
    return
  }
  func.func @transform_0(%arg0: i32) -> (i32, i32, i32) {
    %c0_i32 = arith.constant 0 : i32
    %c0_i32_0 = arith.constant 0 : i32
    %c0_i32_1 = arith.constant 0 : i32
    return %arg0, %c0_i32, %c0_i32_0 : i32, i32, i32
  }
  func.func @transform_1(%arg0: i32) -> (i32, i32) {
    %c0_i32 = arith.constant 0 : i32
    %c0_i32_0 = arith.constant 0 : i32
    %c0_i32_1 = arith.constant 0 : i32
    return %c0_i32, %c0_i32_0 : i32, i32
  }
  func.func @transform_2(%arg0: i32) -> (i32, i32) {
    %c0_i32 = arith.constant 0 : i32
    %c0_i32_0 = arith.constant 0 : i32
    %c0_i32_1 = arith.constant 0 : i32
    return %c0_i32, %c0_i32_0 : i32, i32
  }
  func.func @transform_3(%arg0: i32) -> (i32, i32, i32) {
    %c0_i32 = arith.constant 0 : i32
    %c0_i32_0 = arith.constant 0 : i32
    %c0_i32_1 = arith.constant 0 : i32
    return %arg0, %c0_i32, %c0_i32_0 : i32, i32, i32
  }
}

module attributes {stable_mosaic.version = 11 : i64} {
  func.func @_nin_stats_kernel(%arg0: i32, %arg1: memref<1x88x256xbf16, #tpu.memory_space<vmem>>, %arg2: memref<4x256x128xbf16, #tpu.memory_space<vmem>>, %arg3: memref<128x128xbf16, #tpu.memory_space<vmem>>, %arg4: memref<128x128xbf16, #tpu.memory_space<vmem>>, %arg5: memref<1x80x128xbf16, #tpu.memory_space<vmem>>, %arg6: memref<1x1x128xf32, #tpu.memory_space<vmem>>, %arg7: memref<1x1x128xf32, #tpu.memory_space<vmem>>) attributes {dimension_semantics = [#tpu.dimension_semantics<parallel>], iteration_bounds = array<i64: 2>, scalar_prefetch = 0 : i64, scratch_operands = 0 : i64, tpu.core_type = #tpu.core_type<tc>, window_params = [{transform_indices = @transform_0, window_bounds = array<i64: 1, 88, 256>}, {pipeline_mode = #tpu.pipeline_mode<synchronous>, transform_indices = @transform_1, window_bounds = array<i64: 4, 256, 128>}, {pipeline_mode = #tpu.pipeline_mode<synchronous>, transform_indices = @transform_2, window_bounds = array<i64: 128, 128>}, {pipeline_mode = #tpu.pipeline_mode<synchronous>, transform_indices = @transform_3, window_bounds = array<i64: 128, 128>}, {transform_indices = @transform_4, window_bounds = array<i64: 1, 80, 128>}, {transform_indices = @transform_5, window_bounds = array<i64: 1, 1, 128>}, {transform_indices = @transform_6, window_bounds = array<i64: 1, 1, 128>}]} {
    %c0_i32 = arith.constant 0 : i32
    %c0_i32_0 = arith.constant 0 : i32
    %c0_i32_1 = arith.constant 0 : i32
    %0 = tpu.memref_slice %arg1[%c0_i32, %c0_i32_0, %c0_i32_1] : memref<1x88x256xbf16, #tpu.memory_space<vmem>> -> memref<1x88x256xbf16, #tpu.memory_space<vmem>>
    %1 = tpu.memref_squeeze %0 : memref<1x88x256xbf16, #tpu.memory_space<vmem>> -> memref<88x256xbf16, #tpu.memory_space<vmem>>
    %c0 = arith.constant 0 : index
    %c0_2 = arith.constant 0 : index
    %2 = vector.load %1[%c0, %c0_2] : memref<88x256xbf16, #tpu.memory_space<vmem>>, vector<80x256xbf16>
    %c0_3 = arith.constant 0 : index
    %c0_4 = arith.constant 0 : index
    %c0_5 = arith.constant 0 : index
    %3 = vector.load %arg2[%c0_3, %c0_4, %c0_5] : memref<4x256x128xbf16, #tpu.memory_space<vmem>>, vector<1x256x128xbf16>
    %4 = vector.shape_cast %3 : vector<1x256x128xbf16> to vector<256x128xbf16>
    %cst = arith.constant dense<0.000000e+00> : vector<80x128xf32>
    %5 = tpu.matmul %2, %4, %cst {dimension_numbers = #tpu.dot_dimension_numbers<[1], [0], [0], [1], [0, 0, 1, 1], [], []>} : vector<80x256xbf16>, vector<256x128xbf16>, vector<80x128xf32> -> vector<80x128xf32>
    %c0_i32_6 = arith.constant 0 : i32
    %c0_i32_7 = arith.constant 0 : i32
    %c0_i32_8 = arith.constant 0 : i32
    %6 = tpu.memref_slice %arg1[%c0_i32_6, %c0_i32_7, %c0_i32_8] : memref<1x88x256xbf16, #tpu.memory_space<vmem>> -> memref<1x88x256xbf16, #tpu.memory_space<vmem>>
    %7 = tpu.memref_squeeze %6 : memref<1x88x256xbf16, #tpu.memory_space<vmem>> -> memref<88x256xbf16, #tpu.memory_space<vmem>>
    %c1 = arith.constant 1 : index
    %c0_9 = arith.constant 0 : index
    %8 = vector.load %7[%c1, %c0_9] : memref<88x256xbf16, #tpu.memory_space<vmem>>, vector<80x256xbf16>
    %c1_10 = arith.constant 1 : index
    %c0_11 = arith.constant 0 : index
    %c0_12 = arith.constant 0 : index
    %9 = vector.load %arg2[%c1_10, %c0_11, %c0_12] : memref<4x256x128xbf16, #tpu.memory_space<vmem>>, vector<1x256x128xbf16>
    %10 = vector.shape_cast %9 : vector<1x256x128xbf16> to vector<256x128xbf16>
    %cst_13 = arith.constant dense<0.000000e+00> : vector<80x128xf32>
    %11 = tpu.matmul %8, %10, %cst_13 {dimension_numbers = #tpu.dot_dimension_numbers<[1], [0], [0], [1], [0, 0, 1, 1], [], []>} : vector<80x256xbf16>, vector<256x128xbf16>, vector<80x128xf32> -> vector<80x128xf32>
    %12 = arith.addf %5, %11 : vector<80x128xf32>
    %c0_i32_14 = arith.constant 0 : i32
    %c0_i32_15 = arith.constant 0 : i32
    %c0_i32_16 = arith.constant 0 : i32
    %13 = tpu.memref_slice %arg1[%c0_i32_14, %c0_i32_15, %c0_i32_16] : memref<1x88x256xbf16, #tpu.memory_space<vmem>> -> memref<1x88x256xbf16, #tpu.memory_space<vmem>>
    %14 = tpu.memref_squeeze %13 : memref<1x88x256xbf16, #tpu.memory_space<vmem>> -> memref<88x256xbf16, #tpu.memory_space<vmem>>
    %c2 = arith.constant 2 : index
    %c0_17 = arith.constant 0 : index
    %15 = vector.load %14[%c2, %c0_17] : memref<88x256xbf16, #tpu.memory_space<vmem>>, vector<80x256xbf16>
    %c2_18 = arith.constant 2 : index
    %c0_19 = arith.constant 0 : index
    %c0_20 = arith.constant 0 : index
    %16 = vector.load %arg2[%c2_18, %c0_19, %c0_20] : memref<4x256x128xbf16, #tpu.memory_space<vmem>>, vector<1x256x128xbf16>
    %17 = vector.shape_cast %16 : vector<1x256x128xbf16> to vector<256x128xbf16>
    %cst_21 = arith.constant dense<0.000000e+00> : vector<80x128xf32>
    %18 = tpu.matmul %15, %17, %cst_21 {dimension_numbers = #tpu.dot_dimension_numbers<[1], [0], [0], [1], [0, 0, 1, 1], [], []>} : vector<80x256xbf16>, vector<256x128xbf16>, vector<80x128xf32> -> vector<80x128xf32>
    %19 = arith.addf %12, %18 : vector<80x128xf32>
    %c0_i32_22 = arith.constant 0 : i32
    %c0_i32_23 = arith.constant 0 : i32
    %c0_i32_24 = arith.constant 0 : i32
    %20 = tpu.memref_slice %arg1[%c0_i32_22, %c0_i32_23, %c0_i32_24] : memref<1x88x256xbf16, #tpu.memory_space<vmem>> -> memref<1x88x256xbf16, #tpu.memory_space<vmem>>
    %21 = tpu.memref_squeeze %20 : memref<1x88x256xbf16, #tpu.memory_space<vmem>> -> memref<88x256xbf16, #tpu.memory_space<vmem>>
    %c3 = arith.constant 3 : index
    %c0_25 = arith.constant 0 : index
    %22 = vector.load %21[%c3, %c0_25] : memref<88x256xbf16, #tpu.memory_space<vmem>>, vector<80x256xbf16>
    %c3_26 = arith.constant 3 : index
    %c0_27 = arith.constant 0 : index
    %c0_28 = arith.constant 0 : index
    %23 = vector.load %arg2[%c3_26, %c0_27, %c0_28] : memref<4x256x128xbf16, #tpu.memory_space<vmem>>, vector<1x256x128xbf16>
    %24 = vector.shape_cast %23 : vector<1x256x128xbf16> to vector<256x128xbf16>
    %cst_29 = arith.constant dense<0.000000e+00> : vector<80x128xf32>
    %25 = tpu.matmul %22, %24, %cst_29 {dimension_numbers = #tpu.dot_dimension_numbers<[1], [0], [0], [1], [0, 0, 1, 1], [], []>} : vector<80x256xbf16>, vector<256x128xbf16>, vector<80x128xf32> -> vector<80x128xf32>
    %26 = arith.addf %19, %25 : vector<80x128xf32>
    %cst_30 = arith.constant 0.000000e+00 : f32
    %27 = vector.broadcast %cst_30 : f32 to vector<80x128xf32>
    %28 = arith.maximumf %26, %27 : vector<80x128xf32>
    %29 = arith.truncf %28 : vector<80x128xf32> to vector<80x128xbf16>
    %c0_31 = arith.constant 0 : index
    %c0_32 = arith.constant 0 : index
    %30 = vector.load %arg3[%c0_31, %c0_32] : memref<128x128xbf16, #tpu.memory_space<vmem>>, vector<128x128xbf16>
    %cst_33 = arith.constant dense<0.000000e+00> : vector<80x128xf32>
    %31 = tpu.matmul %29, %30, %cst_33 {dimension_numbers = #tpu.dot_dimension_numbers<[1], [0], [0], [1], [0, 0, 1, 1], [], []>} : vector<80x128xbf16>, vector<128x128xbf16>, vector<80x128xf32> -> vector<80x128xf32>
    %cst_34 = arith.constant 0.000000e+00 : f32
    %32 = vector.broadcast %cst_34 : f32 to vector<80x128xf32>
    %33 = arith.maximumf %31, %32 : vector<80x128xf32>
    %34 = arith.truncf %33 : vector<80x128xf32> to vector<80x128xbf16>
    %c0_35 = arith.constant 0 : index
    %c0_36 = arith.constant 0 : index
    %35 = vector.load %arg4[%c0_35, %c0_36] : memref<128x128xbf16, #tpu.memory_space<vmem>>, vector<128x128xbf16>
    %cst_37 = arith.constant dense<0.000000e+00> : vector<80x128xf32>
    %36 = tpu.matmul %34, %35, %cst_37 {dimension_numbers = #tpu.dot_dimension_numbers<[1], [0], [0], [1], [0, 0, 1, 1], [], []>} : vector<80x128xbf16>, vector<128x128xbf16>, vector<80x128xf32> -> vector<80x128xf32>
    %cst_38 = arith.constant 0.000000e+00 : f32
    %37 = vector.broadcast %cst_38 : f32 to vector<80x128xf32>
    %38 = arith.maximumf %36, %37 : vector<80x128xf32>
    %39 = tpu.iota {dimensions = array<i32: 0>} : vector<80x128xi32>
    %c63_i32 = arith.constant 63 : i32
    %40 = vector.broadcast %c63_i32 : i32 to vector<80x128xi32>
    %41 = arith.cmpi slt, %39, %40 : vector<80x128xi32>
    %cst_39 = arith.constant 0.000000e+00 : f32
    %42 = vector.broadcast %cst_39 : f32 to vector<80x128xf32>
    %43 = arith.select %41, %38, %42 : vector<80x128xi1>, vector<80x128xf32>
    %cst_40 = arith.constant dense<0.000000e+00> : vector<128xf32>
    %44 = vector.multi_reduction <add>, %43, %cst_40 [0] : vector<80x128xf32> to vector<128xf32>
    %45 = vector.shape_cast %44 : vector<128xf32> to vector<1x128xf32>
    %c0_41 = arith.constant 0 : index
    %c0_42 = arith.constant 0 : index
    %c0_43 = arith.constant 0 : index
    %46 = vector.load %arg6[%c0_41, %c0_42, %c0_43] : memref<1x1x128xf32, #tpu.memory_space<vmem>>, vector<1x1x128xf32>
    %47 = vector.shape_cast %46 : vector<1x1x128xf32> to vector<1x128xf32>
    %48 = vector.shape_cast %45 : vector<1x128xf32> to vector<1x1x128xf32>
    tpu.vector_store %arg6[%c0_41, %c0_42, %c0_43], %48 {strides = array<i32>} : memref<1x1x128xf32, #tpu.memory_space<vmem>>, vector<1x1x128xf32>,
    %49 = arith.mulf %43, %43 : vector<80x128xf32>
    %cst_44 = arith.constant dense<0.000000e+00> : vector<128xf32>
    %50 = vector.multi_reduction <add>, %49, %cst_44 [0] : vector<80x128xf32> to vector<128xf32>
    %51 = vector.shape_cast %50 : vector<128xf32> to vector<1x128xf32>
    %c0_45 = arith.constant 0 : index
    %c0_46 = arith.constant 0 : index
    %c0_47 = arith.constant 0 : index
    %52 = vector.load %arg7[%c0_45, %c0_46, %c0_47] : memref<1x1x128xf32, #tpu.memory_space<vmem>>, vector<1x1x128xf32>
    %53 = vector.shape_cast %52 : vector<1x1x128xf32> to vector<1x128xf32>
    %54 = vector.shape_cast %51 : vector<1x128xf32> to vector<1x1x128xf32>
    tpu.vector_store %arg7[%c0_45, %c0_46, %c0_47], %54 {strides = array<i32>} : memref<1x1x128xf32, #tpu.memory_space<vmem>>, vector<1x1x128xf32>,
    %55 = arith.truncf %38 : vector<80x128xf32> to vector<80x128xbf16>
    %c0_48 = arith.constant 0 : index
    %c0_49 = arith.constant 0 : index
    %c0_50 = arith.constant 0 : index
    %56 = vector.load %arg5[%c0_48, %c0_49, %c0_50] : memref<1x80x128xbf16, #tpu.memory_space<vmem>>, vector<1x80x128xbf16>
    %57 = vector.shape_cast %56 : vector<1x80x128xbf16> to vector<80x128xbf16>
    %58 = vector.shape_cast %55 : vector<80x128xbf16> to vector<1x80x128xbf16>
    tpu.vector_store %arg5[%c0_48, %c0_49, %c0_50], %58 {strides = array<i32>} : memref<1x80x128xbf16, #tpu.memory_space<vmem>>, vector<1x80x128xbf16>,
    return
  }
  func.func @transform_0(%arg0: i32) -> (i32, i32, i32) {
    %c0_i32 = arith.constant 0 : i32
    %c0_i32_0 = arith.constant 0 : i32
    %c0_i32_1 = arith.constant 0 : i32
    return %arg0, %c0_i32, %c0_i32_0 : i32, i32, i32
  }
  func.func @transform_1(%arg0: i32) -> (i32, i32, i32) {
    %c0_i32 = arith.constant 0 : i32
    %c0_i32_0 = arith.constant 0 : i32
    %c0_i32_1 = arith.constant 0 : i32
    %c0_i32_2 = arith.constant 0 : i32
    return %c0_i32, %c0_i32_0, %c0_i32_1 : i32, i32, i32
  }
  func.func @transform_2(%arg0: i32) -> (i32, i32) {
    %c0_i32 = arith.constant 0 : i32
    %c0_i32_0 = arith.constant 0 : i32
    %c0_i32_1 = arith.constant 0 : i32
    return %c0_i32, %c0_i32_0 : i32, i32
  }
  func.func @transform_3(%arg0: i32) -> (i32, i32) {
    %c0_i32 = arith.constant 0 : i32
    %c0_i32_0 = arith.constant 0 : i32
    %c0_i32_1 = arith.constant 0 : i32
    return %c0_i32, %c0_i32_0 : i32, i32
  }
  func.func @transform_4(%arg0: i32) -> (i32, i32, i32) {
    %c0_i32 = arith.constant 0 : i32
    %c0_i32_0 = arith.constant 0 : i32
    %c0_i32_1 = arith.constant 0 : i32
    return %arg0, %c0_i32, %c0_i32_0 : i32, i32, i32
  }
  func.func @transform_5(%arg0: i32) -> (i32, i32, i32) {
    %c0_i32 = arith.constant 0 : i32
    %c0_i32_0 = arith.constant 0 : i32
    %c0_i32_1 = arith.constant 0 : i32
    return %arg0, %c0_i32, %c0_i32_0 : i32, i32, i32
  }
  func.func @transform_6(%arg0: i32) -> (i32, i32, i32) {
    %c0_i32 = arith.constant 0 : i32
    %c0_i32_0 = arith.constant 0 : i32
    %c0_i32_1 = arith.constant 0 : i32
    return %arg0, %c0_i32, %c0_i32_0 : i32, i32, i32
  }
}

module attributes {stable_mosaic.version = 11 : i64} {
  func.func @_bn_relu_pool_kernel(%arg0: i32, %arg1: memref<1x40x256xbf16, #tpu.memory_space<vmem>>, %arg2: memref<1x128xf32, #tpu.memory_space<vmem>>, %arg3: memref<1x128xf32, #tpu.memory_space<vmem>>, %arg4: memref<1x40x128xbf16, #tpu.memory_space<vmem>>) attributes {dimension_semantics = [#tpu.dimension_semantics<parallel>], iteration_bounds = array<i64: 2>, scalar_prefetch = 0 : i64, scratch_operands = 0 : i64, tpu.core_type = #tpu.core_type<tc>, window_params = [{transform_indices = @transform_0, window_bounds = array<i64: 1, 40, 256>}, {pipeline_mode = #tpu.pipeline_mode<synchronous>, transform_indices = @transform_1, window_bounds = array<i64: 1, 128>}, {pipeline_mode = #tpu.pipeline_mode<synchronous>, transform_indices = @transform_2, window_bounds = array<i64: 1, 128>}, {transform_indices = @transform_3, window_bounds = array<i64: 1, 40, 128>}]} {
    %c0 = arith.constant 0 : index
    %c0_0 = arith.constant 0 : index
    %0 = vector.load %arg2[%c0, %c0_0] : memref<1x128xf32, #tpu.memory_space<vmem>>, vector<1x128xf32>
    %c0_1 = arith.constant 0 : index
    %c0_2 = arith.constant 0 : index
    %1 = vector.load %arg3[%c0_1, %c0_2] : memref<1x128xf32, #tpu.memory_space<vmem>>, vector<1x128xf32>
    %2 = tpu.iota {dimensions = array<i32: 0>} : vector<40x128xi32>
    %c0_i32 = arith.constant 0 : i32
    %c0_i32_3 = arith.constant 0 : i32
    %c0_i32_4 = arith.constant 0 : i32
    %3 = tpu.memref_slice %arg1[%c0_i32, %c0_i32_3, %c0_i32_4] : memref<1x40x256xbf16, #tpu.memory_space<vmem>> -> memref<1x40x256xbf16, #tpu.memory_space<vmem>>
    %4 = tpu.memref_squeeze %3 : memref<1x40x256xbf16, #tpu.memory_space<vmem>> -> memref<40x256xbf16, #tpu.memory_space<vmem>>
    %c0_5 = arith.constant 0 : index
    %c0_6 = arith.constant 0 : index
    %5 = vector.load %4[%c0_5, %c0_6] : memref<40x256xbf16, #tpu.memory_space<vmem>>, vector<40x128xbf16>
    %6 = arith.extf %5 : vector<40x128xbf16> to vector<40x128xf32>
    %c0_i32_7 = arith.constant 0 : i32
    %c0_i32_8 = arith.constant 0 : i32
    %c0_i32_9 = arith.constant 0 : i32
    %7 = tpu.memref_slice %arg1[%c0_i32_7, %c0_i32_8, %c0_i32_9] : memref<1x40x256xbf16, #tpu.memory_space<vmem>> -> memref<1x40x256xbf16, #tpu.memory_space<vmem>>
    %8 = tpu.memref_squeeze %7 : memref<1x40x256xbf16, #tpu.memory_space<vmem>> -> memref<40x256xbf16, #tpu.memory_space<vmem>>
    %c0_10 = arith.constant 0 : index
    %c128 = arith.constant 128 : index
    %9 = vector.load %8[%c0_10, %c128] : memref<40x256xbf16, #tpu.memory_space<vmem>>, vector<40x128xbf16>
    %10 = arith.extf %9 : vector<40x128xbf16> to vector<40x128xf32>
    %11 = vector.broadcast %0 : vector<1x128xf32> to vector<40x128xf32>
    %12 = arith.mulf %6, %11 : vector<40x128xf32>
    %13 = vector.broadcast %1 : vector<1x128xf32> to vector<40x128xf32>
    %14 = arith.addf %12, %13 : vector<40x128xf32>
    %cst = arith.constant 0.000000e+00 : f32
    %15 = vector.broadcast %cst : f32 to vector<40x128xf32>
    %16 = arith.maximumf %14, %15 : vector<40x128xf32>
    %17 = vector.broadcast %0 : vector<1x128xf32> to vector<40x128xf32>
    %18 = arith.mulf %10, %17 : vector<40x128xf32>
    %19 = vector.broadcast %1 : vector<1x128xf32> to vector<40x128xf32>
    %20 = arith.addf %18, %19 : vector<40x128xf32>
    %cst_11 = arith.constant 0.000000e+00 : f32
    %21 = vector.broadcast %cst_11 : f32 to vector<40x128xf32>
    %22 = arith.maximumf %20, %21 : vector<40x128xf32>
    %c2_i32 = arith.constant 2 : i32
    %23 = vector.broadcast %c2_i32 : i32 to vector<40x128xi32>
    %24 = arith.muli %23, %2 : vector<40x128xi32>
    %c63_i32 = arith.constant 63 : i32
    %25 = vector.broadcast %c63_i32 : i32 to vector<40x128xi32>
    %26 = arith.cmpi slt, %24, %25 : vector<40x128xi32>
    %cst_12 = arith.constant 0.000000e+00 : f32
    %27 = vector.broadcast %cst_12 : f32 to vector<40x128xf32>
    %28 = arith.select %26, %16, %27 : vector<40x128xi1>, vector<40x128xf32>
    %c2_i32_13 = arith.constant 2 : i32
    %29 = vector.broadcast %c2_i32_13 : i32 to vector<40x128xi32>
    %30 = arith.muli %29, %2 : vector<40x128xi32>
    %c1_i32 = arith.constant 1 : i32
    %31 = vector.broadcast %c1_i32 : i32 to vector<40x128xi32>
    %32 = arith.addi %30, %31 : vector<40x128xi32>
    %c63_i32_14 = arith.constant 63 : i32
    %33 = vector.broadcast %c63_i32_14 : i32 to vector<40x128xi32>
    %34 = arith.cmpi slt, %32, %33 : vector<40x128xi32>
    %cst_15 = arith.constant 0.000000e+00 : f32
    %35 = vector.broadcast %cst_15 : f32 to vector<40x128xf32>
    %36 = arith.select %34, %22, %35 : vector<40x128xi1>, vector<40x128xf32>
    %cst_16 = arith.constant 0.000000e+00 : f32
    %37 = vector.broadcast %cst_16 : f32 to vector<1x128xf32>
    %38 = vector.extract_strided_slice %28 {offsets = [1, 0], sizes = [39, 128], strides = [1, 1]} : vector<40x128xf32> to vector<39x128xf32>
    %39 = tpu.concatenate %38, %37 in 0 : vector<39x128xf32>, vector<1x128xf32> -> vector<40x128xf32>
    %40 = vector.extract_strided_slice %36 {offsets = [1, 0], sizes = [39, 128], strides = [1, 1]} : vector<40x128xf32> to vector<39x128xf32>
    %41 = tpu.concatenate %40, %37 in 0 : vector<39x128xf32>, vector<1x128xf32> -> vector<40x128xf32>
    %42 = arith.addf %28, %36 : vector<40x128xf32>
    %43 = arith.addf %42, %39 : vector<40x128xf32>
    %44 = arith.addf %43, %41 : vector<40x128xf32>
    %c30_i32 = arith.constant 30 : i32
    %45 = vector.broadcast %c30_i32 : i32 to vector<40x128xi32>
    %46 = arith.cmpi slt, %2, %45 : vector<40x128xi32>
    %cst_17 = arith.constant 2.500000e-01 : f32
    %47 = vector.broadcast %cst_17 : f32 to vector<40x128xf32>
    %48 = arith.mulf %44, %47 : vector<40x128xf32>
    %cst_18 = arith.constant 0.000000e+00 : f32
    %49 = vector.broadcast %cst_18 : f32 to vector<40x128xf32>
    %50 = arith.select %46, %48, %49 : vector<40x128xi1>, vector<40x128xf32>
    %51 = arith.truncf %50 : vector<40x128xf32> to vector<40x128xbf16>
    %c0_19 = arith.constant 0 : index
    %c0_20 = arith.constant 0 : index
    %c0_21 = arith.constant 0 : index
    %52 = vector.load %arg4[%c0_19, %c0_20, %c0_21] : memref<1x40x128xbf16, #tpu.memory_space<vmem>>, vector<1x40x128xbf16>
    %53 = vector.shape_cast %52 : vector<1x40x128xbf16> to vector<40x128xbf16>
    %54 = vector.shape_cast %51 : vector<40x128xbf16> to vector<1x40x128xbf16>
    tpu.vector_store %arg4[%c0_19, %c0_20, %c0_21], %54 {strides = array<i32>} : memref<1x40x128xbf16, #tpu.memory_space<vmem>>, vector<1x40x128xbf16>,
    return
  }
  func.func @transform_0(%arg0: i32) -> (i32, i32, i32) {
    %c0_i32 = arith.constant 0 : i32
    %c0_i32_0 = arith.constant 0 : i32
    %c0_i32_1 = arith.constant 0 : i32
    return %arg0, %c0_i32, %c0_i32_0 : i32, i32, i32
  }
  func.func @transform_1(%arg0: i32) -> (i32, i32) {
    %c0_i32 = arith.constant 0 : i32
    %c0_i32_0 = arith.constant 0 : i32
    %c0_i32_1 = arith.constant 0 : i32
    return %c0_i32, %c0_i32_0 : i32, i32
  }
  func.func @transform_2(%arg0: i32) -> (i32, i32) {
    %c0_i32 = arith.constant 0 : i32
    %c0_i32_0 = arith.constant 0 : i32
    %c0_i32_1 = arith.constant 0 : i32
    return %c0_i32, %c0_i32_0 : i32, i32
  }
  func.func @transform_3(%arg0: i32) -> (i32, i32, i32) {
    %c0_i32 = arith.constant 0 : i32
    %c0_i32_0 = arith.constant 0 : i32
    %c0_i32_1 = arith.constant 0 : i32
    return %arg0, %c0_i32, %c0_i32_0 : i32, i32, i32
  }
}

module attributes {stable_mosaic.version = 11 : i64} {
  func.func @_conv_bias_stats_kernel(%arg0: i32, %arg1: memref<1x24x512xbf16, #tpu.memory_space<vmem>>, %arg2: memref<2x512x128xbf16, #tpu.memory_space<vmem>>, %arg3: memref<1x128xf32, #tpu.memory_space<vmem>>, %arg4: memref<1x16x128xbf16, #tpu.memory_space<vmem>>, %arg5: memref<1x1x128xf32, #tpu.memory_space<vmem>>, %arg6: memref<1x1x128xf32, #tpu.memory_space<vmem>>) attributes {dimension_semantics = [#tpu.dimension_semantics<parallel>], iteration_bounds = array<i64: 2>, scalar_prefetch = 0 : i64, scratch_operands = 0 : i64, tpu.core_type = #tpu.core_type<tc>, window_params = [{transform_indices = @transform_0, window_bounds = array<i64: 1, 24, 512>}, {pipeline_mode = #tpu.pipeline_mode<synchronous>, transform_indices = @transform_1, window_bounds = array<i64: 2, 512, 128>}, {pipeline_mode = #tpu.pipeline_mode<synchronous>, transform_indices = @transform_2, window_bounds = array<i64: 1, 128>}, {transform_indices = @transform_3, window_bounds = array<i64: 1, 16, 128>}, {transform_indices = @transform_4, window_bounds = array<i64: 1, 1, 128>}, {transform_indices = @transform_5, window_bounds = array<i64: 1, 1, 128>}]} {
    %c0_i32 = arith.constant 0 : i32
    %c0_i32_0 = arith.constant 0 : i32
    %c0_i32_1 = arith.constant 0 : i32
    %0 = tpu.memref_slice %arg1[%c0_i32, %c0_i32_0, %c0_i32_1] : memref<1x24x512xbf16, #tpu.memory_space<vmem>> -> memref<1x24x512xbf16, #tpu.memory_space<vmem>>
    %1 = tpu.memref_squeeze %0 : memref<1x24x512xbf16, #tpu.memory_space<vmem>> -> memref<24x512xbf16, #tpu.memory_space<vmem>>
    %c0 = arith.constant 0 : index
    %c0_2 = arith.constant 0 : index
    %2 = vector.load %1[%c0, %c0_2] : memref<24x512xbf16, #tpu.memory_space<vmem>>, vector<16x512xbf16>
    %c0_3 = arith.constant 0 : index
    %c0_4 = arith.constant 0 : index
    %c0_5 = arith.constant 0 : index
    %3 = vector.load %arg2[%c0_3, %c0_4, %c0_5] : memref<2x512x128xbf16, #tpu.memory_space<vmem>>, vector<1x512x128xbf16>
    %4 = vector.shape_cast %3 : vector<1x512x128xbf16> to vector<512x128xbf16>
    %cst = arith.constant dense<0.000000e+00> : vector<16x128xf32>
    %5 = tpu.matmul %2, %4, %cst {dimension_numbers = #tpu.dot_dimension_numbers<[1], [0], [0], [1], [0, 0, 1, 1], [], []>} : vector<16x512xbf16>, vector<512x128xbf16>, vector<16x128xf32> -> vector<16x128xf32>
    %c0_i32_6 = arith.constant 0 : i32
    %c0_i32_7 = arith.constant 0 : i32
    %c0_i32_8 = arith.constant 0 : i32
    %6 = tpu.memref_slice %arg1[%c0_i32_6, %c0_i32_7, %c0_i32_8] : memref<1x24x512xbf16, #tpu.memory_space<vmem>> -> memref<1x24x512xbf16, #tpu.memory_space<vmem>>
    %7 = tpu.memref_squeeze %6 : memref<1x24x512xbf16, #tpu.memory_space<vmem>> -> memref<24x512xbf16, #tpu.memory_space<vmem>>
    %c1 = arith.constant 1 : index
    %c0_9 = arith.constant 0 : index
    %8 = vector.load %7[%c1, %c0_9] : memref<24x512xbf16, #tpu.memory_space<vmem>>, vector<16x512xbf16>
    %c1_10 = arith.constant 1 : index
    %c0_11 = arith.constant 0 : index
    %c0_12 = arith.constant 0 : index
    %9 = vector.load %arg2[%c1_10, %c0_11, %c0_12] : memref<2x512x128xbf16, #tpu.memory_space<vmem>>, vector<1x512x128xbf16>
    %10 = vector.shape_cast %9 : vector<1x512x128xbf16> to vector<512x128xbf16>
    %cst_13 = arith.constant dense<0.000000e+00> : vector<16x128xf32>
    %11 = tpu.matmul %8, %10, %cst_13 {dimension_numbers = #tpu.dot_dimension_numbers<[1], [0], [0], [1], [0, 0, 1, 1], [], []>} : vector<16x512xbf16>, vector<512x128xbf16>, vector<16x128xf32> -> vector<16x128xf32>
    %12 = arith.addf %5, %11 : vector<16x128xf32>
    %c0_14 = arith.constant 0 : index
    %c0_15 = arith.constant 0 : index
    %13 = vector.load %arg3[%c0_14, %c0_15] : memref<1x128xf32, #tpu.memory_space<vmem>>, vector<1x128xf32>
    %14 = vector.broadcast %13 : vector<1x128xf32> to vector<16x128xf32>
    %15 = arith.addf %12, %14 : vector<16x128xf32>
    %16 = tpu.iota {dimensions = array<i32: 0>} : vector<16x128xi32>
    %c6_i32 = arith.constant 6 : i32
    %17 = vector.broadcast %c6_i32 : i32 to vector<16x128xi32>
    %18 = arith.cmpi slt, %16, %17 : vector<16x128xi32>
    %cst_16 = arith.constant 0.000000e+00 : f32
    %19 = vector.broadcast %cst_16 : f32 to vector<16x128xf32>
    %20 = arith.select %18, %15, %19 : vector<16x128xi1>, vector<16x128xf32>
    %cst_17 = arith.constant dense<0.000000e+00> : vector<128xf32>
    %21 = vector.multi_reduction <add>, %20, %cst_17 [0] : vector<16x128xf32> to vector<128xf32>
    %22 = vector.shape_cast %21 : vector<128xf32> to vector<1x128xf32>
    %c0_18 = arith.constant 0 : index
    %c0_19 = arith.constant 0 : index
    %c0_20 = arith.constant 0 : index
    %23 = vector.load %arg5[%c0_18, %c0_19, %c0_20] : memref<1x1x128xf32, #tpu.memory_space<vmem>>, vector<1x1x128xf32>
    %24 = vector.shape_cast %23 : vector<1x1x128xf32> to vector<1x128xf32>
    %25 = vector.shape_cast %22 : vector<1x128xf32> to vector<1x1x128xf32>
    tpu.vector_store %arg5[%c0_18, %c0_19, %c0_20], %25 {strides = array<i32>} : memref<1x1x128xf32, #tpu.memory_space<vmem>>, vector<1x1x128xf32>,
    %26 = arith.mulf %20, %20 : vector<16x128xf32>
    %cst_21 = arith.constant dense<0.000000e+00> : vector<128xf32>
    %27 = vector.multi_reduction <add>, %26, %cst_21 [0] : vector<16x128xf32> to vector<128xf32>
    %28 = vector.shape_cast %27 : vector<128xf32> to vector<1x128xf32>
    %c0_22 = arith.constant 0 : index
    %c0_23 = arith.constant 0 : index
    %c0_24 = arith.constant 0 : index
    %29 = vector.load %arg6[%c0_22, %c0_23, %c0_24] : memref<1x1x128xf32, #tpu.memory_space<vmem>>, vector<1x1x128xf32>
    %30 = vector.shape_cast %29 : vector<1x1x128xf32> to vector<1x128xf32>
    %31 = vector.shape_cast %28 : vector<1x128xf32> to vector<1x1x128xf32>
    tpu.vector_store %arg6[%c0_22, %c0_23, %c0_24], %31 {strides = array<i32>} : memref<1x1x128xf32, #tpu.memory_space<vmem>>, vector<1x1x128xf32>,
    %32 = arith.truncf %15 : vector<16x128xf32> to vector<16x128xbf16>
    %c0_25 = arith.constant 0 : index
    %c0_26 = arith.constant 0 : index
    %c0_27 = arith.constant 0 : index
    %33 = vector.load %arg4[%c0_25, %c0_26, %c0_27] : memref<1x16x128xbf16, #tpu.memory_space<vmem>>, vector<1x16x128xbf16>
    %34 = vector.shape_cast %33 : vector<1x16x128xbf16> to vector<16x128xbf16>
    %35 = vector.shape_cast %32 : vector<16x128xbf16> to vector<1x16x128xbf16>
    tpu.vector_store %arg4[%c0_25, %c0_26, %c0_27], %35 {strides = array<i32>} : memref<1x16x128xbf16, #tpu.memory_space<vmem>>, vector<1x16x128xbf16>,
    return
  }
  func.func @transform_0(%arg0: i32) -> (i32, i32, i32) {
    %c0_i32 = arith.constant 0 : i32
    %c0_i32_0 = arith.constant 0 : i32
    %c0_i32_1 = arith.constant 0 : i32
    return %arg0, %c0_i32, %c0_i32_0 : i32, i32, i32
  }
  func.func @transform_1(%arg0: i32) -> (i32, i32, i32) {
    %c0_i32 = arith.constant 0 : i32
    %c0_i32_0 = arith.constant 0 : i32
    %c0_i32_1 = arith.constant 0 : i32
    %c0_i32_2 = arith.constant 0 : i32
    return %c0_i32, %c0_i32_0, %c0_i32_1 : i32, i32, i32
  }
  func.func @transform_2(%arg0: i32) -> (i32, i32) {
    %c0_i32 = arith.constant 0 : i32
    %c0_i32_0 = arith.constant 0 : i32
    %c0_i32_1 = arith.constant 0 : i32
    return %c0_i32, %c0_i32_0 : i32, i32
  }
  func.func @transform_3(%arg0: i32) -> (i32, i32, i32) {
    %c0_i32 = arith.constant 0 : i32
    %c0_i32_0 = arith.constant 0 : i32
    %c0_i32_1 = arith.constant 0 : i32
    return %arg0, %c0_i32, %c0_i32_0 : i32, i32, i32
  }
  func.func @transform_4(%arg0: i32) -> (i32, i32, i32) {
    %c0_i32 = arith.constant 0 : i32
    %c0_i32_0 = arith.constant 0 : i32
    %c0_i32_1 = arith.constant 0 : i32
    return %arg0, %c0_i32, %c0_i32_0 : i32, i32, i32
  }
  func.func @transform_5(%arg0: i32) -> (i32, i32, i32) {
    %c0_i32 = arith.constant 0 : i32
    %c0_i32_0 = arith.constant 0 : i32
    %c0_i32_1 = arith.constant 0 : i32
    return %arg0, %c0_i32, %c0_i32_0 : i32, i32, i32
  }
}

module attributes {stable_mosaic.version = 11 : i64} {
  func.func @_bn_relu_pool_kernel(%arg0: i32, %arg1: memref<1x8x256xbf16, #tpu.memory_space<vmem>>, %arg2: memref<1x128xf32, #tpu.memory_space<vmem>>, %arg3: memref<1x128xf32, #tpu.memory_space<vmem>>, %arg4: memref<1x8x128xf32, #tpu.memory_space<vmem>>) attributes {dimension_semantics = [#tpu.dimension_semantics<parallel>], iteration_bounds = array<i64: 2>, scalar_prefetch = 0 : i64, scratch_operands = 0 : i64, tpu.core_type = #tpu.core_type<tc>, window_params = [{transform_indices = @transform_0, window_bounds = array<i64: 1, 8, 256>}, {pipeline_mode = #tpu.pipeline_mode<synchronous>, transform_indices = @transform_1, window_bounds = array<i64: 1, 128>}, {pipeline_mode = #tpu.pipeline_mode<synchronous>, transform_indices = @transform_2, window_bounds = array<i64: 1, 128>}, {transform_indices = @transform_3, window_bounds = array<i64: 1, 8, 128>}]} {
    %c0 = arith.constant 0 : index
    %c0_0 = arith.constant 0 : index
    %0 = vector.load %arg2[%c0, %c0_0] : memref<1x128xf32, #tpu.memory_space<vmem>>, vector<1x128xf32>
    %c0_1 = arith.constant 0 : index
    %c0_2 = arith.constant 0 : index
    %1 = vector.load %arg3[%c0_1, %c0_2] : memref<1x128xf32, #tpu.memory_space<vmem>>, vector<1x128xf32>
    %2 = tpu.iota {dimensions = array<i32: 0>} : vector<8x128xi32>
    %c0_i32 = arith.constant 0 : i32
    %c0_i32_3 = arith.constant 0 : i32
    %c0_i32_4 = arith.constant 0 : i32
    %3 = tpu.memref_slice %arg1[%c0_i32, %c0_i32_3, %c0_i32_4] : memref<1x8x256xbf16, #tpu.memory_space<vmem>> -> memref<1x8x256xbf16, #tpu.memory_space<vmem>>
    %4 = tpu.memref_squeeze %3 : memref<1x8x256xbf16, #tpu.memory_space<vmem>> -> memref<8x256xbf16, #tpu.memory_space<vmem>>
    %c0_5 = arith.constant 0 : index
    %c0_6 = arith.constant 0 : index
    %5 = vector.load %4[%c0_5, %c0_6] : memref<8x256xbf16, #tpu.memory_space<vmem>>, vector<8x128xbf16>
    %6 = arith.extf %5 : vector<8x128xbf16> to vector<8x128xf32>
    %c0_i32_7 = arith.constant 0 : i32
    %c0_i32_8 = arith.constant 0 : i32
    %c0_i32_9 = arith.constant 0 : i32
    %7 = tpu.memref_slice %arg1[%c0_i32_7, %c0_i32_8, %c0_i32_9] : memref<1x8x256xbf16, #tpu.memory_space<vmem>> -> memref<1x8x256xbf16, #tpu.memory_space<vmem>>
    %8 = tpu.memref_squeeze %7 : memref<1x8x256xbf16, #tpu.memory_space<vmem>> -> memref<8x256xbf16, #tpu.memory_space<vmem>>
    %c0_10 = arith.constant 0 : index
    %c128 = arith.constant 128 : index
    %9 = vector.load %8[%c0_10, %c128] : memref<8x256xbf16, #tpu.memory_space<vmem>>, vector<8x128xbf16>
    %10 = arith.extf %9 : vector<8x128xbf16> to vector<8x128xf32>
    %11 = vector.broadcast %0 : vector<1x128xf32> to vector<8x128xf32>
    %12 = arith.mulf %6, %11 : vector<8x128xf32>
    %13 = vector.broadcast %1 : vector<1x128xf32> to vector<8x128xf32>
    %14 = arith.addf %12, %13 : vector<8x128xf32>
    %cst = arith.constant 0.000000e+00 : f32
    %15 = vector.broadcast %cst : f32 to vector<8x128xf32>
    %16 = arith.maximumf %14, %15 : vector<8x128xf32>
    %17 = vector.broadcast %0 : vector<1x128xf32> to vector<8x128xf32>
    %18 = arith.mulf %10, %17 : vector<8x128xf32>
    %19 = vector.broadcast %1 : vector<1x128xf32> to vector<8x128xf32>
    %20 = arith.addf %18, %19 : vector<8x128xf32>
    %cst_11 = arith.constant 0.000000e+00 : f32
    %21 = vector.broadcast %cst_11 : f32 to vector<8x128xf32>
    %22 = arith.maximumf %20, %21 : vector<8x128xf32>
    %c2_i32 = arith.constant 2 : i32
    %23 = vector.broadcast %c2_i32 : i32 to vector<8x128xi32>
    %24 = arith.muli %23, %2 : vector<8x128xi32>
    %c6_i32 = arith.constant 6 : i32
    %25 = vector.broadcast %c6_i32 : i32 to vector<8x128xi32>
    %26 = arith.cmpi slt, %24, %25 : vector<8x128xi32>
    %cst_12 = arith.constant 0.000000e+00 : f32
    %27 = vector.broadcast %cst_12 : f32 to vector<8x128xf32>
    %28 = arith.select %26, %16, %27 : vector<8x128xi1>, vector<8x128xf32>
    %c2_i32_13 = arith.constant 2 : i32
    %29 = vector.broadcast %c2_i32_13 : i32 to vector<8x128xi32>
    %30 = arith.muli %29, %2 : vector<8x128xi32>
    %c1_i32 = arith.constant 1 : i32
    %31 = vector.broadcast %c1_i32 : i32 to vector<8x128xi32>
    %32 = arith.addi %30, %31 : vector<8x128xi32>
    %c6_i32_14 = arith.constant 6 : i32
    %33 = vector.broadcast %c6_i32_14 : i32 to vector<8x128xi32>
    %34 = arith.cmpi slt, %32, %33 : vector<8x128xi32>
    %cst_15 = arith.constant 0.000000e+00 : f32
    %35 = vector.broadcast %cst_15 : f32 to vector<8x128xf32>
    %36 = arith.select %34, %22, %35 : vector<8x128xi1>, vector<8x128xf32>
    %cst_16 = arith.constant 0.000000e+00 : f32
    %37 = vector.broadcast %cst_16 : f32 to vector<1x128xf32>
    %38 = vector.extract_strided_slice %28 {offsets = [1, 0], sizes = [7, 128], strides = [1, 1]} : vector<8x128xf32> to vector<7x128xf32>
    %39 = tpu.concatenate %38, %37 in 0 : vector<7x128xf32>, vector<1x128xf32> -> vector<8x128xf32>
    %40 = vector.extract_strided_slice %36 {offsets = [1, 0], sizes = [7, 128], strides = [1, 1]} : vector<8x128xf32> to vector<7x128xf32>
    %41 = tpu.concatenate %40, %37 in 0 : vector<7x128xf32>, vector<1x128xf32> -> vector<8x128xf32>
    %42 = arith.addf %28, %36 : vector<8x128xf32>
    %43 = arith.addf %42, %39 : vector<8x128xf32>
    %44 = arith.addf %43, %41 : vector<8x128xf32>
    %c2_i32_17 = arith.constant 2 : i32
    %45 = vector.broadcast %c2_i32_17 : i32 to vector<8x128xi32>
    %46 = arith.cmpi slt, %2, %45 : vector<8x128xi32>
    %cst_18 = arith.constant 2.500000e-01 : f32
    %47 = vector.broadcast %cst_18 : f32 to vector<8x128xf32>
    %48 = arith.mulf %44, %47 : vector<8x128xf32>
    %cst_19 = arith.constant 0.000000e+00 : f32
    %49 = vector.broadcast %cst_19 : f32 to vector<8x128xf32>
    %50 = arith.select %46, %48, %49 : vector<8x128xi1>, vector<8x128xf32>
    %c0_20 = arith.constant 0 : index
    %c0_21 = arith.constant 0 : index
    %c0_22 = arith.constant 0 : index
    %51 = vector.load %arg4[%c0_20, %c0_21, %c0_22] : memref<1x8x128xf32, #tpu.memory_space<vmem>>, vector<1x8x128xf32>
    %52 = vector.shape_cast %51 : vector<1x8x128xf32> to vector<8x128xf32>
    %53 = vector.shape_cast %50 : vector<8x128xf32> to vector<1x8x128xf32>
    tpu.vector_store %arg4[%c0_20, %c0_21, %c0_22], %53 {strides = array<i32>} : memref<1x8x128xf32, #tpu.memory_space<vmem>>, vector<1x8x128xf32>,
    return
  }
  func.func @transform_0(%arg0: i32) -> (i32, i32, i32) {
    %c0_i32 = arith.constant 0 : i32
    %c0_i32_0 = arith.constant 0 : i32
    %c0_i32_1 = arith.constant 0 : i32
    return %arg0, %c0_i32, %c0_i32_0 : i32, i32, i32
  }
  func.func @transform_1(%arg0: i32) -> (i32, i32) {
    %c0_i32 = arith.constant 0 : i32
    %c0_i32_0 = arith.constant 0 : i32
    %c0_i32_1 = arith.constant 0 : i32
    return %c0_i32, %c0_i32_0 : i32, i32
  }
  func.func @transform_2(%arg0: i32) -> (i32, i32) {
    %c0_i32 = arith.constant 0 : i32
    %c0_i32_0 = arith.constant 0 : i32
    %c0_i32_1 = arith.constant 0 : i32
    return %c0_i32, %c0_i32_0 : i32, i32
  }
  func.func @transform_3(%arg0: i32) -> (i32, i32, i32) {
    %c0_i32 = arith.constant 0 : i32
    %c0_i32_0 = arith.constant 0 : i32
    %c0_i32_1 = arith.constant 0 : i32
    return %arg0, %c0_i32, %c0_i32_0 : i32, i32, i32
  }
}

</mosaic_0001>

<llo_original>
// kernel: cnn_frontend.7
$region0: #{cnn_frontend.7}
  #allocation0 [shape = 'u32[]', space=smem, size = 0x4, offset = 0x4, fixed_abs, tag = 'smem constant byte address 0x4 - core index']
  #allocation1 [shape = 'u32[72,128]{1,0:T(1,128)}', space=vmem, size = 0x9000, scoped, tag = 'internal scratch']
  %s0 = inlined_call_operand.vmem [shape: bf16[2,264,128], index: 0, kind: input, shape index: {}]
  %s1 = inlined_call_operand.vmem [shape: f32[1,64], index: 1, kind: input, shape index: {}]
  %s2 = inlined_call_operand.vmem [shape: f32[1,64], index: 2, kind: input, shape index: {}]
  %s3 = inlined_call_operand.vmem [shape: bf16[2,264,64], index: 3, kind: output, shape index: {}]
  %s4 = sld [smem:[#allocation0]]
  $region45: #{cnn_frontend.7} parent=0
    _
  %s6 = ssub.s32 1, %s4
  %s7 = scalar_select 0, %s6, %s4
  loop: start=0, step=1, limit=4
  $region2: #{cnn_frontend.7} parent=0 // loop_pre_header
    _
  $region3: #{cnn_frontend.7} parent=0 // loop_header
    %s9 = sphi 0, %s13
    %p10 = scmp.ge.s32.totalorder %s9, 4
    %s19 = sphi 0, %s21
    %s22 = sphi 0, %s19
    %s23 = sphi 0, %s22
    %s39 = sphi 0, %s23
    %s43 = sphi 0, %s43
    %s45 = sphi 0, %s43
    %s46 = sphi 0, %s45
    %s60 = sphi 0, %s46
    %s64 = sphi 0, %s64
    %s66 = sphi 0, %s64
    %s67 = sphi 0, %s66
    %s81 = sphi 0, %s67
    %s87 = sphi 0, %s89
    %s90 = sphi 0, %s87
    %s91 = sphi 0, %s90
    %s107 = sphi 0, %s91
  $region4: #{cnn_frontend.7} parent=0 // loop_header_branch
    %12 = sbr.rel (%p10) target = $region8
  $region5: #{cnn_frontend.7} parent=0 // loop_body
    %s14 = ssub.s32 %s9, 1
    %s15 = ssub.s32 %s9, 2
    %s16 = sadd.s32 %s9, 1
    %s17 = ssub.s32 %s9, %s16
    %p18 = scmp.eq.s32.totalorder %s17, 0
    %s20 = sadd.s32 %s19, 1
    %s21 = scalar_select %p18, %s19, %s20
    %p24 = pneg %p18
    %p25 = scmp.eq.s32.totalorder %s9, 1
    %p26 = por %p24, %p25
    %p27 = scmp.ne.s32.totalorder %s19, %s22
    %p28 = scmp.eq.s32.totalorder %s9, 0
    %p29 = por %p27, %p28
    %p30 = scmp.ne.s32.totalorder %s19, %s22
    %p31 = scmp.eq.s32.totalorder %s14, 1
    %p32 = por %p30, %p31
    %p33 = scmp.ne.s32.totalorder %s22, %s23
    %p34 = scmp.eq.s32.totalorder %s14, 0
    %p35 = por %p33, %p34
    %p36 = scmp.ne.s32.totalorder %s22, %s23
    %p37 = scmp.eq.s32.totalorder %s15, 1
    %p38 = por %p36, %p37
    %p40 = scmp.ne.s32.totalorder %s23, %s39
    %p41 = scmp.eq.s32.totalorder %s15, 0
    %p42 = por %p40, %p41
    %s44 = sadd.s32 %s43, 1
    %p47 = scmp.eq.s32.totalorder %s9, 1
    %p48 = scmp.ne.s32.totalorder %s43, %s45
    %p49 = scmp.eq.s32.totalorder %s9, 0
    %p50 = por %p48, %p49
    %p51 = scmp.ne.s32.totalorder %s43, %s45
    %p52 = scmp.eq.s32.totalorder %s14, 1
    %p53 = por %p51, %p52
    %p54 = scmp.ne.s32.totalorder %s45, %s46
    %p55 = scmp.eq.s32.totalorder %s14, 0
    %p56 = por %p54, %p55
    %p57 = scmp.ne.s32.totalorder %s45, %s46
    %p58 = scmp.eq.s32.totalorder %s15, 1
    %p59 = por %p57, %p58
    %p61 = scmp.ne.s32.totalorder %s46, %s60
    %p62 = scmp.eq.s32.totalorder %s15, 0
    %p63 = por %p61, %p62
    %s65 = sadd.s32 %s64, 1
    %p68 = scmp.eq.s32.totalorder %s9, 1
    %p69 = scmp.ne.s32.totalorder %s64, %s66
    %p70 = scmp.eq.s32.totalorder %s9, 0
    %p71 = por %p69, %p70
    %p72 = scmp.ne.s32.totalorder %s64, %s66
    %p73 = scmp.eq.s32.totalorder %s14, 1
    %p74 = por %p72, %p73
    %p75 = scmp.ne.s32.totalorder %s66, %s67
    %p76 = scmp.eq.s32.totalorder %s14, 0
    %p77 = por %p75, %p76
    %p78 = scmp.ne.s32.totalorder %s66, %s67
    %p79 = scmp.eq.s32.totalorder %s15, 1
    %p80 = por %p78, %p79
    %p82 = scmp.ne.s32.totalorder %s67, %s81
    %p83 = scmp.eq.s32.totalorder %s15, 0
    %p84 = por %p82, %p83
    %s85 = ssub.s32 %s9, %s16
    %p86 = scmp.eq.s32.totalorder %s85, 0
    %s88 = sadd.s32 %s87, 1
    %s89 = scalar_select %p86, %s87, %s88
    %p92 = pneg %p86
    %p93 = scmp.eq.s32.totalorder %s9, 1
    %p94 = por %p92, %p93
    %p95 = scmp.ne.s32.totalorder %s87, %s90
    %p96 = scmp.eq.s32.totalorder %s9, 0
    %p97 = por %p95, %p96
    %p98 = scmp.ne.s32.totalorder %s87, %s90
    %p99 = scmp.eq.s32.totalorder %s14, 1
    %p100 = por %p98, %p99
    %p101 = scmp.ne.s32.totalorder %s90, %s91
    %p102 = scmp.eq.s32.totalorder %s14, 0
    %p103 = por %p101, %p102
    %p104 = scmp.ne.s32.totalorder %s90, %s91
    %p105 = scmp.eq.s32.totalorder %s15, 1
    %p106 = por %p104, %p105
    %p108 = scmp.ne.s32.totalorder %s91, %s107
    %p109 = scmp.eq.s32.totalorder %s15, 0
    %p110 = por %p108, %p109
    %p111 = scmp.le.s32.totalorder 1, %s9
    %p112 = scmp.lt.s32.totalorder %s9, 3
    %p113 = pnand %p111, %p112
    %p114 = pneg %p113
    // Predicated region
    $region9: #{cnn_frontend.7} parent=5 // pred_check
      _
    $region10: #{cnn_frontend.7} parent=5 // pred_check_branch
      %116 = sbr.rel (%p113) target = $region12
    $region11: #{cnn_frontend.7} parent=5 // pred_region
      %s117 = ssub.s32 %s9, 1
      // Predicated region
      $region13: #{cnn_frontend.7} parent=11 // pred_check
        %p118 = pneg %p56
      $region14: #{cnn_frontend.7} parent=11 // pred_check_branch
        %120 = sbr.rel (%p118) target = $region16
      $region15: #{cnn_frontend.7} parent=11 // pred_region
        _
      $region16: #{cnn_frontend.7} parent=11 // pred_fallthru
        _
      // Predicated region
      $region17: #{cnn_frontend.7} parent=11 // pred_check
        %p121 = pneg %p77
      $region18: #{cnn_frontend.7} parent=11 // pred_check_branch
        %123 = sbr.rel (%p121) target = $region20
      $region19: #{cnn_frontend.7} parent=11 // pred_region
        _
      $region20: #{cnn_frontend.7} parent=11 // pred_fallthru
        _
    $region12: #{cnn_frontend.7} parent=5 // pred_fallthru
      _
    %p124 = scmp.lt.s32.totalorder %s9, 2
    // Predicated region
    $region21: #{cnn_frontend.7} parent=5 // pred_check
      %p125 = pneg %p124
    $region22: #{cnn_frontend.7} parent=5 // pred_check_branch
      %127 = sbr.rel (%p125) target = $region24
    $region23: #{cnn_frontend.7} parent=5 // pred_region
      // Predicated region
      $region25: #{cnn_frontend.7} parent=23 // pred_check
        %p128 = pneg %p29
      $region26: #{cnn_frontend.7} parent=23 // pred_check_branch
        %130 = sbr.rel (%p128) target = $region28
      $region27: #{cnn_frontend.7} parent=23 // pred_region
        %p131 = scmp.lt.s32.totalorder %s9, 1
        %s132 = scalar_select %p131, %s9, 1
        %s133 = smul.addr %s132, 33
        %s134 = smul.addr %s133, 4
        %s135 = scalar_lea.vmem %s0, %s134
      $region28: #{cnn_frontend.7} parent=23 // pred_fallthru
        _
    $region24: #{cnn_frontend.7} parent=5 // pred_fallthru
      _
    %p136 = scmp.le.s32.totalorder 1, %s9
    %p137 = scmp.lt.s32.totalorder %s9, 3
    %p138 = pnand %p136, %p137
    %p139 = pneg %p138
    // Predicated region
    $region29: #{cnn_frontend.7} parent=5 // pred_check
      _
    $region30: #{cnn_frontend.7} parent=5 // pred_check_branch
      %141 = sbr.rel (%p138) target = $region32
    $region31: #{cnn_frontend.7} parent=5 // pred_region
      %s142 = ssub.s32 %s9, 1
      %p143 = scmp.lt.s32.totalorder %s14, 1
      %s144 = scalar_select %p143, %s14, 1
      %s145 = smul.addr %s144, 33
      %s146 = smul.addr %s145, 4
      %s147 = scalar_lea.vmem %s0, %s146
      %p148 = pneg %p35
      %p149 = pneg %p32
      %p150 = pneg %p56
      %p151 = pneg %p53
      %p152 = pneg %p77
      %p153 = pneg %p74
      %p154 = pneg %p103
      %p155 = pneg %p100
      %p156 = scmp.lt.s32.totalorder %s14, 1
      %s157 = scalar_select %p156, %s14, 1
      %s158 = smul.addr %s157, 33
      %s159 = smul.addr %s158, 4
      %s160 = scalar_lea.vmem %s3, %s159
      %p161 = scmp.lt.s32.totalorder %s14, 1
      %s162 = scalar_select %p161, %s14, 1
      %s163 = smul.addr %s162, 33
      %s164 = smul.addr %s163, 4
      %s165 = scalar_lea.vmem %s0, %s164
      %p166 = scmp.lt.s32.totalorder %s14, 1
      %s167 = scalar_select %p166, %s14, 1
      %s168 = smul.addr %s167, 33
      %s169 = smul.addr %s168, 4
      %s170 = scalar_lea.vmem %s3, %s169
      %v171 = vld [vmem:[%s1] sm:$0x1]
      %v172 = vld [vmem:[%s2] sm:$0x1]
      %v173 = vlaneseq
      %v174 = vshrl.u32 %v173, 7
      %v175 = vadd.s32 %v174, 8
      %v176 = vadd.s32 %v174, 16
      %v177 = vadd.s32 %v174, 24
      %v178 = vadd.s32 %v174, 32
      %v179 = vadd.s32 %v174, 40
      %v180 = vadd.s32 %v174, 48
      %v181 = vadd.s32 %v174, 56
      %v182 = vadd.s32 %v174, 64
      %v183 = vadd.s32 %v174, 72
      %v184 = vadd.s32 %v174, 80
      %v185 = vadd.s32 %v174, 88
      %v186 = vadd.s32 %v174, 96
      %v187 = vadd.s32 %v174, 104
      %v188 = vadd.s32 %v174, 112
      %v189 = vadd.s32 %v174, 120
      %v190 = vadd.s32 %v174, 128
      %v191 = vadd.s32 %v174, 136
      %v192 = vadd.s32 %v174, 144
      %v193 = vadd.s32 %v174, 152
      %v194 = vadd.s32 %v174, 160
      %v195 = vadd.s32 %v174, 168
      %v196 = vadd.s32 %v174, 176
      %v197 = vadd.s32 %v174, 184
      %v198 = vadd.s32 %v174, 192
      %v199 = vadd.s32 %v174, 200
      %v200 = vadd.s32 %v174, 208
      %v201 = vadd.s32 %v174, 216
      %v202 = vadd.s32 %v174, 224
      %v203 = vadd.s32 %v174, 232
      %v204 = vadd.s32 %v174, 240
      %v205 = vadd.s32 %v174, 248
      %v206 = vadd.s32 %v174, 256
      %v207 = vld [vmem:[%s165] sm:$0xf]
      %v208 = vld [vmem:[%s165 + $0x4] sm:$0xf]
      %v209 = vld [vmem:[%s165 + $0x8] sm:$0xf]
      %v210 = vld [vmem:[%s165 + $0xc] sm:$0xf]
      %v211 = vld [vmem:[%s165 + $0x10] sm:$0xf]
      %v212 = vld [vmem:[%s165 + $0x14] sm:$0xf]
      %v213 = vld [vmem:[%s165 + $0x18] sm:$0xf]
      %v214 = vld [vmem:[%s165 + $0x1c] sm:$0xf]
      %v215 = vld [vmem:[%s165 + $0x20] sm:$0xf]
      %v216 = vld [vmem:[%s165 + $0x24] sm:$0xf]
      %v217 = vld [vmem:[%s165 + $0x28] sm:$0xf]
      %v218 = vld [vmem:[%s165 + $0x2c] sm:$0xf]
      %v219 = vld [vmem:[%s165 + $0x30] sm:$0xf]
      %v220 = vld [vmem:[%s165 + $0x34] sm:$0xf]
      %v221 = vld [vmem:[%s165 + $0x38] sm:$0xf]
      %v222 = vld [vmem:[%s165 + $0x3c] sm:$0xf]
      %v223 = vld [vmem:[%s165 + $0x40] sm:$0xf]
      %v224 = vld [vmem:[%s165 + $0x44] sm:$0xf]
      %v225 = vld [vmem:[%s165 + $0x48] sm:$0xf]
      %v226 = vld [vmem:[%s165 + $0x4c] sm:$0xf]
      %v227 = vld [vmem:[%s165 + $0x50] sm:$0xf]
      %v228 = vld [vmem:[%s165 + $0x54] sm:$0xf]
      %v229 = vld [vmem:[%s165 + $0x58] sm:$0xf]
      %v230 = vld [vmem:[%s165 + $0x5c] sm:$0xf]
      %v231 = vld [vmem:[%s165 + $0x60] sm:$0xf]
      %v232 = vld [vmem:[%s165 + $0x64] sm:$0xf]
      %v233 = vld [vmem:[%s165 + $0x68] sm:$0xf]
      %v234 = vld [vmem:[%s165 + $0x6c] sm:$0xf]
      %v235 = vld [vmem:[%s165 + $0x70] sm:$0xf]
      %v236 = vld [vmem:[%s165 + $0x74] sm:$0xf]
      %v237 = vld [vmem:[%s165 + $0x78] sm:$0xf]
      %v238 = vld [vmem:[%s165 + $0x7c] sm:$0xf]
      %v239 = vld [vmem:[%s165 + $0x80] sm:$0xf]
      %v240 = vunpack.c.l.bf16 %v207
      %v241 = vunpack.c.l.bf16 %v208
      %v242 = vunpack.c.l.bf16 %v209
      %v243 = vunpack.c.l.bf16 %v210
      %v244 = vunpack.c.l.bf16 %v211
      %v245 = vunpack.c.l.bf16 %v212
      %v246 = vunpack.c.l.bf16 %v213
      %v247 = vunpack.c.l.bf16 %v214
      %v248 = vunpack.c.l.bf16 %v215
      %v249 = vunpack.c.l.bf16 %v216
      %v250 = vunpack.c.l.bf16 %v217
      %v251 = vunpack.c.l.bf16 %v218
      %v252 = vunpack.c.l.bf16 %v219
      %v253 = vunpack.c.l.bf16 %v220
      %v254 = vunpack.c.l.bf16 %v221
      %v255 = vunpack.c.l.bf16 %v222
      %v256 = vunpack.c.l.bf16 %v223
      %v257 = vunpack.c.l.bf16 %v224
      %v258 = vunpack.c.l.bf16 %v225
      %v259 = vunpack.c.l.bf16 %v226
      %v260 = vunpack.c.l.bf16 %v227
      %v261 = vunpack.c.l.bf16 %v228
      %v262 = vunpack.c.l.bf16 %v229
      %v263 = vunpack.c.l.bf16 %v230
      %v264 = vunpack.c.l.bf16 %v231
      %v265 = vunpack.c.l.bf16 %v232
      %v266 = vunpack.c.l.bf16 %v233
      %v267 = vunpack.c.l.bf16 %v234
      %v268 = vunpack.c.l.bf16 %v235
      %v269 = vunpack.c.l.bf16 %v236
      %v270 = vunpack.c.l.bf16 %v237
      %v271 = vunpack.c.l.bf16 %v238
      %v272 = vunpack.c.l.bf16 %v239
      %v274 = vperm.slane %v171, 0
      %v276 = vmul.f32 %v240, %v274
      %v277 = vmul.f32 %v241, %v274
      %v278 = vmul.f32 %v242, %v274
      %v279 = vmul.f32 %v243, %v274
      %v280 = vmul.f32 %v244, %v274
      %v281 = vmul.f32 %v245, %v274
      %v282 = vmul.f32 %v246, %v274
      %v283 = vmul.f32 %v247, %v274
      %v284 = vmul.f32 %v248, %v274
      %v285 = vmul.f32 %v249, %v274
      %v286 = vmul.f32 %v250, %v274
      %v287 = vmul.f32 %v251, %v274
      %v288 = vmul.f32 %v252, %v274
      %v289 = vmul.f32 %v253, %v274
      %v290 = vmul.f32 %v254, %v274
      %v291 = vmul.f32 %v255, %v274
      %v292 = vmul.f32 %v256, %v274
      %v293 = vmul.f32 %v257, %v274
      %v294 = vmul.f32 %v258, %v274
      %v295 = vmul.f32 %v259, %v274
      %v296 = vmul.f32 %v260, %v274
      %v297 = vmul.f32 %v261, %v274
      %v298 = vmul.f32 %v262, %v274
      %v299 = vmul.f32 %v263, %v274
      %v300 = vmul.f32 %v264, %v274
      %v301 = vmul.f32 %v265, %v274
      %v302 = vmul.f32 %v266, %v274
      %v303 = vmul.f32 %v267, %v274
      %v304 = vmul.f32 %v268, %v274
      %v305 = vmul.f32 %v269, %v274
      %v306 = vmul.f32 %v270, %v274
      %v307 = vmul.f32 %v271, %v274
      %v308 = vmul.f32 %v272, %v274
      %v310 = vperm.slane %v172, 0
      %v312 = vadd.f32 %v276, %v310
      %v313 = vadd.f32 %v277, %v310
      %v314 = vadd.f32 %v278, %v310
      %v315 = vadd.f32 %v279, %v310
      %v316 = vadd.f32 %v280, %v310
      %v317 = vadd.f32 %v281, %v310
      %v318 = vadd.f32 %v282, %v310
      %v319 = vadd.f32 %v283, %v310
      %v320 = vadd.f32 %v284, %v310
      %v321 = vadd.f32 %v285, %v310
      %v322 = vadd.f32 %v286, %v310
      %v323 = vadd.f32 %v287, %v310
      %v324 = vadd.f32 %v288, %v310
      %v325 = vadd.f32 %v289, %v310
      %v326 = vadd.f32 %v290, %v310
      %v327 = vadd.f32 %v291, %v310
      %v328 = vadd.f32 %v292, %v310
      %v329 = vadd.f32 %v293, %v310
      %v330 = vadd.f32 %v294, %v310
      %v331 = vadd.f32 %v295, %v310
      %v332 = vadd.f32 %v296, %v310
      %v333 = vadd.f32 %v297, %v310
      %v334 = vadd.f32 %v298, %v310
      %v335 = vadd.f32 %v299, %v310
      %v336 = vadd.f32 %v300, %v310
      %v337 = vadd.f32 %v301, %v310
      %v338 = vadd.f32 %v302, %v310
      %v339 = vadd.f32 %v303, %v310
      %v340 = vadd.f32 %v304, %v310
      %v341 = vadd.f32 %v305, %v310
      %v342 = vadd.f32 %v306, %v310
      %v343 = vadd.f32 %v307, %v310
      %v344 = vadd.f32 %v308, %v310
      %v345 = vmax.f32 %v312, 0.0
      %v346 = vmax.f32 %v313, 0.0
      %v347 = vmax.f32 %v314, 0.0
      %v348 = vmax.f32 %v315, 0.0
      %v349 = vmax.f32 %v316, 0.0
      %v350 = vmax.f32 %v317, 0.0
      %v351 = vmax.f32 %v318, 0.0
      %v352 = vmax.f32 %v319, 0.0
      %v353 = vmax.f32 %v320, 0.0
      %v354 = vmax.f32 %v321, 0.0
      %v355 = vmax.f32 %v322, 0.0
      %v356 = vmax.f32 %v323, 0.0
      %v357 = vmax.f32 %v324, 0.0
      %v358 = vmax.f32 %v325, 0.0
      %v359 = vmax.f32 %v326, 0.0
      %v360 = vmax.f32 %v327, 0.0
      %v361 = vmax.f32 %v328, 0.0
      %v362 = vmax.f32 %v329, 0.0
      %v363 = vmax.f32 %v330, 0.0
      %v364 = vmax.f32 %v331, 0.0
      %v365 = vmax.f32 %v332, 0.0
      %v366 = vmax.f32 %v333, 0.0
      %v367 = vmax.f32 %v334, 0.0
      %v368 = vmax.f32 %v335, 0.0
      %v369 = vmax.f32 %v336, 0.0
      %v370 = vmax.f32 %v337, 0.0
      %v371 = vmax.f32 %v338, 0.0
      %v372 = vmax.f32 %v339, 0.0
      %v373 = vmax.f32 %v340, 0.0
      %v374 = vmax.f32 %v341, 0.0
      %v375 = vmax.f32 %v342, 0.0
      %v376 = vmax.f32 %v343, 0.0
      %v377 = vmax.f32 %v344, 0.0
      %378 = vrot.lane.b32.xlu0 %v274, 64
      %v379 = vpop.permute.xlu0 %378
      %v381 = vmul.f32 %v240, %v379
      %v382 = vmul.f32 %v241, %v379
      %v383 = vmul.f32 %v242, %v379
      %v384 = vmul.f32 %v243, %v379
      %v385 = vmul.f32 %v244, %v379
      %v386 = vmul.f32 %v245, %v379
      %v387 = vmul.f32 %v246, %v379
      %v388 = vmul.f32 %v247, %v379
      %v389 = vmul.f32 %v248, %v379
      %v390 = vmul.f32 %v249, %v379
      %v391 = vmul.f32 %v250, %v379
      %v392 = vmul.f32 %v251, %v379
      %v393 = vmul.f32 %v252, %v379
      %v394 = vmul.f32 %v253, %v379
      %v395 = vmul.f32 %v254, %v379
      %v396 = vmul.f32 %v255, %v379
      %v397 = vmul.f32 %v256, %v379
      %v398 = vmul.f32 %v257, %v379
      %v399 = vmul.f32 %v258, %v379
      %v400 = vmul.f32 %v259, %v379
      %v401 = vmul.f32 %v260, %v379
      %v402 = vmul.f32 %v261, %v379
      %v403 = vmul.f32 %v262, %v379
      %v404 = vmul.f32 %v263, %v379
      %v405 = vmul.f32 %v264, %v379
      %v406 = vmul.f32 %v265, %v379
      %v407 = vmul.f32 %v266, %v379
      %v408 = vmul.f32 %v267, %v379
      %v409 = vmul.f32 %v268, %v379
      %v410 = vmul.f32 %v269, %v379
      %v411 = vmul.f32 %v270, %v379
      %v412 = vmul.f32 %v271, %v379
      %v413 = vmul.f32 %v272, %v379
      %414 = vrot.lane.b32.xlu0 %v310, 64
      %v415 = vpop.permute.xlu0 %414
      %v417 = vadd.f32 %v381, %v415
      %v418 = vadd.f32 %v382, %v415
      %v419 = vadd.f32 %v383, %v415
      %v420 = vadd.f32 %v384, %v415
      %v421 = vadd.f32 %v385, %v415
      %v422 = vadd.f32 %v386, %v415
      %v423 = vadd.f32 %v387, %v415
      %v424 = vadd.f32 %v388, %v415
      %v425 = vadd.f32 %v389, %v415
      %v426 = vadd.f32 %v390, %v415
      %v427 = vadd.f32 %v391, %v415
      %v428 = vadd.f32 %v392, %v415
      %v429 = vadd.f32 %v393, %v415
      %v430 = vadd.f32 %v394, %v415
      %v431 = vadd.f32 %v395, %v415
      %v432 = vadd.f32 %v396, %v415
      %v433 = vadd.f32 %v397, %v415
      %v434 = vadd.f32 %v398, %v415
      %v435 = vadd.f32 %v399, %v415
      %v436 = vadd.f32 %v400, %v415
      %v437 = vadd.f32 %v401, %v415
      %v438 = vadd.f32 %v402, %v415
      %v439 = vadd.f32 %v403, %v415
      %v440 = vadd.f32 %v404, %v415
      %v441 = vadd.f32 %v405, %v415
      %v442 = vadd.f32 %v406, %v415
      %v443 = vadd.f32 %v407, %v415
      %v444 = vadd.f32 %v408, %v415
      %v445 = vadd.f32 %v409, %v415
      %v446 = vadd.f32 %v410, %v415
      %v447 = vadd.f32 %v411, %v415
      %v448 = vadd.f32 %v412, %v415
      %v449 = vadd.f32 %v413, %v415
      %v450 = vmax.f32 %v417, 0.0
      %v451 = vmax.f32 %v418, 0.0
      %v452 = vmax.f32 %v419, 0.0
      %v453 = vmax.f32 %v420, 0.0
      %v454 = vmax.f32 %v421, 0.0
      %v455 = vmax.f32 %v422, 0.0
      %v456 = vmax.f32 %v423, 0.0
      %v457 = vmax.f32 %v424, 0.0
      %v458 = vmax.f32 %v425, 0.0
      %v459 = vmax.f32 %v426, 0.0
      %v460 = vmax.f32 %v427, 0.0
      %v461 = vmax.f32 %v428, 0.0
      %v462 = vmax.f32 %v429, 0.0
      %v463 = vmax.f32 %v430, 0.0
      %v464 = vmax.f32 %v431, 0.0
      %v465 = vmax.f32 %v432, 0.0
      %v466 = vmax.f32 %v433, 0.0
      %v467 = vmax.f32 %v434, 0.0
      %v468 = vmax.f32 %v435, 0.0
      %v469 = vmax.f32 %v436, 0.0
      %v470 = vmax.f32 %v437, 0.0
      %v471 = vmax.f32 %v438, 0.0
      %v472 = vmax.f32 %v439, 0.0
      %v473 = vmax.f32 %v440, 0.0
      %v474 = vmax.f32 %v441, 0.0
      %v475 = vmax.f32 %v442, 0.0
      %v476 = vmax.f32 %v443, 0.0
      %v477 = vmax.f32 %v444, 0.0
      %v478 = vmax.f32 %v445, 0.0
      %v479 = vmax.f32 %v446, 0.0
      %v480 = vmax.f32 %v447, 0.0
      %v481 = vmax.f32 %v448, 0.0
      %v482 = vmax.f32 %v449, 0.0
      %v483 = vmul.u32 %v174, 2
      %v484 = vmul.u32 %v175, 2
      %v485 = vmul.u32 %v176, 2
      %v486 = vmul.u32 %v177, 2
      %v487 = vmul.u32 %v178, 2
      %v488 = vmul.u32 %v179, 2
      %v489 = vmul.u32 %v180, 2
      %v490 = vmul.u32 %v181, 2
      %v491 = vmul.u32 %v182, 2
      %v492 = vmul.u32 %v183, 2
      %v493 = vmul.u32 %v184, 2
      %v494 = vmul.u32 %v185, 2
      %v495 = vmul.u32 %v186, 2
      %v496 = vmul.u32 %v187, 2
      %v497 = vmul.u32 %v188, 2
      %v498 = vmul.u32 %v189, 2
      %v499 = vmul.u32 %v190, 2
      %v500 = vmul.u32 %v191, 2
      %v501 = vmul.u32 %v192, 2
      %v502 = vmul.u32 %v193, 2
      %v503 = vmul.u32 %v194, 2
      %v504 = vmul.u32 %v195, 2
      %v505 = vmul.u32 %v196, 2
      %v506 = vmul.u32 %v197, 2
      %v507 = vmul.u32 %v198, 2
      %v508 = vmul.u32 %v199, 2
      %v509 = vmul.u32 %v200, 2
      %v510 = vmul.u32 %v201, 2
      %v511 = vmul.u32 %v202, 2
      %v512 = vmul.u32 %v203, 2
      %v513 = vmul.u32 %v204, 2
      %v514 = vmul.u32 %v205, 2
      %v515 = vmul.u32 %v206, 2
      %vm516 = vcmp.lt.s32.totalorder %v483, 511
      %vm517 = vcmp.lt.s32.totalorder %v484, 511
      %vm518 = vcmp.lt.s32.totalorder %v485, 511
      %vm519 = vcmp.lt.s32.totalorder %v486, 511
      %vm520 = vcmp.lt.s32.totalorder %v487, 511
      %vm521 = vcmp.lt.s32.totalorder %v488, 511
      %vm522 = vcmp.lt.s32.totalorder %v489, 511
      %vm523 = vcmp.lt.s32.totalorder %v490, 511
      %vm524 = vcmp.lt.s32.totalorder %v491, 511
      %vm525 = vcmp.lt.s32.totalorder %v492, 511
      %vm526 = vcmp.lt.s32.totalorder %v493, 511
      %vm527 = vcmp.lt.s32.totalorder %v494, 511
      %vm528 = vcmp.lt.s32.totalorder %v495, 511
      %vm529 = vcmp.lt.s32.totalorder %v496, 511
      %vm530 = vcmp.lt.s32.totalorder %v497, 511
      %vm531 = vcmp.lt.s32.totalorder %v498, 511
      %vm532 = vcmp.lt.s32.totalorder %v499, 511
      %vm533 = vcmp.lt.s32.totalorder %v500, 511
      %vm534 = vcmp.lt.s32.totalorder %v501, 511
      %vm535 = vcmp.lt.s32.totalorder %v502, 511
      %vm536 = vcmp.lt.s32.totalorder %v503, 511
      %vm537 = vcmp.lt.s32.totalorder %v504, 511
      %vm538 = vcmp.lt.s32.totalorder %v505, 511
      %vm539 = vcmp.lt.s32.totalorder %v506, 511
      %vm540 = vcmp.lt.s32.totalorder %v507, 511
      %vm541 = vcmp.lt.s32.totalorder %v508, 511
      %vm542 = vcmp.lt.s32.totalorder %v509, 511
      %vm543 = vcmp.lt.s32.totalorder %v510, 511
      %vm544 = vcmp.lt.s32.totalorder %v511, 511
      %vm545 = vcmp.lt.s32.totalorder %v512, 511
      %vm546 = vcmp.lt.s32.totalorder %v513, 511
      %vm547 = vcmp.lt.s32.totalorder %v514, 511
      %vm548 = vcmp.lt.s32.totalorder %v515, 511
      %v549 = vsel %vm516, %v345, 0.0
      %v550 = vsel %vm517, %v346, 0.0
      %v551 = vsel %vm518, %v347, 0.0
      %v552 = vsel %vm519, %v348, 0.0
      %v553 = vsel %vm520, %v349, 0.0
      %v554 = vsel %vm521, %v350, 0.0
      %v555 = vsel %vm522, %v351, 0.0
      %v556 = vsel %vm523, %v352, 0.0
      %v557 = vsel %vm524, %v353, 0.0
      %v558 = vsel %vm525, %v354, 0.0
      %v559 = vsel %vm526, %v355, 0.0
      %v560 = vsel %vm527, %v356, 0.0
      %v561 = vsel %vm528, %v357, 0.0
      %v562 = vsel %vm529, %v358, 0.0
      %v563 = vsel %vm530, %v359, 0.0
      %v564 = vsel %vm531, %v360, 0.0
      %v565 = vsel %vm532, %v361, 0.0
      %v566 = vsel %vm533, %v362, 0.0
      %v567 = vsel %vm534, %v363, 0.0
      %v568 = vsel %vm535, %v364, 0.0
      %v569 = vsel %vm536, %v365, 0.0
      %v570 = vsel %vm537, %v366, 0.0
      %v571 = vsel %vm538, %v367, 0.0
      %v572 = vsel %vm539, %v368, 0.0
      %v573 = vsel %vm540, %v369, 0.0
      %v574 = vsel %vm541, %v370, 0.0
      %v575 = vsel %vm542, %v371, 0.0
      %v576 = vsel %vm543, %v372, 0.0
      %v577 = vsel %vm544, %v373, 0.0
      %v578 = vsel %vm545, %v374, 0.0
      %v579 = vsel %vm546, %v375, 0.0
      %v580 = vsel %vm547, %v376, 0.0
      %v581 = vsel %vm548, %v377, 0.0
      %v582 = vadd.s32 %v483, 1
      %v583 = vadd.s32 %v484, 1
      %v584 = vadd.s32 %v485, 1
      %v585 = vadd.s32 %v486, 1
      %v586 = vadd.s32 %v487, 1
      %v587 = vadd.s32 %v488, 1
      %v588 = vadd.s32 %v489, 1
      %v589 = vadd.s32 %v490, 1
      %v590 = vadd.s32 %v491, 1
      %v591 = vadd.s32 %v492, 1
      %v592 = vadd.s32 %v493, 1
      %v593 = vadd.s32 %v494, 1
      %v594 = vadd.s32 %v495, 1
      %v595 = vadd.s32 %v496, 1
      %v596 = vadd.s32 %v497, 1
      %v597 = vadd.s32 %v498, 1
      %v598 = vadd.s32 %v499, 1
      %v599 = vadd.s32 %v500, 1
      %v600 = vadd.s32 %v501, 1
      %v601 = vadd.s32 %v502, 1
      %v602 = vadd.s32 %v503, 1
      %v603 = vadd.s32 %v504, 1
      %v604 = vadd.s32 %v505, 1
      %v605 = vadd.s32 %v506, 1
      %v606 = vadd.s32 %v507, 1
      %v607 = vadd.s32 %v508, 1
      %v608 = vadd.s32 %v509, 1
      %v609 = vadd.s32 %v510, 1
      %v610 = vadd.s32 %v511, 1
      %v611 = vadd.s32 %v512, 1
      %v612 = vadd.s32 %v513, 1
      %v613 = vadd.s32 %v514, 1
      %v614 = vadd.s32 %v515, 1
      %vm615 = vcmp.lt.s32.totalorder %v582, 511
      %vm616 = vcmp.lt.s32.totalorder %v583, 511
      %vm617 = vcmp.lt.s32.totalorder %v584, 511
      %vm618 = vcmp.lt.s32.totalorder %v585, 511
      %vm619 = vcmp.lt.s32.totalorder %v586, 511
      %vm620 = vcmp.lt.s32.totalorder %v587, 511
      %vm621 = vcmp.lt.s32.totalorder %v588, 511
      %vm622 = vcmp.lt.s32.totalorder %v589, 511
      %vm623 = vcmp.lt.s32.totalorder %v590, 511
      %vm624 = vcmp.lt.s32.totalorder %v591, 511
      %vm625 = vcmp.lt.s32.totalorder %v592, 511
      %vm626 = vcmp.lt.s32.totalorder %v593, 511
      %vm627 = vcmp.lt.s32.totalorder %v594, 511
      %vm628 = vcmp.lt.s32.totalorder %v595, 511
      %vm629 = vcmp.lt.s32.totalorder %v596, 511
      %vm630 = vcmp.lt.s32.totalorder %v597, 511
      %vm631 = vcmp.lt.s32.totalorder %v598, 511
      %vm632 = vcmp.lt.s32.totalorder %v599, 511
      %vm633 = vcmp.lt.s32.totalorder %v600, 511
      %vm634 = vcmp.lt.s32.totalorder %v601, 511
      %vm635 = vcmp.lt.s32.totalorder %v602, 511
      %vm636 = vcmp.lt.s32.totalorder %v603, 511
      %vm637 = vcmp.lt.s32.totalorder %v604, 511
      %vm638 = vcmp.lt.s32.totalorder %v605, 511
      %vm639 = vcmp.lt.s32.totalorder %v606, 511
      %vm640 = vcmp.lt.s32.totalorder %v607, 511
      %vm641 = vcmp.lt.s32.totalorder %v608, 511
      %vm642 = vcmp.lt.s32.totalorder %v609, 511
      %vm643 = vcmp.lt.s32.totalorder %v610, 511
      %vm644 = vcmp.lt.s32.totalorder %v611, 511
      %vm645 = vcmp.lt.s32.totalorder %v612, 511
      %vm646 = vcmp.lt.s32.totalorder %v613, 511
      %vm647 = vcmp.lt.s32.totalorder %v614, 511
      %v648 = vsel %vm615, %v450, 0.0
      %v649 = vsel %vm616, %v451, 0.0
      %v650 = vsel %vm617, %v452, 0.0
      %v651 = vsel %vm618, %v453, 0.0
      %v652 = vsel %vm619, %v454, 0.0
      %v653 = vsel %vm620, %v455, 0.0
      %v654 = vsel %vm621, %v456, 0.0
      %v655 = vsel %vm622, %v457, 0.0
      %v656 = vsel %vm623, %v458, 0.0
      %v657 = vsel %vm624, %v459, 0.0
      %v658 = vsel %vm625, %v460, 0.0
      %v659 = vsel %vm626, %v461, 0.0
      %v660 = vsel %vm627, %v462, 0.0
      %v661 = vsel %vm628, %v463, 0.0
      %v662 = vsel %vm629, %v464, 0.0
      %v663 = vsel %vm630, %v465, 0.0
      %v664 = vsel %vm631, %v466, 0.0
      %v665 = vsel %vm632, %v467, 0.0
      %v666 = vsel %vm633, %v468, 0.0
      %v667 = vsel %vm634, %v469, 0.0
      %v668 = vsel %vm635, %v470, 0.0
      %v669 = vsel %vm636, %v471, 0.0
      %v670 = vsel %vm637, %v472, 0.0
      %v671 = vsel %vm638, %v473, 0.0
      %v672 = vsel %vm639, %v474, 0.0
      %v673 = vsel %vm640, %v475, 0.0
      %v674 = vsel %vm641, %v476, 0.0
      %v675 = vsel %vm642, %v477, 0.0
      %v676 = vsel %vm643, %v478, 0.0
      %v677 = vsel %vm644, %v479, 0.0
      %v678 = vsel %vm645, %v480, 0.0
      %v679 = vsel %vm646, %v481, 0.0
      %v680 = vsel %vm647, %v482, 0.0
      %vm714 = vcmask 1046528
      %v715 = vrot.slane %v549, 1
      %v716 = vrot.slane %v550, 1
      %v717 = vsel %vm714, %v715, %v716
      %v718 = vrot.slane %v551, 1
      %v719 = vsel %vm714, %v716, %v718
      %v720 = vrot.slane %v552, 1
      %v721 = vsel %vm714, %v718, %v720
      %v722 = vrot.slane %v553, 1
      %v723 = vsel %vm714, %v720, %v722
      %v724 = vrot.slane %v554, 1
      %v725 = vsel %vm714, %v722, %v724
      %v726 = vrot.slane %v555, 1
      %v727 = vsel %vm714, %v724, %v726
      %v728 = vrot.slane %v556, 1
      %v729 = vsel %vm714, %v726, %v728
      %v730 = vrot.slane %v557, 1
      %v731 = vsel %vm714, %v728, %v730
      %v732 = vrot.slane %v558, 1
      %v733 = vsel %vm714, %v730, %v732
      %v734 = vrot.slane %v559, 1
      %v735 = vsel %vm714, %v732, %v734
      %v736 = vrot.slane %v560, 1
      %v737 = vsel %vm714, %v734, %v736
      %v738 = vrot.slane %v561, 1
      %v739 = vsel %vm714, %v736, %v738
      %v740 = vrot.slane %v562, 1
      %v741 = vsel %vm714, %v738, %v740
      %v742 = vrot.slane %v563, 1
      %v743 = vsel %vm714, %v740, %v742
      %v744 = vrot.slane %v564, 1
      %v745 = vsel %vm714, %v742, %v744
      %v746 = vrot.slane %v565, 1
      %v747 = vsel %vm714, %v744, %v746
      %v748 = vrot.slane %v566, 1
      %v749 = vsel %vm714, %v746, %v748
      %v750 = vrot.slane %v567, 1
      %v751 = vsel %vm714, %v748, %v750
      %v752 = vrot.slane %v568, 1
      %v753 = vsel %vm714, %v750, %v752
      %v754 = vrot.slane %v569, 1
      %v755 = vsel %vm714, %v752, %v754
      %v756 = vrot.slane %v570, 1
      %v757 = vsel %vm714, %v754, %v756
      %v758 = vrot.slane %v571, 1
      %v759 = vsel %vm714, %v756, %v758
      %v760 = vrot.slane %v572, 1
      %v761 = vsel %vm714, %v758, %v760
      %v762 = vrot.slane %v573, 1
      %v763 = vsel %vm714, %v760, %v762
      %v764 = vrot.slane %v574, 1
      %v765 = vsel %vm714, %v762, %v764
      %v766 = vrot.slane %v575, 1
      %v767 = vsel %vm714, %v764, %v766
      %v768 = vrot.slane %v576, 1
      %v769 = vsel %vm714, %v766, %v768
      %v770 = vrot.slane %v577, 1
      %v771 = vsel %vm714, %v768, %v770
      %v772 = vrot.slane %v578, 1
      %v773 = vsel %vm714, %v770, %v772
      %v774 = vrot.slane %v579, 1
      %v775 = vsel %vm714, %v772, %v774
      %v776 = vrot.slane %v580, 1
      %v777 = vsel %vm714, %v774, %v776
      %v778 = vrot.slane %v581, 1
      %v779 = vsel %vm714, %v776, %v778
      %v813 = vsel %vm714, %v778, 0.0
      %vm847 = vcmask 1040384
      %v848 = vrot.slane %v648, 7
      %v849 = vrot.slane %v649, 7
      %v850 = vsel %vm847, %v848, %v849
      %v851 = vrot.slane %v650, 7
      %v852 = vsel %vm847, %v849, %v851
      %v853 = vrot.slane %v651, 7
      %v854 = vsel %vm847, %v851, %v853
      %v855 = vrot.slane %v652, 7
      %v856 = vsel %vm847, %v853, %v855
      %v857 = vrot.slane %v653, 7
      %v858 = vsel %vm847, %v855, %v857
      %v859 = vrot.slane %v654, 7
      %v860 = vsel %vm847, %v857, %v859
      %v861 = vrot.slane %v655, 7
      %v862 = vsel %vm847, %v859, %v861
      %v863 = vrot.slane %v656, 7
      %v864 = vsel %vm847, %v861, %v863
      %v865 = vrot.slane %v657, 7
      %v866 = vsel %vm847, %v863, %v865
      %v867 = vrot.slane %v658, 7
      %v868 = vsel %vm847, %v865, %v867
      %v869 = vrot.slane %v659, 7
      %v870 = vsel %vm847, %v867, %v869
      %v871 = vrot.slane %v660, 7
      %v872 = vsel %vm847, %v869, %v871
      %v873 = vrot.slane %v661, 7
      %v874 = vsel %vm847, %v871, %v873
      %v875 = vrot.slane %v662, 7
      %v876 = vsel %vm847, %v873, %v875
      %v877 = vrot.slane %v663, 7
      %v878 = vsel %vm847, %v875, %v877
      %v879 = vrot.slane %v664, 7
      %v880 = vsel %vm847, %v877, %v879
      %v881 = vrot.slane %v665, 7
      %v882 = vsel %vm847, %v879, %v881
      %v883 = vrot.slane %v666, 7
      %v884 = vsel %vm847, %v881, %v883
      %v885 = vrot.slane %v667, 7
      %v886 = vsel %vm847, %v883, %v885
      %v887 = vrot.slane %v668, 7
      %v888 = vsel %vm847, %v885, %v887
      %v889 = vrot.slane %v669, 7
      %v890 = vsel %vm847, %v887, %v889
      %v891 = vrot.slane %v670, 7
      %v892 = vsel %vm847, %v889, %v891
      %v893 = vrot.slane %v671, 7
      %v894 = vsel %vm847, %v891, %v893
      %v895 = vrot.slane %v672, 7
      %v896 = vsel %vm847, %v893, %v895
      %v897 = vrot.slane %v673, 7
      %v898 = vsel %vm847, %v895, %v897
      %v899 = vrot.slane %v674, 7
      %v900 = vsel %vm847, %v897, %v899
      %v901 = vrot.slane %v675, 7
      %v902 = vsel %vm847, %v899, %v901
      %v903 = vrot.slane %v676, 7
      %v904 = vsel %vm847, %v901, %v903
      %v905 = vrot.slane %v677, 7
      %v906 = vsel %vm847, %v903, %v905
      %v907 = vrot.slane %v678, 7
      %v908 = vsel %vm847, %v905, %v907
      %v909 = vrot.slane %v679, 7
      %v910 = vsel %vm847, %v907, %v909
      %v911 = vrot.slane %v680, 7
      %v912 = vsel %vm847, %v909, %v911
      %913 = vrot.lane.b32.xlu0 %v848, 64
      %v914 = vpop.permute.xlu0 %913
      %915 = vrot.lane.b32.xlu0 %v850, 64
      %v916 = vpop.permute.xlu0 %915
      %917 = vrot.lane.b32.xlu0 %v852, 64
      %v918 = vpop.permute.xlu0 %917
      %919 = vrot.lane.b32.xlu0 %v854, 64
      %v920 = vpop.permute.xlu0 %919
      %921 = vrot.lane.b32.xlu0 %v856, 64
      %v922 = vpop.permute.xlu0 %921
      %923 = vrot.lane.b32.xlu0 %v858, 64
      %v924 = vpop.permute.xlu0 %923
      %925 = vrot.lane.b32.xlu0 %v860, 64
      %v926 = vpop.permute.xlu0 %925
      %927 = vrot.lane.b32.xlu0 %v862, 64
      %v928 = vpop.permute.xlu0 %927
      %929 = vrot.lane.b32.xlu0 %v864, 64
      %v930 = vpop.permute.xlu0 %929
      %931 = vrot.lane.b32.xlu0 %v866, 64
      %v932 = vpop.permute.xlu0 %931
      %933 = vrot.lane.b32.xlu0 %v868, 64
      %v934 = vpop.permute.xlu0 %933
      %935 = vrot.lane.b32.xlu0 %v870, 64
      %v936 = vpop.permute.xlu0 %935
      %937 = vrot.lane.b32.xlu0 %v872, 64
      %v938 = vpop.permute.xlu0 %937
      %939 = vrot.lane.b32.xlu0 %v874, 64
      %v940 = vpop.permute.xlu0 %939
      %941 = vrot.lane.b32.xlu0 %v876, 64
      %v942 = vpop.permute.xlu0 %941
      %943 = vrot.lane.b32.xlu0 %v878, 64
      %v944 = vpop.permute.xlu0 %943
      %945 = vrot.lane.b32.xlu0 %v880, 64
      %v946 = vpop.permute.xlu0 %945
      %947 = vrot.lane.b32.xlu0 %v882, 64
      %v948 = vpop.permute.xlu0 %947
      %949 = vrot.lane.b32.xlu0 %v884, 64
      %v950 = vpop.permute.xlu0 %949
      %951 = vrot.lane.b32.xlu0 %v886, 64
      %v952 = vpop.permute.xlu0 %951
      %953 = vrot.lane.b32.xlu0 %v888, 64
      %v954 = vpop.permute.xlu0 %953
      %955 = vrot.lane.b32.xlu0 %v890, 64
      %v956 = vpop.permute.xlu0 %955
      %957 = vrot.lane.b32.xlu0 %v892, 64
      %v958 = vpop.permute.xlu0 %957
      %959 = vrot.lane.b32.xlu0 %v894, 64
      %v960 = vpop.permute.xlu0 %959
      %961 = vrot.lane.b32.xlu0 %v896, 64
      %v962 = vpop.permute.xlu0 %961
      %963 = vrot.lane.b32.xlu0 %v898, 64
      %v964 = vpop.permute.xlu0 %963
      %965 = vrot.lane.b32.xlu0 %v900, 64
      %v966 = vpop.permute.xlu0 %965
      %967 = vrot.lane.b32.xlu0 %v902, 64
      %v968 = vpop.permute.xlu0 %967
      %969 = vrot.lane.b32.xlu0 %v904, 64
      %v970 = vpop.permute.xlu0 %969
      %971 = vrot.lane.b32.xlu0 %v906, 64
      %v972 = vpop.permute.xlu0 %971
      %973 = vrot.lane.b32.xlu0 %v908, 64
      %v974 = vpop.permute.xlu0 %973
      %975 = vrot.lane.b32.xlu0 %v910, 64
      %v976 = vpop.permute.xlu0 %975
      %977 = vrot.lane.b32.xlu0 %v912, 64
      %v978 = vpop.permute.xlu0 %977
      %v1012 = vsel %vm847, 0.0, %v914
      %v1013 = vadd.f32 %v1012, %v549
      %v1014 = vadd.f32 %v916, %v550
      %v1015 = vadd.f32 %v918, %v551
      %v1016 = vadd.f32 %v920, %v552
      %v1017 = vadd.f32 %v922, %v553
      %v1018 = vadd.f32 %v924, %v554
      %v1019 = vadd.f32 %v926, %v555
      %v1020 = vadd.f32 %v928, %v556
      %v1021 = vadd.f32 %v930, %v557
      %v1022 = vadd.f32 %v932, %v558
      %v1023 = vadd.f32 %v934, %v559
      %v1024 = vadd.f32 %v936, %v560
      %v1025 = vadd.f32 %v938, %v561
      %v1026 = vadd.f32 %v940, %v562
      %v1027 = vadd.f32 %v942, %v563
      %v1028 = vadd.f32 %v944, %v564
      %v1029 = vadd.f32 %v946, %v565
      %v1030 = vadd.f32 %v948, %v566
      %v1031 = vadd.f32 %v950, %v567
      %v1032 = vadd.f32 %v952, %v568
      %v1033 = vadd.f32 %v954, %v569
      %v1034 = vadd.f32 %v956, %v570
      %v1035 = vadd.f32 %v958, %v571
      %v1036 = vadd.f32 %v960, %v572
      %v1037 = vadd.f32 %v962, %v573
      %v1038 = vadd.f32 %v964, %v574
      %v1039 = vadd.f32 %v966, %v575
      %v1040 = vadd.f32 %v968, %v576
      %v1041 = vadd.f32 %v970, %v577
      %v1042 = vadd.f32 %v972, %v578
      %v1043 = vadd.f32 %v974, %v579
      %v1044 = vadd.f32 %v976, %v580
      %v1045 = vadd.f32 %v978, %v581
      %1046 = vrot.lane.b32.xlu0 %v648, 64
      %v1047 = vpop.permute.xlu0 %1046
      %1048 = vrot.lane.b32.xlu0 %v649, 64
      %v1049 = vpop.permute.xlu0 %1048
      %1050 = vrot.lane.b32.xlu0 %v650, 64
      %v1051 = vpop.permute.xlu0 %1050
      %1052 = vrot.lane.b32.xlu0 %v651, 64
      %v1053 = vpop.permute.xlu0 %1052
      %1054 = vrot.lane.b32.xlu0 %v652, 64
      %v1055 = vpop.permute.xlu0 %1054
      %1056 = vrot.lane.b32.xlu0 %v653, 64
      %v1057 = vpop.permute.xlu0 %1056
      %1058 = vrot.lane.b32.xlu0 %v654, 64
      %v1059 = vpop.permute.xlu0 %1058
      %1060 = vrot.lane.b32.xlu0 %v655, 64
      %v1061 = vpop.permute.xlu0 %1060
      %1062 = vrot.lane.b32.xlu0 %v656, 64
      %v1063 = vpop.permute.xlu0 %1062
      %1064 = vrot.lane.b32.xlu0 %v657, 64
      %v1065 = vpop.permute.xlu0 %1064
      %1066 = vrot.lane.b32.xlu0 %v658, 64
      %v1067 = vpop.permute.xlu0 %1066
      %1068 = vrot.lane.b32.xlu0 %v659, 64
      %v1069 = vpop.permute.xlu0 %1068
      %1070 = vrot.lane.b32.xlu0 %v660, 64
      %v1071 = vpop.permute.xlu0 %1070
      %1072 = vrot.lane.b32.xlu0 %v661, 64
      %v1073 = vpop.permute.xlu0 %1072
      %1074 = vrot.lane.b32.xlu0 %v662, 64
      %v1075 = vpop.permute.xlu0 %1074
      %1076 = vrot.lane.b32.xlu0 %v663, 64
      %v1077 = vpop.permute.xlu0 %1076
      %1078 = vrot.lane.b32.xlu0 %v664, 64
      %v1079 = vpop.permute.xlu0 %1078
      %1080 = vrot.lane.b32.xlu0 %v665, 64
      %v1081 = vpop.permute.xlu0 %1080
      %1082 = vrot.lane.b32.xlu0 %v666, 64
      %v1083 = vpop.permute.xlu0 %1082
      %1084 = vrot.lane.b32.xlu0 %v667, 64
      %v1085 = vpop.permute.xlu0 %1084
      %1086 = vrot.lane.b32.xlu0 %v668, 64
      %v1087 = vpop.permute.xlu0 %1086
      %1088 = vrot.lane.b32.xlu0 %v669, 64
      %v1089 = vpop.permute.xlu0 %1088
      %1090 = vrot.lane.b32.xlu0 %v670, 64
      %v1091 = vpop.permute.xlu0 %1090
      %1092 = vrot.lane.b32.xlu0 %v671, 64
      %v1093 = vpop.permute.xlu0 %1092
      %1094 = vrot.lane.b32.xlu0 %v672, 64
      %v1095 = vpop.permute.xlu0 %1094
      %1096 = vrot.lane.b32.xlu0 %v673, 64
      %v1097 = vpop.permute.xlu0 %1096
      %1098 = vrot.lane.b32.xlu0 %v674, 64
      %v1099 = vpop.permute.xlu0 %1098
      %1100 = vrot.lane.b32.xlu0 %v675, 64
      %v1101 = vpop.permute.xlu0 %1100
      %1102 = vrot.lane.b32.xlu0 %v676, 64
      %v1103 = vpop.permute.xlu0 %1102
      %1104 = vrot.lane.b32.xlu0 %v677, 64
      %v1105 = vpop.permute.xlu0 %1104
      %1106 = vrot.lane.b32.xlu0 %v678, 64
      %v1107 = vpop.permute.xlu0 %1106
      %1108 = vrot.lane.b32.xlu0 %v679, 64
      %v1109 = vpop.permute.xlu0 %1108
      %1110 = vrot.lane.b32.xlu0 %v680, 64
      %v1111 = vpop.permute.xlu0 %1110
      %v1145 = vadd.f32 %v1013, %v1047
      %v1146 = vadd.f32 %v1014, %v1049
      %v1147 = vadd.f32 %v1015, %v1051
      %v1148 = vadd.f32 %v1016, %v1053
      %v1149 = vadd.f32 %v1017, %v1055
      %v1150 = vadd.f32 %v1018, %v1057
      %v1151 = vadd.f32 %v1019, %v1059
      %v1152 = vadd.f32 %v1020, %v1061
      %v1153 = vadd.f32 %v1021, %v1063
      %v1154 = vadd.f32 %v1022, %v1065
      %v1155 = vadd.f32 %v1023, %v1067
      %v1156 = vadd.f32 %v1024, %v1069
      %v1157 = vadd.f32 %v1025, %v1071
      %v1158 = vadd.f32 %v1026, %v1073
      %v1159 = vadd.f32 %v1027, %v1075
      %v1160 = vadd.f32 %v1028, %v1077
      %v1161 = vadd.f32 %v1029, %v1079
      %v1162 = vadd.f32 %v1030, %v1081
      %v1163 = vadd.f32 %v1031, %v1083
      %v1164 = vadd.f32 %v1032, %v1085
      %v1165 = vadd.f32 %v1033, %v1087
      %v1166 = vadd.f32 %v1034, %v1089
      %v1167 = vadd.f32 %v1035, %v1091
      %v1168 = vadd.f32 %v1036, %v1093
      %v1169 = vadd.f32 %v1037, %v1095
      %v1170 = vadd.f32 %v1038, %v1097
      %v1171 = vadd.f32 %v1039, %v1099
      %v1172 = vadd.f32 %v1040, %v1101
      %v1173 = vadd.f32 %v1041, %v1103
      %v1174 = vadd.f32 %v1042, %v1105
      %v1175 = vadd.f32 %v1043, %v1107
      %v1176 = vadd.f32 %v1044, %v1109
      %v1177 = vadd.f32 %v1045, %v1111
      %v1178 = vadd.f32 %v1145, %v717
      %v1179 = vadd.f32 %v1146, %v719
      %v1180 = vadd.f32 %v1147, %v721
      %v1181 = vadd.f32 %v1148, %v723
      %v1182 = vadd.f32 %v1149, %v725
      %v1183 = vadd.f32 %v1150, %v727
      %v1184 = vadd.f32 %v1151, %v729
      %v1185 = vadd.f32 %v1152, %v731
      %v1186 = vadd.f32 %v1153, %v733
      %v1187 = vadd.f32 %v1154, %v735
      %v1188 = vadd.f32 %v1155, %v737
      %v1189 = vadd.f32 %v1156, %v739
      %v1190 = vadd.f32 %v1157, %v741
      %v1191 = vadd.f32 %v1158, %v743
      %v1192 = vadd.f32 %v1159, %v745
      %v1193 = vadd.f32 %v1160, %v747
      %v1194 = vadd.f32 %v1161, %v749
      %v1195 = vadd.f32 %v1162, %v751
      %v1196 = vadd.f32 %v1163, %v753
      %v1197 = vadd.f32 %v1164, %v755
      %v1198 = vadd.f32 %v1165, %v757
      %v1199 = vadd.f32 %v1166, %v759
      %v1200 = vadd.f32 %v1167, %v761
      %v1201 = vadd.f32 %v1168, %v763
      %v1202 = vadd.f32 %v1169, %v765
      %v1203 = vadd.f32 %v1170, %v767
      %v1204 = vadd.f32 %v1171, %v769
      %v1205 = vadd.f32 %v1172, %v771
      %v1206 = vadd.f32 %v1173, %v773
      %v1207 = vadd.f32 %v1174, %v775
      %v1208 = vadd.f32 %v1175, %v777
      %v1209 = vadd.f32 %v1176, %v779
      %v1210 = vadd.f32 %v1177, %v813
      %vm1211 = vcmp.lt.s32.totalorder %v174, 255
      %vm1212 = vcmp.lt.s32.totalorder %v175, 255
      %vm1213 = vcmp.lt.s32.totalorder %v176, 255
      %vm1214 = vcmp.lt.s32.totalorder %v177, 255
      %vm1215 = vcmp.lt.s32.totalorder %v178, 255
      %vm1216 = vcmp.lt.s32.totalorder %v179, 255
      %vm1217 = vcmp.lt.s32.totalorder %v180, 255
      %vm1218 = vcmp.lt.s32.totalorder %v181, 255
      %vm1219 = vcmp.lt.s32.totalorder %v182, 255
      %vm1220 = vcmp.lt.s32.totalorder %v183, 255
      %vm1221 = vcmp.lt.s32.totalorder %v184, 255
      %vm1222 = vcmp.lt.s32.totalorder %v185, 255
      %vm1223 = vcmp.lt.s32.totalorder %v186, 255
      %vm1224 = vcmp.lt.s32.totalorder %v187, 255
      %vm1225 = vcmp.lt.s32.totalorder %v188, 255
      %vm1226 = vcmp.lt.s32.totalorder %v189, 255
      %vm1227 = vcmp.lt.s32.totalorder %v190, 255
      %vm1228 = vcmp.lt.s32.totalorder %v191, 255
      %vm1229 = vcmp.lt.s32.totalorder %v192, 255
      %vm1230 = vcmp.lt.s32.totalorder %v193, 255
      %vm1231 = vcmp.lt.s32.totalorder %v194, 255
      %vm1232 = vcmp.lt.s32.totalorder %v195, 255
      %vm1233 = vcmp.lt.s32.totalorder %v196, 255
      %vm1234 = vcmp.lt.s32.totalorder %v197, 255
      %vm1235 = vcmp.lt.s32.totalorder %v198, 255
      %vm1236 = vcmp.lt.s32.totalorder %v199, 255
      %vm1237 = vcmp.lt.s32.totalorder %v200, 255
      %vm1238 = vcmp.lt.s32.totalorder %v201, 255
      %vm1239 = vcmp.lt.s32.totalorder %v202, 255
      %vm1240 = vcmp.lt.s32.totalorder %v203, 255
      %vm1241 = vcmp.lt.s32.totalorder %v204, 255
      %vm1242 = vcmp.lt.s32.totalorder %v205, 255
      %vm1243 = vcmp.lt.s32.totalorder %v206, 255
      %v1244 = vmul.f32 %v1178, 0.25
      %v1245 = vmul.f32 %v1179, 0.25
      %v1246 = vmul.f32 %v1180, 0.25
      %v1247 = vmul.f32 %v1181, 0.25
      %v1248 = vmul.f32 %v1182, 0.25
      %v1249 = vmul.f32 %v1183, 0.25
      %v1250 = vmul.f32 %v1184, 0.25
      %v1251 = vmul.f32 %v1185, 0.25
      %v1252 = vmul.f32 %v1186, 0.25
      %v1253 = vmul.f32 %v1187, 0.25
      %v1254 = vmul.f32 %v1188, 0.25
      %v1255 = vmul.f32 %v1189, 0.25
      %v1256 = vmul.f32 %v1190, 0.25
      %v1257 = vmul.f32 %v1191, 0.25
      %v1258 = vmul.f32 %v1192, 0.25
      %v1259 = vmul.f32 %v1193, 0.25
      %v1260 = vmul.f32 %v1194, 0.25
      %v1261 = vmul.f32 %v1195, 0.25
      %v1262 = vmul.f32 %v1196, 0.25
      %v1263 = vmul.f32 %v1197, 0.25
      %v1264 = vmul.f32 %v1198, 0.25
      %v1265 = vmul.f32 %v1199, 0.25
      %v1266 = vmul.f32 %v1200, 0.25
      %v1267 = vmul.f32 %v1201, 0.25
      %v1268 = vmul.f32 %v1202, 0.25
      %v1269 = vmul.f32 %v1203, 0.25
      %v1270 = vmul.f32 %v1204, 0.25
      %v1271 = vmul.f32 %v1205, 0.25
      %v1272 = vmul.f32 %v1206, 0.25
      %v1273 = vmul.f32 %v1207, 0.25
      %v1274 = vmul.f32 %v1208, 0.25
      %v1275 = vmul.f32 %v1209, 0.25
      %v1276 = vmul.f32 %v1210, 0.25
      %v1277 = vsel %vm1211, %v1244, 0.0
      %v1278 = vsel %vm1212, %v1245, 0.0
      %v1279 = vsel %vm1213, %v1246, 0.0
      %v1280 = vsel %vm1214, %v1247, 0.0
      %v1281 = vsel %vm1215, %v1248, 0.0
      %v1282 = vsel %vm1216, %v1249, 0.0
      %v1283 = vsel %vm1217, %v1250, 0.0
      %v1284 = vsel %vm1218, %v1251, 0.0
      %v1285 = vsel %vm1219, %v1252, 0.0
      %v1286 = vsel %vm1220, %v1253, 0.0
      %v1287 = vsel %vm1221, %v1254, 0.0
      %v1288 = vsel %vm1222, %v1255, 0.0
      %v1289 = vsel %vm1223, %v1256, 0.0
      %v1290 = vsel %vm1224, %v1257, 0.0
      %v1291 = vsel %vm1225, %v1258, 0.0
      %v1292 = vsel %vm1226, %v1259, 0.0
      %v1293 = vsel %vm1227, %v1260, 0.0
      %v1294 = vsel %vm1228, %v1261, 0.0
      %v1295 = vsel %vm1229, %v1262, 0.0
      %v1296 = vsel %vm1230, %v1263, 0.0
      %v1297 = vsel %vm1231, %v1264, 0.0
      %v1298 = vsel %vm1232, %v1265, 0.0
      %v1299 = vsel %vm1233, %v1266, 0.0
      %v1300 = vsel %vm1234, %v1267, 0.0
      %v1301 = vsel %vm1235, %v1268, 0.0
      %v1302 = vsel %vm1236, %v1269, 0.0
      %v1303 = vsel %vm1237, %v1270, 0.0
      %v1304 = vsel %vm1238, %v1271, 0.0
      %v1305 = vsel %vm1239, %v1272, 0.0
      %v1306 = vsel %vm1240, %v1273, 0.0
      %v1307 = vsel %vm1241, %v1274, 0.0
      %v1308 = vsel %vm1242, %v1275, 0.0
      %v1309 = vsel %vm1243, %v1276, 0.0
      %v1310 = vpack.c.bf16 %v1277, %v1277
      %v1311 = vpack.c.bf16 %v1278, %v1278
      %v1312 = vpack.c.bf16 %v1279, %v1279
      %v1313 = vpack.c.bf16 %v1280, %v1280
      %v1314 = vpack.c.bf16 %v1281, %v1281
      %v1315 = vpack.c.bf16 %v1282, %v1282
      %v1316 = vpack.c.bf16 %v1283, %v1283
      %v1317 = vpack.c.bf16 %v1284, %v1284
      %v1318 = vpack.c.bf16 %v1285, %v1285
      %v1319 = vpack.c.bf16 %v1286, %v1286
      %v1320 = vpack.c.bf16 %v1287, %v1287
      %v1321 = vpack.c.bf16 %v1288, %v1288
      %v1322 = vpack.c.bf16 %v1289, %v1289
      %v1323 = vpack.c.bf16 %v1290, %v1290
      %v1324 = vpack.c.bf16 %v1291, %v1291
      %v1325 = vpack.c.bf16 %v1292, %v1292
      %v1326 = vpack.c.bf16 %v1293, %v1293
      %v1327 = vpack.c.bf16 %v1294, %v1294
      %v1328 = vpack.c.bf16 %v1295, %v1295
      %v1329 = vpack.c.bf16 %v1296, %v1296
      %v1330 = vpack.c.bf16 %v1297, %v1297
      %v1331 = vpack.c.bf16 %v1298, %v1298
      %v1332 = vpack.c.bf16 %v1299, %v1299
      %v1333 = vpack.c.bf16 %v1300, %v1300
      %v1334 = vpack.c.bf16 %v1301, %v1301
      %v1335 = vpack.c.bf16 %v1302, %v1302
      %v1336 = vpack.c.bf16 %v1303, %v1303
      %v1337 = vpack.c.bf16 %v1304, %v1304
      %v1338 = vpack.c.bf16 %v1305, %v1305
      %v1339 = vpack.c.bf16 %v1306, %v1306
      %v1340 = vpack.c.bf16 %v1307, %v1307
      %v1341 = vpack.c.bf16 %v1308, %v1308
      %v1342 = vpack.c.bf16 %v1309, %v1309
      %vm1343 = vcmask 519168
      %1344 = vst.msk [vmem:[%s170] sm:$0xf] %vm1343, %v1310
      %1345 = vst.msk [vmem:[%s170 + $0x4] sm:$0xf] %vm1343, %v1311
      %1346 = vst.msk [vmem:[%s170 + $0x8] sm:$0xf] %vm1343, %v1312
      %1347 = vst.msk [vmem:[%s170 + $0xc] sm:$0xf] %vm1343, %v1313
      %1348 = vst.msk [vmem:[%s170 + $0x10] sm:$0xf] %vm1343, %v1314
      %1349 = vst.msk [vmem:[%s170 + $0x14] sm:$0xf] %vm1343, %v1315
      %1350 = vst.msk [vmem:[%s170 + $0x18] sm:$0xf] %vm1343, %v1316
      %1351 = vst.msk [vmem:[%s170 + $0x1c] sm:$0xf] %vm1343, %v1317
      %1352 = vst.msk [vmem:[%s170 + $0x20] sm:$0xf] %vm1343, %v1318
      %1353 = vst.msk [vmem:[%s170 + $0x24] sm:$0xf] %vm1343, %v1319
      %1354 = vst.msk [vmem:[%s170 + $0x28] sm:$0xf] %vm1343, %v1320
      %1355 = vst.msk [vmem:[%s170 + $0x2c] sm:$0xf] %vm1343, %v1321
      %1356 = vst.msk [vmem:[%s170 + $0x30] sm:$0xf] %vm1343, %v1322
      %1357 = vst.msk [vmem:[%s170 + $0x34] sm:$0xf] %vm1343, %v1323
      %1358 = vst.msk [vmem:[%s170 + $0x38] sm:$0xf] %vm1343, %v1324
      %1359 = vst.msk [vmem:[%s170 + $0x3c] sm:$0xf] %vm1343, %v1325
      %1360 = vst.msk [vmem:[%s170 + $0x40] sm:$0xf] %vm1343, %v1326
      %1361 = vst.msk [vmem:[%s170 + $0x44] sm:$0xf] %vm1343, %v1327
      %1362 = vst.msk [vmem:[%s170 + $0x48] sm:$0xf] %vm1343, %v1328
      %1363 = vst.msk [vmem:[%s170 + $0x4c] sm:$0xf] %vm1343, %v1329
      %1364 = vst.msk [vmem:[%s170 + $0x50] sm:$0xf] %vm1343, %v1330
      %1365 = vst.msk [vmem:[%s170 + $0x54] sm:$0xf] %vm1343, %v1331
      %1366 = vst.msk [vmem:[%s170 + $0x58] sm:$0xf] %vm1343, %v1332
      %1367 = vst.msk [vmem:[%s170 + $0x5c] sm:$0xf] %vm1343, %v1333
      %1368 = vst.msk [vmem:[%s170 + $0x60] sm:$0xf] %vm1343, %v1334
      %1369 = vst.msk [vmem:[%s170 + $0x64] sm:$0xf] %vm1343, %v1335
      %1370 = vst.msk [vmem:[%s170 + $0x68] sm:$0xf] %vm1343, %v1336
      %1371 = vst.msk [vmem:[%s170 + $0x6c] sm:$0xf] %vm1343, %v1337
      %1372 = vst.msk [vmem:[%s170 + $0x70] sm:$0xf] %vm1343, %v1338
      %1373 = vst.msk [vmem:[%s170 + $0x74] sm:$0xf] %vm1343, %v1339
      %1374 = vst.msk [vmem:[%s170 + $0x78] sm:$0xf] %vm1343, %v1340
      %1375 = vst.msk [vmem:[%s170 + $0x7c] sm:$0xf] %vm1343, %v1341
      %1376 = vst.msk [vmem:[%s170 + $0x80] sm:$0xf] %vm1343, %v1342
      %p1377 = scmp.lt.s32.totalorder %s14, 1
      %s1378 = scalar_select %p1377, %s14, 1
      %s1379 = smul.addr %s1378, 33
      %s1380 = smul.addr %s1379, 4
      %s1381 = scalar_lea.vmem %s3, %s1380
      // Predicated region
      $region33: #{cnn_frontend.7} parent=31 // pred_check
        %p1382 = pneg %p100
      $region34: #{cnn_frontend.7} parent=31 // pred_check_branch
        %1384 = sbr.rel (%p1382) target = $region36
      $region35: #{cnn_frontend.7} parent=31 // pred_region
        _
      $region36: #{cnn_frontend.7} parent=31 // pred_fallthru
        _
    $region32: #{cnn_frontend.7} parent=5 // pred_fallthru
      _
    %p1385 = scmp.le.s32.totalorder 2, %s9
    // Predicated region
    $region37: #{cnn_frontend.7} parent=5 // pred_check
      %p1386 = pneg %p1385
    $region38: #{cnn_frontend.7} parent=5 // pred_check_branch
      %1388 = sbr.rel (%p1386) target = $region40
    $region39: #{cnn_frontend.7} parent=5 // pred_region
      %s1389 = ssub.s32 %s9, 2
      // Predicated region
      $region41: #{cnn_frontend.7} parent=39 // pred_check
        %p1390 = pneg %p106
      $region42: #{cnn_frontend.7} parent=39 // pred_check_branch
        %1392 = sbr.rel (%p1390) target = $region44
      $region43: #{cnn_frontend.7} parent=39 // pred_region
        %p1393 = scmp.lt.s32.totalorder %s15, 1
        %s1394 = scalar_select %p1393, %s15, 1
        %s1395 = smul.addr %s1394, 33
        %s1396 = smul.addr %s1395, 4
        %s1397 = scalar_lea.vmem %s3, %s1396
      $region44: #{cnn_frontend.7} parent=39 // pred_fallthru
        _
    $region40: #{cnn_frontend.7} parent=5 // pred_fallthru
      _
  $region6: #{cnn_frontend.7} parent=0 // loop_footer
    %s13 = sadd.s32 1, %s9
  $region7: #{cnn_frontend.7} parent=0 // loop_footer_branch
    %8 = sbr.rel target = $region3
  $region8: #{cnn_frontend.7} parent=0 // loop_exit
    _

// kernel: cnn_frontend.9
$region0: #{cnn_frontend.9}
  #allocation0 [shape = 'u32[]', space=smem, size = 0x4, offset = 0x4, fixed_abs, tag = 'smem constant byte address 0x4 - core index']
  #allocation1 [shape = 'u32[72,128]{1,0:T(1,128)}', space=vmem, size = 0x9000, scoped, tag = 'internal scratch']
  %s0 = inlined_call_operand.vmem [shape: bf16[2,40,256], index: 0, kind: input, shape index: {}]
  %s1 = inlined_call_operand.vmem [shape: f32[1,128], index: 1, kind: input, shape index: {}]
  %s2 = inlined_call_operand.vmem [shape: f32[1,128], index: 2, kind: input, shape index: {}]
  %s3 = inlined_call_operand.vmem [shape: bf16[2,40,128], index: 3, kind: output, shape index: {}]
  %s4 = sld [smem:[#allocation0]]
  $region45: #{cnn_frontend.9} parent=0
    _
  %s6 = ssub.s32 1, %s4
  %s7 = scalar_select 0, %s6, %s4
  loop: start=0, step=1, limit=4
  $region2: #{cnn_frontend.9} parent=0 // loop_pre_header
    _
  $region3: #{cnn_frontend.9} parent=0 // loop_header
    %s9 = sphi 0, %s13
    %p10 = scmp.ge.s32.totalorder %s9, 4
    %s19 = sphi 0, %s21
    %s22 = sphi 0, %s19
    %s23 = sphi 0, %s22
    %s39 = sphi 0, %s23
    %s43 = sphi 0, %s43
    %s45 = sphi 0, %s43
    %s46 = sphi 0, %s45
    %s60 = sphi 0, %s46
    %s64 = sphi 0, %s64
    %s66 = sphi 0, %s64
    %s67 = sphi 0, %s66
    %s81 = sphi 0, %s67
    %s87 = sphi 0, %s89
    %s90 = sphi 0, %s87
    %s91 = sphi 0, %s90
    %s107 = sphi 0, %s91
  $region4: #{cnn_frontend.9} parent=0 // loop_header_branch
    %12 = sbr.rel (%p10) target = $region8
  $region5: #{cnn_frontend.9} parent=0 // loop_body
    %s14 = ssub.s32 %s9, 1
    %s15 = ssub.s32 %s9, 2
    %s16 = sadd.s32 %s9, 1
    %s17 = ssub.s32 %s9, %s16
    %p18 = scmp.eq.s32.totalorder %s17, 0
    %s20 = sadd.s32 %s19, 1
    %s21 = scalar_select %p18, %s19, %s20
    %p24 = pneg %p18
    %p25 = scmp.eq.s32.totalorder %s9, 1
    %p26 = por %p24, %p25
    %p27 = scmp.ne.s32.totalorder %s19, %s22
    %p28 = scmp.eq.s32.totalorder %s9, 0
    %p29 = por %p27, %p28
    %p30 = scmp.ne.s32.totalorder %s19, %s22
    %p31 = scmp.eq.s32.totalorder %s14, 1
    %p32 = por %p30, %p31
    %p33 = scmp.ne.s32.totalorder %s22, %s23
    %p34 = scmp.eq.s32.totalorder %s14, 0
    %p35 = por %p33, %p34
    %p36 = scmp.ne.s32.totalorder %s22, %s23
    %p37 = scmp.eq.s32.totalorder %s15, 1
    %p38 = por %p36, %p37
    %p40 = scmp.ne.s32.totalorder %s23, %s39
    %p41 = scmp.eq.s32.totalorder %s15, 0
    %p42 = por %p40, %p41
    %s44 = sadd.s32 %s43, 1
    %p47 = scmp.eq.s32.totalorder %s9, 1
    %p48 = scmp.ne.s32.totalorder %s43, %s45
    %p49 = scmp.eq.s32.totalorder %s9, 0
    %p50 = por %p48, %p49
    %p51 = scmp.ne.s32.totalorder %s43, %s45
    %p52 = scmp.eq.s32.totalorder %s14, 1
    %p53 = por %p51, %p52
    %p54 = scmp.ne.s32.totalorder %s45, %s46
    %p55 = scmp.eq.s32.totalorder %s14, 0
    %p56 = por %p54, %p55
    %p57 = scmp.ne.s32.totalorder %s45, %s46
    %p58 = scmp.eq.s32.totalorder %s15, 1
    %p59 = por %p57, %p58
    %p61 = scmp.ne.s32.totalorder %s46, %s60
    %p62 = scmp.eq.s32.totalorder %s15, 0
    %p63 = por %p61, %p62
    %s65 = sadd.s32 %s64, 1
    %p68 = scmp.eq.s32.totalorder %s9, 1
    %p69 = scmp.ne.s32.totalorder %s64, %s66
    %p70 = scmp.eq.s32.totalorder %s9, 0
    %p71 = por %p69, %p70
    %p72 = scmp.ne.s32.totalorder %s64, %s66
    %p73 = scmp.eq.s32.totalorder %s14, 1
    %p74 = por %p72, %p73
    %p75 = scmp.ne.s32.totalorder %s66, %s67
    %p76 = scmp.eq.s32.totalorder %s14, 0
    %p77 = por %p75, %p76
    %p78 = scmp.ne.s32.totalorder %s66, %s67
    %p79 = scmp.eq.s32.totalorder %s15, 1
    %p80 = por %p78, %p79
    %p82 = scmp.ne.s32.totalorder %s67, %s81
    %p83 = scmp.eq.s32.totalorder %s15, 0
    %p84 = por %p82, %p83
    %s85 = ssub.s32 %s9, %s16
    %p86 = scmp.eq.s32.totalorder %s85, 0
    %s88 = sadd.s32 %s87, 1
    %s89 = scalar_select %p86, %s87, %s88
    %p92 = pneg %p86
    %p93 = scmp.eq.s32.totalorder %s9, 1
    %p94 = por %p92, %p93
    %p95 = scmp.ne.s32.totalorder %s87, %s90
    %p96 = scmp.eq.s32.totalorder %s9, 0
    %p97 = por %p95, %p96
    %p98 = scmp.ne.s32.totalorder %s87, %s90
    %p99 = scmp.eq.s32.totalorder %s14, 1
    %p100 = por %p98, %p99
    %p101 = scmp.ne.s32.totalorder %s90, %s91
    %p102 = scmp.eq.s32.totalorder %s14, 0
    %p103 = por %p101, %p102
    %p104 = scmp.ne.s32.totalorder %s90, %s91
    %p105 = scmp.eq.s32.totalorder %s15, 1
    %p106 = por %p104, %p105
    %p108 = scmp.ne.s32.totalorder %s91, %s107
    %p109 = scmp.eq.s32.totalorder %s15, 0
    %p110 = por %p108, %p109
    %p111 = scmp.le.s32.totalorder 1, %s9
    %p112 = scmp.lt.s32.totalorder %s9, 3
    %p113 = pnand %p111, %p112
    %p114 = pneg %p113
    // Predicated region
    $region9: #{cnn_frontend.9} parent=5 // pred_check
      _
    $region10: #{cnn_frontend.9} parent=5 // pred_check_branch
      %116 = sbr.rel (%p113) target = $region12
    $region11: #{cnn_frontend.9} parent=5 // pred_region
      %s117 = ssub.s32 %s9, 1
      // Predicated region
      $region13: #{cnn_frontend.9} parent=11 // pred_check
        %p118 = pneg %p56
      $region14: #{cnn_frontend.9} parent=11 // pred_check_branch
        %120 = sbr.rel (%p118) target = $region16
      $region15: #{cnn_frontend.9} parent=11 // pred_region
        _
      $region16: #{cnn_frontend.9} parent=11 // pred_fallthru
        _
      // Predicated region
      $region17: #{cnn_frontend.9} parent=11 // pred_check
        %p121 = pneg %p77
      $region18: #{cnn_frontend.9} parent=11 // pred_check_branch
        %123 = sbr.rel (%p121) target = $region20
      $region19: #{cnn_frontend.9} parent=11 // pred_region
        _
      $region20: #{cnn_frontend.9} parent=11 // pred_fallthru
        _
    $region12: #{cnn_frontend.9} parent=5 // pred_fallthru
      _
    %p124 = scmp.lt.s32.totalorder %s9, 2
    // Predicated region
    $region21: #{cnn_frontend.9} parent=5 // pred_check
      %p125 = pneg %p124
    $region22: #{cnn_frontend.9} parent=5 // pred_check_branch
      %127 = sbr.rel (%p125) target = $region24
    $region23: #{cnn_frontend.9} parent=5 // pred_region
      // Predicated region
      $region25: #{cnn_frontend.9} parent=23 // pred_check
        %p128 = pneg %p29
      $region26: #{cnn_frontend.9} parent=23 // pred_check_branch
        %130 = sbr.rel (%p128) target = $region28
      $region27: #{cnn_frontend.9} parent=23 // pred_region
        %p131 = scmp.lt.s32.totalorder %s9, 1
        %s132 = scalar_select %p131, %s9, 1
        %s133 = smul.addr %s132, 10
        %s134 = smul.addr %s133, 4
        %s135 = scalar_lea.vmem %s0, %s134
      $region28: #{cnn_frontend.9} parent=23 // pred_fallthru
        _
    $region24: #{cnn_frontend.9} parent=5 // pred_fallthru
      _
    %p136 = scmp.le.s32.totalorder 1, %s9
    %p137 = scmp.lt.s32.totalorder %s9, 3
    %p138 = pnand %p136, %p137
    %p139 = pneg %p138
    // Predicated region
    $region29: #{cnn_frontend.9} parent=5 // pred_check
      _
    $region30: #{cnn_frontend.9} parent=5 // pred_check_branch
      %141 = sbr.rel (%p138) target = $region32
    $region31: #{cnn_frontend.9} parent=5 // pred_region
      %s142 = ssub.s32 %s9, 1
      %p143 = scmp.lt.s32.totalorder %s14, 1
      %s144 = scalar_select %p143, %s14, 1
      %s145 = smul.addr %s144, 10
      %s146 = smul.addr %s145, 4
      %s147 = scalar_lea.vmem %s0, %s146
      %p148 = pneg %p35
      %p149 = pneg %p32
      %p150 = pneg %p56
      %p151 = pneg %p53
      %p152 = pneg %p77
      %p153 = pneg %p74
      %p154 = pneg %p103
      %p155 = pneg %p100
      %p156 = scmp.lt.s32.totalorder %s14, 1
      %s157 = scalar_select %p156, %s14, 1
      %s158 = smul.addr %s157, 5
      %s159 = smul.addr %s158, 4
      %s160 = scalar_lea.vmem %s3, %s159
      %p161 = scmp.lt.s32.totalorder %s14, 1
      %s162 = scalar_select %p161, %s14, 1
      %s163 = smul.addr %s162, 10
      %s164 = smul.addr %s163, 4
      %s165 = scalar_lea.vmem %s0, %s164
      %p166 = scmp.lt.s32.totalorder %s14, 1
      %s167 = scalar_select %p166, %s14, 1
      %s168 = smul.addr %s167, 5
      %s169 = smul.addr %s168, 4
      %s170 = scalar_lea.vmem %s3, %s169
      %v171 = vld [vmem:[%s1] sm:$0x1]
      %v172 = vld [vmem:[%s2] sm:$0x1]
      %v173 = vlaneseq
      %v174 = vshrl.u32 %v173, 7
      %v175 = vadd.s32 %v174, 8
      %v176 = vadd.s32 %v174, 16
      %v177 = vadd.s32 %v174, 24
      %v178 = vadd.s32 %v174, 32
      %v179 = vld [vmem:[%s165] sm:$0xf]
      %v180 = vld [vmem:[%s165 + $0x8] sm:$0xf]
      %v181 = vld [vmem:[%s165 + $0x10] sm:$0xf]
      %v182 = vld [vmem:[%s165 + $0x18] sm:$0xf]
      %v183 = vld [vmem:[%s165 + $0x20] sm:$0xf]
      %v184 = vunpack.c.l.bf16 %v179
      %v185 = vunpack.c.l.bf16 %v180
      %v186 = vunpack.c.l.bf16 %v181
      %v187 = vunpack.c.l.bf16 %v182
      %v188 = vunpack.c.l.bf16 %v183
      %v189 = vld [vmem:[%s165 + $0x4] sm:$0xf]
      %v190 = vld [vmem:[%s165 + $0xc] sm:$0xf]
      %v191 = vld [vmem:[%s165 + $0x14] sm:$0xf]
      %v192 = vld [vmem:[%s165 + $0x1c] sm:$0xf]
      %v193 = vld [vmem:[%s165 + $0x24] sm:$0xf]
      %v194 = vunpack.c.l.bf16 %v189
      %v195 = vunpack.c.l.bf16 %v190
      %v196 = vunpack.c.l.bf16 %v191
      %v197 = vunpack.c.l.bf16 %v192
      %v198 = vunpack.c.l.bf16 %v193
      %v200 = vperm.slane %v171, 0
      %v202 = vmul.f32 %v184, %v200
      %v203 = vmul.f32 %v185, %v200
      %v204 = vmul.f32 %v186, %v200
      %v205 = vmul.f32 %v187, %v200
      %v206 = vmul.f32 %v188, %v200
      %v208 = vperm.slane %v172, 0
      %v210 = vadd.f32 %v202, %v208
      %v211 = vadd.f32 %v203, %v208
      %v212 = vadd.f32 %v204, %v208
      %v213 = vadd.f32 %v205, %v208
      %v214 = vadd.f32 %v206, %v208
      %v215 = vmax.f32 %v210, 0.0
      %v216 = vmax.f32 %v211, 0.0
      %v217 = vmax.f32 %v212, 0.0
      %v218 = vmax.f32 %v213, 0.0
      %v219 = vmax.f32 %v214, 0.0
      %v220 = vmul.f32 %v194, %v200
      %v221 = vmul.f32 %v195, %v200
      %v222 = vmul.f32 %v196, %v200
      %v223 = vmul.f32 %v197, %v200
      %v224 = vmul.f32 %v198, %v200
      %v225 = vadd.f32 %v220, %v208
      %v226 = vadd.f32 %v221, %v208
      %v227 = vadd.f32 %v222, %v208
      %v228 = vadd.f32 %v223, %v208
      %v229 = vadd.f32 %v224, %v208
      %v230 = vmax.f32 %v225, 0.0
      %v231 = vmax.f32 %v226, 0.0
      %v232 = vmax.f32 %v227, 0.0
      %v233 = vmax.f32 %v228, 0.0
      %v234 = vmax.f32 %v229, 0.0
      %v235 = vmul.u32 %v174, 2
      %v236 = vmul.u32 %v175, 2
      %v237 = vmul.u32 %v176, 2
      %v238 = vmul.u32 %v177, 2
      %v239 = vmul.u32 %v178, 2
      %vm240 = vcmp.lt.s32.totalorder %v235, 63
      %vm241 = vcmp.lt.s32.totalorder %v236, 63
      %vm242 = vcmp.lt.s32.totalorder %v237, 63
      %vm243 = vcmp.lt.s32.totalorder %v238, 63
      %vm244 = vcmp.lt.s32.totalorder %v239, 63
      %v245 = vsel %vm240, %v215, 0.0
      %v246 = vsel %vm241, %v216, 0.0
      %v247 = vsel %vm242, %v217, 0.0
      %v248 = vsel %vm243, %v218, 0.0
      %v249 = vsel %vm244, %v219, 0.0
      %v250 = vadd.s32 %v235, 1
      %v251 = vadd.s32 %v236, 1
      %v252 = vadd.s32 %v237, 1
      %v253 = vadd.s32 %v238, 1
      %v254 = vadd.s32 %v239, 1
      %vm255 = vcmp.lt.s32.totalorder %v250, 63
      %vm256 = vcmp.lt.s32.totalorder %v251, 63
      %vm257 = vcmp.lt.s32.totalorder %v252, 63
      %vm258 = vcmp.lt.s32.totalorder %v253, 63
      %vm259 = vcmp.lt.s32.totalorder %v254, 63
      %v260 = vsel %vm255, %v230, 0.0
      %v261 = vsel %vm256, %v231, 0.0
      %v262 = vsel %vm257, %v232, 0.0
      %v263 = vsel %vm258, %v233, 0.0
      %v264 = vsel %vm259, %v234, 0.0
      %vm270 = vcmask 1046528
      %v271 = vrot.slane %v245, 1
      %v272 = vrot.slane %v246, 1
      %v273 = vsel %vm270, %v271, %v272
      %v274 = vrot.slane %v247, 1
      %v275 = vsel %vm270, %v272, %v274
      %v276 = vrot.slane %v248, 1
      %v277 = vsel %vm270, %v274, %v276
      %v278 = vrot.slane %v249, 1
      %v279 = vsel %vm270, %v276, %v278
      %v285 = vsel %vm270, %v278, 0.0
      %v291 = vrot.slane %v260, 1
      %v292 = vrot.slane %v261, 1
      %v293 = vsel %vm270, %v291, %v292
      %v294 = vrot.slane %v262, 1
      %v295 = vsel %vm270, %v292, %v294
      %v296 = vrot.slane %v263, 1
      %v297 = vsel %vm270, %v294, %v296
      %v298 = vrot.slane %v264, 1
      %v299 = vsel %vm270, %v296, %v298
      %v305 = vsel %vm270, %v298, 0.0
      %v306 = vadd.f32 %v245, %v260
      %v307 = vadd.f32 %v246, %v261
      %v308 = vadd.f32 %v247, %v262
      %v309 = vadd.f32 %v248, %v263
      %v310 = vadd.f32 %v249, %v264
      %v311 = vadd.f32 %v306, %v273
      %v312 = vadd.f32 %v307, %v275
      %v313 = vadd.f32 %v308, %v277
      %v314 = vadd.f32 %v309, %v279
      %v315 = vadd.f32 %v310, %v285
      %v316 = vadd.f32 %v311, %v293
      %v317 = vadd.f32 %v312, %v295
      %v318 = vadd.f32 %v313, %v297
      %v319 = vadd.f32 %v314, %v299
      %v320 = vadd.f32 %v315, %v305
      %vm321 = vcmp.lt.s32.totalorder %v174, 30
      %vm322 = vcmp.lt.s32.totalorder %v175, 30
      %vm323 = vcmp.lt.s32.totalorder %v176, 30
      %vm324 = vcmp.lt.s32.totalorder %v177, 30
      %vm325 = vcmp.lt.s32.totalorder %v178, 30
      %v326 = vmul.f32 %v316, 0.25
      %v327 = vmul.f32 %v317, 0.25
      %v328 = vmul.f32 %v318, 0.25
      %v329 = vmul.f32 %v319, 0.25
      %v330 = vmul.f32 %v320, 0.25
      %v331 = vsel %vm321, %v326, 0.0
      %v332 = vsel %vm322, %v327, 0.0
      %v333 = vsel %vm323, %v328, 0.0
      %v334 = vsel %vm324, %v329, 0.0
      %v335 = vsel %vm325, %v330, 0.0
      %v336 = vpack.c.bf16 %v331, %v331
      %v337 = vpack.c.bf16 %v332, %v332
      %v338 = vpack.c.bf16 %v333, %v333
      %v339 = vpack.c.bf16 %v334, %v334
      %v340 = vpack.c.bf16 %v335, %v335
      %341 = vst [vmem:[%s170] sm:$0xf] %v336
      %342 = vst [vmem:[%s170 + $0x4] sm:$0xf] %v337
      %343 = vst [vmem:[%s170 + $0x8] sm:$0xf] %v338
      %344 = vst [vmem:[%s170 + $0xc] sm:$0xf] %v339
      %345 = vst [vmem:[%s170 + $0x10] sm:$0xf] %v340
      %p346 = scmp.lt.s32.totalorder %s14, 1
      %s347 = scalar_select %p346, %s14, 1
      %s348 = smul.addr %s347, 5
      %s349 = smul.addr %s348, 4
      %s350 = scalar_lea.vmem %s3, %s349
      // Predicated region
      $region33: #{cnn_frontend.9} parent=31 // pred_check
        %p351 = pneg %p100
      $region34: #{cnn_frontend.9} parent=31 // pred_check_branch
        %353 = sbr.rel (%p351) target = $region36
      $region35: #{cnn_frontend.9} parent=31 // pred_region
        _
      $region36: #{cnn_frontend.9} parent=31 // pred_fallthru
        _
    $region32: #{cnn_frontend.9} parent=5 // pred_fallthru
      _
    %p354 = scmp.le.s32.totalorder 2, %s9
    // Predicated region
    $region37: #{cnn_frontend.9} parent=5 // pred_check
      %p355 = pneg %p354
    $region38: #{cnn_frontend.9} parent=5 // pred_check_branch
      %357 = sbr.rel (%p355) target = $region40
    $region39: #{cnn_frontend.9} parent=5 // pred_region
      %s358 = ssub.s32 %s9, 2
      // Predicated region
      $region41: #{cnn_frontend.9} parent=39 // pred_check
        %p359 = pneg %p106
      $region42: #{cnn_frontend.9} parent=39 // pred_check_branch
        %361 = sbr.rel (%p359) target = $region44
      $region43: #{cnn_frontend.9} parent=39 // pred_region
        %p362 = scmp.lt.s32.totalorder %s15, 1
        %s363 = scalar_select %p362, %s15, 1
        %s364 = smul.addr %s363, 5
        %s365 = smul.addr %s364, 4
        %s366 = scalar_lea.vmem %s3, %s365
      $region44: #{cnn_frontend.9} parent=39 // pred_fallthru
        _
    $region40: #{cnn_frontend.9} parent=5 // pred_fallthru
      _
  $region6: #{cnn_frontend.9} parent=0 // loop_footer
    %s13 = sadd.s32 1, %s9
  $region7: #{cnn_frontend.9} parent=0 // loop_footer_branch
    %8 = sbr.rel target = $region3
  $region8: #{cnn_frontend.9} parent=0 // loop_exit
    _

// kernel: cnn_frontend.6
$region0: #{cnn_frontend.6}
  #allocation0 [shape = 'u32[]', space=smem, size = 0x4, offset = 0x4, fixed_abs, tag = 'smem constant byte address 0x4 - core index']
  #allocation1 [shape = 'u32[72,128]{1,0:T(1,128)}', space=vmem, size = 0x9000, scoped, tag = 'internal scratch']
  %s0 = inlined_call_operand.vmem [shape: bf16[2,536,8], index: 0, kind: input, shape index: {}]
  %s1 = inlined_call_operand.vmem [shape: bf16[4,8,64], index: 1, kind: input, shape index: {}]
  %s2 = inlined_call_operand.vmem [shape: bf16[64,64], index: 2, kind: input, shape index: {}]
  %s3 = inlined_call_operand.vmem [shape: bf16[64,64], index: 3, kind: input, shape index: {}]
  %s4 = inlined_call_operand.vmem [shape: bf16[2,528,64], index: 4, kind: output, shape index: {0}]
  %s5 = inlined_call_operand.vmem [shape: f32[2,1,64], index: 5, kind: output, shape index: {1}]
  %s6 = inlined_call_operand.vmem [shape: f32[2,1,64], index: 6, kind: output, shape index: {2}]
  %7 = xla_tuple %s4, %s5, %s6
  %s8 = sld [smem:[#allocation0]]
  $region65: #{cnn_frontend.6} parent=0
    _
  %s10 = ssub.s32 1, %s8
  %s11 = scalar_select 0, %s10, %s8
  loop: start=0, step=1, limit=4
  $region2: #{cnn_frontend.6} parent=0 // loop_pre_header
    _
  $region3: #{cnn_frontend.6} parent=0 // loop_header
    %s13 = sphi 0, %s17
    %p14 = scmp.ge.s32.totalorder %s13, 4
    %s23 = sphi 0, %s25
    %s26 = sphi 0, %s23
    %s27 = sphi 0, %s26
    %s43 = sphi 0, %s27
    %s47 = sphi 0, %s47
    %s49 = sphi 0, %s47
    %s50 = sphi 0, %s49
    %s64 = sphi 0, %s50
    %s68 = sphi 0, %s68
    %s70 = sphi 0, %s68
    %s71 = sphi 0, %s70
    %s85 = sphi 0, %s71
    %s89 = sphi 0, %s89
    %s91 = sphi 0, %s89
    %s92 = sphi 0, %s91
    %s106 = sphi 0, %s92
    %s112 = sphi 0, %s114
    %s115 = sphi 0, %s112
    %s116 = sphi 0, %s115
    %s132 = sphi 0, %s116
    %s138 = sphi 0, %s140
    %s141 = sphi 0, %s138
    %s142 = sphi 0, %s141
    %s158 = sphi 0, %s142
    %s164 = sphi 0, %s166
    %s167 = sphi 0, %s164
    %s168 = sphi 0, %s167
    %s184 = sphi 0, %s168
  $region4: #{cnn_frontend.6} parent=0 // loop_header_branch
    %16 = sbr.rel (%p14) target = $region8
  $region5: #{cnn_frontend.6} parent=0 // loop_body
    %s18 = ssub.s32 %s13, 1
    %s19 = ssub.s32 %s13, 2
    %s20 = sadd.s32 %s13, 1
    %s21 = ssub.s32 %s13, %s20
    %p22 = scmp.eq.s32.totalorder %s21, 0
    %s24 = sadd.s32 %s23, 1
    %s25 = scalar_select %p22, %s23, %s24
    %p28 = pneg %p22
    %p29 = scmp.eq.s32.totalorder %s13, 1
    %p30 = por %p28, %p29
    %p31 = scmp.ne.s32.totalorder %s23, %s26
    %p32 = scmp.eq.s32.totalorder %s13, 0
    %p33 = por %p31, %p32
    %p34 = scmp.ne.s32.totalorder %s23, %s26
    %p35 = scmp.eq.s32.totalorder %s18, 1
    %p36 = por %p34, %p35
    %p37 = scmp.ne.s32.totalorder %s26, %s27
    %p38 = scmp.eq.s32.totalorder %s18, 0
    %p39 = por %p37, %p38
    %p40 = scmp.ne.s32.totalorder %s26, %s27
    %p41 = scmp.eq.s32.totalorder %s19, 1
    %p42 = por %p40, %p41
    %p44 = scmp.ne.s32.totalorder %s27, %s43
    %p45 = scmp.eq.s32.totalorder %s19, 0
    %p46 = por %p44, %p45
    %s48 = sadd.s32 %s47, 1
    %p51 = scmp.eq.s32.totalorder %s13, 1
    %p52 = scmp.ne.s32.totalorder %s47, %s49
    %p53 = scmp.eq.s32.totalorder %s13, 0
    %p54 = por %p52, %p53
    %p55 = scmp.ne.s32.totalorder %s47, %s49
    %p56 = scmp.eq.s32.totalorder %s18, 1
    %p57 = por %p55, %p56
    %p58 = scmp.ne.s32.totalorder %s49, %s50
    %p59 = scmp.eq.s32.totalorder %s18, 0
    %p60 = por %p58, %p59
    %p61 = scmp.ne.s32.totalorder %s49, %s50
    %p62 = scmp.eq.s32.totalorder %s19, 1
    %p63 = por %p61, %p62
    %p65 = scmp.ne.s32.totalorder %s50, %s64
    %p66 = scmp.eq.s32.totalorder %s19, 0
    %p67 = por %p65, %p66
    %s69 = sadd.s32 %s68, 1
    %p72 = scmp.eq.s32.totalorder %s13, 1
    %p73 = scmp.ne.s32.totalorder %s68, %s70
    %p74 = scmp.eq.s32.totalorder %s13, 0
    %p75 = por %p73, %p74
    %p76 = scmp.ne.s32.totalorder %s68, %s70
    %p77 = scmp.eq.s32.totalorder %s18, 1
    %p78 = por %p76, %p77
    %p79 = scmp.ne.s32.totalorder %s70, %s71
    %p80 = scmp.eq.s32.totalorder %s18, 0
    %p81 = por %p79, %p80
    %p82 = scmp.ne.s32.totalorder %s70, %s71
    %p83 = scmp.eq.s32.totalorder %s19, 1
    %p84 = por %p82, %p83
    %p86 = scmp.ne.s32.totalorder %s71, %s85
    %p87 = scmp.eq.s32.totalorder %s19, 0
    %p88 = por %p86, %p87
    %s90 = sadd.s32 %s89, 1
    %p93 = scmp.eq.s32.totalorder %s13, 1
    %p94 = scmp.ne.s32.totalorder %s89, %s91
    %p95 = scmp.eq.s32.totalorder %s13, 0
    %p96 = por %p94, %p95
    %p97 = scmp.ne.s32.totalorder %s89, %s91
    %p98 = scmp.eq.s32.totalorder %s18, 1
    %p99 = por %p97, %p98
    %p100 = scmp.ne.s32.totalorder %s91, %s92
    %p101 = scmp.eq.s32.totalorder %s18, 0
    %p102 = por %p100, %p101
    %p103 = scmp.ne.s32.totalorder %s91, %s92
    %p104 = scmp.eq.s32.totalorder %s19, 1
    %p105 = por %p103, %p104
    %p107 = scmp.ne.s32.totalorder %s92, %s106
    %p108 = scmp.eq.s32.totalorder %s19, 0
    %p109 = por %p107, %p108
    %s110 = ssub.s32 %s13, %s20
    %p111 = scmp.eq.s32.totalorder %s110, 0
    %s113 = sadd.s32 %s112, 1
    %s114 = scalar_select %p111, %s112, %s113
    %p117 = pneg %p111
    %p118 = scmp.eq.s32.totalorder %s13, 1
    %p119 = por %p117, %p118
    %p120 = scmp.ne.s32.totalorder %s112, %s115
    %p121 = scmp.eq.s32.totalorder %s13, 0
    %p122 = por %p120, %p121
    %p123 = scmp.ne.s32.totalorder %s112, %s115
    %p124 = scmp.eq.s32.totalorder %s18, 1
    %p125 = por %p123, %p124
    %p126 = scmp.ne.s32.totalorder %s115, %s116
    %p127 = scmp.eq.s32.totalorder %s18, 0
    %p128 = por %p126, %p127
    %p129 = scmp.ne.s32.totalorder %s115, %s116
    %p130 = scmp.eq.s32.totalorder %s19, 1
    %p131 = por %p129, %p130
    %p133 = scmp.ne.s32.totalorder %s116, %s132
    %p134 = scmp.eq.s32.totalorder %s19, 0
    %p135 = por %p133, %p134
    %s136 = ssub.s32 %s13, %s20
    %p137 = scmp.eq.s32.totalorder %s136, 0
    %s139 = sadd.s32 %s138, 1
    %s140 = scalar_select %p137, %s138, %s139
    %p143 = pneg %p137
    %p144 = scmp.eq.s32.totalorder %s13, 1
    %p145 = por %p143, %p144
    %p146 = scmp.ne.s32.totalorder %s138, %s141
    %p147 = scmp.eq.s32.totalorder %s13, 0
    %p148 = por %p146, %p147
    %p149 = scmp.ne.s32.totalorder %s138, %s141
    %p150 = scmp.eq.s32.totalorder %s18, 1
    %p151 = por %p149, %p150
    %p152 = scmp.ne.s32.totalorder %s141, %s142
    %p153 = scmp.eq.s32.totalorder %s18, 0
    %p154 = por %p152, %p153
    %p155 = scmp.ne.s32.totalorder %s141, %s142
    %p156 = scmp.eq.s32.totalorder %s19, 1
    %p157 = por %p155, %p156
    %p159 = scmp.ne.s32.totalorder %s142, %s158
    %p160 = scmp.eq.s32.totalorder %s19, 0
    %p161 = por %p159, %p160
    %s162 = ssub.s32 %s13, %s20
    %p163 = scmp.eq.s32.totalorder %s162, 0
    %s165 = sadd.s32 %s164, 1
    %s166 = scalar_select %p163, %s164, %s165
    %p169 = pneg %p163
    %p170 = scmp.eq.s32.totalorder %s13, 1
    %p171 = por %p169, %p170
    %p172 = scmp.ne.s32.totalorder %s164, %s167
    %p173 = scmp.eq.s32.totalorder %s13, 0
    %p174 = por %p172, %p173
    %p175 = scmp.ne.s32.totalorder %s164, %s167
    %p176 = scmp.eq.s32.totalorder %s18, 1
    %p177 = por %p175, %p176
    %p178 = scmp.ne.s32.totalorder %s167, %s168
    %p179 = scmp.eq.s32.totalorder %s18, 0
    %p180 = por %p178, %p179
    %p181 = scmp.ne.s32.totalorder %s167, %s168
    %p182 = scmp.eq.s32.totalorder %s19, 1
    %p183 = por %p181, %p182
    %p185 = scmp.ne.s32.totalorder %s168, %s184
    %p186 = scmp.eq.s32.totalorder %s19, 0
    %p187 = por %p185, %p186
    %p188 = scmp.le.s32.totalorder 1, %s13
    %p189 = scmp.lt.s32.totalorder %s13, 3
    %p190 = pnand %p188, %p189
    %p191 = pneg %p190
    // Predicated region
    $region9: #{cnn_frontend.6} parent=5 // pred_check
      _
    $region10: #{cnn_frontend.6} parent=5 // pred_check_branch
      %193 = sbr.rel (%p190) target = $region12
    $region11: #{cnn_frontend.6} parent=5 // pred_region
      %s194 = ssub.s32 %s13, 1
      // Predicated region
      $region13: #{cnn_frontend.6} parent=11 // pred_check
        %p195 = pneg %p60
      $region14: #{cnn_frontend.6} parent=11 // pred_check_branch
        %197 = sbr.rel (%p195) target = $region16
      $region15: #{cnn_frontend.6} parent=11 // pred_region
        _
      $region16: #{cnn_frontend.6} parent=11 // pred_fallthru
        _
      // Predicated region
      $region17: #{cnn_frontend.6} parent=11 // pred_check
        %p198 = pneg %p81
      $region18: #{cnn_frontend.6} parent=11 // pred_check_branch
        %200 = sbr.rel (%p198) target = $region20
      $region19: #{cnn_frontend.6} parent=11 // pred_region
        _
      $region20: #{cnn_frontend.6} parent=11 // pred_fallthru
        _
      // Predicated region
      $region21: #{cnn_frontend.6} parent=11 // pred_check
        %p201 = pneg %p102
      $region22: #{cnn_frontend.6} parent=11 // pred_check_branch
        %203 = sbr.rel (%p201) target = $region24
      $region23: #{cnn_frontend.6} parent=11 // pred_region
        _
      $region24: #{cnn_frontend.6} parent=11 // pred_fallthru
        _
    $region12: #{cnn_frontend.6} parent=5 // pred_fallthru
      _
    %p204 = scmp.lt.s32.totalorder %s13, 2
    // Predicated region
    $region25: #{cnn_frontend.6} parent=5 // pred_check
      %p205 = pneg %p204
    $region26: #{cnn_frontend.6} parent=5 // pred_check_branch
      %207 = sbr.rel (%p205) target = $region28
    $region27: #{cnn_frontend.6} parent=5 // pred_region
      // Predicated region
      $region29: #{cnn_frontend.6} parent=27 // pred_check
        %p208 = pneg %p33
      $region30: #{cnn_frontend.6} parent=27 // pred_check_branch
        %210 = sbr.rel (%p208) target = $region32
      $region31: #{cnn_frontend.6} parent=27 // pred_region
        %p211 = scmp.lt.s32.totalorder %s13, 1
        %s212 = scalar_select %p211, %s13, 1
        %s213 = smul.addr %s212, 67
        %s214 = smul.addr %s213, 4
        %s215 = scalar_lea.vmem %s0, %s214
      $region32: #{cnn_frontend.6} parent=27 // pred_fallthru
        _
    $region28: #{cnn_frontend.6} parent=5 // pred_fallthru
      _
    %p216 = scmp.le.s32.totalorder 1, %s13
    %p217 = scmp.lt.s32.totalorder %s13, 3
    %p218 = pnand %p216, %p217
    %p219 = pneg %p218
    // Predicated region
    $region33: #{cnn_frontend.6} parent=5 // pred_check
      _
    $region34: #{cnn_frontend.6} parent=5 // pred_check_branch
      %221 = sbr.rel (%p218) target = $region36
    $region35: #{cnn_frontend.6} parent=5 // pred_region
      %s222 = ssub.s32 %s13, 1
      %p223 = scmp.lt.s32.totalorder %s18, 1
      %s224 = scalar_select %p223, %s18, 1
      %s225 = smul.addr %s224, 67
      %s226 = smul.addr %s225, 4
      %s227 = scalar_lea.vmem %s0, %s226
      %p228 = pneg %p39
      %p229 = pneg %p36
      %p230 = pneg %p60
      %p231 = pneg %p57
      %p232 = pneg %p81
      %p233 = pneg %p78
      %p234 = pneg %p102
      %p235 = pneg %p99
      %p236 = pneg %p128
      %p237 = pneg %p125
      %p238 = scmp.lt.s32.totalorder %s18, 1
      %s239 = scalar_select %p238, %s18, 1
      %s240 = smul.addr %s239, 66
      %s241 = smul.addr %s240, 4
      %s242 = scalar_lea.vmem %s4, %s241
      %p243 = pneg %p154
      %p244 = pneg %p151
      %p245 = scmp.lt.s32.totalorder %s18, 1
      %s246 = scalar_select %p245, %s18, 1
      %s247 = scalar_lea.vmem %s5, %s246
      %p248 = pneg %p180
      %p249 = pneg %p177
      %p250 = scmp.lt.s32.totalorder %s18, 1
      %s251 = scalar_select %p250, %s18, 1
      %s252 = scalar_lea.vmem %s6, %s251
      %p253 = scmp.lt.s32.totalorder %s18, 1
      %s254 = scalar_select %p253, %s18, 1
      %s255 = smul.addr %s254, 67
      %s256 = smul.addr %s255, 4
      %s257 = scalar_lea.vmem %s0, %s256
      %p258 = scmp.lt.s32.totalorder %s18, 1
      %s259 = scalar_select %p258, %s18, 1
      %s260 = smul.addr %s259, 66
      %s261 = smul.addr %s260, 4
      %s262 = scalar_lea.vmem %s4, %s261
      %p263 = scmp.lt.s32.totalorder %s18, 1
      %s264 = scalar_select %p263, %s18, 1
      %s265 = scalar_lea.vmem %s5, %s264
      %p266 = scmp.lt.s32.totalorder %s18, 1
      %s267 = scalar_select %p266, %s18, 1
      %s268 = scalar_lea.vmem %s6, %s267
      %v270 = vld [vmem:[%s257] sm:$0xf]
      %v271 = vld [vmem:[%s257 + $0x4] sm:$0xf]
      %v272 = vld [vmem:[%s257 + $0x8] sm:$0xf]
      %v273 = vld [vmem:[%s257 + $0xc] sm:$0xf]
      %v274 = vld [vmem:[%s257 + $0x10] sm:$0xf]
      %v275 = vld [vmem:[%s257 + $0x14] sm:$0xf]
      %v276 = vld [vmem:[%s257 + $0x18] sm:$0xf]
      %v277 = vld [vmem:[%s257 + $0x1c] sm:$0xf]
      %v278 = vld [vmem:[%s257 + $0x20] sm:$0xf]
      %v279 = vld [vmem:[%s257 + $0x24] sm:$0xf]
      %v280 = vld [vmem:[%s257 + $0x28] sm:$0xf]
      %v281 = vld [vmem:[%s257 + $0x2c] sm:$0xf]
      %v282 = vld [vmem:[%s257 + $0x30] sm:$0xf]
      %v283 = vld [vmem:[%s257 + $0x34] sm:$0xf]
      %v284 = vld [vmem:[%s257 + $0x38] sm:$0xf]
      %v285 = vld [vmem:[%s257 + $0x3c] sm:$0xf]
      %v286 = vld [vmem:[%s257 + $0x40] sm:$0xf]
      %v287 = vld [vmem:[%s257 + $0x44] sm:$0xf]
      %v288 = vld [vmem:[%s257 + $0x48] sm:$0xf]
      %v289 = vld [vmem:[%s257 + $0x4c] sm:$0xf]
      %v290 = vld [vmem:[%s257 + $0x50] sm:$0xf]
      %v291 = vld [vmem:[%s257 + $0x54] sm:$0xf]
      %v292 = vld [vmem:[%s257 + $0x58] sm:$0xf]
      %v293 = vld [vmem:[%s257 + $0x5c] sm:$0xf]
      %v294 = vld [vmem:[%s257 + $0x60] sm:$0xf]
      %v295 = vld [vmem:[%s257 + $0x64] sm:$0xf]
      %v296 = vld [vmem:[%s257 + $0x68] sm:$0xf]
      %v297 = vld [vmem:[%s257 + $0x6c] sm:$0xf]
      %v298 = vld [vmem:[%s257 + $0x70] sm:$0xf]
      %v299 = vld [vmem:[%s257 + $0x74] sm:$0xf]
      %v300 = vld [vmem:[%s257 + $0x78] sm:$0xf]
      %v301 = vld [vmem:[%s257 + $0x7c] sm:$0xf]
      %v302 = vld [vmem:[%s257 + $0x80] sm:$0xf]
      %v303 = vld [vmem:[%s257 + $0x84] sm:$0xf]
      %v304 = vld [vmem:[%s257 + $0x88] sm:$0xf]
      %v305 = vld [vmem:[%s257 + $0x8c] sm:$0xf]
      %v306 = vld [vmem:[%s257 + $0x90] sm:$0xf]
      %v307 = vld [vmem:[%s257 + $0x94] sm:$0xf]
      %v308 = vld [vmem:[%s257 + $0x98] sm:$0xf]
      %v309 = vld [vmem:[%s257 + $0x9c] sm:$0xf]
      %v310 = vld [vmem:[%s257 + $0xa0] sm:$0xf]
      %v311 = vld [vmem:[%s257 + $0xa4] sm:$0xf]
      %v312 = vld [vmem:[%s257 + $0xa8] sm:$0xf]
      %v313 = vld [vmem:[%s257 + $0xac] sm:$0xf]
      %v314 = vld [vmem:[%s257 + $0xb0] sm:$0xf]
      %v315 = vld [vmem:[%s257 + $0xb4] sm:$0xf]
      %v316 = vld [vmem:[%s257 + $0xb8] sm:$0xf]
      %v317 = vld [vmem:[%s257 + $0xbc] sm:$0xf]
      %v318 = vld [vmem:[%s257 + $0xc0] sm:$0xf]
      %v319 = vld [vmem:[%s257 + $0xc4] sm:$0xf]
      %v320 = vld [vmem:[%s257 + $0xc8] sm:$0xf]
      %v321 = vld [vmem:[%s257 + $0xcc] sm:$0xf]
      %v322 = vld [vmem:[%s257 + $0xd0] sm:$0xf]
      %v323 = vld [vmem:[%s257 + $0xd4] sm:$0xf]
      %v324 = vld [vmem:[%s257 + $0xd8] sm:$0xf]
      %v325 = vld [vmem:[%s257 + $0xdc] sm:$0xf]
      %v326 = vld [vmem:[%s257 + $0xe0] sm:$0xf]
      %v327 = vld [vmem:[%s257 + $0xe4] sm:$0xf]
      %v328 = vld [vmem:[%s257 + $0xe8] sm:$0xf]
      %v329 = vld [vmem:[%s257 + $0xec] sm:$0xf]
      %v330 = vld [vmem:[%s257 + $0xf0] sm:$0xf]
      %v331 = vld [vmem:[%s257 + $0xf4] sm:$0xf]
      %v332 = vld [vmem:[%s257 + $0xf8] sm:$0xf]
      %v333 = vld [vmem:[%s257 + $0xfc] sm:$0xf]
      %v334 = vld [vmem:[%s257 + $0x100] sm:$0xf]
      %v335 = vld [vmem:[%s257 + $0x104] sm:$0xf]
      %v336 = vld [vmem:[%s1] sm:$0xf]
      %v337 = vld [vmem:[%s257 + $0x108] sm:$0x1]
      %s338 = scalar_lea.vmem %s1, 4
      %v339 = vld [vmem:[%s338] sm:$0xf]
      %v407 = vunpack.c.l.b16 %v270
      %v408 = vunpack.c.l.b16 %v271
      %v409 = vunpack.c.l.b16 %v272
      %v410 = vunpack.c.l.b16 %v273
      %v411 = vunpack.c.l.b16 %v274
      %v412 = vunpack.c.l.b16 %v275
      %v413 = vunpack.c.l.b16 %v276
      %v414 = vunpack.c.l.b16 %v277
      %v415 = vunpack.c.l.b16 %v278
      %v416 = vunpack.c.l.b16 %v279
      %v417 = vunpack.c.l.b16 %v280
      %v418 = vunpack.c.l.b16 %v281
      %v419 = vunpack.c.l.b16 %v282
      %v420 = vunpack.c.l.b16 %v283
      %v421 = vunpack.c.l.b16 %v284
      %v422 = vunpack.c.l.b16 %v285
      %v423 = vunpack.c.l.b16 %v286
      %v424 = vunpack.c.l.b16 %v287
      %v425 = vunpack.c.l.b16 %v288
      %v426 = vunpack.c.l.b16 %v289
      %v427 = vunpack.c.l.b16 %v290
      %v428 = vunpack.c.l.b16 %v291
      %v429 = vunpack.c.l.b16 %v292
      %v430 = vunpack.c.l.b16 %v293
      %v431 = vunpack.c.l.b16 %v294
      %v432 = vunpack.c.l.b16 %v295
      %v433 = vunpack.c.l.b16 %v296
      %v434 = vunpack.c.l.b16 %v297
      %v435 = vunpack.c.l.b16 %v298
      %v436 = vunpack.c.l.b16 %v299
      %v437 = vunpack.c.l.b16 %v300
      %v438 = vunpack.c.l.b16 %v301
      %v439 = vunpack.c.l.b16 %v302
      %v440 = vunpack.c.l.b16 %v303
      %v441 = vunpack.c.l.b16 %v304
      %v442 = vunpack.c.l.b16 %v305
      %v443 = vunpack.c.l.b16 %v306
      %v444 = vunpack.c.l.b16 %v307
      %v445 = vunpack.c.l.b16 %v308
      %v446 = vunpack.c.l.b16 %v309
      %v447 = vunpack.c.l.b16 %v310
      %v448 = vunpack.c.l.b16 %v311
      %v449 = vunpack.c.l.b16 %v312
      %v450 = vunpack.c.l.b16 %v313
      %v451 = vunpack.c.l.b16 %v314
      %v452 = vunpack.c.l.b16 %v315
      %v453 = vunpack.c.l.b16 %v316
      %v454 = vunpack.c.l.b16 %v317
      %v455 = vunpack.c.l.b16 %v318
      %v456 = vunpack.c.l.b16 %v319
      %v457 = vunpack.c.l.b16 %v320
      %v458 = vunpack.c.l.b16 %v321
      %v459 = vunpack.c.l.b16 %v322
      %v460 = vunpack.c.l.b16 %v323
      %v461 = vunpack.c.l.b16 %v324
      %v462 = vunpack.c.l.b16 %v325
      %v463 = vunpack.c.l.b16 %v326
      %v464 = vunpack.c.l.b16 %v327
      %v465 = vunpack.c.l.b16 %v328
      %v466 = vunpack.c.l.b16 %v329
      %v467 = vunpack.c.l.b16 %v330
      %v468 = vunpack.c.l.b16 %v331
      %v469 = vunpack.c.l.b16 %v332
      %v470 = vunpack.c.l.b16 %v333
      %v471 = vunpack.c.l.b16 %v334
      %v472 = vunpack.c.l.b16 %v335
      %v473 = vunpack.c.l.b16 %v337
      %v474 = vpack.c.b16 %v408, %v407
      %v475 = vpack.c.b16 %v410, %v409
      %v476 = vpack.c.b16 %v412, %v411
      %v477 = vpack.c.b16 %v414, %v413
      %v478 = vpack.c.b16 %v416, %v415
      %v479 = vpack.c.b16 %v418, %v417
      %v480 = vpack.c.b16 %v420, %v419
      %v481 = vpack.c.b16 %v422, %v421
      %v482 = vpack.c.b16 %v424, %v423
      %v483 = vpack.c.b16 %v426, %v425
      %v484 = vpack.c.b16 %v428, %v427
      %v485 = vpack.c.b16 %v430, %v429
      %v486 = vpack.c.b16 %v432, %v431
      %v487 = vpack.c.b16 %v434, %v433
      %v488 = vpack.c.b16 %v436, %v435
      %v489 = vpack.c.b16 %v438, %v437
      %v490 = vpack.c.b16 %v440, %v439
      %v491 = vpack.c.b16 %v442, %v441
      %v492 = vpack.c.b16 %v444, %v443
      %v493 = vpack.c.b16 %v446, %v445
      %v494 = vpack.c.b16 %v448, %v447
      %v495 = vpack.c.b16 %v450, %v449
      %v496 = vpack.c.b16 %v452, %v451
      %v497 = vpack.c.b16 %v454, %v453
      %v498 = vpack.c.b16 %v456, %v455
      %v499 = vpack.c.b16 %v458, %v457
      %v500 = vpack.c.b16 %v460, %v459
      %v501 = vpack.c.b16 %v462, %v461
      %v502 = vpack.c.b16 %v464, %v463
      %v503 = vpack.c.b16 %v466, %v465
      %v504 = vpack.c.b16 %v468, %v467
      %v505 = vpack.c.b16 %v470, %v469
      %v506 = vpack.c.b16 %v472, %v471
      %v507 = vpack.c.b16 %v473, %v473
      %vm508 = vsmask.f32 7424
      %v510 = vshrl.u32 %v474, 16
      %v512 = vshll.u32 %v474, 16
      %v514 = vrot.slane %v512, 1
      %v515 = vor.u32 %v510, %v514
      %v517 = vshll.u32 %v475, 16
      %v519 = vrot.slane %v517, 1
      %v520 = vsel %vm508, %v515, %v519
      %v521 = vshrl.u32 %v475, 16
      %v523 = vor.u32 %v521, %v519
      %v525 = vshll.u32 %v476, 16
      %v527 = vrot.slane %v525, 1
      %v528 = vsel %vm508, %v523, %v527
      %v529 = vshrl.u32 %v476, 16
      %v531 = vor.u32 %v529, %v527
      %v533 = vshll.u32 %v477, 16
      %v535 = vrot.slane %v533, 1
      %v536 = vsel %vm508, %v531, %v535
      %v537 = vshrl.u32 %v477, 16
      %v539 = vor.u32 %v537, %v535
      %v541 = vshll.u32 %v478, 16
      %v543 = vrot.slane %v541, 1
      %v544 = vsel %vm508, %v539, %v543
      %v545 = vshrl.u32 %v478, 16
      %v547 = vor.u32 %v545, %v543
      %v549 = vshll.u32 %v479, 16
      %v551 = vrot.slane %v549, 1
      %v552 = vsel %vm508, %v547, %v551
      %v553 = vshrl.u32 %v479, 16
      %v555 = vor.u32 %v553, %v551
      %v557 = vshll.u32 %v480, 16
      %v559 = vrot.slane %v557, 1
      %v560 = vsel %vm508, %v555, %v559
      %v561 = vshrl.u32 %v480, 16
      %v563 = vor.u32 %v561, %v559
      %v565 = vshll.u32 %v481, 16
      %v567 = vrot.slane %v565, 1
      %v568 = vsel %vm508, %v563, %v567
      %v569 = vshrl.u32 %v481, 16
      %v571 = vor.u32 %v569, %v567
      %v573 = vshll.u32 %v482, 16
      %v575 = vrot.slane %v573, 1
      %v576 = vsel %vm508, %v571, %v575
      %v577 = vshrl.u32 %v482, 16
      %v579 = vor.u32 %v577, %v575
      %v581 = vshll.u32 %v483, 16
      %v583 = vrot.slane %v581, 1
      %v584 = vsel %vm508, %v579, %v583
      %v585 = vshrl.u32 %v483, 16
      %v587 = vor.u32 %v585, %v583
      %v589 = vshll.u32 %v484, 16
      %v591 = vrot.slane %v589, 1
      %v592 = vsel %vm508, %v587, %v591
      %v593 = vshrl.u32 %v484, 16
      %v595 = vor.u32 %v593, %v591
      %v597 = vshll.u32 %v485, 16
      %v599 = vrot.slane %v597, 1
      %v600 = vsel %vm508, %v595, %v599
      %v601 = vshrl.u32 %v485, 16
      %v603 = vor.u32 %v601, %v599
      %v605 = vshll.u32 %v486, 16
      %v607 = vrot.slane %v605, 1
      %v608 = vsel %vm508, %v603, %v607
      %v609 = vshrl.u32 %v486, 16
      %v611 = vor.u32 %v609, %v607
      %v613 = vshll.u32 %v487, 16
      %v615 = vrot.slane %v613, 1
      %v616 = vsel %vm508, %v611, %v615
      %v617 = vshrl.u32 %v487, 16
      %v619 = vor.u32 %v617, %v615
      %v621 = vshll.u32 %v488, 16
      %v623 = vrot.slane %v621, 1
      %v624 = vsel %vm508, %v619, %v623
      %v625 = vshrl.u32 %v488, 16
      %v627 = vor.u32 %v625, %v623
      %v629 = vshll.u32 %v489, 16
      %v631 = vrot.slane %v629, 1
      %v632 = vsel %vm508, %v627, %v631
      %v633 = vshrl.u32 %v489, 16
      %v635 = vor.u32 %v633, %v631
      %v637 = vshll.u32 %v490, 16
      %v639 = vrot.slane %v637, 1
      %v640 = vsel %vm508, %v635, %v639
      %v641 = vshrl.u32 %v490, 16
      %v643 = vor.u32 %v641, %v639
      %v645 = vshll.u32 %v491, 16
      %v647 = vrot.slane %v645, 1
      %v648 = vsel %vm508, %v643, %v647
      %v649 = vshrl.u32 %v491, 16
      %v651 = vor.u32 %v649, %v647
      %v653 = vshll.u32 %v492, 16
      %v655 = vrot.slane %v653, 1
      %v656 = vsel %vm508, %v651, %v655
      %v657 = vshrl.u32 %v492, 16
      %v659 = vor.u32 %v657, %v655
      %v661 = vshll.u32 %v493, 16
      %v663 = vrot.slane %v661, 1
      %v664 = vsel %vm508, %v659, %v663
      %v665 = vshrl.u32 %v493, 16
      %v667 = vor.u32 %v665, %v663
      %v669 = vshll.u32 %v494, 16
      %v671 = vrot.slane %v669, 1
      %v672 = vsel %vm508, %v667, %v671
      %v673 = vshrl.u32 %v494, 16
      %v675 = vor.u32 %v673, %v671
      %v677 = vshll.u32 %v495, 16
      %v679 = vrot.slane %v677, 1
      %v680 = vsel %vm508, %v675, %v679
      %v681 = vshrl.u32 %v495, 16
      %v683 = vor.u32 %v681, %v679
      %v685 = vshll.u32 %v496, 16
      %v687 = vrot.slane %v685, 1
      %v688 = vsel %vm508, %v683, %v687
      %v689 = vshrl.u32 %v496, 16
      %v691 = vor.u32 %v689, %v687
      %v693 = vshll.u32 %v497, 16
      %v695 = vrot.slane %v693, 1
      %v696 = vsel %vm508, %v691, %v695
      %v697 = vshrl.u32 %v497, 16
      %v699 = vor.u32 %v697, %v695
      %v701 = vshll.u32 %v498, 16
      %v703 = vrot.slane %v701, 1
      %v704 = vsel %vm508, %v699, %v703
      %v705 = vshrl.u32 %v498, 16
      %v707 = vor.u32 %v705, %v703
      %v709 = vshll.u32 %v499, 16
      %v711 = vrot.slane %v709, 1
      %v712 = vsel %vm508, %v707, %v711
      %v713 = vshrl.u32 %v499, 16
      %v715 = vor.u32 %v713, %v711
      %v717 = vshll.u32 %v500, 16
      %v719 = vrot.slane %v717, 1
      %v720 = vsel %vm508, %v715, %v719
      %v721 = vshrl.u32 %v500, 16
      %v723 = vor.u32 %v721, %v719
      %v725 = vshll.u32 %v501, 16
      %v727 = vrot.slane %v725, 1
      %v728 = vsel %vm508, %v723, %v727
      %v729 = vshrl.u32 %v501, 16
      %v731 = vor.u32 %v729, %v727
      %v733 = vshll.u32 %v502, 16
      %v735 = vrot.slane %v733, 1
      %v736 = vsel %vm508, %v731, %v735
      %v737 = vshrl.u32 %v502, 16
      %v739 = vor.u32 %v737, %v735
      %v741 = vshll.u32 %v503, 16
      %v743 = vrot.slane %v741, 1
      %v744 = vsel %vm508, %v739, %v743
      %v745 = vshrl.u32 %v503, 16
      %v747 = vor.u32 %v745, %v743
      %v749 = vshll.u32 %v504, 16
      %v751 = vrot.slane %v749, 1
      %v752 = vsel %vm508, %v747, %v751
      %v753 = vshrl.u32 %v504, 16
      %v755 = vor.u32 %v753, %v751
      %v757 = vshll.u32 %v505, 16
      %v759 = vrot.slane %v757, 1
      %v760 = vsel %vm508, %v755, %v759
      %v761 = vshrl.u32 %v505, 16
      %v763 = vor.u32 %v761, %v759
      %v765 = vshll.u32 %v506, 16
      %v767 = vrot.slane %v765, 1
      %v768 = vsel %vm508, %v763, %v767
      %v769 = vshrl.u32 %v506, 16
      %v771 = vor.u32 %v769, %v767
      %v773 = vshll.u32 %v507, 16
      %v775 = vrot.slane %v773, 1
      %v776 = vsel %vm508, %v771, %v775
      %vm777 = vcmask 64512
      %v779 = vsel %vm777, %v520, 0
      %v782 = vsel %vm777, %v528, 0
      %v785 = vsel %vm777, %v536, 0
      %v788 = vsel %vm777, %v544, 0
      %v791 = vsel %vm777, %v552, 0
      %v794 = vsel %vm777, %v560, 0
      %v797 = vsel %vm777, %v568, 0
      %v800 = vsel %vm777, %v576, 0
      %v803 = vsel %vm777, %v584, 0
      %v806 = vsel %vm777, %v592, 0
      %v809 = vsel %vm777, %v600, 0
      %v812 = vsel %vm777, %v608, 0
      %v815 = vsel %vm777, %v616, 0
      %v818 = vsel %vm777, %v624, 0
      %v821 = vsel %vm777, %v632, 0
      %v824 = vsel %vm777, %v640, 0
      %v827 = vsel %vm777, %v648, 0
      %v830 = vsel %vm777, %v656, 0
      %v833 = vsel %vm777, %v664, 0
      %v836 = vsel %vm777, %v672, 0
      %v839 = vsel %vm777, %v680, 0
      %v842 = vsel %vm777, %v688, 0
      %v845 = vsel %vm777, %v696, 0
      %v848 = vsel %vm777, %v704, 0
      %v851 = vsel %vm777, %v712, 0
      %v854 = vsel %vm777, %v720, 0
      %v857 = vsel %vm777, %v728, 0
      %v860 = vsel %vm777, %v736, 0
      %v863 = vsel %vm777, %v744, 0
      %v866 = vsel %vm777, %v752, 0
      %v869 = vsel %vm777, %v760, 0
      %v872 = vsel %vm777, %v768, 0
      %v875 = vsel %vm777, %v776, 0
      %vm877 = vcmask 1043456
      %v879 = vsel %vm877, %v339, 0
      %881 = vmatpush.bf16.msra.mxu0 0
      %882 = vmatpush.bf16.msra.mxu0 0
      %883 = vmatpush.bf16.msra.mxu0 0
      %884 = vmatpush.bf16.msra.mxu0 0
      %885 = vmatpush.bf16.msra.mxu0 0
      %886 = vmatpush.bf16.msra.mxu0 0
      %887 = vmatpush.bf16.msra.mxu0 0
      %888 = vmatpush.bf16.msra.mxu0 %v879
      %889 = vmatmul.bf16.gmra.mxu0 %v779
      %v890 = vpop.f32.mrf.mxu0
      %v891 = vadd.f32 0.0, %v890
      %v892 = vpop.f32.mrf.mxu0
      %v893 = vadd.f32 0.0, %v892
      %894 = vmatmul.bf16.gmra.mxu0 %v782
      %v895 = vpop.f32.mrf.mxu0
      %v896 = vadd.f32 0.0, %v895
      %v897 = vpop.f32.mrf.mxu0
      %v898 = vadd.f32 0.0, %v897
      %899 = vmatmul.bf16.gmra.mxu0 %v785
      %v900 = vpop.f32.mrf.mxu0
      %v901 = vadd.f32 0.0, %v900
      %v902 = vpop.f32.mrf.mxu0
      %v903 = vadd.f32 0.0, %v902
      %904 = vmatmul.bf16.gmra.mxu0 %v788
      %v905 = vpop.f32.mrf.mxu0
      %v906 = vadd.f32 0.0, %v905
      %v907 = vpop.f32.mrf.mxu0
      %v908 = vadd.f32 0.0, %v907
      %909 = vmatmul.bf16.gmra.mxu0 %v791
      %v910 = vpop.f32.mrf.mxu0
      %v911 = vadd.f32 0.0, %v910
      %v912 = vpop.f32.mrf.mxu0
      %v913 = vadd.f32 0.0, %v912
      %914 = vmatmul.bf16.gmra.mxu0 %v794
      %v915 = vpop.f32.mrf.mxu0
      %v916 = vadd.f32 0.0, %v915
      %v917 = vpop.f32.mrf.mxu0
      %v918 = vadd.f32 0.0, %v917
      %919 = vmatmul.bf16.gmra.mxu0 %v797
      %v920 = vpop.f32.mrf.mxu0
      %v921 = vadd.f32 0.0, %v920
      %v922 = vpop.f32.mrf.mxu0
      %v923 = vadd.f32 0.0, %v922
      %924 = vmatmul.bf16.gmra.mxu0 %v800
      %v925 = vpop.f32.mrf.mxu0
      %v926 = vadd.f32 0.0, %v925
      %v927 = vpop.f32.mrf.mxu0
      %v928 = vadd.f32 0.0, %v927
      %929 = vmatmul.bf16.gmra.mxu0 %v803
      %v930 = vpop.f32.mrf.mxu0
      %v931 = vadd.f32 0.0, %v930
      %v932 = vpop.f32.mrf.mxu0
      %v933 = vadd.f32 0.0, %v932
      %934 = vmatmul.bf16.gmra.mxu0 %v806
      %v935 = vpop.f32.mrf.mxu0
      %v936 = vadd.f32 0.0, %v935
      %v937 = vpop.f32.mrf.mxu0
      %v938 = vadd.f32 0.0, %v937
      %939 = vmatmul.bf16.gmra.mxu0 %v809
      %v940 = vpop.f32.mrf.mxu0
      %v941 = vadd.f32 0.0, %v940
      %v942 = vpop.f32.mrf.mxu0
      %v943 = vadd.f32 0.0, %v942
      %944 = vmatmul.bf16.gmra.mxu0 %v812
      %v945 = vpop.f32.mrf.mxu0
      %v946 = vadd.f32 0.0, %v945
      %v947 = vpop.f32.mrf.mxu0
      %v948 = vadd.f32 0.0, %v947
      %949 = vmatmul.bf16.gmra.mxu0 %v815
      %v950 = vpop.f32.mrf.mxu0
      %v951 = vadd.f32 0.0, %v950
      %v952 = vpop.f32.mrf.mxu0
      %v953 = vadd.f32 0.0, %v952
      %954 = vmatmul.bf16.gmra.mxu0 %v818
      %v955 = vpop.f32.mrf.mxu0
      %v956 = vadd.f32 0.0, %v955
      %v957 = vpop.f32.mrf.mxu0
      %v958 = vadd.f32 0.0, %v957
      %959 = vmatmul.bf16.gmra.mxu0 %v821
      %v960 = vpop.f32.mrf.mxu0
      %v961 = vadd.f32 0.0, %v960
      %v962 = vpop.f32.mrf.mxu0
      %v963 = vadd.f32 0.0, %v962
      %964 = vmatmul.bf16.gmra.mxu0 %v824
      %v965 = vpop.f32.mrf.mxu0
      %v966 = vadd.f32 0.0, %v965
      %v967 = vpop.f32.mrf.mxu0
      %v968 = vadd.f32 0.0, %v967
      %969 = vmatmul.bf16.gmra.mxu0 %v827
      %v970 = vpop.f32.mrf.mxu0
      %v971 = vadd.f32 0.0, %v970
      %v972 = vpop.f32.mrf.mxu0
      %v973 = vadd.f32 0.0, %v972
      %974 = vmatmul.bf16.gmra.mxu0 %v830
      %v975 = vpop.f32.mrf.mxu0
      %v976 = vadd.f32 0.0, %v975
      %v977 = vpop.f32.mrf.mxu0
      %v978 = vadd.f32 0.0, %v977
      %979 = vmatmul.bf16.gmra.mxu0 %v833
      %v980 = vpop.f32.mrf.mxu0
      %v981 = vadd.f32 0.0, %v980
      %v982 = vpop.f32.mrf.mxu0
      %v983 = vadd.f32 0.0, %v982
      %984 = vmatmul.bf16.gmra.mxu0 %v836
      %v985 = vpop.f32.mrf.mxu0
      %v986 = vadd.f32 0.0, %v985
      %v987 = vpop.f32.mrf.mxu0
      %v988 = vadd.f32 0.0, %v987
      %989 = vmatmul.bf16.gmra.mxu0 %v839
      %v990 = vpop.f32.mrf.mxu0
      %v991 = vadd.f32 0.0, %v990
      %v992 = vpop.f32.mrf.mxu0
      %v993 = vadd.f32 0.0, %v992
      %994 = vmatmul.bf16.gmra.mxu0 %v842
      %v995 = vpop.f32.mrf.mxu0
      %v996 = vadd.f32 0.0, %v995
      %v997 = vpop.f32.mrf.mxu0
      %v998 = vadd.f32 0.0, %v997
      %999 = vmatmul.bf16.gmra.mxu0 %v845
      %v1000 = vpop.f32.mrf.mxu0
      %v1001 = vadd.f32 0.0, %v1000
      %v1002 = vpop.f32.mrf.mxu0
      %v1003 = vadd.f32 0.0, %v1002
      %1004 = vmatmul.bf16.gmra.mxu0 %v848
      %v1005 = vpop.f32.mrf.mxu0
      %v1006 = vadd.f32 0.0, %v1005
      %v1007 = vpop.f32.mrf.mxu0
      %v1008 = vadd.f32 0.0, %v1007
      %1009 = vmatmul.bf16.gmra.mxu0 %v851
      %v1010 = vpop.f32.mrf.mxu0
      %v1011 = vadd.f32 0.0, %v1010
      %v1012 = vpop.f32.mrf.mxu0
      %v1013 = vadd.f32 0.0, %v1012
      %1014 = vmatmul.bf16.gmra.mxu0 %v854
      %v1015 = vpop.f32.mrf.mxu0
      %v1016 = vadd.f32 0.0, %v1015
      %v1017 = vpop.f32.mrf.mxu0
      %v1018 = vadd.f32 0.0, %v1017
      %1019 = vmatmul.bf16.gmra.mxu0 %v857
      %v1020 = vpop.f32.mrf.mxu0
      %v1021 = vadd.f32 0.0, %v1020
      %v1022 = vpop.f32.mrf.mxu0
      %v1023 = vadd.f32 0.0, %v1022
      %1024 = vmatmul.bf16.gmra.mxu0 %v860
      %v1025 = vpop.f32.mrf.mxu0
      %v1026 = vadd.f32 0.0, %v1025
      %v1027 = vpop.f32.mrf.mxu0
      %v1028 = vadd.f32 0.0, %v1027
      %1029 = vmatmul.bf16.gmra.mxu0 %v863
      %v1030 = vpop.f32.mrf.mxu0
      %v1031 = vadd.f32 0.0, %v1030
      %v1032 = vpop.f32.mrf.mxu0
      %v1033 = vadd.f32 0.0, %v1032
      %1034 = vmatmul.bf16.gmra.mxu0 %v866
      %v1035 = vpop.f32.mrf.mxu0
      %v1036 = vadd.f32 0.0, %v1035
      %v1037 = vpop.f32.mrf.mxu0
      %v1038 = vadd.f32 0.0, %v1037
      %1039 = vmatmul.bf16.gmra.mxu0 %v869
      %v1040 = vpop.f32.mrf.mxu0
      %v1041 = vadd.f32 0.0, %v1040
      %v1042 = vpop.f32.mrf.mxu0
      %v1043 = vadd.f32 0.0, %v1042
      %1044 = vmatmul.bf16.gmra.mxu0 %v872
      %v1045 = vpop.f32.mrf.mxu0
      %v1046 = vadd.f32 0.0, %v1045
      %v1047 = vpop.f32.mrf.mxu0
      %v1048 = vadd.f32 0.0, %v1047
      %1049 = vmatmul.bf16.gmra.mxu0 %v875
      %v1050 = vpop.f32.mrf.mxu0
      %v1051 = vadd.f32 0.0, %v1050
      %v1052 = vpop.f32.mrf.mxu0
      %v1053 = vadd.f32 0.0, %v1052
      %1054 = vdwg.mxu0
      %v1055 = vsel %vm777, %v474, 0
      %v1057 = vsel %vm777, %v475, 0
      %v1059 = vsel %vm777, %v476, 0
      %v1061 = vsel %vm777, %v477, 0
      %v1063 = vsel %vm777, %v478, 0
      %v1065 = vsel %vm777, %v479, 0
      %v1067 = vsel %vm777, %v480, 0
      %v1069 = vsel %vm777, %v481, 0
      %v1071 = vsel %vm777, %v482, 0
      %v1073 = vsel %vm777, %v483, 0
      %v1075 = vsel %vm777, %v484, 0
      %v1077 = vsel %vm777, %v485, 0
      %v1079 = vsel %vm777, %v486, 0
      %v1081 = vsel %vm777, %v487, 0
      %v1083 = vsel %vm777, %v488, 0
      %v1085 = vsel %vm777, %v489, 0
      %v1087 = vsel %vm777, %v490, 0
      %v1089 = vsel %vm777, %v491, 0
      %v1091 = vsel %vm777, %v492, 0
      %v1093 = vsel %vm777, %v493, 0
      %v1095 = vsel %vm777, %v494, 0
      %v1097 = vsel %vm777, %v495, 0
      %v1099 = vsel %vm777, %v496, 0
      %v1101 = vsel %vm777, %v497, 0
      %v1103 = vsel %vm777, %v498, 0
      %v1105 = vsel %vm777, %v499, 0
      %v1107 = vsel %vm777, %v500, 0
      %v1109 = vsel %vm777, %v501, 0
      %v1111 = vsel %vm777, %v502, 0
      %v1113 = vsel %vm777, %v503, 0
      %v1115 = vsel %vm777, %v504, 0
      %v1117 = vsel %vm777, %v505, 0
      %v1119 = vsel %vm777, %v506, 0
      %v1122 = vsel %vm877, %v336, 0
      %1124 = vmatpush.bf16.msra.mxu0 0
      %1125 = vmatpush.bf16.msra.mxu0 0
      %1126 = vmatpush.bf16.msra.mxu0 0
      %1127 = vmatpush.bf16.msra.mxu0 0
      %1128 = vmatpush.bf16.msra.mxu0 0
      %1129 = vmatpush.bf16.msra.mxu0 0
      %1130 = vmatpush.bf16.msra.mxu0 0
      %1131 = vmatpush.bf16.msra.mxu0 %v1122
      %1132 = vmatmul.bf16.gmra.mxu0 %v1055
      %v1133 = vpop.f32.mrf.mxu0
      %v1134 = vadd.f32 %v891, %v1133
      %v1135 = vpop.f32.mrf.mxu0
      %v1136 = vadd.f32 %v893, %v1135
      %1137 = vmatmul.bf16.gmra.mxu0 %v1057
      %v1138 = vpop.f32.mrf.mxu0
      %v1139 = vadd.f32 %v896, %v1138
      %v1140 = vpop.f32.mrf.mxu0
      %v1141 = vadd.f32 %v898, %v1140
      %1142 = vmatmul.bf16.gmra.mxu0 %v1059
      %v1143 = vpop.f32.mrf.mxu0
      %v1144 = vadd.f32 %v901, %v1143
      %v1145 = vpop.f32.mrf.mxu0
      %v1146 = vadd.f32 %v903, %v1145
      %1147 = vmatmul.bf16.gmra.mxu0 %v1061
      %v1148 = vpop.f32.mrf.mxu0
      %v1149 = vadd.f32 %v906, %v1148
      %v1150 = vpop.f32.mrf.mxu0
      %v1151 = vadd.f32 %v908, %v1150
      %1152 = vmatmul.bf16.gmra.mxu0 %v1063
      %v1153 = vpop.f32.mrf.mxu0
      %v1154 = vadd.f32 %v911, %v1153
      %v1155 = vpop.f32.mrf.mxu0
      %v1156 = vadd.f32 %v913, %v1155
      %1157 = vmatmul.bf16.gmra.mxu0 %v1065
      %v1158 = vpop.f32.mrf.mxu0
      %v1159 = vadd.f32 %v916, %v1158
      %v1160 = vpop.f32.mrf.mxu0
      %v1161 = vadd.f32 %v918, %v1160
      %1162 = vmatmul.bf16.gmra.mxu0 %v1067
      %v1163 = vpop.f32.mrf.mxu0
      %v1164 = vadd.f32 %v921, %v1163
      %v1165 = vpop.f32.mrf.mxu0
      %v1166 = vadd.f32 %v923, %v1165
      %1167 = vmatmul.bf16.gmra.mxu0 %v1069
      %v1168 = vpop.f32.mrf.mxu0
      %v1169 = vadd.f32 %v926, %v1168
      %v1170 = vpop.f32.mrf.mxu0
      %v1171 = vadd.f32 %v928, %v1170
      %1172 = vmatmul.bf16.gmra.mxu0 %v1071
      %v1173 = vpop.f32.mrf.mxu0
      %v1174 = vadd.f32 %v931, %v1173
      %v1175 = vpop.f32.mrf.mxu0
      %v1176 = vadd.f32 %v933, %v1175
      %1177 = vmatmul.bf16.gmra.mxu0 %v1073
      %v1178 = vpop.f32.mrf.mxu0
      %v1179 = vadd.f32 %v936, %v1178
      %v1180 = vpop.f32.mrf.mxu0
      %v1181 = vadd.f32 %v938, %v1180
      %1182 = vmatmul.bf16.gmra.mxu0 %v1075
      %v1183 = vpop.f32.mrf.mxu0
      %v1184 = vadd.f32 %v941, %v1183
      %v1185 = vpop.f32.mrf.mxu0
      %v1186 = vadd.f32 %v943, %v1185
      %1187 = vmatmul.bf16.gmra.mxu0 %v1077
      %v1188 = vpop.f32.mrf.mxu0
      %v1189 = vadd.f32 %v946, %v1188
      %v1190 = vpop.f32.mrf.mxu0
      %v1191 = vadd.f32 %v948, %v1190
      %1192 = vmatmul.bf16.gmra.mxu0 %v1079
      %v1193 = vpop.f32.mrf.mxu0
      %v1194 = vadd.f32 %v951, %v1193
      %v1195 = vpop.f32.mrf.mxu0
      %v1196 = vadd.f32 %v953, %v1195
      %1197 = vmatmul.bf16.gmra.mxu0 %v1081
      %v1198 = vpop.f32.mrf.mxu0
      %v1199 = vadd.f32 %v956, %v1198
      %v1200 = vpop.f32.mrf.mxu0
      %v1201 = vadd.f32 %v958, %v1200
      %1202 = vmatmul.bf16.gmra.mxu0 %v1083
      %v1203 = vpop.f32.mrf.mxu0
      %v1204 = vadd.f32 %v961, %v1203
      %v1205 = vpop.f32.mrf.mxu0
      %v1206 = vadd.f32 %v963, %v1205
      %1207 = vmatmul.bf16.gmra.mxu0 %v1085
      %v1208 = vpop.f32.mrf.mxu0
      %v1209 = vadd.f32 %v966, %v1208
      %v1210 = vpop.f32.mrf.mxu0
      %v1211 = vadd.f32 %v968, %v1210
      %1212 = vmatmul.bf16.gmra.mxu0 %v1087
      %v1213 = vpop.f32.mrf.mxu0
      %v1214 = vadd.f32 %v971, %v1213
      %v1215 = vpop.f32.mrf.mxu0
      %v1216 = vadd.f32 %v973, %v1215
      %1217 = vmatmul.bf16.gmra.mxu0 %v1089
      %v1218 = vpop.f32.mrf.mxu0
      %v1219 = vadd.f32 %v976, %v1218
      %v1220 = vpop.f32.mrf.mxu0
      %v1221 = vadd.f32 %v978, %v1220
      %1222 = vmatmul.bf16.gmra.mxu0 %v1091
      %v1223 = vpop.f32.mrf.mxu0
      %v1224 = vadd.f32 %v981, %v1223
      %v1225 = vpop.f32.mrf.mxu0
      %v1226 = vadd.f32 %v983, %v1225
      %1227 = vmatmul.bf16.gmra.mxu0 %v1093
      %v1228 = vpop.f32.mrf.mxu0
      %v1229 = vadd.f32 %v986, %v1228
      %v1230 = vpop.f32.mrf.mxu0
      %v1231 = vadd.f32 %v988, %v1230
      %1232 = vmatmul.bf16.gmra.mxu0 %v1095
      %v1233 = vpop.f32.mrf.mxu0
      %v1234 = vadd.f32 %v991, %v1233
      %v1235 = vpop.f32.mrf.mxu0
      %v1236 = vadd.f32 %v993, %v1235
      %1237 = vmatmul.bf16.gmra.mxu0 %v1097
      %v1238 = vpop.f32.mrf.mxu0
      %v1239 = vadd.f32 %v996, %v1238
      %v1240 = vpop.f32.mrf.mxu0
      %v1241 = vadd.f32 %v998, %v1240
      %1242 = vmatmul.bf16.gmra.mxu0 %v1099
      %v1243 = vpop.f32.mrf.mxu0
      %v1244 = vadd.f32 %v1001, %v1243
      %v1245 = vpop.f32.mrf.mxu0
      %v1246 = vadd.f32 %v1003, %v1245
      %1247 = vmatmul.bf16.gmra.mxu0 %v1101
      %v1248 = vpop.f32.mrf.mxu0
      %v1249 = vadd.f32 %v1006, %v1248
      %v1250 = vpop.f32.mrf.mxu0
      %v1251 = vadd.f32 %v1008, %v1250
      %1252 = vmatmul.bf16.gmra.mxu0 %v1103
      %v1253 = vpop.f32.mrf.mxu0
      %v1254 = vadd.f32 %v1011, %v1253
      %v1255 = vpop.f32.mrf.mxu0
      %v1256 = vadd.f32 %v1013, %v1255
      %1257 = vmatmul.bf16.gmra.mxu0 %v1105
      %v1258 = vpop.f32.mrf.mxu0
      %v1259 = vadd.f32 %v1016, %v1258
      %v1260 = vpop.f32.mrf.mxu0
      %v1261 = vadd.f32 %v1018, %v1260
      %1262 = vmatmul.bf16.gmra.mxu0 %v1107
      %v1263 = vpop.f32.mrf.mxu0
      %v1264 = vadd.f32 %v1021, %v1263
      %v1265 = vpop.f32.mrf.mxu0
      %v1266 = vadd.f32 %v1023, %v1265
      %1267 = vmatmul.bf16.gmra.mxu0 %v1109
      %v1268 = vpop.f32.mrf.mxu0
      %v1269 = vadd.f32 %v1026, %v1268
      %v1270 = vpop.f32.mrf.mxu0
      %v1271 = vadd.f32 %v1028, %v1270
      %1272 = vmatmul.bf16.gmra.mxu0 %v1111
      %v1273 = vpop.f32.mrf.mxu0
      %v1274 = vadd.f32 %v1031, %v1273
      %v1275 = vpop.f32.mrf.mxu0
      %v1276 = vadd.f32 %v1033, %v1275
      %1277 = vmatmul.bf16.gmra.mxu0 %v1113
      %v1278 = vpop.f32.mrf.mxu0
      %v1279 = vadd.f32 %v1036, %v1278
      %v1280 = vpop.f32.mrf.mxu0
      %v1281 = vadd.f32 %v1038, %v1280
      %1282 = vmatmul.bf16.gmra.mxu0 %v1115
      %v1283 = vpop.f32.mrf.mxu0
      %v1284 = vadd.f32 %v1041, %v1283
      %v1285 = vpop.f32.mrf.mxu0
      %v1286 = vadd.f32 %v1043, %v1285
      %1287 = vmatmul.bf16.gmra.mxu0 %v1117
      %v1288 = vpop.f32.mrf.mxu0
      %v1289 = vadd.f32 %v1046, %v1288
      %v1290 = vpop.f32.mrf.mxu0
      %v1291 = vadd.f32 %v1048, %v1290
      %1292 = vmatmul.bf16.gmra.mxu0 %v1119
      %v1293 = vpop.f32.mrf.mxu0
      %v1294 = vadd.f32 %v1051, %v1293
      %v1295 = vpop.f32.mrf.mxu0
      %v1296 = vadd.f32 %v1053, %v1295
      %1297 = vdwg.mxu0
      %v1298 = vld [vmem:[%s257] sm:$0xe]
      %s1299 = scalar_lea.vmem %s1, 8
      %v1300 = vld [vmem:[%s1299] sm:$0xf]
      %v1302 = vunpack.c.l.b16 %v1298
      %v1303 = vpack.c.b16 %v408, %v1302
      %vm1304 = vcmask 1046528
      %v1305 = vrot.slane %v1303, 1
      %v1306 = vrot.slane %v475, 1
      %v1307 = vsel %vm1304, %v1305, %v1306
      %v1308 = vrot.slane %v476, 1
      %v1309 = vsel %vm1304, %v1306, %v1308
      %v1310 = vrot.slane %v477, 1
      %v1311 = vsel %vm1304, %v1308, %v1310
      %v1312 = vrot.slane %v478, 1
      %v1313 = vsel %vm1304, %v1310, %v1312
      %v1314 = vrot.slane %v479, 1
      %v1315 = vsel %vm1304, %v1312, %v1314
      %v1316 = vrot.slane %v480, 1
      %v1317 = vsel %vm1304, %v1314, %v1316
      %v1318 = vrot.slane %v481, 1
      %v1319 = vsel %vm1304, %v1316, %v1318
      %v1320 = vrot.slane %v482, 1
      %v1321 = vsel %vm1304, %v1318, %v1320
      %v1322 = vrot.slane %v483, 1
      %v1323 = vsel %vm1304, %v1320, %v1322
      %v1324 = vrot.slane %v484, 1
      %v1325 = vsel %vm1304, %v1322, %v1324
      %v1326 = vrot.slane %v485, 1
      %v1327 = vsel %vm1304, %v1324, %v1326
      %v1328 = vrot.slane %v486, 1
      %v1329 = vsel %vm1304, %v1326, %v1328
      %v1330 = vrot.slane %v487, 1
      %v1331 = vsel %vm1304, %v1328, %v1330
      %v1332 = vrot.slane %v488, 1
      %v1333 = vsel %vm1304, %v1330, %v1332
      %v1334 = vrot.slane %v489, 1
      %v1335 = vsel %vm1304, %v1332, %v1334
      %v1336 = vrot.slane %v490, 1
      %v1337 = vsel %vm1304, %v1334, %v1336
      %v1338 = vrot.slane %v491, 1
      %v1339 = vsel %vm1304, %v1336, %v1338
      %v1340 = vrot.slane %v492, 1
      %v1341 = vsel %vm1304, %v1338, %v1340
      %v1342 = vrot.slane %v493, 1
      %v1343 = vsel %vm1304, %v1340, %v1342
      %v1344 = vrot.slane %v494, 1
      %v1345 = vsel %vm1304, %v1342, %v1344
      %v1346 = vrot.slane %v495, 1
      %v1347 = vsel %vm1304, %v1344, %v1346
      %v1348 = vrot.slane %v496, 1
      %v1349 = vsel %vm1304, %v1346, %v1348
      %v1350 = vrot.slane %v497, 1
      %v1351 = vsel %vm1304, %v1348, %v1350
      %v1352 = vrot.slane %v498, 1
      %v1353 = vsel %vm1304, %v1350, %v1352
      %v1354 = vrot.slane %v499, 1
      %v1355 = vsel %vm1304, %v1352, %v1354
      %v1356 = vrot.slane %v500, 1
      %v1357 = vsel %vm1304, %v1354, %v1356
      %v1358 = vrot.slane %v501, 1
      %v1359 = vsel %vm1304, %v1356, %v1358
      %v1360 = vrot.slane %v502, 1
      %v1361 = vsel %vm1304, %v1358, %v1360
      %v1362 = vrot.slane %v503, 1
      %v1363 = vsel %vm1304, %v1360, %v1362
      %v1364 = vrot.slane %v504, 1
      %v1365 = vsel %vm1304, %v1362, %v1364
      %v1366 = vrot.slane %v505, 1
      %v1367 = vsel %vm1304, %v1364, %v1366
      %v1368 = vrot.slane %v506, 1
      %v1369 = vsel %vm1304, %v1366, %v1368
      %v1370 = vrot.slane %v507, 1
      %v1371 = vsel %vm1304, %v1368, %v1370
      %v1373 = vsel %vm777, %v1307, 0
      %v1376 = vsel %vm777, %v1309, 0
      %v1379 = vsel %vm777, %v1311, 0
      %v1382 = vsel %vm777, %v1313, 0
      %v1385 = vsel %vm777, %v1315, 0
      %v1388 = vsel %vm777, %v1317, 0
      %v1391 = vsel %vm777, %v1319, 0
      %v1394 = vsel %vm777, %v1321, 0
      %v1397 = vsel %vm777, %v1323, 0
      %v1400 = vsel %vm777, %v1325, 0
      %v1403 = vsel %vm777, %v1327, 0
      %v1406 = vsel %vm777, %v1329, 0
      %v1409 = vsel %vm777, %v1331, 0
      %v1412 = vsel %vm777, %v1333, 0
      %v1415 = vsel %vm777, %v1335, 0
      %v1418 = vsel %vm777, %v1337, 0
      %v1421 = vsel %vm777, %v1339, 0
      %v1424 = vsel %vm777, %v1341, 0
      %v1427 = vsel %vm777, %v1343, 0
      %v1430 = vsel %vm777, %v1345, 0
      %v1433 = vsel %vm777, %v1347, 0
      %v1436 = vsel %vm777, %v1349, 0
      %v1439 = vsel %vm777, %v1351, 0
      %v1442 = vsel %vm777, %v1353, 0
      %v1445 = vsel %vm777, %v1355, 0
      %v1448 = vsel %vm777, %v1357, 0
      %v1451 = vsel %vm777, %v1359, 0
      %v1454 = vsel %vm777, %v1361, 0
      %v1457 = vsel %vm777, %v1363, 0
      %v1460 = vsel %vm777, %v1365, 0
      %v1463 = vsel %vm777, %v1367, 0
      %v1466 = vsel %vm777, %v1369, 0
      %v1469 = vsel %vm777, %v1371, 0
      %v1472 = vsel %vm877, %v1300, 0
      %1474 = vmatpush.bf16.msra.mxu0 0
      %1475 = vmatpush.bf16.msra.mxu0 0
      %1476 = vmatpush.bf16.msra.mxu0 0
      %1477 = vmatpush.bf16.msra.mxu0 0
      %1478 = vmatpush.bf16.msra.mxu0 0
      %1479 = vmatpush.bf16.msra.mxu0 0
      %1480 = vmatpush.bf16.msra.mxu0 0
      %1481 = vmatpush.bf16.msra.mxu0 %v1472
      %1482 = vmatmul.bf16.gmra.mxu0 %v1373
      %v1483 = vpop.f32.mrf.mxu0
      %v1484 = vadd.f32 0.0, %v1483
      %v1485 = vpop.f32.mrf.mxu0
      %v1486 = vadd.f32 0.0, %v1485
      %1487 = vmatmul.bf16.gmra.mxu0 %v1376
      %v1488 = vpop.f32.mrf.mxu0
      %v1489 = vadd.f32 0.0, %v1488
      %v1490 = vpop.f32.mrf.mxu0
      %v1491 = vadd.f32 0.0, %v1490
      %1492 = vmatmul.bf16.gmra.mxu0 %v1379
      %v1493 = vpop.f32.mrf.mxu0
      %v1494 = vadd.f32 0.0, %v1493
      %v1495 = vpop.f32.mrf.mxu0
      %v1496 = vadd.f32 0.0, %v1495
      %1497 = vmatmul.bf16.gmra.mxu0 %v1382
      %v1498 = vpop.f32.mrf.mxu0
      %v1499 = vadd.f32 0.0, %v1498
      %v1500 = vpop.f32.mrf.mxu0
      %v1501 = vadd.f32 0.0, %v1500
      %1502 = vmatmul.bf16.gmra.mxu0 %v1385
      %v1503 = vpop.f32.mrf.mxu0
      %v1504 = vadd.f32 0.0, %v1503
      %v1505 = vpop.f32.mrf.mxu0
      %v1506 = vadd.f32 0.0, %v1505
      %1507 = vmatmul.bf16.gmra.mxu0 %v1388
      %v1508 = vpop.f32.mrf.mxu0
      %v1509 = vadd.f32 0.0, %v1508
      %v1510 = vpop.f32.mrf.mxu0
      %v1511 = vadd.f32 0.0, %v1510
      %1512 = vmatmul.bf16.gmra.mxu0 %v1391
      %v1513 = vpop.f32.mrf.mxu0
      %v1514 = vadd.f32 0.0, %v1513
      %v1515 = vpop.f32.mrf.mxu0
      %v1516 = vadd.f32 0.0, %v1515
      %1517 = vmatmul.bf16.gmra.mxu0 %v1394
      %v1518 = vpop.f32.mrf.mxu0
      %v1519 = vadd.f32 0.0, %v1518
      %v1520 = vpop.f32.mrf.mxu0
      %v1521 = vadd.f32 0.0, %v1520
      %1522 = vmatmul.bf16.gmra.mxu0 %v1397
      %v1523 = vpop.f32.mrf.mxu0
      %v1524 = vadd.f32 0.0, %v1523
      %v1525 = vpop.f32.mrf.mxu0
      %v1526 = vadd.f32 0.0, %v1525
      %1527 = vmatmul.bf16.gmra.mxu0 %v1400
      %v1528 = vpop.f32.mrf.mxu0
      %v1529 = vadd.f32 0.0, %v1528
      %v1530 = vpop.f32.mrf.mxu0
      %v1531 = vadd.f32 0.0, %v1530
      %1532 = vmatmul.bf16.gmra.mxu0 %v1403
      %v1533 = vpop.f32.mrf.mxu0
      %v1534 = vadd.f32 0.0, %v1533
      %v1535 = vpop.f32.mrf.mxu0
      %v1536 = vadd.f32 0.0, %v1535
      %1537 = vmatmul.bf16.gmra.mxu0 %v1406
      %v1538 = vpop.f32.mrf.mxu0
      %v1539 = vadd.f32 0.0, %v1538
      %v1540 = vpop.f32.mrf.mxu0
      %v1541 = vadd.f32 0.0, %v1540
      %1542 = vmatmul.bf16.gmra.mxu0 %v1409
      %v1543 = vpop.f32.mrf.mxu0
      %v1544 = vadd.f32 0.0, %v1543
      %v1545 = vpop.f32.mrf.mxu0
      %v1546 = vadd.f32 0.0, %v1545
      %1547 = vmatmul.bf16.gmra.mxu0 %v1412
      %v1548 = vpop.f32.mrf.mxu0
      %v1549 = vadd.f32 0.0, %v1548
      %v1550 = vpop.f32.mrf.mxu0
      %v1551 = vadd.f32 0.0, %v1550
      %1552 = vmatmul.bf16.gmra.mxu0 %v1415
      %v1553 = vpop.f32.mrf.mxu0
      %v1554 = vadd.f32 0.0, %v1553
      %v1555 = vpop.f32.mrf.mxu0
      %v1556 = vadd.f32 0.0, %v1555
      %1557 = vmatmul.bf16.gmra.mxu0 %v1418
      %v1558 = vpop.f32.mrf.mxu0
      %v1559 = vadd.f32 0.0, %v1558
      %v1560 = vpop.f32.mrf.mxu0
      %v1561 = vadd.f32 0.0, %v1560
      %1562 = vmatmul.bf16.gmra.mxu0 %v1421
      %v1563 = vpop.f32.mrf.mxu0
      %v1564 = vadd.f32 0.0, %v1563
      %v1565 = vpop.f32.mrf.mxu0
      %v1566 = vadd.f32 0.0, %v1565
      %1567 = vmatmul.bf16.gmra.mxu0 %v1424
      %v1568 = vpop.f32.mrf.mxu0
      %v1569 = vadd.f32 0.0, %v1568
      %v1570 = vpop.f32.mrf.mxu0
      %v1571 = vadd.f32 0.0, %v1570
      %1572 = vmatmul.bf16.gmra.mxu0 %v1427
      %v1573 = vpop.f32.mrf.mxu0
      %v1574 = vadd.f32 0.0, %v1573
      %v1575 = vpop.f32.mrf.mxu0
      %v1576 = vadd.f32 0.0, %v1575
      %1577 = vmatmul.bf16.gmra.mxu0 %v1430
      %v1578 = vpop.f32.mrf.mxu0
      %v1579 = vadd.f32 0.0, %v1578
      %v1580 = vpop.f32.mrf.mxu0
      %v1581 = vadd.f32 0.0, %v1580
      %1582 = vmatmul.bf16.gmra.mxu0 %v1433
      %v1583 = vpop.f32.mrf.mxu0
      %v1584 = vadd.f32 0.0, %v1583
      %v1585 = vpop.f32.mrf.mxu0
      %v1586 = vadd.f32 0.0, %v1585
      %1587 = vmatmul.bf16.gmra.mxu0 %v1436
      %v1588 = vpop.f32.mrf.mxu0
      %v1589 = vadd.f32 0.0, %v1588
      %v1590 = vpop.f32.mrf.mxu0
      %v1591 = vadd.f32 0.0, %v1590
      %1592 = vmatmul.bf16.gmra.mxu0 %v1439
      %v1593 = vpop.f32.mrf.mxu0
      %v1594 = vadd.f32 0.0, %v1593
      %v1595 = vpop.f32.mrf.mxu0
      %v1596 = vadd.f32 0.0, %v1595
      %1597 = vmatmul.bf16.gmra.mxu0 %v1442
      %v1598 = vpop.f32.mrf.mxu0
      %v1599 = vadd.f32 0.0, %v1598
      %v1600 = vpop.f32.mrf.mxu0
      %v1601 = vadd.f32 0.0, %v1600
      %1602 = vmatmul.bf16.gmra.mxu0 %v1445
      %v1603 = vpop.f32.mrf.mxu0
      %v1604 = vadd.f32 0.0, %v1603
      %v1605 = vpop.f32.mrf.mxu0
      %v1606 = vadd.f32 0.0, %v1605
      %1607 = vmatmul.bf16.gmra.mxu0 %v1448
      %v1608 = vpop.f32.mrf.mxu0
      %v1609 = vadd.f32 0.0, %v1608
      %v1610 = vpop.f32.mrf.mxu0
      %v1611 = vadd.f32 0.0, %v1610
      %1612 = vmatmul.bf16.gmra.mxu0 %v1451
      %v1613 = vpop.f32.mrf.mxu0
      %v1614 = vadd.f32 0.0, %v1613
      %v1615 = vpop.f32.mrf.mxu0
      %v1616 = vadd.f32 0.0, %v1615
      %1617 = vmatmul.bf16.gmra.mxu0 %v1454
      %v1618 = vpop.f32.mrf.mxu0
      %v1619 = vadd.f32 0.0, %v1618
      %v1620 = vpop.f32.mrf.mxu0
      %v1621 = vadd.f32 0.0, %v1620
      %1622 = vmatmul.bf16.gmra.mxu0 %v1457
      %v1623 = vpop.f32.mrf.mxu0
      %v1624 = vadd.f32 0.0, %v1623
      %v1625 = vpop.f32.mrf.mxu0
      %v1626 = vadd.f32 0.0, %v1625
      %1627 = vmatmul.bf16.gmra.mxu0 %v1460
      %v1628 = vpop.f32.mrf.mxu0
      %v1629 = vadd.f32 0.0, %v1628
      %v1630 = vpop.f32.mrf.mxu0
      %v1631 = vadd.f32 0.0, %v1630
      %1632 = vmatmul.bf16.gmra.mxu0 %v1463
      %v1633 = vpop.f32.mrf.mxu0
      %v1634 = vadd.f32 0.0, %v1633
      %v1635 = vpop.f32.mrf.mxu0
      %v1636 = vadd.f32 0.0, %v1635
      %1637 = vmatmul.bf16.gmra.mxu0 %v1466
      %v1638 = vpop.f32.mrf.mxu0
      %v1639 = vadd.f32 0.0, %v1638
      %v1640 = vpop.f32.mrf.mxu0
      %v1641 = vadd.f32 0.0, %v1640
      %1642 = vmatmul.bf16.gmra.mxu0 %v1469
      %v1643 = vpop.f32.mrf.mxu0
      %v1644 = vadd.f32 0.0, %v1643
      %v1645 = vpop.f32.mrf.mxu0
      %v1646 = vadd.f32 0.0, %v1645
      %1647 = vdwg.mxu0
      %v1648 = vadd.f32 %v1134, %v1484
      %v1649 = vadd.f32 %v1136, %v1486
      %v1650 = vadd.f32 %v1139, %v1489
      %v1651 = vadd.f32 %v1141, %v1491
      %v1652 = vadd.f32 %v1144, %v1494
      %v1653 = vadd.f32 %v1146, %v1496
      %v1654 = vadd.f32 %v1149, %v1499
      %v1655 = vadd.f32 %v1151, %v1501
      %v1656 = vadd.f32 %v1154, %v1504
      %v1657 = vadd.f32 %v1156, %v1506
      %v1658 = vadd.f32 %v1159, %v1509
      %v1659 = vadd.f32 %v1161, %v1511
      %v1660 = vadd.f32 %v1164, %v1514
      %v1661 = vadd.f32 %v1166, %v1516
      %v1662 = vadd.f32 %v1169, %v1519
      %v1663 = vadd.f32 %v1171, %v1521
      %v1664 = vadd.f32 %v1174, %v1524
      %v1665 = vadd.f32 %v1176, %v1526
      %v1666 = vadd.f32 %v1179, %v1529
      %v1667 = vadd.f32 %v1181, %v1531
      %v1668 = vadd.f32 %v1184, %v1534
      %v1669 = vadd.f32 %v1186, %v1536
      %v1670 = vadd.f32 %v1189, %v1539
      %v1671 = vadd.f32 %v1191, %v1541
      %v1672 = vadd.f32 %v1194, %v1544
      %v1673 = vadd.f32 %v1196, %v1546
      %v1674 = vadd.f32 %v1199, %v1549
      %v1675 = vadd.f32 %v1201, %v1551
      %v1676 = vadd.f32 %v1204, %v1554
      %v1677 = vadd.f32 %v1206, %v1556
      %v1678 = vadd.f32 %v1209, %v1559
      %v1679 = vadd.f32 %v1211, %v1561
      %v1680 = vadd.f32 %v1214, %v1564
      %v1681 = vadd.f32 %v1216, %v1566
      %v1682 = vadd.f32 %v1219, %v1569
      %v1683 = vadd.f32 %v1221, %v1571
      %v1684 = vadd.f32 %v1224, %v1574
      %v1685 = vadd.f32 %v1226, %v1576
      %v1686 = vadd.f32 %v1229, %v1579
      %v1687 = vadd.f32 %v1231, %v1581
      %v1688 = vadd.f32 %v1234, %v1584
      %v1689 = vadd.f32 %v1236, %v1586
      %v1690 = vadd.f32 %v1239, %v1589
      %v1691 = vadd.f32 %v1241, %v1591
      %v1692 = vadd.f32 %v1244, %v1594
      %v1693 = vadd.f32 %v1246, %v1596
      %v1694 = vadd.f32 %v1249, %v1599
      %v1695 = vadd.f32 %v1251, %v1601
      %v1696 = vadd.f32 %v1254, %v1604
      %v1697 = vadd.f32 %v1256, %v1606
      %v1698 = vadd.f32 %v1259, %v1609
      %v1699 = vadd.f32 %v1261, %v1611
      %v1700 = vadd.f32 %v1264, %v1614
      %v1701 = vadd.f32 %v1266, %v1616
      %v1702 = vadd.f32 %v1269, %v1619
      %v1703 = vadd.f32 %v1271, %v1621
      %v1704 = vadd.f32 %v1274, %v1624
      %v1705 = vadd.f32 %v1276, %v1626
      %v1706 = vadd.f32 %v1279, %v1629
      %v1707 = vadd.f32 %v1281, %v1631
      %v1708 = vadd.f32 %v1284, %v1634
      %v1709 = vadd.f32 %v1286, %v1636
      %v1710 = vadd.f32 %v1289, %v1639
      %v1711 = vadd.f32 %v1291, %v1641
      %v1712 = vadd.f32 %v1294, %v1644
      %v1713 = vadd.f32 %v1296, %v1646
      %v1714 = vld [vmem:[%s257 + $0x108] sm:$0x3]
      %s1715 = scalar_lea.vmem %s1, 12
      %v1716 = vld [vmem:[%s1715] sm:$0xf]
      %v1718 = vunpack.c.l.b16 %v1714
      %v1719 = vpack.c.b16 %v1718, %v1718
      %vm1720 = vsmask.f32 6400
      %v1722 = vshrl.u32 %v1303, 16
      %v1724 = vrot.slane %v1722, 1
      %v1725 = vshll.u32 %v1303, 16
      %v1727 = vrot.slane %v1725, 2
      %v1728 = vor.u32 %v1724, %v1727
      %v1729 = vrot.slane %v521, 1
      %v1730 = vrot.slane %v517, 2
      %v1731 = vor.u32 %v1729, %v1730
      %v1732 = vsel %vm1720, %v1728, %v1731
      %v1733 = vrot.slane %v529, 1
      %v1734 = vrot.slane %v525, 2
      %v1735 = vor.u32 %v1733, %v1734
      %v1736 = vsel %vm1720, %v1731, %v1735
      %v1737 = vrot.slane %v537, 1
      %v1738 = vrot.slane %v533, 2
      %v1739 = vor.u32 %v1737, %v1738
      %v1740 = vsel %vm1720, %v1735, %v1739
      %v1741 = vrot.slane %v545, 1
      %v1742 = vrot.slane %v541, 2
      %v1743 = vor.u32 %v1741, %v1742
      %v1744 = vsel %vm1720, %v1739, %v1743
      %v1745 = vrot.slane %v553, 1
      %v1746 = vrot.slane %v549, 2
      %v1747 = vor.u32 %v1745, %v1746
      %v1748 = vsel %vm1720, %v1743, %v1747
      %v1749 = vrot.slane %v561, 1
      %v1750 = vrot.slane %v557, 2
      %v1751 = vor.u32 %v1749, %v1750
      %v1752 = vsel %vm1720, %v1747, %v1751
      %v1753 = vrot.slane %v569, 1
      %v1754 = vrot.slane %v565, 2
      %v1755 = vor.u32 %v1753, %v1754
      %v1756 = vsel %vm1720, %v1751, %v1755
      %v1757 = vrot.slane %v577, 1
      %v1758 = vrot.slane %v573, 2
      %v1759 = vor.u32 %v1757, %v1758
      %v1760 = vsel %vm1720, %v1755, %v1759
      %v1761 = vrot.slane %v585, 1
      %v1762 = vrot.slane %v581, 2
      %v1763 = vor.u32 %v1761, %v1762
      %v1764 = vsel %vm1720, %v1759, %v1763
      %v1765 = vrot.slane %v593, 1
      %v1766 = vrot.slane %v589, 2
      %v1767 = vor.u32 %v1765, %v1766
      %v1768 = vsel %vm1720, %v1763, %v1767
      %v1769 = vrot.slane %v601, 1
      %v1770 = vrot.slane %v597, 2
      %v1771 = vor.u32 %v1769, %v1770
      %v1772 = vsel %vm1720, %v1767, %v1771
      %v1773 = vrot.slane %v609, 1
      %v1774 = vrot.slane %v605, 2
      %v1775 = vor.u32 %v1773, %v1774
      %v1776 = vsel %vm1720, %v1771, %v1775
      %v1777 = vrot.slane %v617, 1
      %v1778 = vrot.slane %v613, 2
      %v1779 = vor.u32 %v1777, %v1778
      %v1780 = vsel %vm1720, %v1775, %v1779
      %v1781 = vrot.slane %v625, 1
      %v1782 = vrot.slane %v621, 2
      %v1783 = vor.u32 %v1781, %v1782
      %v1784 = vsel %vm1720, %v1779, %v1783
      %v1785 = vrot.slane %v633, 1
      %v1786 = vrot.slane %v629, 2
      %v1787 = vor.u32 %v1785, %v1786
      %v1788 = vsel %vm1720, %v1783, %v1787
      %v1789 = vrot.slane %v641, 1
      %v1790 = vrot.slane %v637, 2
      %v1791 = vor.u32 %v1789, %v1790
      %v1792 = vsel %vm1720, %v1787, %v1791
      %v1793 = vrot.slane %v649, 1
      %v1794 = vrot.slane %v645, 2
      %v1795 = vor.u32 %v1793, %v1794
      %v1796 = vsel %vm1720, %v1791, %v1795
      %v1797 = vrot.slane %v657, 1
      %v1798 = vrot.slane %v653, 2
      %v1799 = vor.u32 %v1797, %v1798
      %v1800 = vsel %vm1720, %v1795, %v1799
      %v1801 = vrot.slane %v665, 1
      %v1802 = vrot.slane %v661, 2
      %v1803 = vor.u32 %v1801, %v1802
      %v1804 = vsel %vm1720, %v1799, %v1803
      %v1805 = vrot.slane %v673, 1
      %v1806 = vrot.slane %v669, 2
      %v1807 = vor.u32 %v1805, %v1806
      %v1808 = vsel %vm1720, %v1803, %v1807
      %v1809 = vrot.slane %v681, 1
      %v1810 = vrot.slane %v677, 2
      %v1811 = vor.u32 %v1809, %v1810
      %v1812 = vsel %vm1720, %v1807, %v1811
      %v1813 = vrot.slane %v689, 1
      %v1814 = vrot.slane %v685, 2
      %v1815 = vor.u32 %v1813, %v1814
      %v1816 = vsel %vm1720, %v1811, %v1815
      %v1817 = vrot.slane %v697, 1
      %v1818 = vrot.slane %v693, 2
      %v1819 = vor.u32 %v1817, %v1818
      %v1820 = vsel %vm1720, %v1815, %v1819
      %v1821 = vrot.slane %v705, 1
      %v1822 = vrot.slane %v701, 2
      %v1823 = vor.u32 %v1821, %v1822
      %v1824 = vsel %vm1720, %v1819, %v1823
      %v1825 = vrot.slane %v713, 1
      %v1826 = vrot.slane %v709, 2
      %v1827 = vor.u32 %v1825, %v1826
      %v1828 = vsel %vm1720, %v1823, %v1827
      %v1829 = vrot.slane %v721, 1
      %v1830 = vrot.slane %v717, 2
      %v1831 = vor.u32 %v1829, %v1830
      %v1832 = vsel %vm1720, %v1827, %v1831
      %v1833 = vrot.slane %v729, 1
      %v1834 = vrot.slane %v725, 2
      %v1835 = vor.u32 %v1833, %v1834
      %v1836 = vsel %vm1720, %v1831, %v1835
      %v1837 = vrot.slane %v737, 1
      %v1838 = vrot.slane %v733, 2
      %v1839 = vor.u32 %v1837, %v1838
      %v1840 = vsel %vm1720, %v1835, %v1839
      %v1841 = vrot.slane %v745, 1
      %v1842 = vrot.slane %v741, 2
      %v1843 = vor.u32 %v1841, %v1842
      %v1844 = vsel %vm1720, %v1839, %v1843
      %v1845 = vrot.slane %v753, 1
      %v1846 = vrot.slane %v749, 2
      %v1847 = vor.u32 %v1845, %v1846
      %v1848 = vsel %vm1720, %v1843, %v1847
      %v1849 = vrot.slane %v761, 1
      %v1850 = vrot.slane %v757, 2
      %v1851 = vor.u32 %v1849, %v1850
      %v1852 = vsel %vm1720, %v1847, %v1851
      %v1853 = vrot.slane %v769, 1
      %v1854 = vrot.slane %v765, 2
      %v1855 = vor.u32 %v1853, %v1854
      %v1856 = vsel %vm1720, %v1851, %v1855
      %v1858 = vshrl.u32 %v1719, 16
      %v1860 = vrot.slane %v1858, 1
      %v1861 = vshll.u32 %v1719, 16
      %v1863 = vrot.slane %v1861, 2
      %v1864 = vor.u32 %v1860, %v1863
      %v1865 = vsel %vm1720, %v1855, %v1864
      %v1867 = vsel %vm777, %v1732, 0
      %v1870 = vsel %vm777, %v1736, 0
      %v1873 = vsel %vm777, %v1740, 0
      %v1876 = vsel %vm777, %v1744, 0
      %v1879 = vsel %vm777, %v1748, 0
      %v1882 = vsel %vm777, %v1752, 0
      %v1885 = vsel %vm777, %v1756, 0
      %v1888 = vsel %vm777, %v1760, 0
      %v1891 = vsel %vm777, %v1764, 0
      %v1894 = vsel %vm777, %v1768, 0
      %v1897 = vsel %vm777, %v1772, 0
      %v1900 = vsel %vm777, %v1776, 0
      %v1903 = vsel %vm777, %v1780, 0
      %v1906 = vsel %vm777, %v1784, 0
      %v1909 = vsel %vm777, %v1788, 0
      %v1912 = vsel %vm777, %v1792, 0
      %v1915 = vsel %vm777, %v1796, 0
      %v1918 = vsel %vm777, %v1800, 0
      %v1921 = vsel %vm777, %v1804, 0
      %v1924 = vsel %vm777, %v1808, 0
      %v1927 = vsel %vm777, %v1812, 0
      %v1930 = vsel %vm777, %v1816, 0
      %v1933 = vsel %vm777, %v1820, 0
      %v1936 = vsel %vm777, %v1824, 0
      %v1939 = vsel %vm777, %v1828, 0
      %v1942 = vsel %vm777, %v1832, 0
      %v1945 = vsel %vm777, %v1836, 0
      %v1948 = vsel %vm777, %v1840, 0
      %v1951 = vsel %vm777, %v1844, 0
      %v1954 = vsel %vm777, %v1848, 0
      %v1957 = vsel %vm777, %v1852, 0
      %v1960 = vsel %vm777, %v1856, 0
      %v1963 = vsel %vm777, %v1865, 0
      %v1966 = vsel %vm877, %v1716, 0
      %1968 = vmatpush.bf16.msra.mxu0 0
      %1969 = vmatpush.bf16.msra.mxu0 0
      %1970 = vmatpush.bf16.msra.mxu0 0
      %1971 = vmatpush.bf16.msra.mxu0 0
      %1972 = vmatpush.bf16.msra.mxu0 0
      %1973 = vmatpush.bf16.msra.mxu0 0
      %1974 = vmatpush.bf16.msra.mxu0 0
      %1975 = vmatpush.bf16.msra.mxu0 %v1966
      %1976 = vmatmul.bf16.gmra.mxu0 %v1867
      %v1977 = vpop.f32.mrf.mxu0
      %v1978 = vadd.f32 0.0, %v1977
      %v1979 = vpop.f32.mrf.mxu0
      %v1980 = vadd.f32 0.0, %v1979
      %1981 = vmatmul.bf16.gmra.mxu0 %v1870
      %v1982 = vpop.f32.mrf.mxu0
      %v1983 = vadd.f32 0.0, %v1982
      %v1984 = vpop.f32.mrf.mxu0
      %v1985 = vadd.f32 0.0, %v1984
      %1986 = vmatmul.bf16.gmra.mxu0 %v1873
      %v1987 = vpop.f32.mrf.mxu0
      %v1988 = vadd.f32 0.0, %v1987
      %v1989 = vpop.f32.mrf.mxu0
      %v1990 = vadd.f32 0.0, %v1989
      %1991 = vmatmul.bf16.gmra.mxu0 %v1876
      %v1992 = vpop.f32.mrf.mxu0
      %v1993 = vadd.f32 0.0, %v1992
      %v1994 = vpop.f32.mrf.mxu0
      %v1995 = vadd.f32 0.0, %v1994
      %1996 = vmatmul.bf16.gmra.mxu0 %v1879
      %v1997 = vpop.f32.mrf.mxu0
      %v1998 = vadd.f32 0.0, %v1997
      %v1999 = vpop.f32.mrf.mxu0
      %v2000 = vadd.f32 0.0, %v1999
      %2001 = vmatmul.bf16.gmra.mxu0 %v1882
      %v2002 = vpop.f32.mrf.mxu0
      %v2003 = vadd.f32 0.0, %v2002
      %v2004 = vpop.f32.mrf.mxu0
      %v2005 = vadd.f32 0.0, %v2004
      %2006 = vmatmul.bf16.gmra.mxu0 %v1885
      %v2007 = vpop.f32.mrf.mxu0
      %v2008 = vadd.f32 0.0, %v2007
      %v2009 = vpop.f32.mrf.mxu0
      %v2010 = vadd.f32 0.0, %v2009
      %2011 = vmatmul.bf16.gmra.mxu0 %v1888
      %v2012 = vpop.f32.mrf.mxu0
      %v2013 = vadd.f32 0.0, %v2012
      %v2014 = vpop.f32.mrf.mxu0
      %v2015 = vadd.f32 0.0, %v2014
      %2016 = vmatmul.bf16.gmra.mxu0 %v1891
      %v2017 = vpop.f32.mrf.mxu0
      %v2018 = vadd.f32 0.0, %v2017
      %v2019 = vpop.f32.mrf.mxu0
      %v2020 = vadd.f32 0.0, %v2019
      %2021 = vmatmul.bf16.gmra.mxu0 %v1894
      %v2022 = vpop.f32.mrf.mxu0
      %v2023 = vadd.f32 0.0, %v2022
      %v2024 = vpop.f32.mrf.mxu0
      %v2025 = vadd.f32 0.0, %v2024
      %2026 = vmatmul.bf16.gmra.mxu0 %v1897
      %v2027 = vpop.f32.mrf.mxu0
      %v2028 = vadd.f32 0.0, %v2027
      %v2029 = vpop.f32.mrf.mxu0
      %v2030 = vadd.f32 0.0, %v2029
      %2031 = vmatmul.bf16.gmra.mxu0 %v1900
      %v2032 = vpop.f32.mrf.mxu0
      %v2033 = vadd.f32 0.0, %v2032
      %v2034 = vpop.f32.mrf.mxu0
      %v2035 = vadd.f32 0.0, %v2034
      %2036 = vmatmul.bf16.gmra.mxu0 %v1903
      %v2037 = vpop.f32.mrf.mxu0
      %v2038 = vadd.f32 0.0, %v2037
      %v2039 = vpop.f32.mrf.mxu0
      %v2040 = vadd.f32 0.0, %v2039
      %2041 = vmatmul.bf16.gmra.mxu0 %v1906
      %v2042 = vpop.f32.mrf.mxu0
      %v2043 = vadd.f32 0.0, %v2042
      %v2044 = vpop.f32.mrf.mxu0
      %v2045 = vadd.f32 0.0, %v2044
      %2046 = vmatmul.bf16.gmra.mxu0 %v1909
      %v2047 = vpop.f32.mrf.mxu0
      %v2048 = vadd.f32 0.0, %v2047
      %v2049 = vpop.f32.mrf.mxu0
      %v2050 = vadd.f32 0.0, %v2049
      %2051 = vmatmul.bf16.gmra.mxu0 %v1912
      %v2052 = vpop.f32.mrf.mxu0
      %v2053 = vadd.f32 0.0, %v2052
      %v2054 = vpop.f32.mrf.mxu0
      %v2055 = vadd.f32 0.0, %v2054
      %2056 = vmatmul.bf16.gmra.mxu0 %v1915
      %v2057 = vpop.f32.mrf.mxu0
      %v2058 = vadd.f32 0.0, %v2057
      %v2059 = vpop.f32.mrf.mxu0
      %v2060 = vadd.f32 0.0, %v2059
      %2061 = vmatmul.bf16.gmra.mxu0 %v1918
      %v2062 = vpop.f32.mrf.mxu0
      %v2063 = vadd.f32 0.0, %v2062
      %v2064 = vpop.f32.mrf.mxu0
      %v2065 = vadd.f32 0.0, %v2064
      %2066 = vmatmul.bf16.gmra.mxu0 %v1921
      %v2067 = vpop.f32.mrf.mxu0
      %v2068 = vadd.f32 0.0, %v2067
      %v2069 = vpop.f32.mrf.mxu0
      %v2070 = vadd.f32 0.0, %v2069
      %2071 = vmatmul.bf16.gmra.mxu0 %v1924
      %v2072 = vpop.f32.mrf.mxu0
      %v2073 = vadd.f32 0.0, %v2072
      %v2074 = vpop.f32.mrf.mxu0
      %v2075 = vadd.f32 0.0, %v2074
      %2076 = vmatmul.bf16.gmra.mxu0 %v1927
      %v2077 = vpop.f32.mrf.mxu0
      %v2078 = vadd.f32 0.0, %v2077
      %v2079 = vpop.f32.mrf.mxu0
      %v2080 = vadd.f32 0.0, %v2079
      %2081 = vmatmul.bf16.gmra.mxu0 %v1930
      %v2082 = vpop.f32.mrf.mxu0
      %v2083 = vadd.f32 0.0, %v2082
      %v2084 = vpop.f32.mrf.mxu0
      %v2085 = vadd.f32 0.0, %v2084
      %2086 = vmatmul.bf16.gmra.mxu0 %v1933
      %v2087 = vpop.f32.mrf.mxu0
      %v2088 = vadd.f32 0.0, %v2087
      %v2089 = vpop.f32.mrf.mxu0
      %v2090 = vadd.f32 0.0, %v2089
      %2091 = vmatmul.bf16.gmra.mxu0 %v1936
      %v2092 = vpop.f32.mrf.mxu0
      %v2093 = vadd.f32 0.0, %v2092
      %v2094 = vpop.f32.mrf.mxu0
      %v2095 = vadd.f32 0.0, %v2094
      %2096 = vmatmul.bf16.gmra.mxu0 %v1939
      %v2097 = vpop.f32.mrf.mxu0
      %v2098 = vadd.f32 0.0, %v2097
      %v2099 = vpop.f32.mrf.mxu0
      %v2100 = vadd.f32 0.0, %v2099
      %2101 = vmatmul.bf16.gmra.mxu0 %v1942
      %v2102 = vpop.f32.mrf.mxu0
      %v2103 = vadd.f32 0.0, %v2102
      %v2104 = vpop.f32.mrf.mxu0
      %v2105 = vadd.f32 0.0, %v2104
      %2106 = vmatmul.bf16.gmra.mxu0 %v1945
      %v2107 = vpop.f32.mrf.mxu0
      %v2108 = vadd.f32 0.0, %v2107
      %v2109 = vpop.f32.mrf.mxu0
      %v2110 = vadd.f32 0.0, %v2109
      %2111 = vmatmul.bf16.gmra.mxu0 %v1948
      %v2112 = vpop.f32.mrf.mxu0
      %v2113 = vadd.f32 0.0, %v2112
      %v2114 = vpop.f32.mrf.mxu0
      %v2115 = vadd.f32 0.0, %v2114
      %2116 = vmatmul.bf16.gmra.mxu0 %v1951
      %v2117 = vpop.f32.mrf.mxu0
      %v2118 = vadd.f32 0.0, %v2117
      %v2119 = vpop.f32.mrf.mxu0
      %v2120 = vadd.f32 0.0, %v2119
      %2121 = vmatmul.bf16.gmra.mxu0 %v1954
      %v2122 = vpop.f32.mrf.mxu0
      %v2123 = vadd.f32 0.0, %v2122
      %v2124 = vpop.f32.mrf.mxu0
      %v2125 = vadd.f32 0.0, %v2124
      %2126 = vmatmul.bf16.gmra.mxu0 %v1957
      %v2127 = vpop.f32.mrf.mxu0
      %v2128 = vadd.f32 0.0, %v2127
      %v2129 = vpop.f32.mrf.mxu0
      %v2130 = vadd.f32 0.0, %v2129
      %2131 = vmatmul.bf16.gmra.mxu0 %v1960
      %v2132 = vpop.f32.mrf.mxu0
      %v2133 = vadd.f32 0.0, %v2132
      %v2134 = vpop.f32.mrf.mxu0
      %v2135 = vadd.f32 0.0, %v2134
      %2136 = vmatmul.bf16.gmra.mxu0 %v1963
      %v2137 = vpop.f32.mrf.mxu0
      %v2138 = vadd.f32 0.0, %v2137
      %v2139 = vpop.f32.mrf.mxu0
      %v2140 = vadd.f32 0.0, %v2139
      %2141 = vdwg.mxu0
      %v2142 = vadd.f32 %v1648, %v1978
      %v2143 = vadd.f32 %v1649, %v1980
      %v2144 = vadd.f32 %v1650, %v1983
      %v2145 = vadd.f32 %v1651, %v1985
      %v2146 = vadd.f32 %v1652, %v1988
      %v2147 = vadd.f32 %v1653, %v1990
      %v2148 = vadd.f32 %v1654, %v1993
      %v2149 = vadd.f32 %v1655, %v1995
      %v2150 = vadd.f32 %v1656, %v1998
      %v2151 = vadd.f32 %v1657, %v2000
      %v2152 = vadd.f32 %v1658, %v2003
      %v2153 = vadd.f32 %v1659, %v2005
      %v2154 = vadd.f32 %v1660, %v2008
      %v2155 = vadd.f32 %v1661, %v2010
      %v2156 = vadd.f32 %v1662, %v2013
      %v2157 = vadd.f32 %v1663, %v2015
      %v2158 = vadd.f32 %v1664, %v2018
      %v2159 = vadd.f32 %v1665, %v2020
      %v2160 = vadd.f32 %v1666, %v2023
      %v2161 = vadd.f32 %v1667, %v2025
      %v2162 = vadd.f32 %v1668, %v2028
      %v2163 = vadd.f32 %v1669, %v2030
      %v2164 = vadd.f32 %v1670, %v2033
      %v2165 = vadd.f32 %v1671, %v2035
      %v2166 = vadd.f32 %v1672, %v2038
      %v2167 = vadd.f32 %v1673, %v2040
      %v2168 = vadd.f32 %v1674, %v2043
      %v2169 = vadd.f32 %v1675, %v2045
      %v2170 = vadd.f32 %v1676, %v2048
      %v2171 = vadd.f32 %v1677, %v2050
      %v2172 = vadd.f32 %v1678, %v2053
      %v2173 = vadd.f32 %v1679, %v2055
      %v2174 = vadd.f32 %v1680, %v2058
      %v2175 = vadd.f32 %v1681, %v2060
      %v2176 = vadd.f32 %v1682, %v2063
      %v2177 = vadd.f32 %v1683, %v2065
      %v2178 = vadd.f32 %v1684, %v2068
      %v2179 = vadd.f32 %v1685, %v2070
      %v2180 = vadd.f32 %v1686, %v2073
      %v2181 = vadd.f32 %v1687, %v2075
      %v2182 = vadd.f32 %v1688, %v2078
      %v2183 = vadd.f32 %v1689, %v2080
      %v2184 = vadd.f32 %v1690, %v2083
      %v2185 = vadd.f32 %v1691, %v2085
      %v2186 = vadd.f32 %v1692, %v2088
      %v2187 = vadd.f32 %v1693, %v2090
      %v2188 = vadd.f32 %v1694, %v2093
      %v2189 = vadd.f32 %v1695, %v2095
      %v2190 = vadd.f32 %v1696, %v2098
      %v2191 = vadd.f32 %v1697, %v2100
      %v2192 = vadd.f32 %v1698, %v2103
      %v2193 = vadd.f32 %v1699, %v2105
      %v2194 = vadd.f32 %v1700, %v2108
      %v2195 = vadd.f32 %v1701, %v2110
      %v2196 = vadd.f32 %v1702, %v2113
      %v2197 = vadd.f32 %v1703, %v2115
      %v2198 = vadd.f32 %v1704, %v2118
      %v2199 = vadd.f32 %v1705, %v2120
      %v2200 = vadd.f32 %v1706, %v2123
      %v2201 = vadd.f32 %v1707, %v2125
      %v2202 = vadd.f32 %v1708, %v2128
      %v2203 = vadd.f32 %v1709, %v2130
      %v2204 = vadd.f32 %v1710, %v2133
      %v2205 = vadd.f32 %v1711, %v2135
      %v2206 = vadd.f32 %v1712, %v2138
      %v2207 = vadd.f32 %v1713, %v2140
      %v2208 = vmax.f32 %v2142, 0.0
      %v2209 = vmax.f32 %v2143, 0.0
      %v2210 = vmax.f32 %v2144, 0.0
      %v2211 = vmax.f32 %v2145, 0.0
      %v2212 = vmax.f32 %v2146, 0.0
      %v2213 = vmax.f32 %v2147, 0.0
      %v2214 = vmax.f32 %v2148, 0.0
      %v2215 = vmax.f32 %v2149, 0.0
      %v2216 = vmax.f32 %v2150, 0.0
      %v2217 = vmax.f32 %v2151, 0.0
      %v2218 = vmax.f32 %v2152, 0.0
      %v2219 = vmax.f32 %v2153, 0.0
      %v2220 = vmax.f32 %v2154, 0.0
      %v2221 = vmax.f32 %v2155, 0.0
      %v2222 = vmax.f32 %v2156, 0.0
      %v2223 = vmax.f32 %v2157, 0.0
      %v2224 = vmax.f32 %v2158, 0.0
      %v2225 = vmax.f32 %v2159, 0.0
      %v2226 = vmax.f32 %v2160, 0.0
      %v2227 = vmax.f32 %v2161, 0.0
      %v2228 = vmax.f32 %v2162, 0.0
      %v2229 = vmax.f32 %v2163, 0.0
      %v2230 = vmax.f32 %v2164, 0.0
      %v2231 = vmax.f32 %v2165, 0.0
      %v2232 = vmax.f32 %v2166, 0.0
      %v2233 = vmax.f32 %v2167, 0.0
      %v2234 = vmax.f32 %v2168, 0.0
      %v2235 = vmax.f32 %v2169, 0.0
      %v2236 = vmax.f32 %v2170, 0.0
      %v2237 = vmax.f32 %v2171, 0.0
      %v2238 = vmax.f32 %v2172, 0.0
      %v2239 = vmax.f32 %v2173, 0.0
      %v2240 = vmax.f32 %v2174, 0.0
      %v2241 = vmax.f32 %v2175, 0.0
      %v2242 = vmax.f32 %v2176, 0.0
      %v2243 = vmax.f32 %v2177, 0.0
      %v2244 = vmax.f32 %v2178, 0.0
      %v2245 = vmax.f32 %v2179, 0.0
      %v2246 = vmax.f32 %v2180, 0.0
      %v2247 = vmax.f32 %v2181, 0.0
      %v2248 = vmax.f32 %v2182, 0.0
      %v2249 = vmax.f32 %v2183, 0.0
      %v2250 = vmax.f32 %v2184, 0.0
      %v2251 = vmax.f32 %v2185, 0.0
      %v2252 = vmax.f32 %v2186, 0.0
      %v2253 = vmax.f32 %v2187, 0.0
      %v2254 = vmax.f32 %v2188, 0.0
      %v2255 = vmax.f32 %v2189, 0.0
      %v2256 = vmax.f32 %v2190, 0.0
      %v2257 = vmax.f32 %v2191, 0.0
      %v2258 = vmax.f32 %v2192, 0.0
      %v2259 = vmax.f32 %v2193, 0.0
      %v2260 = vmax.f32 %v2194, 0.0
      %v2261 = vmax.f32 %v2195, 0.0
      %v2262 = vmax.f32 %v2196, 0.0
      %v2263 = vmax.f32 %v2197, 0.0
      %v2264 = vmax.f32 %v2198, 0.0
      %v2265 = vmax.f32 %v2199, 0.0
      %v2266 = vmax.f32 %v2200, 0.0
      %v2267 = vmax.f32 %v2201, 0.0
      %v2268 = vmax.f32 %v2202, 0.0
      %v2269 = vmax.f32 %v2203, 0.0
      %v2270 = vmax.f32 %v2204, 0.0
      %v2271 = vmax.f32 %v2205, 0.0
      %v2272 = vmax.f32 %v2206, 0.0
      %v2273 = vmax.f32 %v2207, 0.0
      %v2274 = vpack.c.bf16 %v2209, %v2208
      %v2275 = vpack.c.bf16 %v2211, %v2210
      %v2276 = vpack.c.bf16 %v2213, %v2212
      %v2277 = vpack.c.bf16 %v2215, %v2214
      %v2278 = vpack.c.bf16 %v2217, %v2216
      %v2279 = vpack.c.bf16 %v2219, %v2218
      %v2280 = vpack.c.bf16 %v2221, %v2220
      %v2281 = vpack.c.bf16 %v2223, %v2222
      %v2282 = vpack.c.bf16 %v2225, %v2224
      %v2283 = vpack.c.bf16 %v2227, %v2226
      %v2284 = vpack.c.bf16 %v2229, %v2228
      %v2285 = vpack.c.bf16 %v2231, %v2230
      %v2286 = vpack.c.bf16 %v2233, %v2232
      %v2287 = vpack.c.bf16 %v2235, %v2234
      %v2288 = vpack.c.bf16 %v2237, %v2236
      %v2289 = vpack.c.bf16 %v2239, %v2238
      %v2290 = vpack.c.bf16 %v2241, %v2240
      %v2291 = vpack.c.bf16 %v2243, %v2242
      %v2292 = vpack.c.bf16 %v2245, %v2244
      %v2293 = vpack.c.bf16 %v2247, %v2246
      %v2294 = vpack.c.bf16 %v2249, %v2248
      %v2295 = vpack.c.bf16 %v2251, %v2250
      %v2296 = vpack.c.bf16 %v2253, %v2252
      %v2297 = vpack.c.bf16 %v2255, %v2254
      %v2298 = vpack.c.bf16 %v2257, %v2256
      %v2299 = vpack.c.bf16 %v2259, %v2258
      %v2300 = vpack.c.bf16 %v2261, %v2260
      %v2301 = vpack.c.bf16 %v2263, %v2262
      %v2302 = vpack.c.bf16 %v2265, %v2264
      %v2303 = vpack.c.bf16 %v2267, %v2266
      %v2304 = vpack.c.bf16 %v2269, %v2268
      %v2305 = vpack.c.bf16 %v2271, %v2270
      %v2306 = vpack.c.bf16 %v2273, %v2272
      %v2307 = vld [vmem:[%s2] sm:$0xf]
      %v2308 = vld [vmem:[%s2 + $0x4] sm:$0xf]
      %v2309 = vld [vmem:[%s2 + $0x8] sm:$0xf]
      %v2310 = vld [vmem:[%s2 + $0xc] sm:$0xf]
      %v2311 = vld [vmem:[%s2 + $0x10] sm:$0xf]
      %v2312 = vld [vmem:[%s2 + $0x14] sm:$0xf]
      %v2313 = vld [vmem:[%s2 + $0x18] sm:$0xf]
      %v2314 = vld [vmem:[%s2 + $0x1c] sm:$0xf]
      %v2323 = vunpack.c.l.b16 %v2307
      %v2324 = vunpack.c.l.b16 %v2308
      %v2325 = vunpack.c.l.b16 %v2309
      %v2326 = vunpack.c.l.b16 %v2310
      %v2327 = vunpack.c.l.b16 %v2311
      %v2328 = vunpack.c.l.b16 %v2312
      %v2329 = vunpack.c.l.b16 %v2313
      %v2330 = vunpack.c.l.b16 %v2314
      %v2331 = vpack.c.b16 %v2324, %v2323
      %v2332 = vpack.c.b16 %v2326, %v2325
      %v2333 = vpack.c.b16 %v2328, %v2327
      %v2334 = vpack.c.b16 %v2330, %v2329
      %vm2339 = vcmask 523264
      %v2341 = vsel %vm2339, %v2274, 0
      %v2344 = vsel %vm2339, %v2275, 0
      %v2347 = vsel %vm2339, %v2276, 0
      %v2350 = vsel %vm2339, %v2277, 0
      %v2353 = vsel %vm2339, %v2278, 0
      %v2356 = vsel %vm2339, %v2279, 0
      %v2359 = vsel %vm2339, %v2280, 0
      %v2362 = vsel %vm2339, %v2281, 0
      %v2365 = vsel %vm2339, %v2282, 0
      %v2368 = vsel %vm2339, %v2283, 0
      %v2371 = vsel %vm2339, %v2284, 0
      %v2374 = vsel %vm2339, %v2285, 0
      %v2377 = vsel %vm2339, %v2286, 0
      %v2380 = vsel %vm2339, %v2287, 0
      %v2383 = vsel %vm2339, %v2288, 0
      %v2386 = vsel %vm2339, %v2289, 0
      %v2389 = vsel %vm2339, %v2290, 0
      %v2392 = vsel %vm2339, %v2291, 0
      %v2395 = vsel %vm2339, %v2292, 0
      %v2398 = vsel %vm2339, %v2293, 0
      %v2401 = vsel %vm2339, %v2294, 0
      %v2404 = vsel %vm2339, %v2295, 0
      %v2407 = vsel %vm2339, %v2296, 0
      %v2410 = vsel %vm2339, %v2297, 0
      %v2413 = vsel %vm2339, %v2298, 0
      %v2416 = vsel %vm2339, %v2299, 0
      %v2419 = vsel %vm2339, %v2300, 0
      %v2422 = vsel %vm2339, %v2301, 0
      %v2425 = vsel %vm2339, %v2302, 0
      %v2428 = vsel %vm2339, %v2303, 0
      %v2431 = vsel %vm2339, %v2304, 0
      %v2434 = vsel %vm2339, %v2305, 0
      %v2437 = vsel %vm2339, %v2306, 0
      %2439 = vmatpush.bf16.msra.mxu0 0
      %2440 = vmatpush.bf16.msra.mxu0 0
      %2441 = vmatpush.bf16.msra.mxu0 0
      %2442 = vmatpush.bf16.msra.mxu0 0
      %2443 = vmatpush.bf16.msra.mxu0 %v2334
      %2444 = vmatpush.bf16.msra.mxu0 %v2333
      %2445 = vmatpush.bf16.msra.mxu0 %v2332
      %2446 = vmatpush.bf16.msra.mxu0 %v2331
      %2447 = vmatmul.bf16.gmra.mxu0 %v2341
      %v2448 = vpop.f32.mrf.mxu0
      %v2449 = vadd.f32 0.0, %v2448
      %v2450 = vpop.f32.mrf.mxu0
      %v2451 = vadd.f32 0.0, %v2450
      %2452 = vmatmul.bf16.gmra.mxu0 %v2344
      %v2453 = vpop.f32.mrf.mxu0
      %v2454 = vadd.f32 0.0, %v2453
      %v2455 = vpop.f32.mrf.mxu0
      %v2456 = vadd.f32 0.0, %v2455
      %2457 = vmatmul.bf16.gmra.mxu0 %v2347
      %v2458 = vpop.f32.mrf.mxu0
      %v2459 = vadd.f32 0.0, %v2458
      %v2460 = vpop.f32.mrf.mxu0
      %v2461 = vadd.f32 0.0, %v2460
      %2462 = vmatmul.bf16.gmra.mxu0 %v2350
      %v2463 = vpop.f32.mrf.mxu0
      %v2464 = vadd.f32 0.0, %v2463
      %v2465 = vpop.f32.mrf.mxu0
      %v2466 = vadd.f32 0.0, %v2465
      %2467 = vmatmul.bf16.gmra.mxu0 %v2353
      %v2468 = vpop.f32.mrf.mxu0
      %v2469 = vadd.f32 0.0, %v2468
      %v2470 = vpop.f32.mrf.mxu0
      %v2471 = vadd.f32 0.0, %v2470
      %2472 = vmatmul.bf16.gmra.mxu0 %v2356
      %v2473 = vpop.f32.mrf.mxu0
      %v2474 = vadd.f32 0.0, %v2473
      %v2475 = vpop.f32.mrf.mxu0
      %v2476 = vadd.f32 0.0, %v2475
      %2477 = vmatmul.bf16.gmra.mxu0 %v2359
      %v2478 = vpop.f32.mrf.mxu0
      %v2479 = vadd.f32 0.0, %v2478
      %v2480 = vpop.f32.mrf.mxu0
      %v2481 = vadd.f32 0.0, %v2480
      %2482 = vmatmul.bf16.gmra.mxu0 %v2362
      %v2483 = vpop.f32.mrf.mxu0
      %v2484 = vadd.f32 0.0, %v2483
      %v2485 = vpop.f32.mrf.mxu0
      %v2486 = vadd.f32 0.0, %v2485
      %2487 = vmatmul.bf16.gmra.mxu0 %v2365
      %v2488 = vpop.f32.mrf.mxu0
      %v2489 = vadd.f32 0.0, %v2488
      %v2490 = vpop.f32.mrf.mxu0
      %v2491 = vadd.f32 0.0, %v2490
      %2492 = vmatmul.bf16.gmra.mxu0 %v2368
      %v2493 = vpop.f32.mrf.mxu0
      %v2494 = vadd.f32 0.0, %v2493
      %v2495 = vpop.f32.mrf.mxu0
      %v2496 = vadd.f32 0.0, %v2495
      %2497 = vmatmul.bf16.gmra.mxu0 %v2371
      %v2498 = vpop.f32.mrf.mxu0
      %v2499 = vadd.f32 0.0, %v2498
      %v2500 = vpop.f32.mrf.mxu0
      %v2501 = vadd.f32 0.0, %v2500
      %2502 = vmatmul.bf16.gmra.mxu0 %v2374
      %v2503 = vpop.f32.mrf.mxu0
      %v2504 = vadd.f32 0.0, %v2503
      %v2505 = vpop.f32.mrf.mxu0
      %v2506 = vadd.f32 0.0, %v2505
      %2507 = vmatmul.bf16.gmra.mxu0 %v2377
      %v2508 = vpop.f32.mrf.mxu0
      %v2509 = vadd.f32 0.0, %v2508
      %v2510 = vpop.f32.mrf.mxu0
      %v2511 = vadd.f32 0.0, %v2510
      %2512 = vmatmul.bf16.gmra.mxu0 %v2380
      %v2513 = vpop.f32.mrf.mxu0
      %v2514 = vadd.f32 0.0, %v2513
      %v2515 = vpop.f32.mrf.mxu0
      %v2516 = vadd.f32 0.0, %v2515
      %2517 = vmatmul.bf16.gmra.mxu0 %v2383
      %v2518 = vpop.f32.mrf.mxu0
      %v2519 = vadd.f32 0.0, %v2518
      %v2520 = vpop.f32.mrf.mxu0
      %v2521 = vadd.f32 0.0, %v2520
      %2522 = vmatmul.bf16.gmra.mxu0 %v2386
      %v2523 = vpop.f32.mrf.mxu0
      %v2524 = vadd.f32 0.0, %v2523
      %v2525 = vpop.f32.mrf.mxu0
      %v2526 = vadd.f32 0.0, %v2525
      %2527 = vmatmul.bf16.gmra.mxu0 %v2389
      %v2528 = vpop.f32.mrf.mxu0
      %v2529 = vadd.f32 0.0, %v2528
      %v2530 = vpop.f32.mrf.mxu0
      %v2531 = vadd.f32 0.0, %v2530
      %2532 = vmatmul.bf16.gmra.mxu0 %v2392
      %v2533 = vpop.f32.mrf.mxu0
      %v2534 = vadd.f32 0.0, %v2533
      %v2535 = vpop.f32.mrf.mxu0
      %v2536 = vadd.f32 0.0, %v2535
      %2537 = vmatmul.bf16.gmra.mxu0 %v2395
      %v2538 = vpop.f32.mrf.mxu0
      %v2539 = vadd.f32 0.0, %v2538
      %v2540 = vpop.f32.mrf.mxu0
      %v2541 = vadd.f32 0.0, %v2540
      %2542 = vmatmul.bf16.gmra.mxu0 %v2398
      %v2543 = vpop.f32.mrf.mxu0
      %v2544 = vadd.f32 0.0, %v2543
      %v2545 = vpop.f32.mrf.mxu0
      %v2546 = vadd.f32 0.0, %v2545
      %2547 = vmatmul.bf16.gmra.mxu0 %v2401
      %v2548 = vpop.f32.mrf.mxu0
      %v2549 = vadd.f32 0.0, %v2548
      %v2550 = vpop.f32.mrf.mxu0
      %v2551 = vadd.f32 0.0, %v2550
      %2552 = vmatmul.bf16.gmra.mxu0 %v2404
      %v2553 = vpop.f32.mrf.mxu0
      %v2554 = vadd.f32 0.0, %v2553
      %v2555 = vpop.f32.mrf.mxu0
      %v2556 = vadd.f32 0.0, %v2555
      %2557 = vmatmul.bf16.gmra.mxu0 %v2407
      %v2558 = vpop.f32.mrf.mxu0
      %v2559 = vadd.f32 0.0, %v2558
      %v2560 = vpop.f32.mrf.mxu0
      %v2561 = vadd.f32 0.0, %v2560
      %2562 = vmatmul.bf16.gmra.mxu0 %v2410
      %v2563 = vpop.f32.mrf.mxu0
      %v2564 = vadd.f32 0.0, %v2563
      %v2565 = vpop.f32.mrf.mxu0
      %v2566 = vadd.f32 0.0, %v2565
      %2567 = vmatmul.bf16.gmra.mxu0 %v2413
      %v2568 = vpop.f32.mrf.mxu0
      %v2569 = vadd.f32 0.0, %v2568
      %v2570 = vpop.f32.mrf.mxu0
      %v2571 = vadd.f32 0.0, %v2570
      %2572 = vmatmul.bf16.gmra.mxu0 %v2416
      %v2573 = vpop.f32.mrf.mxu0
      %v2574 = vadd.f32 0.0, %v2573
      %v2575 = vpop.f32.mrf.mxu0
      %v2576 = vadd.f32 0.0, %v2575
      %2577 = vmatmul.bf16.gmra.mxu0 %v2419
      %v2578 = vpop.f32.mrf.mxu0
      %v2579 = vadd.f32 0.0, %v2578
      %v2580 = vpop.f32.mrf.mxu0
      %v2581 = vadd.f32 0.0, %v2580
      %2582 = vmatmul.bf16.gmra.mxu0 %v2422
      %v2583 = vpop.f32.mrf.mxu0
      %v2584 = vadd.f32 0.0, %v2583
      %v2585 = vpop.f32.mrf.mxu0
      %v2586 = vadd.f32 0.0, %v2585
      %2587 = vmatmul.bf16.gmra.mxu0 %v2425
      %v2588 = vpop.f32.mrf.mxu0
      %v2589 = vadd.f32 0.0, %v2588
      %v2590 = vpop.f32.mrf.mxu0
      %v2591 = vadd.f32 0.0, %v2590
      %2592 = vmatmul.bf16.gmra.mxu0 %v2428
      %v2593 = vpop.f32.mrf.mxu0
      %v2594 = vadd.f32 0.0, %v2593
      %v2595 = vpop.f32.mrf.mxu0
      %v2596 = vadd.f32 0.0, %v2595
      %2597 = vmatmul.bf16.gmra.mxu0 %v2431
      %v2598 = vpop.f32.mrf.mxu0
      %v2599 = vadd.f32 0.0, %v2598
      %v2600 = vpop.f32.mrf.mxu0
      %v2601 = vadd.f32 0.0, %v2600
      %2602 = vmatmul.bf16.gmra.mxu0 %v2434
      %v2603 = vpop.f32.mrf.mxu0
      %v2604 = vadd.f32 0.0, %v2603
      %v2605 = vpop.f32.mrf.mxu0
      %v2606 = vadd.f32 0.0, %v2605
      %2607 = vmatmul.bf16.gmra.mxu0 %v2437
      %v2608 = vpop.f32.mrf.mxu0
      %v2609 = vadd.f32 0.0, %v2608
      %v2610 = vpop.f32.mrf.mxu0
      %v2611 = vadd.f32 0.0, %v2610
      %2612 = vdwg.mxu0
      %v2613 = vmax.f32 %v2449, 0.0
      %v2614 = vmax.f32 %v2451, 0.0
      %v2615 = vmax.f32 %v2454, 0.0
      %v2616 = vmax.f32 %v2456, 0.0
      %v2617 = vmax.f32 %v2459, 0.0
      %v2618 = vmax.f32 %v2461, 0.0
      %v2619 = vmax.f32 %v2464, 0.0
      %v2620 = vmax.f32 %v2466, 0.0
      %v2621 = vmax.f32 %v2469, 0.0
      %v2622 = vmax.f32 %v2471, 0.0
      %v2623 = vmax.f32 %v2474, 0.0
      %v2624 = vmax.f32 %v2476, 0.0
      %v2625 = vmax.f32 %v2479, 0.0
      %v2626 = vmax.f32 %v2481, 0.0
      %v2627 = vmax.f32 %v2484, 0.0
      %v2628 = vmax.f32 %v2486, 0.0
      %v2629 = vmax.f32 %v2489, 0.0
      %v2630 = vmax.f32 %v2491, 0.0
      %v2631 = vmax.f32 %v2494, 0.0
      %v2632 = vmax.f32 %v2496, 0.0
      %v2633 = vmax.f32 %v2499, 0.0
      %v2634 = vmax.f32 %v2501, 0.0
      %v2635 = vmax.f32 %v2504, 0.0
      %v2636 = vmax.f32 %v2506, 0.0
      %v2637 = vmax.f32 %v2509, 0.0
      %v2638 = vmax.f32 %v2511, 0.0
      %v2639 = vmax.f32 %v2514, 0.0
      %v2640 = vmax.f32 %v2516, 0.0
      %v2641 = vmax.f32 %v2519, 0.0
      %v2642 = vmax.f32 %v2521, 0.0
      %v2643 = vmax.f32 %v2524, 0.0
      %v2644 = vmax.f32 %v2526, 0.0
      %v2645 = vmax.f32 %v2529, 0.0
      %v2646 = vmax.f32 %v2531, 0.0
      %v2647 = vmax.f32 %v2534, 0.0
      %v2648 = vmax.f32 %v2536, 0.0
      %v2649 = vmax.f32 %v2539, 0.0
      %v2650 = vmax.f32 %v2541, 0.0
      %v2651 = vmax.f32 %v2544, 0.0
      %v2652 = vmax.f32 %v2546, 0.0
      %v2653 = vmax.f32 %v2549, 0.0
      %v2654 = vmax.f32 %v2551, 0.0
      %v2655 = vmax.f32 %v2554, 0.0
      %v2656 = vmax.f32 %v2556, 0.0
      %v2657 = vmax.f32 %v2559, 0.0
      %v2658 = vmax.f32 %v2561, 0.0
      %v2659 = vmax.f32 %v2564, 0.0
      %v2660 = vmax.f32 %v2566, 0.0
      %v2661 = vmax.f32 %v2569, 0.0
      %v2662 = vmax.f32 %v2571, 0.0
      %v2663 = vmax.f32 %v2574, 0.0
      %v2664 = vmax.f32 %v2576, 0.0
      %v2665 = vmax.f32 %v2579, 0.0
      %v2666 = vmax.f32 %v2581, 0.0
      %v2667 = vmax.f32 %v2584, 0.0
      %v2668 = vmax.f32 %v2586, 0.0
      %v2669 = vmax.f32 %v2589, 0.0
      %v2670 = vmax.f32 %v2591, 0.0
      %v2671 = vmax.f32 %v2594, 0.0
      %v2672 = vmax.f32 %v2596, 0.0
      %v2673 = vmax.f32 %v2599, 0.0
      %v2674 = vmax.f32 %v2601, 0.0
      %v2675 = vmax.f32 %v2604, 0.0
      %v2676 = vmax.f32 %v2606, 0.0
      %v2677 = vmax.f32 %v2609, 0.0
      %v2678 = vmax.f32 %v2611, 0.0
      %v2679 = vpack.c.bf16 %v2614, %v2613
      %v2680 = vpack.c.bf16 %v2616, %v2615
      %v2681 = vpack.c.bf16 %v2618, %v2617
      %v2682 = vpack.c.bf16 %v2620, %v2619
      %v2683 = vpack.c.bf16 %v2622, %v2621
      %v2684 = vpack.c.bf16 %v2624, %v2623
      %v2685 = vpack.c.bf16 %v2626, %v2625
      %v2686 = vpack.c.bf16 %v2628, %v2627
      %v2687 = vpack.c.bf16 %v2630, %v2629
      %v2688 = vpack.c.bf16 %v2632, %v2631
      %v2689 = vpack.c.bf16 %v2634, %v2633
      %v2690 = vpack.c.bf16 %v2636, %v2635
      %v2691 = vpack.c.bf16 %v2638, %v2637
      %v2692 = vpack.c.bf16 %v2640, %v2639
      %v2693 = vpack.c.bf16 %v2642, %v2641
      %v2694 = vpack.c.bf16 %v2644, %v2643
      %v2695 = vpack.c.bf16 %v2646, %v2645
      %v2696 = vpack.c.bf16 %v2648, %v2647
      %v2697 = vpack.c.bf16 %v2650, %v2649
      %v2698 = vpack.c.bf16 %v2652, %v2651
      %v2699 = vpack.c.bf16 %v2654, %v2653
      %v2700 = vpack.c.bf16 %v2656, %v2655
      %v2701 = vpack.c.bf16 %v2658, %v2657
      %v2702 = vpack.c.bf16 %v2660, %v2659
      %v2703 = vpack.c.bf16 %v2662, %v2661
      %v2704 = vpack.c.bf16 %v2664, %v2663
      %v2705 = vpack.c.bf16 %v2666, %v2665
      %v2706 = vpack.c.bf16 %v2668, %v2667
      %v2707 = vpack.c.bf16 %v2670, %v2669
      %v2708 = vpack.c.bf16 %v2672, %v2671
      %v2709 = vpack.c.bf16 %v2674, %v2673
      %v2710 = vpack.c.bf16 %v2676, %v2675
      %v2711 = vpack.c.bf16 %v2678, %v2677
      %v2712 = vld [vmem:[%s3] sm:$0xf]
      %v2713 = vld [vmem:[%s3 + $0x4] sm:$0xf]
      %v2714 = vld [vmem:[%s3 + $0x8] sm:$0xf]
      %v2715 = vld [vmem:[%s3 + $0xc] sm:$0xf]
      %v2716 = vld [vmem:[%s3 + $0x10] sm:$0xf]
      %v2717 = vld [vmem:[%s3 + $0x14] sm:$0xf]
      %v2718 = vld [vmem:[%s3 + $0x18] sm:$0xf]
      %v2719 = vld [vmem:[%s3 + $0x1c] sm:$0xf]
      %v2728 = vunpack.c.l.b16 %v2712
      %v2729 = vunpack.c.l.b16 %v2713
      %v2730 = vunpack.c.l.b16 %v2714
      %v2731 = vunpack.c.l.b16 %v2715
      %v2732 = vunpack.c.l.b16 %v2716
      %v2733 = vunpack.c.l.b16 %v2717
      %v2734 = vunpack.c.l.b16 %v2718
      %v2735 = vunpack.c.l.b16 %v2719
      %v2736 = vpack.c.b16 %v2729, %v2728
      %v2737 = vpack.c.b16 %v2731, %v2730
      %v2738 = vpack.c.b16 %v2733, %v2732
      %v2739 = vpack.c.b16 %v2735, %v2734
      %v2745 = vsel %vm2339, %v2679, 0
      %v2748 = vsel %vm2339, %v2680, 0
      %v2751 = vsel %vm2339, %v2681, 0
      %v2754 = vsel %vm2339, %v2682, 0
      %v2757 = vsel %vm2339, %v2683, 0
      %v2760 = vsel %vm2339, %v2684, 0
      %v2763 = vsel %vm2339, %v2685, 0
      %v2766 = vsel %vm2339, %v2686, 0
      %v2769 = vsel %vm2339, %v2687, 0
      %v2772 = vsel %vm2339, %v2688, 0
      %v2775 = vsel %vm2339, %v2689, 0
      %v2778 = vsel %vm2339, %v2690, 0
      %v2781 = vsel %vm2339, %v2691, 0
      %v2784 = vsel %vm2339, %v2692, 0
      %v2787 = vsel %vm2339, %v2693, 0
      %v2790 = vsel %vm2339, %v2694, 0
      %v2793 = vsel %vm2339, %v2695, 0
      %v2796 = vsel %vm2339, %v2696, 0
      %v2799 = vsel %vm2339, %v2697, 0
      %v2802 = vsel %vm2339, %v2698, 0
      %v2805 = vsel %vm2339, %v2699, 0
      %v2808 = vsel %vm2339, %v2700, 0
      %v2811 = vsel %vm2339, %v2701, 0
      %v2814 = vsel %vm2339, %v2702, 0
      %v2817 = vsel %vm2339, %v2703, 0
      %v2820 = vsel %vm2339, %v2704, 0
      %v2823 = vsel %vm2339, %v2705, 0
      %v2826 = vsel %vm2339, %v2706, 0
      %v2829 = vsel %vm2339, %v2707, 0
      %v2832 = vsel %vm2339, %v2708, 0
      %v2835 = vsel %vm2339, %v2709, 0
      %v2838 = vsel %vm2339, %v2710, 0
      %v2841 = vsel %vm2339, %v2711, 0
      %2843 = vmatpush.bf16.msra.mxu0 0
      %2844 = vmatpush.bf16.msra.mxu0 0
      %2845 = vmatpush.bf16.msra.mxu0 0
      %2846 = vmatpush.bf16.msra.mxu0 0
      %2847 = vmatpush.bf16.msra.mxu0 %v2739
      %2848 = vmatpush.bf16.msra.mxu0 %v2738
      %2849 = vmatpush.bf16.msra.mxu0 %v2737
      %2850 = vmatpush.bf16.msra.mxu0 %v2736
      %2851 = vmatmul.bf16.gmra.mxu0 %v2745
      %v2852 = vpop.f32.mrf.mxu0
      %v2853 = vadd.f32 0.0, %v2852
      %v2854 = vpop.f32.mrf.mxu0
      %v2855 = vadd.f32 0.0, %v2854
      %2856 = vmatmul.bf16.gmra.mxu0 %v2748
      %v2857 = vpop.f32.mrf.mxu0
      %v2858 = vadd.f32 0.0, %v2857
      %v2859 = vpop.f32.mrf.mxu0
      %v2860 = vadd.f32 0.0, %v2859
      %2861 = vmatmul.bf16.gmra.mxu0 %v2751
      %v2862 = vpop.f32.mrf.mxu0
      %v2863 = vadd.f32 0.0, %v2862
      %v2864 = vpop.f32.mrf.mxu0
      %v2865 = vadd.f32 0.0, %v2864
      %2866 = vmatmul.bf16.gmra.mxu0 %v2754
      %v2867 = vpop.f32.mrf.mxu0
      %v2868 = vadd.f32 0.0, %v2867
      %v2869 = vpop.f32.mrf.mxu0
      %v2870 = vadd.f32 0.0, %v2869
      %2871 = vmatmul.bf16.gmra.mxu0 %v2757
      %v2872 = vpop.f32.mrf.mxu0
      %v2873 = vadd.f32 0.0, %v2872
      %v2874 = vpop.f32.mrf.mxu0
      %v2875 = vadd.f32 0.0, %v2874
      %2876 = vmatmul.bf16.gmra.mxu0 %v2760
      %v2877 = vpop.f32.mrf.mxu0
      %v2878 = vadd.f32 0.0, %v2877
      %v2879 = vpop.f32.mrf.mxu0
      %v2880 = vadd.f32 0.0, %v2879
      %2881 = vmatmul.bf16.gmra.mxu0 %v2763
      %v2882 = vpop.f32.mrf.mxu0
      %v2883 = vadd.f32 0.0, %v2882
      %v2884 = vpop.f32.mrf.mxu0
      %v2885 = vadd.f32 0.0, %v2884
      %2886 = vmatmul.bf16.gmra.mxu0 %v2766
      %v2887 = vpop.f32.mrf.mxu0
      %v2888 = vadd.f32 0.0, %v2887
      %v2889 = vpop.f32.mrf.mxu0
      %v2890 = vadd.f32 0.0, %v2889
      %2891 = vmatmul.bf16.gmra.mxu0 %v2769
      %v2892 = vpop.f32.mrf.mxu0
      %v2893 = vadd.f32 0.0, %v2892
      %v2894 = vpop.f32.mrf.mxu0
      %v2895 = vadd.f32 0.0, %v2894
      %2896 = vmatmul.bf16.gmra.mxu0 %v2772
      %v2897 = vpop.f32.mrf.mxu0
      %v2898 = vadd.f32 0.0, %v2897
      %v2899 = vpop.f32.mrf.mxu0
      %v2900 = vadd.f32 0.0, %v2899
      %2901 = vmatmul.bf16.gmra.mxu0 %v2775
      %v2902 = vpop.f32.mrf.mxu0
      %v2903 = vadd.f32 0.0, %v2902
      %v2904 = vpop.f32.mrf.mxu0
      %v2905 = vadd.f32 0.0, %v2904
      %2906 = vmatmul.bf16.gmra.mxu0 %v2778
      %v2907 = vpop.f32.mrf.mxu0
      %v2908 = vadd.f32 0.0, %v2907
      %v2909 = vpop.f32.mrf.mxu0
      %v2910 = vadd.f32 0.0, %v2909
      %2911 = vmatmul.bf16.gmra.mxu0 %v2781
      %v2912 = vpop.f32.mrf.mxu0
      %v2913 = vadd.f32 0.0, %v2912
      %v2914 = vpop.f32.mrf.mxu0
      %v2915 = vadd.f32 0.0, %v2914
      %2916 = vmatmul.bf16.gmra.mxu0 %v2784
      %v2917 = vpop.f32.mrf.mxu0
      %v2918 = vadd.f32 0.0, %v2917
      %v2919 = vpop.f32.mrf.mxu0
      %v2920 = vadd.f32 0.0, %v2919
      %2921 = vmatmul.bf16.gmra.mxu0 %v2787
      %v2922 = vpop.f32.mrf.mxu0
      %v2923 = vadd.f32 0.0, %v2922
      %v2924 = vpop.f32.mrf.mxu0
      %v2925 = vadd.f32 0.0, %v2924
      %2926 = vmatmul.bf16.gmra.mxu0 %v2790
      %v2927 = vpop.f32.mrf.mxu0
      %v2928 = vadd.f32 0.0, %v2927
      %v2929 = vpop.f32.mrf.mxu0
      %v2930 = vadd.f32 0.0, %v2929
      %2931 = vmatmul.bf16.gmra.mxu0 %v2793
      %v2932 = vpop.f32.mrf.mxu0
      %v2933 = vadd.f32 0.0, %v2932
      %v2934 = vpop.f32.mrf.mxu0
      %v2935 = vadd.f32 0.0, %v2934
      %2936 = vmatmul.bf16.gmra.mxu0 %v2796
      %v2937 = vpop.f32.mrf.mxu0
      %v2938 = vadd.f32 0.0, %v2937
      %v2939 = vpop.f32.mrf.mxu0
      %v2940 = vadd.f32 0.0, %v2939
      %2941 = vmatmul.bf16.gmra.mxu0 %v2799
      %v2942 = vpop.f32.mrf.mxu0
      %v2943 = vadd.f32 0.0, %v2942
      %v2944 = vpop.f32.mrf.mxu0
      %v2945 = vadd.f32 0.0, %v2944
      %2946 = vmatmul.bf16.gmra.mxu0 %v2802
      %v2947 = vpop.f32.mrf.mxu0
      %v2948 = vadd.f32 0.0, %v2947
      %v2949 = vpop.f32.mrf.mxu0
      %v2950 = vadd.f32 0.0, %v2949
      %2951 = vmatmul.bf16.gmra.mxu0 %v2805
      %v2952 = vpop.f32.mrf.mxu0
      %v2953 = vadd.f32 0.0, %v2952
      %v2954 = vpop.f32.mrf.mxu0
      %v2955 = vadd.f32 0.0, %v2954
      %2956 = vmatmul.bf16.gmra.mxu0 %v2808
      %v2957 = vpop.f32.mrf.mxu0
      %v2958 = vadd.f32 0.0, %v2957
      %v2959 = vpop.f32.mrf.mxu0
      %v2960 = vadd.f32 0.0, %v2959
      %2961 = vmatmul.bf16.gmra.mxu0 %v2811
      %v2962 = vpop.f32.mrf.mxu0
      %v2963 = vadd.f32 0.0, %v2962
      %v2964 = vpop.f32.mrf.mxu0
      %v2965 = vadd.f32 0.0, %v2964
      %2966 = vmatmul.bf16.gmra.mxu0 %v2814
      %v2967 = vpop.f32.mrf.mxu0
      %v2968 = vadd.f32 0.0, %v2967
      %v2969 = vpop.f32.mrf.mxu0
      %v2970 = vadd.f32 0.0, %v2969
      %2971 = vmatmul.bf16.gmra.mxu0 %v2817
      %v2972 = vpop.f32.mrf.mxu0
      %v2973 = vadd.f32 0.0, %v2972
      %v2974 = vpop.f32.mrf.mxu0
      %v2975 = vadd.f32 0.0, %v2974
      %2976 = vmatmul.bf16.gmra.mxu0 %v2820
      %v2977 = vpop.f32.mrf.mxu0
      %v2978 = vadd.f32 0.0, %v2977
      %v2979 = vpop.f32.mrf.mxu0
      %v2980 = vadd.f32 0.0, %v2979
      %2981 = vmatmul.bf16.gmra.mxu0 %v2823
      %v2982 = vpop.f32.mrf.mxu0
      %v2983 = vadd.f32 0.0, %v2982
      %v2984 = vpop.f32.mrf.mxu0
      %v2985 = vadd.f32 0.0, %v2984
      %2986 = vmatmul.bf16.gmra.mxu0 %v2826
      %v2987 = vpop.f32.mrf.mxu0
      %v2988 = vadd.f32 0.0, %v2987
      %v2989 = vpop.f32.mrf.mxu0
      %v2990 = vadd.f32 0.0, %v2989
      %2991 = vmatmul.bf16.gmra.mxu0 %v2829
      %v2992 = vpop.f32.mrf.mxu0
      %v2993 = vadd.f32 0.0, %v2992
      %v2994 = vpop.f32.mrf.mxu0
      %v2995 = vadd.f32 0.0, %v2994
      %2996 = vmatmul.bf16.gmra.mxu0 %v2832
      %v2997 = vpop.f32.mrf.mxu0
      %v2998 = vadd.f32 0.0, %v2997
      %v2999 = vpop.f32.mrf.mxu0
      %v3000 = vadd.f32 0.0, %v2999
      %3001 = vmatmul.bf16.gmra.mxu0 %v2835
      %v3002 = vpop.f32.mrf.mxu0
      %v3003 = vadd.f32 0.0, %v3002
      %v3004 = vpop.f32.mrf.mxu0
      %v3005 = vadd.f32 0.0, %v3004
      %3006 = vmatmul.bf16.gmra.mxu0 %v2838
      %v3007 = vpop.f32.mrf.mxu0
      %v3008 = vadd.f32 0.0, %v3007
      %v3009 = vpop.f32.mrf.mxu0
      %v3010 = vadd.f32 0.0, %v3009
      %3011 = vmatmul.bf16.gmra.mxu0 %v2841
      %v3012 = vpop.f32.mrf.mxu0
      %v3013 = vadd.f32 0.0, %v3012
      %v3014 = vpop.f32.mrf.mxu0
      %v3015 = vadd.f32 0.0, %v3014
      %3016 = vdwg.mxu0
      %v3017 = vmax.f32 %v2853, 0.0
      %v3018 = vmax.f32 %v2855, 0.0
      %v3019 = vmax.f32 %v2858, 0.0
      %v3020 = vmax.f32 %v2860, 0.0
      %v3021 = vmax.f32 %v2863, 0.0
      %v3022 = vmax.f32 %v2865, 0.0
      %v3023 = vmax.f32 %v2868, 0.0
      %v3024 = vmax.f32 %v2870, 0.0
      %v3025 = vmax.f32 %v2873, 0.0
      %v3026 = vmax.f32 %v2875, 0.0
      %v3027 = vmax.f32 %v2878, 0.0
      %v3028 = vmax.f32 %v2880, 0.0
      %v3029 = vmax.f32 %v2883, 0.0
      %v3030 = vmax.f32 %v2885, 0.0
      %v3031 = vmax.f32 %v2888, 0.0
      %v3032 = vmax.f32 %v2890, 0.0
      %v3033 = vmax.f32 %v2893, 0.0
      %v3034 = vmax.f32 %v2895, 0.0
      %v3035 = vmax.f32 %v2898, 0.0
      %v3036 = vmax.f32 %v2900, 0.0
      %v3037 = vmax.f32 %v2903, 0.0
      %v3038 = vmax.f32 %v2905, 0.0
      %v3039 = vmax.f32 %v2908, 0.0
      %v3040 = vmax.f32 %v2910, 0.0
      %v3041 = vmax.f32 %v2913, 0.0
      %v3042 = vmax.f32 %v2915, 0.0
      %v3043 = vmax.f32 %v2918, 0.0
      %v3044 = vmax.f32 %v2920, 0.0
      %v3045 = vmax.f32 %v2923, 0.0
      %v3046 = vmax.f32 %v2925, 0.0
      %v3047 = vmax.f32 %v2928, 0.0
      %v3048 = vmax.f32 %v2930, 0.0
      %v3049 = vmax.f32 %v2933, 0.0
      %v3050 = vmax.f32 %v2935, 0.0
      %v3051 = vmax.f32 %v2938, 0.0
      %v3052 = vmax.f32 %v2940, 0.0
      %v3053 = vmax.f32 %v2943, 0.0
      %v3054 = vmax.f32 %v2945, 0.0
      %v3055 = vmax.f32 %v2948, 0.0
      %v3056 = vmax.f32 %v2950, 0.0
      %v3057 = vmax.f32 %v2953, 0.0
      %v3058 = vmax.f32 %v2955, 0.0
      %v3059 = vmax.f32 %v2958, 0.0
      %v3060 = vmax.f32 %v2960, 0.0
      %v3061 = vmax.f32 %v2963, 0.0
      %v3062 = vmax.f32 %v2965, 0.0
      %v3063 = vmax.f32 %v2968, 0.0
      %v3064 = vmax.f32 %v2970, 0.0
      %v3065 = vmax.f32 %v2973, 0.0
      %v3066 = vmax.f32 %v2975, 0.0
      %v3067 = vmax.f32 %v2978, 0.0
      %v3068 = vmax.f32 %v2980, 0.0
      %v3069 = vmax.f32 %v2983, 0.0
      %v3070 = vmax.f32 %v2985, 0.0
      %v3071 = vmax.f32 %v2988, 0.0
      %v3072 = vmax.f32 %v2990, 0.0
      %v3073 = vmax.f32 %v2993, 0.0
      %v3074 = vmax.f32 %v2995, 0.0
      %v3075 = vmax.f32 %v2998, 0.0
      %v3076 = vmax.f32 %v3000, 0.0
      %v3077 = vmax.f32 %v3003, 0.0
      %v3078 = vmax.f32 %v3005, 0.0
      %v3079 = vmax.f32 %v3008, 0.0
      %v3080 = vmax.f32 %v3010, 0.0
      %v3081 = vmax.f32 %v3013, 0.0
      %v3082 = vmax.f32 %v3015, 0.0
      %v3083 = vlaneseq
      %v3084 = vshrl.u32 %v3083, 7
      %v3085 = vadd.s32 %v3084, 8
      %v3086 = vadd.s32 %v3084, 16
      %v3087 = vadd.s32 %v3084, 24
      %v3088 = vadd.s32 %v3084, 32
      %v3089 = vadd.s32 %v3084, 40
      %v3090 = vadd.s32 %v3084, 48
      %v3091 = vadd.s32 %v3084, 56
      %v3092 = vadd.s32 %v3084, 64
      %v3093 = vadd.s32 %v3084, 72
      %v3094 = vadd.s32 %v3084, 80
      %v3095 = vadd.s32 %v3084, 88
      %v3096 = vadd.s32 %v3084, 96
      %v3097 = vadd.s32 %v3084, 104
      %v3098 = vadd.s32 %v3084, 112
      %v3099 = vadd.s32 %v3084, 120
      %v3100 = vadd.s32 %v3084, 128
      %v3101 = vadd.s32 %v3084, 136
      %v3102 = vadd.s32 %v3084, 144
      %v3103 = vadd.s32 %v3084, 152
      %v3104 = vadd.s32 %v3084, 160
      %v3105 = vadd.s32 %v3084, 168
      %v3106 = vadd.s32 %v3084, 176
      %v3107 = vadd.s32 %v3084, 184
      %v3108 = vadd.s32 %v3084, 192
      %v3109 = vadd.s32 %v3084, 200
      %v3110 = vadd.s32 %v3084, 208
      %v3111 = vadd.s32 %v3084, 216
      %v3112 = vadd.s32 %v3084, 224
      %v3113 = vadd.s32 %v3084, 232
      %v3114 = vadd.s32 %v3084, 240
      %v3115 = vadd.s32 %v3084, 248
      %v3116 = vadd.s32 %v3084, 256
      %v3117 = vadd.s32 %v3084, 264
      %v3118 = vadd.s32 %v3084, 272
      %v3119 = vadd.s32 %v3084, 280
      %v3120 = vadd.s32 %v3084, 288
      %v3121 = vadd.s32 %v3084, 296
      %v3122 = vadd.s32 %v3084, 304
      %v3123 = vadd.s32 %v3084, 312
      %v3124 = vadd.s32 %v3084, 320
      %v3125 = vadd.s32 %v3084, 328
      %v3126 = vadd.s32 %v3084, 336
      %v3127 = vadd.s32 %v3084, 344
      %v3128 = vadd.s32 %v3084, 352
      %v3129 = vadd.s32 %v3084, 360
      %v3130 = vadd.s32 %v3084, 368
      %v3131 = vadd.s32 %v3084, 376
      %v3132 = vadd.s32 %v3084, 384
      %v3133 = vadd.s32 %v3084, 392
      %v3134 = vadd.s32 %v3084, 400
      %v3135 = vadd.s32 %v3084, 408
      %v3136 = vadd.s32 %v3084, 416
      %v3137 = vadd.s32 %v3084, 424
      %v3138 = vadd.s32 %v3084, 432
      %v3139 = vadd.s32 %v3084, 440
      %v3140 = vadd.s32 %v3084, 448
      %v3141 = vadd.s32 %v3084, 456
      %v3142 = vadd.s32 %v3084, 464
      %v3143 = vadd.s32 %v3084, 472
      %v3144 = vadd.s32 %v3084, 480
      %v3145 = vadd.s32 %v3084, 488
      %v3146 = vadd.s32 %v3084, 496
      %v3147 = vadd.s32 %v3084, 504
      %v3148 = vadd.s32 %v3084, 512
      %v3149 = vadd.s32 %v3084, 520
      %vm3150 = vcmp.lt.s32.totalorder %v3084, 511
      %vm3151 = vcmp.lt.s32.totalorder %v3085, 511
      %vm3152 = vcmp.lt.s32.totalorder %v3086, 511
      %vm3153 = vcmp.lt.s32.totalorder %v3087, 511
      %vm3154 = vcmp.lt.s32.totalorder %v3088, 511
      %vm3155 = vcmp.lt.s32.totalorder %v3089, 511
      %vm3156 = vcmp.lt.s32.totalorder %v3090, 511
      %vm3157 = vcmp.lt.s32.totalorder %v3091, 511
      %vm3158 = vcmp.lt.s32.totalorder %v3092, 511
      %vm3159 = vcmp.lt.s32.totalorder %v3093, 511
      %vm3160 = vcmp.lt.s32.totalorder %v3094, 511
      %vm3161 = vcmp.lt.s32.totalorder %v3095, 511
      %vm3162 = vcmp.lt.s32.totalorder %v3096, 511
      %vm3163 = vcmp.lt.s32.totalorder %v3097, 511
      %vm3164 = vcmp.lt.s32.totalorder %v3098, 511
      %vm3165 = vcmp.lt.s32.totalorder %v3099, 511
      %vm3166 = vcmp.lt.s32.totalorder %v3100, 511
      %vm3167 = vcmp.lt.s32.totalorder %v3101, 511
      %vm3168 = vcmp.lt.s32.totalorder %v3102, 511
      %vm3169 = vcmp.lt.s32.totalorder %v3103, 511
      %vm3170 = vcmp.lt.s32.totalorder %v3104, 511
      %vm3171 = vcmp.lt.s32.totalorder %v3105, 511
      %vm3172 = vcmp.lt.s32.totalorder %v3106, 511
      %vm3173 = vcmp.lt.s32.totalorder %v3107, 511
      %vm3174 = vcmp.lt.s32.totalorder %v3108, 511
      %vm3175 = vcmp.lt.s32.totalorder %v3109, 511
      %vm3176 = vcmp.lt.s32.totalorder %v3110, 511
      %vm3177 = vcmp.lt.s32.totalorder %v3111, 511
      %vm3178 = vcmp.lt.s32.totalorder %v3112, 511
      %vm3179 = vcmp.lt.s32.totalorder %v3113, 511
      %vm3180 = vcmp.lt.s32.totalorder %v3114, 511
      %vm3181 = vcmp.lt.s32.totalorder %v3115, 511
      %vm3182 = vcmp.lt.s32.totalorder %v3116, 511
      %vm3183 = vcmp.lt.s32.totalorder %v3117, 511
      %vm3184 = vcmp.lt.s32.totalorder %v3118, 511
      %vm3185 = vcmp.lt.s32.totalorder %v3119, 511
      %vm3186 = vcmp.lt.s32.totalorder %v3120, 511
      %vm3187 = vcmp.lt.s32.totalorder %v3121, 511
      %vm3188 = vcmp.lt.s32.totalorder %v3122, 511
      %vm3189 = vcmp.lt.s32.totalorder %v3123, 511
      %vm3190 = vcmp.lt.s32.totalorder %v3124, 511
      %vm3191 = vcmp.lt.s32.totalorder %v3125, 511
      %vm3192 = vcmp.lt.s32.totalorder %v3126, 511
      %vm3193 = vcmp.lt.s32.totalorder %v3127, 511
      %vm3194 = vcmp.lt.s32.totalorder %v3128, 511
      %vm3195 = vcmp.lt.s32.totalorder %v3129, 511
      %vm3196 = vcmp.lt.s32.totalorder %v3130, 511
      %vm3197 = vcmp.lt.s32.totalorder %v3131, 511
      %vm3198 = vcmp.lt.s32.totalorder %v3132, 511
      %vm3199 = vcmp.lt.s32.totalorder %v3133, 511
      %vm3200 = vcmp.lt.s32.totalorder %v3134, 511
      %vm3201 = vcmp.lt.s32.totalorder %v3135, 511
      %vm3202 = vcmp.lt.s32.totalorder %v3136, 511
      %vm3203 = vcmp.lt.s32.totalorder %v3137, 511
      %vm3204 = vcmp.lt.s32.totalorder %v3138, 511
      %vm3205 = vcmp.lt.s32.totalorder %v3139, 511
      %vm3206 = vcmp.lt.s32.totalorder %v3140, 511
      %vm3207 = vcmp.lt.s32.totalorder %v3141, 511
      %vm3208 = vcmp.lt.s32.totalorder %v3142, 511
      %vm3209 = vcmp.lt.s32.totalorder %v3143, 511
      %vm3210 = vcmp.lt.s32.totalorder %v3144, 511
      %vm3211 = vcmp.lt.s32.totalorder %v3145, 511
      %vm3212 = vcmp.lt.s32.totalorder %v3146, 511
      %vm3213 = vcmp.lt.s32.totalorder %v3147, 511
      %vm3214 = vcmp.lt.s32.totalorder %v3148, 511
      %vm3215 = vcmp.lt.s32.totalorder %v3149, 511
      %v3216 = vsel %vm3150, %v3017, 0.0
      %v3217 = vsel %vm3151, %v3018, 0.0
      %v3218 = vsel %vm3152, %v3019, 0.0
      %v3219 = vsel %vm3153, %v3020, 0.0
      %v3220 = vsel %vm3154, %v3021, 0.0
      %v3221 = vsel %vm3155, %v3022, 0.0
      %v3222 = vsel %vm3156, %v3023, 0.0
      %v3223 = vsel %vm3157, %v3024, 0.0
      %v3224 = vsel %vm3158, %v3025, 0.0
      %v3225 = vsel %vm3159, %v3026, 0.0
      %v3226 = vsel %vm3160, %v3027, 0.0
      %v3227 = vsel %vm3161, %v3028, 0.0
      %v3228 = vsel %vm3162, %v3029, 0.0
      %v3229 = vsel %vm3163, %v3030, 0.0
      %v3230 = vsel %vm3164, %v3031, 0.0
      %v3231 = vsel %vm3165, %v3032, 0.0
      %v3232 = vsel %vm3166, %v3033, 0.0
      %v3233 = vsel %vm3167, %v3034, 0.0
      %v3234 = vsel %vm3168, %v3035, 0.0
      %v3235 = vsel %vm3169, %v3036, 0.0
      %v3236 = vsel %vm3170, %v3037, 0.0
      %v3237 = vsel %vm3171, %v3038, 0.0
      %v3238 = vsel %vm3172, %v3039, 0.0
      %v3239 = vsel %vm3173, %v3040, 0.0
      %v3240 = vsel %vm3174, %v3041, 0.0
      %v3241 = vsel %vm3175, %v3042, 0.0
      %v3242 = vsel %vm3176, %v3043, 0.0
      %v3243 = vsel %vm3177, %v3044, 0.0
      %v3244 = vsel %vm3178, %v3045, 0.0
      %v3245 = vsel %vm3179, %v3046, 0.0
      %v3246 = vsel %vm3180, %v3047, 0.0
      %v3247 = vsel %vm3181, %v3048, 0.0
      %v3248 = vsel %vm3182, %v3049, 0.0
      %v3249 = vsel %vm3183, %v3050, 0.0
      %v3250 = vsel %vm3184, %v3051, 0.0
      %v3251 = vsel %vm3185, %v3052, 0.0
      %v3252 = vsel %vm3186, %v3053, 0.0
      %v3253 = vsel %vm3187, %v3054, 0.0
      %v3254 = vsel %vm3188, %v3055, 0.0
      %v3255 = vsel %vm3189, %v3056, 0.0
      %v3256 = vsel %vm3190, %v3057, 0.0
      %v3257 = vsel %vm3191, %v3058, 0.0
      %v3258 = vsel %vm3192, %v3059, 0.0
      %v3259 = vsel %vm3193, %v3060, 0.0
      %v3260 = vsel %vm3194, %v3061, 0.0
      %v3261 = vsel %vm3195, %v3062, 0.0
      %v3262 = vsel %vm3196, %v3063, 0.0
      %v3263 = vsel %vm3197, %v3064, 0.0
      %v3264 = vsel %vm3198, %v3065, 0.0
      %v3265 = vsel %vm3199, %v3066, 0.0
      %v3266 = vsel %vm3200, %v3067, 0.0
      %v3267 = vsel %vm3201, %v3068, 0.0
      %v3268 = vsel %vm3202, %v3069, 0.0
      %v3269 = vsel %vm3203, %v3070, 0.0
      %v3270 = vsel %vm3204, %v3071, 0.0
      %v3271 = vsel %vm3205, %v3072, 0.0
      %v3272 = vsel %vm3206, %v3073, 0.0
      %v3273 = vsel %vm3207, %v3074, 0.0
      %v3274 = vsel %vm3208, %v3075, 0.0
      %v3275 = vsel %vm3209, %v3076, 0.0
      %v3276 = vsel %vm3210, %v3077, 0.0
      %v3277 = vsel %vm3211, %v3078, 0.0
      %v3278 = vsel %vm3212, %v3079, 0.0
      %v3279 = vsel %vm3213, %v3080, 0.0
      %v3280 = vsel %vm3214, %v3081, 0.0
      %v3281 = vsel %vm3215, %v3082, 0.0
      %v3282 = vsel %vm2339, %v3216, 0.0
      %v3283 = vsel %vm2339, %v3217, 0.0
      %v3284 = vadd.f32 %v3282, %v3283
      %v3285 = vsel %vm2339, %v3218, 0.0
      %v3286 = vadd.f32 %v3284, %v3285
      %v3287 = vsel %vm2339, %v3219, 0.0
      %v3288 = vadd.f32 %v3286, %v3287
      %v3289 = vsel %vm2339, %v3220, 0.0
      %v3290 = vadd.f32 %v3288, %v3289
      %v3291 = vsel %vm2339, %v3221, 0.0
      %v3292 = vadd.f32 %v3290, %v3291
      %v3293 = vsel %vm2339, %v3222, 0.0
      %v3294 = vadd.f32 %v3292, %v3293
      %v3295 = vsel %vm2339, %v3223, 0.0
      %v3296 = vadd.f32 %v3294, %v3295
      %v3297 = vsel %vm2339, %v3224, 0.0
      %v3298 = vadd.f32 %v3296, %v3297
      %v3299 = vsel %vm2339, %v3225, 0.0
      %v3300 = vadd.f32 %v3298, %v3299
      %v3301 = vsel %vm2339, %v3226, 0.0
      %v3302 = vadd.f32 %v3300, %v3301
      %v3303 = vsel %vm2339, %v3227, 0.0
      %v3304 = vadd.f32 %v3302, %v3303
      %v3305 = vsel %vm2339, %v3228, 0.0
      %v3306 = vadd.f32 %v3304, %v3305
      %v3307 = vsel %vm2339, %v3229, 0.0
      %v3308 = vadd.f32 %v3306, %v3307
      %v3309 = vsel %vm2339, %v3230, 0.0
      %v3310 = vadd.f32 %v3308, %v3309
      %v3311 = vsel %vm2339, %v3231, 0.0
      %v3312 = vadd.f32 %v3310, %v3311
      %v3313 = vsel %vm2339, %v3232, 0.0
      %v3314 = vadd.f32 %v3312, %v3313
      %v3315 = vsel %vm2339, %v3233, 0.0
      %v3316 = vadd.f32 %v3314, %v3315
      %v3317 = vsel %vm2339, %v3234, 0.0
      %v3318 = vadd.f32 %v3316, %v3317
      %v3319 = vsel %vm2339, %v3235, 0.0
      %v3320 = vadd.f32 %v3318, %v3319
      %v3321 = vsel %vm2339, %v3236, 0.0
      %v3322 = vadd.f32 %v3320, %v3321
      %v3323 = vsel %vm2339, %v3237, 0.0
      %v3324 = vadd.f32 %v3322, %v3323
      %v3325 = vsel %vm2339, %v3238, 0.0
      %v3326 = vadd.f32 %v3324, %v3325
      %v3327 = vsel %vm2339, %v3239, 0.0
      %v3328 = vadd.f32 %v3326, %v3327
      %v3329 = vsel %vm2339, %v3240, 0.0
      %v3330 = vadd.f32 %v3328, %v3329
      %v3331 = vsel %vm2339, %v3241, 0.0
      %v3332 = vadd.f32 %v3330, %v3331
      %v3333 = vsel %vm2339, %v3242, 0.0
      %v3334 = vadd.f32 %v3332, %v3333
      %v3335 = vsel %vm2339, %v3243, 0.0
      %v3336 = vadd.f32 %v3334, %v3335
      %v3337 = vsel %vm2339, %v3244, 0.0
      %v3338 = vadd.f32 %v3336, %v3337
      %v3339 = vsel %vm2339, %v3245, 0.0
      %v3340 = vadd.f32 %v3338, %v3339
      %v3341 = vsel %vm2339, %v3246, 0.0
      %v3342 = vadd.f32 %v3340, %v3341
      %v3343 = vsel %vm2339, %v3247, 0.0
      %v3344 = vadd.f32 %v3342, %v3343
      %v3345 = vsel %vm2339, %v3248, 0.0
      %v3346 = vadd.f32 %v3344, %v3345
      %v3347 = vsel %vm2339, %v3249, 0.0
      %v3348 = vadd.f32 %v3346, %v3347
      %v3349 = vsel %vm2339, %v3250, 0.0
      %v3350 = vadd.f32 %v3348, %v3349
      %v3351 = vsel %vm2339, %v3251, 0.0
      %v3352 = vadd.f32 %v3350, %v3351
      %v3353 = vsel %vm2339, %v3252, 0.0
      %v3354 = vadd.f32 %v3352, %v3353
      %v3355 = vsel %vm2339, %v3253, 0.0
      %v3356 = vadd.f32 %v3354, %v3355
      %v3357 = vsel %vm2339, %v3254, 0.0
      %v3358 = vadd.f32 %v3356, %v3357
      %v3359 = vsel %vm2339, %v3255, 0.0
      %v3360 = vadd.f32 %v3358, %v3359
      %v3361 = vsel %vm2339, %v3256, 0.0
      %v3362 = vadd.f32 %v3360, %v3361
      %v3363 = vsel %vm2339, %v3257, 0.0
      %v3364 = vadd.f32 %v3362, %v3363
      %v3365 = vsel %vm2339, %v3258, 0.0
      %v3366 = vadd.f32 %v3364, %v3365
      %v3367 = vsel %vm2339, %v3259, 0.0
      %v3368 = vadd.f32 %v3366, %v3367
      %v3369 = vsel %vm2339, %v3260, 0.0
      %v3370 = vadd.f32 %v3368, %v3369
      %v3371 = vsel %vm2339, %v3261, 0.0
      %v3372 = vadd.f32 %v3370, %v3371
      %v3373 = vsel %vm2339, %v3262, 0.0
      %v3374 = vadd.f32 %v3372, %v3373
      %v3375 = vsel %vm2339, %v3263, 0.0
      %v3376 = vadd.f32 %v3374, %v3375
      %v3377 = vsel %vm2339, %v3264, 0.0
      %v3378 = vadd.f32 %v3376, %v3377
      %v3379 = vsel %vm2339, %v3265, 0.0
      %v3380 = vadd.f32 %v3378, %v3379
      %v3381 = vsel %vm2339, %v3266, 0.0
      %v3382 = vadd.f32 %v3380, %v3381
      %v3383 = vsel %vm2339, %v3267, 0.0
      %v3384 = vadd.f32 %v3382, %v3383
      %v3385 = vsel %vm2339, %v3268, 0.0
      %v3386 = vadd.f32 %v3384, %v3385
      %v3387 = vsel %vm2339, %v3269, 0.0
      %v3388 = vadd.f32 %v3386, %v3387
      %v3389 = vsel %vm2339, %v3270, 0.0
      %v3390 = vadd.f32 %v3388, %v3389
      %v3391 = vsel %vm2339, %v3271, 0.0
      %v3392 = vadd.f32 %v3390, %v3391
      %v3393 = vsel %vm2339, %v3272, 0.0
      %v3394 = vadd.f32 %v3392, %v3393
      %v3395 = vsel %vm2339, %v3273, 0.0
      %v3396 = vadd.f32 %v3394, %v3395
      %v3397 = vsel %vm2339, %v3274, 0.0
      %v3398 = vadd.f32 %v3396, %v3397
      %v3399 = vsel %vm2339, %v3275, 0.0
      %v3400 = vadd.f32 %v3398, %v3399
      %v3401 = vsel %vm2339, %v3276, 0.0
      %v3402 = vadd.f32 %v3400, %v3401
      %v3403 = vsel %vm2339, %v3277, 0.0
      %v3404 = vadd.f32 %v3402, %v3403
      %v3405 = vsel %vm2339, %v3278, 0.0
      %v3406 = vadd.f32 %v3404, %v3405
      %v3407 = vsel %vm2339, %v3279, 0.0
      %v3408 = vadd.f32 %v3406, %v3407
      %v3409 = vsel %vm2339, %v3280, 0.0
      %v3410 = vadd.f32 %v3408, %v3409
      %v3411 = vsel %vm2339, %v3281, 0.0
      %v3412 = vadd.f32 %v3410, %v3411
      %v3413 = vrot.slane %v3412, 4
      %v3414 = vadd.f32 %v3412, %v3413
      %v3415 = vrot.slane %v3414, 2
      %v3416 = vadd.f32 %v3414, %v3415
      %v3417 = vrot.slane %v3416, 1
      %v3418 = vadd.f32 %v3416, %v3417
      %vm3419 = vcmask 516096
      %3420 = vst.msk [vmem:[%s265] sm:$0x1] %vm3419, %v3418
      %v3421 = vmul.f32 %v3216, %v3216
      %v3422 = vmul.f32 %v3217, %v3217
      %v3423 = vmul.f32 %v3218, %v3218
      %v3424 = vmul.f32 %v3219, %v3219
      %v3425 = vmul.f32 %v3220, %v3220
      %v3426 = vmul.f32 %v3221, %v3221
      %v3427 = vmul.f32 %v3222, %v3222
      %v3428 = vmul.f32 %v3223, %v3223
      %v3429 = vmul.f32 %v3224, %v3224
      %v3430 = vmul.f32 %v3225, %v3225
      %v3431 = vmul.f32 %v3226, %v3226
      %v3432 = vmul.f32 %v3227, %v3227
      %v3433 = vmul.f32 %v3228, %v3228
      %v3434 = vmul.f32 %v3229, %v3229
      %v3435 = vmul.f32 %v3230, %v3230
      %v3436 = vmul.f32 %v3231, %v3231
      %v3437 = vmul.f32 %v3232, %v3232
      %v3438 = vmul.f32 %v3233, %v3233
      %v3439 = vmul.f32 %v3234, %v3234
      %v3440 = vmul.f32 %v3235, %v3235
      %v3441 = vmul.f32 %v3236, %v3236
      %v3442 = vmul.f32 %v3237, %v3237
      %v3443 = vmul.f32 %v3238, %v3238
      %v3444 = vmul.f32 %v3239, %v3239
      %v3445 = vmul.f32 %v3240, %v3240
      %v3446 = vmul.f32 %v3241, %v3241
      %v3447 = vmul.f32 %v3242, %v3242
      %v3448 = vmul.f32 %v3243, %v3243
      %v3449 = vmul.f32 %v3244, %v3244
      %v3450 = vmul.f32 %v3245, %v3245
      %v3451 = vmul.f32 %v3246, %v3246
      %v3452 = vmul.f32 %v3247, %v3247
      %v3453 = vmul.f32 %v3248, %v3248
      %v3454 = vmul.f32 %v3249, %v3249
      %v3455 = vmul.f32 %v3250, %v3250
      %v3456 = vmul.f32 %v3251, %v3251
      %v3457 = vmul.f32 %v3252, %v3252
      %v3458 = vmul.f32 %v3253, %v3253
      %v3459 = vmul.f32 %v3254, %v3254
      %v3460 = vmul.f32 %v3255, %v3255
      %v3461 = vmul.f32 %v3256, %v3256
      %v3462 = vmul.f32 %v3257, %v3257
      %v3463 = vmul.f32 %v3258, %v3258
      %v3464 = vmul.f32 %v3259, %v3259
      %v3465 = vmul.f32 %v3260, %v3260
      %v3466 = vmul.f32 %v3261, %v3261
      %v3467 = vmul.f32 %v3262, %v3262
      %v3468 = vmul.f32 %v3263, %v3263
      %v3469 = vmul.f32 %v3264, %v3264
      %v3470 = vmul.f32 %v3265, %v3265
      %v3471 = vmul.f32 %v3266, %v3266
      %v3472 = vmul.f32 %v3267, %v3267
      %v3473 = vmul.f32 %v3268, %v3268
      %v3474 = vmul.f32 %v3269, %v3269
      %v3475 = vmul.f32 %v3270, %v3270
      %v3476 = vmul.f32 %v3271, %v3271
      %v3477 = vmul.f32 %v3272, %v3272
      %v3478 = vmul.f32 %v3273, %v3273
      %v3479 = vmul.f32 %v3274, %v3274
      %v3480 = vmul.f32 %v3275, %v3275
      %v3481 = vmul.f32 %v3276, %v3276
      %v3482 = vmul.f32 %v3277, %v3277
      %v3483 = vmul.f32 %v3278, %v3278
      %v3484 = vmul.f32 %v3279, %v3279
      %v3485 = vmul.f32 %v3280, %v3280
      %v3486 = vmul.f32 %v3281, %v3281
      %v3487 = vsel %vm2339, %v3421, 0.0
      %v3488 = vsel %vm2339, %v3422, 0.0
      %v3489 = vadd.f32 %v3487, %v3488
      %v3490 = vsel %vm2339, %v3423, 0.0
      %v3491 = vadd.f32 %v3489, %v3490
      %v3492 = vsel %vm2339, %v3424, 0.0
      %v3493 = vadd.f32 %v3491, %v3492
      %v3494 = vsel %vm2339, %v3425, 0.0
      %v3495 = vadd.f32 %v3493, %v3494
      %v3496 = vsel %vm2339, %v3426, 0.0
      %v3497 = vadd.f32 %v3495, %v3496
      %v3498 = vsel %vm2339, %v3427, 0.0
      %v3499 = vadd.f32 %v3497, %v3498
      %v3500 = vsel %vm2339, %v3428, 0.0
      %v3501 = vadd.f32 %v3499, %v3500
      %v3502 = vsel %vm2339, %v3429, 0.0
      %v3503 = vadd.f32 %v3501, %v3502
      %v3504 = vsel %vm2339, %v3430, 0.0
      %v3505 = vadd.f32 %v3503, %v3504
      %v3506 = vsel %vm2339, %v3431, 0.0
      %v3507 = vadd.f32 %v3505, %v3506
      %v3508 = vsel %vm2339, %v3432, 0.0
      %v3509 = vadd.f32 %v3507, %v3508
      %v3510 = vsel %vm2339, %v3433, 0.0
      %v3511 = vadd.f32 %v3509, %v3510
      %v3512 = vsel %vm2339, %v3434, 0.0
      %v3513 = vadd.f32 %v3511, %v3512
      %v3514 = vsel %vm2339, %v3435, 0.0
      %v3515 = vadd.f32 %v3513, %v3514
      %v3516 = vsel %vm2339, %v3436, 0.0
      %v3517 = vadd.f32 %v3515, %v3516
      %v3518 = vsel %vm2339, %v3437, 0.0
      %v3519 = vadd.f32 %v3517, %v3518
      %v3520 = vsel %vm2339, %v3438, 0.0
      %v3521 = vadd.f32 %v3519, %v3520
      %v3522 = vsel %vm2339, %v3439, 0.0
      %v3523 = vadd.f32 %v3521, %v3522
      %v3524 = vsel %vm2339, %v3440, 0.0
      %v3525 = vadd.f32 %v3523, %v3524
      %v3526 = vsel %vm2339, %v3441, 0.0
      %v3527 = vadd.f32 %v3525, %v3526
      %v3528 = vsel %vm2339, %v3442, 0.0
      %v3529 = vadd.f32 %v3527, %v3528
      %v3530 = vsel %vm2339, %v3443, 0.0
      %v3531 = vadd.f32 %v3529, %v3530
      %v3532 = vsel %vm2339, %v3444, 0.0
      %v3533 = vadd.f32 %v3531, %v3532
      %v3534 = vsel %vm2339, %v3445, 0.0
      %v3535 = vadd.f32 %v3533, %v3534
      %v3536 = vsel %vm2339, %v3446, 0.0
      %v3537 = vadd.f32 %v3535, %v3536
      %v3538 = vsel %vm2339, %v3447, 0.0
      %v3539 = vadd.f32 %v3537, %v3538
      %v3540 = vsel %vm2339, %v3448, 0.0
      %v3541 = vadd.f32 %v3539, %v3540
      %v3542 = vsel %vm2339, %v3449, 0.0
      %v3543 = vadd.f32 %v3541, %v3542
      %v3544 = vsel %vm2339, %v3450, 0.0
      %v3545 = vadd.f32 %v3543, %v3544
      %v3546 = vsel %vm2339, %v3451, 0.0
      %v3547 = vadd.f32 %v3545, %v3546
      %v3548 = vsel %vm2339, %v3452, 0.0
      %v3549 = vadd.f32 %v3547, %v3548
      %v3550 = vsel %vm2339, %v3453, 0.0
      %v3551 = vadd.f32 %v3549, %v3550
      %v3552 = vsel %vm2339, %v3454, 0.0
      %v3553 = vadd.f32 %v3551, %v3552
      %v3554 = vsel %vm2339, %v3455, 0.0
      %v3555 = vadd.f32 %v3553, %v3554
      %v3556 = vsel %vm2339, %v3456, 0.0
      %v3557 = vadd.f32 %v3555, %v3556
      %v3558 = vsel %vm2339, %v3457, 0.0
      %v3559 = vadd.f32 %v3557, %v3558
      %v3560 = vsel %vm2339, %v3458, 0.0
      %v3561 = vadd.f32 %v3559, %v3560
      %v3562 = vsel %vm2339, %v3459, 0.0
      %v3563 = vadd.f32 %v3561, %v3562
      %v3564 = vsel %vm2339, %v3460, 0.0
      %v3565 = vadd.f32 %v3563, %v3564
      %v3566 = vsel %vm2339, %v3461, 0.0
      %v3567 = vadd.f32 %v3565, %v3566
      %v3568 = vsel %vm2339, %v3462, 0.0
      %v3569 = vadd.f32 %v3567, %v3568
      %v3570 = vsel %vm2339, %v3463, 0.0
      %v3571 = vadd.f32 %v3569, %v3570
      %v3572 = vsel %vm2339, %v3464, 0.0
      %v3573 = vadd.f32 %v3571, %v3572
      %v3574 = vsel %vm2339, %v3465, 0.0
      %v3575 = vadd.f32 %v3573, %v3574
      %v3576 = vsel %vm2339, %v3466, 0.0
      %v3577 = vadd.f32 %v3575, %v3576
      %v3578 = vsel %vm2339, %v3467, 0.0
      %v3579 = vadd.f32 %v3577, %v3578
      %v3580 = vsel %vm2339, %v3468, 0.0
      %v3581 = vadd.f32 %v3579, %v3580
      %v3582 = vsel %vm2339, %v3469, 0.0
      %v3583 = vadd.f32 %v3581, %v3582
      %v3584 = vsel %vm2339, %v3470, 0.0
      %v3585 = vadd.f32 %v3583, %v3584
      %v3586 = vsel %vm2339, %v3471, 0.0
      %v3587 = vadd.f32 %v3585, %v3586
      %v3588 = vsel %vm2339, %v3472, 0.0
      %v3589 = vadd.f32 %v3587, %v3588
      %v3590 = vsel %vm2339, %v3473, 0.0
      %v3591 = vadd.f32 %v3589, %v3590
      %v3592 = vsel %vm2339, %v3474, 0.0
      %v3593 = vadd.f32 %v3591, %v3592
      %v3594 = vsel %vm2339, %v3475, 0.0
      %v3595 = vadd.f32 %v3593, %v3594
      %v3596 = vsel %vm2339, %v3476, 0.0
      %v3597 = vadd.f32 %v3595, %v3596
      %v3598 = vsel %vm2339, %v3477, 0.0
      %v3599 = vadd.f32 %v3597, %v3598
      %v3600 = vsel %vm2339, %v3478, 0.0
      %v3601 = vadd.f32 %v3599, %v3600
      %v3602 = vsel %vm2339, %v3479, 0.0
      %v3603 = vadd.f32 %v3601, %v3602
      %v3604 = vsel %vm2339, %v3480, 0.0
      %v3605 = vadd.f32 %v3603, %v3604
      %v3606 = vsel %vm2339, %v3481, 0.0
      %v3607 = vadd.f32 %v3605, %v3606
      %v3608 = vsel %vm2339, %v3482, 0.0
      %v3609 = vadd.f32 %v3607, %v3608
      %v3610 = vsel %vm2339, %v3483, 0.0
      %v3611 = vadd.f32 %v3609, %v3610
      %v3612 = vsel %vm2339, %v3484, 0.0
      %v3613 = vadd.f32 %v3611, %v3612
      %v3614 = vsel %vm2339, %v3485, 0.0
      %v3615 = vadd.f32 %v3613, %v3614
      %v3616 = vsel %vm2339, %v3486, 0.0
      %v3617 = vadd.f32 %v3615, %v3616
      %v3618 = vrot.slane %v3617, 4
      %v3619 = vadd.f32 %v3617, %v3618
      %v3620 = vrot.slane %v3619, 2
      %v3621 = vadd.f32 %v3619, %v3620
      %v3622 = vrot.slane %v3621, 1
      %v3623 = vadd.f32 %v3621, %v3622
      %3624 = vst.msk [vmem:[%s268] sm:$0x1] %vm3419, %v3623
      %v3625 = vpack.c.bf16 %v3017, %v3017
      %v3626 = vpack.c.bf16 %v3018, %v3018
      %v3627 = vpack.c.bf16 %v3019, %v3019
      %v3628 = vpack.c.bf16 %v3020, %v3020
      %v3629 = vpack.c.bf16 %v3021, %v3021
      %v3630 = vpack.c.bf16 %v3022, %v3022
      %v3631 = vpack.c.bf16 %v3023, %v3023
      %v3632 = vpack.c.bf16 %v3024, %v3024
      %v3633 = vpack.c.bf16 %v3025, %v3025
      %v3634 = vpack.c.bf16 %v3026, %v3026
      %v3635 = vpack.c.bf16 %v3027, %v3027
      %v3636 = vpack.c.bf16 %v3028, %v3028
      %v3637 = vpack.c.bf16 %v3029, %v3029
      %v3638 = vpack.c.bf16 %v3030, %v3030
      %v3639 = vpack.c.bf16 %v3031, %v3031
      %v3640 = vpack.c.bf16 %v3032, %v3032
      %v3641 = vpack.c.bf16 %v3033, %v3033
      %v3642 = vpack.c.bf16 %v3034, %v3034
      %v3643 = vpack.c.bf16 %v3035, %v3035
      %v3644 = vpack.c.bf16 %v3036, %v3036
      %v3645 = vpack.c.bf16 %v3037, %v3037
      %v3646 = vpack.c.bf16 %v3038, %v3038
      %v3647 = vpack.c.bf16 %v3039, %v3039
      %v3648 = vpack.c.bf16 %v3040, %v3040
      %v3649 = vpack.c.bf16 %v3041, %v3041
      %v3650 = vpack.c.bf16 %v3042, %v3042
      %v3651 = vpack.c.bf16 %v3043, %v3043
      %v3652 = vpack.c.bf16 %v3044, %v3044
      %v3653 = vpack.c.bf16 %v3045, %v3045
      %v3654 = vpack.c.bf16 %v3046, %v3046
      %v3655 = vpack.c.bf16 %v3047, %v3047
      %v3656 = vpack.c.bf16 %v3048, %v3048
      %v3657 = vpack.c.bf16 %v3049, %v3049
      %v3658 = vpack.c.bf16 %v3050, %v3050
      %v3659 = vpack.c.bf16 %v3051, %v3051
      %v3660 = vpack.c.bf16 %v3052, %v3052
      %v3661 = vpack.c.bf16 %v3053, %v3053
      %v3662 = vpack.c.bf16 %v3054, %v3054
      %v3663 = vpack.c.bf16 %v3055, %v3055
      %v3664 = vpack.c.bf16 %v3056, %v3056
      %v3665 = vpack.c.bf16 %v3057, %v3057
      %v3666 = vpack.c.bf16 %v3058, %v3058
      %v3667 = vpack.c.bf16 %v3059, %v3059
      %v3668 = vpack.c.bf16 %v3060, %v3060
      %v3669 = vpack.c.bf16 %v3061, %v3061
      %v3670 = vpack.c.bf16 %v3062, %v3062
      %v3671 = vpack.c.bf16 %v3063, %v3063
      %v3672 = vpack.c.bf16 %v3064, %v3064
      %v3673 = vpack.c.bf16 %v3065, %v3065
      %v3674 = vpack.c.bf16 %v3066, %v3066
      %v3675 = vpack.c.bf16 %v3067, %v3067
      %v3676 = vpack.c.bf16 %v3068, %v3068
      %v3677 = vpack.c.bf16 %v3069, %v3069
      %v3678 = vpack.c.bf16 %v3070, %v3070
      %v3679 = vpack.c.bf16 %v3071, %v3071
      %v3680 = vpack.c.bf16 %v3072, %v3072
      %v3681 = vpack.c.bf16 %v3073, %v3073
      %v3682 = vpack.c.bf16 %v3074, %v3074
      %v3683 = vpack.c.bf16 %v3075, %v3075
      %v3684 = vpack.c.bf16 %v3076, %v3076
      %v3685 = vpack.c.bf16 %v3077, %v3077
      %v3686 = vpack.c.bf16 %v3078, %v3078
      %v3687 = vpack.c.bf16 %v3079, %v3079
      %v3688 = vpack.c.bf16 %v3080, %v3080
      %v3689 = vpack.c.bf16 %v3081, %v3081
      %v3690 = vpack.c.bf16 %v3082, %v3082
      %vm3691 = vcmask 519168
      %3692 = vst.msk [vmem:[%s262] sm:$0xf] %vm3691, %v3625
      %3693 = vst.msk [vmem:[%s262 + $0x4] sm:$0xf] %vm3691, %v3626
      %3694 = vst.msk [vmem:[%s262 + $0x8] sm:$0xf] %vm3691, %v3627
      %3695 = vst.msk [vmem:[%s262 + $0xc] sm:$0xf] %vm3691, %v3628
      %3696 = vst.msk [vmem:[%s262 + $0x10] sm:$0xf] %vm3691, %v3629
      %3697 = vst.msk [vmem:[%s262 + $0x14] sm:$0xf] %vm3691, %v3630
      %3698 = vst.msk [vmem:[%s262 + $0x18] sm:$0xf] %vm3691, %v3631
      %3699 = vst.msk [vmem:[%s262 + $0x1c] sm:$0xf] %vm3691, %v3632
      %3700 = vst.msk [vmem:[%s262 + $0x20] sm:$0xf] %vm3691, %v3633
      %3701 = vst.msk [vmem:[%s262 + $0x24] sm:$0xf] %vm3691, %v3634
      %3702 = vst.msk [vmem:[%s262 + $0x28] sm:$0xf] %vm3691, %v3635
      %3703 = vst.msk [vmem:[%s262 + $0x2c] sm:$0xf] %vm3691, %v3636
      %3704 = vst.msk [vmem:[%s262 + $0x30] sm:$0xf] %vm3691, %v3637
      %3705 = vst.msk [vmem:[%s262 + $0x34] sm:$0xf] %vm3691, %v3638
      %3706 = vst.msk [vmem:[%s262 + $0x38] sm:$0xf] %vm3691, %v3639
      %3707 = vst.msk [vmem:[%s262 + $0x3c] sm:$0xf] %vm3691, %v3640
      %3708 = vst.msk [vmem:[%s262 + $0x40] sm:$0xf] %vm3691, %v3641
      %3709 = vst.msk [vmem:[%s262 + $0x44] sm:$0xf] %vm3691, %v3642
      %3710 = vst.msk [vmem:[%s262 + $0x48] sm:$0xf] %vm3691, %v3643
      %3711 = vst.msk [vmem:[%s262 + $0x4c] sm:$0xf] %vm3691, %v3644
      %3712 = vst.msk [vmem:[%s262 + $0x50] sm:$0xf] %vm3691, %v3645
      %3713 = vst.msk [vmem:[%s262 + $0x54] sm:$0xf] %vm3691, %v3646
      %3714 = vst.msk [vmem:[%s262 + $0x58] sm:$0xf] %vm3691, %v3647
      %3715 = vst.msk [vmem:[%s262 + $0x5c] sm:$0xf] %vm3691, %v3648
      %3716 = vst.msk [vmem:[%s262 + $0x60] sm:$0xf] %vm3691, %v3649
      %3717 = vst.msk [vmem:[%s262 + $0x64] sm:$0xf] %vm3691, %v3650
      %3718 = vst.msk [vmem:[%s262 + $0x68] sm:$0xf] %vm3691, %v3651
      %3719 = vst.msk [vmem:[%s262 + $0x6c] sm:$0xf] %vm3691, %v3652
      %3720 = vst.msk [vmem:[%s262 + $0x70] sm:$0xf] %vm3691, %v3653
      %3721 = vst.msk [vmem:[%s262 + $0x74] sm:$0xf] %vm3691, %v3654
      %3722 = vst.msk [vmem:[%s262 + $0x78] sm:$0xf] %vm3691, %v3655
      %3723 = vst.msk [vmem:[%s262 + $0x7c] sm:$0xf] %vm3691, %v3656
      %3724 = vst.msk [vmem:[%s262 + $0x80] sm:$0xf] %vm3691, %v3657
      %3725 = vst.msk [vmem:[%s262 + $0x84] sm:$0xf] %vm3691, %v3658
      %3726 = vst.msk [vmem:[%s262 + $0x88] sm:$0xf] %vm3691, %v3659
      %3727 = vst.msk [vmem:[%s262 + $0x8c] sm:$0xf] %vm3691, %v3660
      %3728 = vst.msk [vmem:[%s262 + $0x90] sm:$0xf] %vm3691, %v3661
      %3729 = vst.msk [vmem:[%s262 + $0x94] sm:$0xf] %vm3691, %v3662
      %3730 = vst.msk [vmem:[%s262 + $0x98] sm:$0xf] %vm3691, %v3663
      %3731 = vst.msk [vmem:[%s262 + $0x9c] sm:$0xf] %vm3691, %v3664
      %3732 = vst.msk [vmem:[%s262 + $0xa0] sm:$0xf] %vm3691, %v3665
      %3733 = vst.msk [vmem:[%s262 + $0xa4] sm:$0xf] %vm3691, %v3666
      %3734 = vst.msk [vmem:[%s262 + $0xa8] sm:$0xf] %vm3691, %v3667
      %3735 = vst.msk [vmem:[%s262 + $0xac] sm:$0xf] %vm3691, %v3668
      %3736 = vst.msk [vmem:[%s262 + $0xb0] sm:$0xf] %vm3691, %v3669
      %3737 = vst.msk [vmem:[%s262 + $0xb4] sm:$0xf] %vm3691, %v3670
      %3738 = vst.msk [vmem:[%s262 + $0xb8] sm:$0xf] %vm3691, %v3671
      %3739 = vst.msk [vmem:[%s262 + $0xbc] sm:$0xf] %vm3691, %v3672
      %3740 = vst.msk [vmem:[%s262 + $0xc0] sm:$0xf] %vm3691, %v3673
      %3741 = vst.msk [vmem:[%s262 + $0xc4] sm:$0xf] %vm3691, %v3674
      %3742 = vst.msk [vmem:[%s262 + $0xc8] sm:$0xf] %vm3691, %v3675
      %3743 = vst.msk [vmem:[%s262 + $0xcc] sm:$0xf] %vm3691, %v3676
      %3744 = vst.msk [vmem:[%s262 + $0xd0] sm:$0xf] %vm3691, %v3677
      %3745 = vst.msk [vmem:[%s262 + $0xd4] sm:$0xf] %vm3691, %v3678
      %3746 = vst.msk [vmem:[%s262 + $0xd8] sm:$0xf] %vm3691, %v3679
      %3747 = vst.msk [vmem:[%s262 + $0xdc] sm:$0xf] %vm3691, %v3680
      %3748 = vst.msk [vmem:[%s262 + $0xe0] sm:$0xf] %vm3691, %v3681
      %3749 = vst.msk [vmem:[%s262 + $0xe4] sm:$0xf] %vm3691, %v3682
      %3750 = vst.msk [vmem:[%s262 + $0xe8] sm:$0xf] %vm3691, %v3683
      %3751 = vst.msk [vmem:[%s262 + $0xec] sm:$0xf] %vm3691, %v3684
      %3752 = vst.msk [vmem:[%s262 + $0xf0] sm:$0xf] %vm3691, %v3685
      %3753 = vst.msk [vmem:[%s262 + $0xf4] sm:$0xf] %vm3691, %v3686
      %3754 = vst.msk [vmem:[%s262 + $0xf8] sm:$0xf] %vm3691, %v3687
      %3755 = vst.msk [vmem:[%s262 + $0xfc] sm:$0xf] %vm3691, %v3688
      %3756 = vst.msk [vmem:[%s262 + $0x100] sm:$0xf] %vm3691, %v3689
      %3757 = vst.msk [vmem:[%s262 + $0x104] sm:$0xf] %vm3691, %v3690
      %p3758 = scmp.lt.s32.totalorder %s18, 1
      %s3759 = scalar_select %p3758, %s18, 1
      %s3760 = smul.addr %s3759, 66
      %s3761 = smul.addr %s3760, 4
      %s3762 = scalar_lea.vmem %s4, %s3761
      %p3763 = scmp.lt.s32.totalorder %s18, 1
      %s3764 = scalar_select %p3763, %s18, 1
      %s3765 = scalar_lea.vmem %s5, %s3764
      %p3766 = scmp.lt.s32.totalorder %s18, 1
      %s3767 = scalar_select %p3766, %s18, 1
      %s3768 = scalar_lea.vmem %s6, %s3767
      // Predicated region
      $region37: #{cnn_frontend.6} parent=35 // pred_check
        %p3769 = pneg %p125
      $region38: #{cnn_frontend.6} parent=35 // pred_check_branch
        %3771 = sbr.rel (%p3769) target = $region40
      $region39: #{cnn_frontend.6} parent=35 // pred_region
        _
      $region40: #{cnn_frontend.6} parent=35 // pred_fallthru
        _
      // Predicated region
      $region41: #{cnn_frontend.6} parent=35 // pred_check
        %p3772 = pneg %p151
      $region42: #{cnn_frontend.6} parent=35 // pred_check_branch
        %3774 = sbr.rel (%p3772) target = $region44
      $region43: #{cnn_frontend.6} parent=35 // pred_region
        _
      $region44: #{cnn_frontend.6} parent=35 // pred_fallthru
        _
      // Predicated region
      $region45: #{cnn_frontend.6} parent=35 // pred_check
        %p3775 = pneg %p177
      $region46: #{cnn_frontend.6} parent=35 // pred_check_branch
        %3777 = sbr.rel (%p3775) target = $region48
      $region47: #{cnn_frontend.6} parent=35 // pred_region
        _
      $region48: #{cnn_frontend.6} parent=35 // pred_fallthru
        _
    $region36: #{cnn_frontend.6} parent=5 // pred_fallthru
      _
    %p3778 = scmp.le.s32.totalorder 2, %s13
    // Predicated region
    $region49: #{cnn_frontend.6} parent=5 // pred_check
      %p3779 = pneg %p3778
    $region50: #{cnn_frontend.6} parent=5 // pred_check_branch
      %3781 = sbr.rel (%p3779) target = $region52
    $region51: #{cnn_frontend.6} parent=5 // pred_region
      %s3782 = ssub.s32 %s13, 2
      // Predicated region
      $region53: #{cnn_frontend.6} parent=51 // pred_check
        %p3783 = pneg %p131
      $region54: #{cnn_frontend.6} parent=51 // pred_check_branch
        %3785 = sbr.rel (%p3783) target = $region56
      $region55: #{cnn_frontend.6} parent=51 // pred_region
        %p3786 = scmp.lt.s32.totalorder %s19, 1
        %s3787 = scalar_select %p3786, %s19, 1
        %s3788 = smul.addr %s3787, 66
        %s3789 = smul.addr %s3788, 4
        %s3790 = scalar_lea.vmem %s4, %s3789
      $region56: #{cnn_frontend.6} parent=51 // pred_fallthru
        _
      // Predicated region
      $region57: #{cnn_frontend.6} parent=51 // pred_check
        %p3791 = pneg %p157
      $region58: #{cnn_frontend.6} parent=51 // pred_check_branch
        %3793 = sbr.rel (%p3791) target = $region60
      $region59: #{cnn_frontend.6} parent=51 // pred_region
        %p3794 = scmp.lt.s32.totalorder %s19, 1
        %s3795 = scalar_select %p3794, %s19, 1
        %s3796 = scalar_lea.vmem %s5, %s3795
      $region60: #{cnn_frontend.6} parent=51 // pred_fallthru
        _
      // Predicated region
      $region61: #{cnn_frontend.6} parent=51 // pred_check
        %p3797 = pneg %p183
      $region62: #{cnn_frontend.6} parent=51 // pred_check_branch
        %3799 = sbr.rel (%p3797) target = $region64
      $region63: #{cnn_frontend.6} parent=51 // pred_region
        %p3800 = scmp.lt.s32.totalorder %s19, 1
        %s3801 = scalar_select %p3800, %s19, 1
        %s3802 = scalar_lea.vmem %s6, %s3801
      $region64: #{cnn_frontend.6} parent=51 // pred_fallthru
        _
    $region52: #{cnn_frontend.6} parent=5 // pred_fallthru
      _
  $region6: #{cnn_frontend.6} parent=0 // loop_footer
    %s17 = sadd.s32 1, %s13
  $region7: #{cnn_frontend.6} parent=0 // loop_footer_branch
    %12 = sbr.rel target = $region3
  $region8: #{cnn_frontend.6} parent=0 // loop_exit
    _

// kernel: cnn_frontend.8
$region0: #{cnn_frontend.8}
  #allocation0 [shape = 'u32[]', space=smem, size = 0x4, offset = 0x4, fixed_abs, tag = 'smem constant byte address 0x4 - core index']
  #allocation1 [shape = 'u32[72,128]{1,0:T(1,128)}', space=vmem, size = 0x9000, scoped, tag = 'internal scratch']
  %s0 = inlined_call_operand.vmem [shape: bf16[2,88,256], index: 0, kind: input, shape index: {}]
  %s1 = inlined_call_operand.vmem [shape: bf16[4,256,128], index: 1, kind: input, shape index: {}]
  %s2 = inlined_call_operand.vmem [shape: bf16[128,128], index: 2, kind: input, shape index: {}]
  %s3 = inlined_call_operand.vmem [shape: bf16[128,128], index: 3, kind: input, shape index: {}]
  %s4 = inlined_call_operand.vmem [shape: bf16[2,80,128], index: 4, kind: output, shape index: {0}]
  %s5 = inlined_call_operand.vmem [shape: f32[2,1,128], index: 5, kind: output, shape index: {1}]
  %s6 = inlined_call_operand.vmem [shape: f32[2,1,128], index: 6, kind: output, shape index: {2}]
  %7 = xla_tuple %s4, %s5, %s6
  %s8 = sld [smem:[#allocation0]]
  $region65: #{cnn_frontend.8} parent=0
    _
  %s10 = ssub.s32 1, %s8
  %s11 = scalar_select 0, %s10, %s8
  loop: start=0, step=1, limit=4
  $region2: #{cnn_frontend.8} parent=0 // loop_pre_header
    _
  $region3: #{cnn_frontend.8} parent=0 // loop_header
    %s13 = sphi 0, %s17
    %p14 = scmp.ge.s32.totalorder %s13, 4
    %s23 = sphi 0, %s25
    %s26 = sphi 0, %s23
    %s27 = sphi 0, %s26
    %s43 = sphi 0, %s27
    %s47 = sphi 0, %s47
    %s49 = sphi 0, %s47
    %s50 = sphi 0, %s49
    %s64 = sphi 0, %s50
    %s68 = sphi 0, %s68
    %s70 = sphi 0, %s68
    %s71 = sphi 0, %s70
    %s85 = sphi 0, %s71
    %s89 = sphi 0, %s89
    %s91 = sphi 0, %s89
    %s92 = sphi 0, %s91
    %s106 = sphi 0, %s92
    %s112 = sphi 0, %s114
    %s115 = sphi 0, %s112
    %s116 = sphi 0, %s115
    %s132 = sphi 0, %s116
    %s138 = sphi 0, %s140
    %s141 = sphi 0, %s138
    %s142 = sphi 0, %s141
    %s158 = sphi 0, %s142
    %s164 = sphi 0, %s166
    %s167 = sphi 0, %s164
    %s168 = sphi 0, %s167
    %s184 = sphi 0, %s168
  $region4: #{cnn_frontend.8} parent=0 // loop_header_branch
    %16 = sbr.rel (%p14) target = $region8
  $region5: #{cnn_frontend.8} parent=0 // loop_body
    %s18 = ssub.s32 %s13, 1
    %s19 = ssub.s32 %s13, 2
    %s20 = sadd.s32 %s13, 1
    %s21 = ssub.s32 %s13, %s20
    %p22 = scmp.eq.s32.totalorder %s21, 0
    %s24 = sadd.s32 %s23, 1
    %s25 = scalar_select %p22, %s23, %s24
    %p28 = pneg %p22
    %p29 = scmp.eq.s32.totalorder %s13, 1
    %p30 = por %p28, %p29
    %p31 = scmp.ne.s32.totalorder %s23, %s26
    %p32 = scmp.eq.s32.totalorder %s13, 0
    %p33 = por %p31, %p32
    %p34 = scmp.ne.s32.totalorder %s23, %s26
    %p35 = scmp.eq.s32.totalorder %s18, 1
    %p36 = por %p34, %p35
    %p37 = scmp.ne.s32.totalorder %s26, %s27
    %p38 = scmp.eq.s32.totalorder %s18, 0
    %p39 = por %p37, %p38
    %p40 = scmp.ne.s32.totalorder %s26, %s27
    %p41 = scmp.eq.s32.totalorder %s19, 1
    %p42 = por %p40, %p41
    %p44 = scmp.ne.s32.totalorder %s27, %s43
    %p45 = scmp.eq.s32.totalorder %s19, 0
    %p46 = por %p44, %p45
    %s48 = sadd.s32 %s47, 1
    %p51 = scmp.eq.s32.totalorder %s13, 1
    %p52 = scmp.ne.s32.totalorder %s47, %s49
    %p53 = scmp.eq.s32.totalorder %s13, 0
    %p54 = por %p52, %p53
    %p55 = scmp.ne.s32.totalorder %s47, %s49
    %p56 = scmp.eq.s32.totalorder %s18, 1
    %p57 = por %p55, %p56
    %p58 = scmp.ne.s32.totalorder %s49, %s50
    %p59 = scmp.eq.s32.totalorder %s18, 0
    %p60 = por %p58, %p59
    %p61 = scmp.ne.s32.totalorder %s49, %s50
    %p62 = scmp.eq.s32.totalorder %s19, 1
    %p63 = por %p61, %p62
    %p65 = scmp.ne.s32.totalorder %s50, %s64
    %p66 = scmp.eq.s32.totalorder %s19, 0
    %p67 = por %p65, %p66
    %s69 = sadd.s32 %s68, 1
    %p72 = scmp.eq.s32.totalorder %s13, 1
    %p73 = scmp.ne.s32.totalorder %s68, %s70
    %p74 = scmp.eq.s32.totalorder %s13, 0
    %p75 = por %p73, %p74
    %p76 = scmp.ne.s32.totalorder %s68, %s70
    %p77 = scmp.eq.s32.totalorder %s18, 1
    %p78 = por %p76, %p77
    %p79 = scmp.ne.s32.totalorder %s70, %s71
    %p80 = scmp.eq.s32.totalorder %s18, 0
    %p81 = por %p79, %p80
    %p82 = scmp.ne.s32.totalorder %s70, %s71
    %p83 = scmp.eq.s32.totalorder %s19, 1
    %p84 = por %p82, %p83
    %p86 = scmp.ne.s32.totalorder %s71, %s85
    %p87 = scmp.eq.s32.totalorder %s19, 0
    %p88 = por %p86, %p87
    %s90 = sadd.s32 %s89, 1
    %p93 = scmp.eq.s32.totalorder %s13, 1
    %p94 = scmp.ne.s32.totalorder %s89, %s91
    %p95 = scmp.eq.s32.totalorder %s13, 0
    %p96 = por %p94, %p95
    %p97 = scmp.ne.s32.totalorder %s89, %s91
    %p98 = scmp.eq.s32.totalorder %s18, 1
    %p99 = por %p97, %p98
    %p100 = scmp.ne.s32.totalorder %s91, %s92
    %p101 = scmp.eq.s32.totalorder %s18, 0
    %p102 = por %p100, %p101
    %p103 = scmp.ne.s32.totalorder %s91, %s92
    %p104 = scmp.eq.s32.totalorder %s19, 1
    %p105 = por %p103, %p104
    %p107 = scmp.ne.s32.totalorder %s92, %s106
    %p108 = scmp.eq.s32.totalorder %s19, 0
    %p109 = por %p107, %p108
    %s110 = ssub.s32 %s13, %s20
    %p111 = scmp.eq.s32.totalorder %s110, 0
    %s113 = sadd.s32 %s112, 1
    %s114 = scalar_select %p111, %s112, %s113
    %p117 = pneg %p111
    %p118 = scmp.eq.s32.totalorder %s13, 1
    %p119 = por %p117, %p118
    %p120 = scmp.ne.s32.totalorder %s112, %s115
    %p121 = scmp.eq.s32.totalorder %s13, 0
    %p122 = por %p120, %p121
    %p123 = scmp.ne.s32.totalorder %s112, %s115
    %p124 = scmp.eq.s32.totalorder %s18, 1
    %p125 = por %p123, %p124
    %p126 = scmp.ne.s32.totalorder %s115, %s116
    %p127 = scmp.eq.s32.totalorder %s18, 0
    %p128 = por %p126, %p127
    %p129 = scmp.ne.s32.totalorder %s115, %s116
    %p130 = scmp.eq.s32.totalorder %s19, 1
    %p131 = por %p129, %p130
    %p133 = scmp.ne.s32.totalorder %s116, %s132
    %p134 = scmp.eq.s32.totalorder %s19, 0
    %p135 = por %p133, %p134
    %s136 = ssub.s32 %s13, %s20
    %p137 = scmp.eq.s32.totalorder %s136, 0
    %s139 = sadd.s32 %s138, 1
    %s140 = scalar_select %p137, %s138, %s139
    %p143 = pneg %p137
    %p144 = scmp.eq.s32.totalorder %s13, 1
    %p145 = por %p143, %p144
    %p146 = scmp.ne.s32.totalorder %s138, %s141
    %p147 = scmp.eq.s32.totalorder %s13, 0
    %p148 = por %p146, %p147
    %p149 = scmp.ne.s32.totalorder %s138, %s141
    %p150 = scmp.eq.s32.totalorder %s18, 1
    %p151 = por %p149, %p150
    %p152 = scmp.ne.s32.totalorder %s141, %s142
    %p153 = scmp.eq.s32.totalorder %s18, 0
    %p154 = por %p152, %p153
    %p155 = scmp.ne.s32.totalorder %s141, %s142
    %p156 = scmp.eq.s32.totalorder %s19, 1
    %p157 = por %p155, %p156
    %p159 = scmp.ne.s32.totalorder %s142, %s158
    %p160 = scmp.eq.s32.totalorder %s19, 0
    %p161 = por %p159, %p160
    %s162 = ssub.s32 %s13, %s20
    %p163 = scmp.eq.s32.totalorder %s162, 0
    %s165 = sadd.s32 %s164, 1
    %s166 = scalar_select %p163, %s164, %s165
    %p169 = pneg %p163
    %p170 = scmp.eq.s32.totalorder %s13, 1
    %p171 = por %p169, %p170
    %p172 = scmp.ne.s32.totalorder %s164, %s167
    %p173 = scmp.eq.s32.totalorder %s13, 0
    %p174 = por %p172, %p173
    %p175 = scmp.ne.s32.totalorder %s164, %s167
    %p176 = scmp.eq.s32.totalorder %s18, 1
    %p177 = por %p175, %p176
    %p178 = scmp.ne.s32.totalorder %s167, %s168
    %p179 = scmp.eq.s32.totalorder %s18, 0
    %p180 = por %p178, %p179
    %p181 = scmp.ne.s32.totalorder %s167, %s168
    %p182 = scmp.eq.s32.totalorder %s19, 1
    %p183 = por %p181, %p182
    %p185 = scmp.ne.s32.totalorder %s168, %s184
    %p186 = scmp.eq.s32.totalorder %s19, 0
    %p187 = por %p185, %p186
    %p188 = scmp.le.s32.totalorder 1, %s13
    %p189 = scmp.lt.s32.totalorder %s13, 3
    %p190 = pnand %p188, %p189
    %p191 = pneg %p190
    // Predicated region
    $region9: #{cnn_frontend.8} parent=5 // pred_check
      _
    $region10: #{cnn_frontend.8} parent=5 // pred_check_branch
      %193 = sbr.rel (%p190) target = $region12
    $region11: #{cnn_frontend.8} parent=5 // pred_region
      %s194 = ssub.s32 %s13, 1
      // Predicated region
      $region13: #{cnn_frontend.8} parent=11 // pred_check
        %p195 = pneg %p60
      $region14: #{cnn_frontend.8} parent=11 // pred_check_branch
        %197 = sbr.rel (%p195) target = $region16
      $region15: #{cnn_frontend.8} parent=11 // pred_region
        _
      $region16: #{cnn_frontend.8} parent=11 // pred_fallthru
        _
      // Predicated region
      $region17: #{cnn_frontend.8} parent=11 // pred_check
        %p198 = pneg %p81
      $region18: #{cnn_frontend.8} parent=11 // pred_check_branch
        %200 = sbr.rel (%p198) target = $region20
      $region19: #{cnn_frontend.8} parent=11 // pred_region
        _
      $region20: #{cnn_frontend.8} parent=11 // pred_fallthru
        _
      // Predicated region
      $region21: #{cnn_frontend.8} parent=11 // pred_check
        %p201 = pneg %p102
      $region22: #{cnn_frontend.8} parent=11 // pred_check_branch
        %203 = sbr.rel (%p201) target = $region24
      $region23: #{cnn_frontend.8} parent=11 // pred_region
        _
      $region24: #{cnn_frontend.8} parent=11 // pred_fallthru
        _
    $region12: #{cnn_frontend.8} parent=5 // pred_fallthru
      _
    %p204 = scmp.lt.s32.totalorder %s13, 2
    // Predicated region
    $region25: #{cnn_frontend.8} parent=5 // pred_check
      %p205 = pneg %p204
    $region26: #{cnn_frontend.8} parent=5 // pred_check_branch
      %207 = sbr.rel (%p205) target = $region28
    $region27: #{cnn_frontend.8} parent=5 // pred_region
      // Predicated region
      $region29: #{cnn_frontend.8} parent=27 // pred_check
        %p208 = pneg %p33
      $region30: #{cnn_frontend.8} parent=27 // pred_check_branch
        %210 = sbr.rel (%p208) target = $region32
      $region31: #{cnn_frontend.8} parent=27 // pred_region
        %p211 = scmp.lt.s32.totalorder %s13, 1
        %s212 = scalar_select %p211, %s13, 1
        %s213 = smul.addr %s212, 22
        %s214 = smul.addr %s213, 4
        %s215 = scalar_lea.vmem %s0, %s214
      $region32: #{cnn_frontend.8} parent=27 // pred_fallthru
        _
    $region28: #{cnn_frontend.8} parent=5 // pred_fallthru
      _
    %p216 = scmp.le.s32.totalorder 1, %s13
    %p217 = scmp.lt.s32.totalorder %s13, 3
    %p218 = pnand %p216, %p217
    %p219 = pneg %p218
    // Predicated region
    $region33: #{cnn_frontend.8} parent=5 // pred_check
      _
    $region34: #{cnn_frontend.8} parent=5 // pred_check_branch
      %221 = sbr.rel (%p218) target = $region36
    $region35: #{cnn_frontend.8} parent=5 // pred_region
      %s222 = ssub.s32 %s13, 1
      %p223 = scmp.lt.s32.totalorder %s18, 1
      %s224 = scalar_select %p223, %s18, 1
      %s225 = smul.addr %s224, 22
      %s226 = smul.addr %s225, 4
      %s227 = scalar_lea.vmem %s0, %s226
      %p228 = pneg %p39
      %p229 = pneg %p36
      %p230 = pneg %p60
      %p231 = pneg %p57
      %p232 = pneg %p81
      %p233 = pneg %p78
      %p234 = pneg %p102
      %p235 = pneg %p99
      %p236 = pneg %p128
      %p237 = pneg %p125
      %p238 = scmp.lt.s32.totalorder %s18, 1
      %s239 = scalar_select %p238, %s18, 1
      %s240 = smul.addr %s239, 10
      %s241 = smul.addr %s240, 4
      %s242 = scalar_lea.vmem %s4, %s241
      %p243 = pneg %p154
      %p244 = pneg %p151
      %p245 = scmp.lt.s32.totalorder %s18, 1
      %s246 = scalar_select %p245, %s18, 1
      %s247 = scalar_lea.vmem %s5, %s246
      %p248 = pneg %p180
      %p249 = pneg %p177
      %p250 = scmp.lt.s32.totalorder %s18, 1
      %s251 = scalar_select %p250, %s18, 1
      %s252 = scalar_lea.vmem %s6, %s251
      %p253 = scmp.lt.s32.totalorder %s18, 1
      %s254 = scalar_select %p253, %s18, 1
      %s255 = smul.addr %s254, 22
      %s256 = smul.addr %s255, 4
      %s257 = scalar_lea.vmem %s0, %s256
      %p258 = scmp.lt.s32.totalorder %s18, 1
      %s259 = scalar_select %p258, %s18, 1
      %s260 = smul.addr %s259, 10
      %s261 = smul.addr %s260, 4
      %s262 = scalar_lea.vmem %s4, %s261
      %p263 = scmp.lt.s32.totalorder %s18, 1
      %s264 = scalar_select %p263, %s18, 1
      %s265 = scalar_lea.vmem %s5, %s264
      %p266 = scmp.lt.s32.totalorder %s18, 1
      %s267 = scalar_select %p266, %s18, 1
      %s268 = scalar_lea.vmem %s6, %s267
      %v269 = vld [vmem:[%s257] sm:$0xff]
      %v270 = vld [vmem:[%s257 + $0x8] sm:$0xff]
      %v271 = vld [vmem:[%s257 + $0x10] sm:$0xff]
      %v272 = vld [vmem:[%s257 + $0x18] sm:$0xff]
      %v273 = vld [vmem:[%s257 + $0x20] sm:$0xff]
      %v274 = vld [vmem:[%s257 + $0x28] sm:$0xff]
      %v275 = vld [vmem:[%s257 + $0x30] sm:$0xff]
      %v276 = vld [vmem:[%s257 + $0x38] sm:$0xff]
      %v277 = vld [vmem:[%s257 + $0x40] sm:$0xff]
      %v278 = vld [vmem:[%s257 + $0x48] sm:$0xff]
      %v279 = vld [vmem:[%s1] sm:$0xf]
      %v280 = vld [vmem:[%s1 + $0x4] sm:$0xf]
      %v281 = vld [vmem:[%s1 + $0x8] sm:$0xf]
      %v282 = vld [vmem:[%s1 + $0xc] sm:$0xf]
      %v283 = vld [vmem:[%s1 + $0x10] sm:$0xf]
      %v284 = vld [vmem:[%s1 + $0x14] sm:$0xf]
      %v285 = vld [vmem:[%s1 + $0x18] sm:$0xf]
      %v286 = vld [vmem:[%s1 + $0x1c] sm:$0xf]
      %v287 = vld [vmem:[%s1 + $0x20] sm:$0xf]
      %v288 = vld [vmem:[%s1 + $0x24] sm:$0xf]
      %v289 = vld [vmem:[%s1 + $0x28] sm:$0xf]
      %v290 = vld [vmem:[%s1 + $0x2c] sm:$0xf]
      %v291 = vld [vmem:[%s1 + $0x30] sm:$0xf]
      %v292 = vld [vmem:[%s1 + $0x34] sm:$0xf]
      %v293 = vld [vmem:[%s1 + $0x38] sm:$0xf]
      %v294 = vld [vmem:[%s1 + $0x3c] sm:$0xf]
      %v295 = vld [vmem:[%s1 + $0x40] sm:$0xf]
      %v296 = vld [vmem:[%s1 + $0x44] sm:$0xf]
      %v297 = vld [vmem:[%s1 + $0x48] sm:$0xf]
      %v298 = vld [vmem:[%s1 + $0x4c] sm:$0xf]
      %v299 = vld [vmem:[%s1 + $0x50] sm:$0xf]
      %v300 = vld [vmem:[%s1 + $0x54] sm:$0xf]
      %v301 = vld [vmem:[%s1 + $0x58] sm:$0xf]
      %v302 = vld [vmem:[%s1 + $0x5c] sm:$0xf]
      %v303 = vld [vmem:[%s1 + $0x60] sm:$0xf]
      %v304 = vld [vmem:[%s1 + $0x64] sm:$0xf]
      %v305 = vld [vmem:[%s1 + $0x68] sm:$0xf]
      %v306 = vld [vmem:[%s1 + $0x6c] sm:$0xf]
      %v307 = vld [vmem:[%s1 + $0x70] sm:$0xf]
      %v308 = vld [vmem:[%s1 + $0x74] sm:$0xf]
      %v309 = vld [vmem:[%s1 + $0x78] sm:$0xf]
      %v310 = vld [vmem:[%s1 + $0x7c] sm:$0xf]
      %v311 = vld [vmem:[%s257] sm:$0xff]
      %v312 = vld [vmem:[%s257 + $0x8] sm:$0xff]
      %v313 = vld [vmem:[%s257 + $0x10] sm:$0xff]
      %v314 = vld [vmem:[%s257 + $0x18] sm:$0xff]
      %v315 = vld [vmem:[%s257 + $0x20] sm:$0xff]
      %v316 = vld [vmem:[%s257 + $0x28] sm:$0xff]
      %v317 = vld [vmem:[%s257 + $0x30] sm:$0xff]
      %v318 = vld [vmem:[%s257 + $0x38] sm:$0xff]
      %v319 = vld [vmem:[%s257 + $0x40] sm:$0xff]
      %v320 = vld [vmem:[%s257 + $0x48] sm:$0xff]
      %v321 = vld [vmem:[%s257 + $0x50] sm:$0x11]
      %s322 = scalar_lea.vmem %s1, 128
      %v323 = vld [vmem:[%s322] sm:$0xf]
      %v324 = vld [vmem:[%s322 + $0x4] sm:$0xf]
      %v325 = vld [vmem:[%s322 + $0x8] sm:$0xf]
      %v326 = vld [vmem:[%s322 + $0xc] sm:$0xf]
      %v327 = vld [vmem:[%s322 + $0x10] sm:$0xf]
      %v328 = vld [vmem:[%s322 + $0x14] sm:$0xf]
      %v329 = vld [vmem:[%s322 + $0x18] sm:$0xf]
      %v330 = vld [vmem:[%s322 + $0x1c] sm:$0xf]
      %v331 = vld [vmem:[%s322 + $0x20] sm:$0xf]
      %v332 = vld [vmem:[%s322 + $0x24] sm:$0xf]
      %v333 = vld [vmem:[%s322 + $0x28] sm:$0xf]
      %v334 = vld [vmem:[%s322 + $0x2c] sm:$0xf]
      %v335 = vld [vmem:[%s322 + $0x30] sm:$0xf]
      %v336 = vld [vmem:[%s322 + $0x34] sm:$0xf]
      %v337 = vld [vmem:[%s322 + $0x38] sm:$0xf]
      %v338 = vld [vmem:[%s322 + $0x3c] sm:$0xf]
      %v339 = vld [vmem:[%s322 + $0x40] sm:$0xf]
      %v340 = vld [vmem:[%s322 + $0x44] sm:$0xf]
      %v341 = vld [vmem:[%s322 + $0x48] sm:$0xf]
      %v342 = vld [vmem:[%s322 + $0x4c] sm:$0xf]
      %v343 = vld [vmem:[%s322 + $0x50] sm:$0xf]
      %v344 = vld [vmem:[%s322 + $0x54] sm:$0xf]
      %v345 = vld [vmem:[%s322 + $0x58] sm:$0xf]
      %v346 = vld [vmem:[%s322 + $0x5c] sm:$0xf]
      %v347 = vld [vmem:[%s322 + $0x60] sm:$0xf]
      %v348 = vld [vmem:[%s322 + $0x64] sm:$0xf]
      %v349 = vld [vmem:[%s322 + $0x68] sm:$0xf]
      %v350 = vld [vmem:[%s322 + $0x6c] sm:$0xf]
      %v351 = vld [vmem:[%s322 + $0x70] sm:$0xf]
      %v352 = vld [vmem:[%s322 + $0x74] sm:$0xf]
      %v353 = vld [vmem:[%s322 + $0x78] sm:$0xf]
      %v354 = vld [vmem:[%s322 + $0x7c] sm:$0xf]
      %v366 = vunpack.c.l.b16 %v311
      %v367 = vunpack.c.h.b16 %v311
      %v368 = vunpack.c.l.b16 %v312
      %v369 = vunpack.c.h.b16 %v312
      %v370 = vunpack.c.l.b16 %v313
      %v371 = vunpack.c.h.b16 %v313
      %v372 = vunpack.c.l.b16 %v314
      %v373 = vunpack.c.h.b16 %v314
      %v374 = vunpack.c.l.b16 %v315
      %v375 = vunpack.c.h.b16 %v315
      %v376 = vunpack.c.l.b16 %v316
      %v377 = vunpack.c.h.b16 %v316
      %v378 = vunpack.c.l.b16 %v317
      %v379 = vunpack.c.h.b16 %v317
      %v380 = vunpack.c.l.b16 %v318
      %v381 = vunpack.c.h.b16 %v318
      %v382 = vunpack.c.l.b16 %v319
      %v383 = vunpack.c.h.b16 %v319
      %v384 = vunpack.c.l.b16 %v320
      %v385 = vunpack.c.h.b16 %v320
      %v386 = vunpack.c.l.b16 %v321
      %v387 = vunpack.c.h.b16 %v321
      %v388 = vpack.c.b16 %v368, %v366
      %v389 = vpack.c.b16 %v369, %v367
      %v390 = vpack.c.b16 %v372, %v370
      %v391 = vpack.c.b16 %v373, %v371
      %v392 = vpack.c.b16 %v376, %v374
      %v393 = vpack.c.b16 %v377, %v375
      %v394 = vpack.c.b16 %v380, %v378
      %v395 = vpack.c.b16 %v381, %v379
      %v396 = vpack.c.b16 %v384, %v382
      %v397 = vpack.c.b16 %v385, %v383
      %v398 = vpack.c.b16 %v386, %v386
      %v399 = vpack.c.b16 %v387, %v387
      %vm400 = vsmask.f32 7424
      %v402 = vshrl.u32 %v388, 16
      %v404 = vshll.u32 %v388, 16
      %v406 = vrot.slane %v404, 1
      %v407 = vor.u32 %v402, %v406
      %v409 = vshll.u32 %v390, 16
      %v411 = vrot.slane %v409, 1
      %v412 = vsel %vm400, %v407, %v411
      %v414 = vshrl.u32 %v389, 16
      %v416 = vshll.u32 %v389, 16
      %v418 = vrot.slane %v416, 1
      %v419 = vor.u32 %v414, %v418
      %v421 = vshll.u32 %v391, 16
      %v423 = vrot.slane %v421, 1
      %v424 = vsel %vm400, %v419, %v423
      %v425 = vshrl.u32 %v390, 16
      %v427 = vor.u32 %v425, %v411
      %v429 = vshll.u32 %v392, 16
      %v431 = vrot.slane %v429, 1
      %v432 = vsel %vm400, %v427, %v431
      %v433 = vshrl.u32 %v391, 16
      %v435 = vor.u32 %v433, %v423
      %v437 = vshll.u32 %v393, 16
      %v439 = vrot.slane %v437, 1
      %v440 = vsel %vm400, %v435, %v439
      %v441 = vshrl.u32 %v392, 16
      %v443 = vor.u32 %v441, %v431
      %v445 = vshll.u32 %v394, 16
      %v447 = vrot.slane %v445, 1
      %v448 = vsel %vm400, %v443, %v447
      %v449 = vshrl.u32 %v393, 16
      %v451 = vor.u32 %v449, %v439
      %v453 = vshll.u32 %v395, 16
      %v455 = vrot.slane %v453, 1
      %v456 = vsel %vm400, %v451, %v455
      %v457 = vshrl.u32 %v394, 16
      %v459 = vor.u32 %v457, %v447
      %v461 = vshll.u32 %v396, 16
      %v463 = vrot.slane %v461, 1
      %v464 = vsel %vm400, %v459, %v463
      %v465 = vshrl.u32 %v395, 16
      %v467 = vor.u32 %v465, %v455
      %v469 = vshll.u32 %v397, 16
      %v471 = vrot.slane %v469, 1
      %v472 = vsel %vm400, %v467, %v471
      %v473 = vshrl.u32 %v396, 16
      %v475 = vor.u32 %v473, %v463
      %v477 = vshll.u32 %v398, 16
      %v479 = vrot.slane %v477, 1
      %v480 = vsel %vm400, %v475, %v479
      %v481 = vshrl.u32 %v397, 16
      %v483 = vor.u32 %v481, %v471
      %v485 = vshll.u32 %v399, 16
      %v487 = vrot.slane %v485, 1
      %v488 = vsel %vm400, %v483, %v487
      %v531 = vunpack.c.l.b16 %v323
      %v532 = vunpack.c.l.b16 %v324
      %v533 = vunpack.c.l.b16 %v325
      %v534 = vunpack.c.l.b16 %v326
      %v535 = vunpack.c.l.b16 %v327
      %v536 = vunpack.c.l.b16 %v328
      %v537 = vunpack.c.l.b16 %v329
      %v538 = vunpack.c.l.b16 %v330
      %v539 = vunpack.c.l.b16 %v331
      %v540 = vunpack.c.l.b16 %v332
      %v541 = vunpack.c.l.b16 %v333
      %v542 = vunpack.c.l.b16 %v334
      %v543 = vunpack.c.l.b16 %v335
      %v544 = vunpack.c.l.b16 %v336
      %v545 = vunpack.c.l.b16 %v337
      %v546 = vunpack.c.l.b16 %v338
      %v547 = vunpack.c.l.b16 %v339
      %v548 = vunpack.c.l.b16 %v340
      %v549 = vunpack.c.l.b16 %v341
      %v550 = vunpack.c.l.b16 %v342
      %v551 = vunpack.c.l.b16 %v343
      %v552 = vunpack.c.l.b16 %v344
      %v553 = vunpack.c.l.b16 %v345
      %v554 = vunpack.c.l.b16 %v346
      %v555 = vunpack.c.l.b16 %v347
      %v556 = vunpack.c.l.b16 %v348
      %v557 = vunpack.c.l.b16 %v349
      %v558 = vunpack.c.l.b16 %v350
      %v559 = vunpack.c.l.b16 %v351
      %v560 = vunpack.c.l.b16 %v352
      %v561 = vunpack.c.l.b16 %v353
      %v562 = vunpack.c.l.b16 %v354
      %v563 = vpack.c.b16 %v532, %v531
      %v564 = vpack.c.b16 %v534, %v533
      %v565 = vpack.c.b16 %v536, %v535
      %v566 = vpack.c.b16 %v538, %v537
      %v567 = vpack.c.b16 %v540, %v539
      %v568 = vpack.c.b16 %v542, %v541
      %v569 = vpack.c.b16 %v544, %v543
      %v570 = vpack.c.b16 %v546, %v545
      %v571 = vpack.c.b16 %v548, %v547
      %v572 = vpack.c.b16 %v550, %v549
      %v573 = vpack.c.b16 %v552, %v551
      %v574 = vpack.c.b16 %v554, %v553
      %v575 = vpack.c.b16 %v556, %v555
      %v576 = vpack.c.b16 %v558, %v557
      %v577 = vpack.c.b16 %v560, %v559
      %v578 = vpack.c.b16 %v562, %v561
      %595 = vmatpush.bf16.msra.mxu0 %v570
      %596 = vmatpush.bf16.msra.mxu0 %v569
      %597 = vmatpush.bf16.msra.mxu0 %v568
      %598 = vmatpush.bf16.msra.mxu0 %v567
      %599 = vmatpush.bf16.msra.mxu0 %v566
      %600 = vmatpush.bf16.msra.mxu0 %v565
      %601 = vmatpush.bf16.msra.mxu0 %v564
      %602 = vmatpush.bf16.msra.mxu0 %v563
      %603 = vmatmul.bf16.gmra.mxu0 %v412
      %v604 = vpop.f32.mrf.mxu0
      %v605 = vadd.f32 0.0, %v604
      %v606 = vpop.f32.mrf.mxu0
      %v607 = vadd.f32 0.0, %v606
      %608 = vmatmul.bf16.gmra.mxu0 %v432
      %v609 = vpop.f32.mrf.mxu0
      %v610 = vadd.f32 0.0, %v609
      %v611 = vpop.f32.mrf.mxu0
      %v612 = vadd.f32 0.0, %v611
      %613 = vmatmul.bf16.gmra.mxu0 %v448
      %v614 = vpop.f32.mrf.mxu0
      %v615 = vadd.f32 0.0, %v614
      %v616 = vpop.f32.mrf.mxu0
      %v617 = vadd.f32 0.0, %v616
      %618 = vmatmul.bf16.gmra.mxu0 %v464
      %v619 = vpop.f32.mrf.mxu0
      %v620 = vadd.f32 0.0, %v619
      %v621 = vpop.f32.mrf.mxu0
      %v622 = vadd.f32 0.0, %v621
      %623 = vmatmul.bf16.gmra.mxu0 %v480
      %v624 = vpop.f32.mrf.mxu0
      %v625 = vadd.f32 0.0, %v624
      %v626 = vpop.f32.mrf.mxu0
      %v627 = vadd.f32 0.0, %v626
      %628 = vdwg.mxu0
      %629 = vmatpush.bf16.msra.mxu0 %v578
      %630 = vmatpush.bf16.msra.mxu0 %v577
      %631 = vmatpush.bf16.msra.mxu0 %v576
      %632 = vmatpush.bf16.msra.mxu0 %v575
      %633 = vmatpush.bf16.msra.mxu0 %v574
      %634 = vmatpush.bf16.msra.mxu0 %v573
      %635 = vmatpush.bf16.msra.mxu0 %v572
      %636 = vmatpush.bf16.msra.mxu0 %v571
      %637 = vmatmul.bf16.gmra.mxu0 %v424
      %v638 = vpop.f32.mrf.mxu0
      %v639 = vadd.f32 %v605, %v638
      %v640 = vpop.f32.mrf.mxu0
      %v641 = vadd.f32 %v607, %v640
      %642 = vmatmul.bf16.gmra.mxu0 %v440
      %v643 = vpop.f32.mrf.mxu0
      %v644 = vadd.f32 %v610, %v643
      %v645 = vpop.f32.mrf.mxu0
      %v646 = vadd.f32 %v612, %v645
      %647 = vmatmul.bf16.gmra.mxu0 %v456
      %v648 = vpop.f32.mrf.mxu0
      %v649 = vadd.f32 %v615, %v648
      %v650 = vpop.f32.mrf.mxu0
      %v651 = vadd.f32 %v617, %v650
      %652 = vmatmul.bf16.gmra.mxu0 %v472
      %v653 = vpop.f32.mrf.mxu0
      %v654 = vadd.f32 %v620, %v653
      %v655 = vpop.f32.mrf.mxu0
      %v656 = vadd.f32 %v622, %v655
      %657 = vmatmul.bf16.gmra.mxu0 %v488
      %v658 = vpop.f32.mrf.mxu0
      %v659 = vadd.f32 %v625, %v658
      %v660 = vpop.f32.mrf.mxu0
      %v661 = vadd.f32 %v627, %v660
      %662 = vdwg.mxu0
      %v673 = vunpack.c.l.b16 %v269
      %v674 = vunpack.c.h.b16 %v269
      %v675 = vunpack.c.l.b16 %v270
      %v676 = vunpack.c.h.b16 %v270
      %v677 = vunpack.c.l.b16 %v271
      %v678 = vunpack.c.h.b16 %v271
      %v679 = vunpack.c.l.b16 %v272
      %v680 = vunpack.c.h.b16 %v272
      %v681 = vunpack.c.l.b16 %v273
      %v682 = vunpack.c.h.b16 %v273
      %v683 = vunpack.c.l.b16 %v274
      %v684 = vunpack.c.h.b16 %v274
      %v685 = vunpack.c.l.b16 %v275
      %v686 = vunpack.c.h.b16 %v275
      %v687 = vunpack.c.l.b16 %v276
      %v688 = vunpack.c.h.b16 %v276
      %v689 = vunpack.c.l.b16 %v277
      %v690 = vunpack.c.h.b16 %v277
      %v691 = vunpack.c.l.b16 %v278
      %v692 = vunpack.c.h.b16 %v278
      %v693 = vpack.c.b16 %v675, %v673
      %v694 = vpack.c.b16 %v676, %v674
      %v695 = vpack.c.b16 %v679, %v677
      %v696 = vpack.c.b16 %v680, %v678
      %v697 = vpack.c.b16 %v683, %v681
      %v698 = vpack.c.b16 %v684, %v682
      %v699 = vpack.c.b16 %v687, %v685
      %v700 = vpack.c.b16 %v688, %v686
      %v701 = vpack.c.b16 %v691, %v689
      %v702 = vpack.c.b16 %v692, %v690
      %v745 = vunpack.c.l.b16 %v279
      %v746 = vunpack.c.l.b16 %v280
      %v747 = vunpack.c.l.b16 %v281
      %v748 = vunpack.c.l.b16 %v282
      %v749 = vunpack.c.l.b16 %v283
      %v750 = vunpack.c.l.b16 %v284
      %v751 = vunpack.c.l.b16 %v285
      %v752 = vunpack.c.l.b16 %v286
      %v753 = vunpack.c.l.b16 %v287
      %v754 = vunpack.c.l.b16 %v288
      %v755 = vunpack.c.l.b16 %v289
      %v756 = vunpack.c.l.b16 %v290
      %v757 = vunpack.c.l.b16 %v291
      %v758 = vunpack.c.l.b16 %v292
      %v759 = vunpack.c.l.b16 %v293
      %v760 = vunpack.c.l.b16 %v294
      %v761 = vunpack.c.l.b16 %v295
      %v762 = vunpack.c.l.b16 %v296
      %v763 = vunpack.c.l.b16 %v297
      %v764 = vunpack.c.l.b16 %v298
      %v765 = vunpack.c.l.b16 %v299
      %v766 = vunpack.c.l.b16 %v300
      %v767 = vunpack.c.l.b16 %v301
      %v768 = vunpack.c.l.b16 %v302
      %v769 = vunpack.c.l.b16 %v303
      %v770 = vunpack.c.l.b16 %v304
      %v771 = vunpack.c.l.b16 %v305
      %v772 = vunpack.c.l.b16 %v306
      %v773 = vunpack.c.l.b16 %v307
      %v774 = vunpack.c.l.b16 %v308
      %v775 = vunpack.c.l.b16 %v309
      %v776 = vunpack.c.l.b16 %v310
      %v777 = vpack.c.b16 %v746, %v745
      %v778 = vpack.c.b16 %v748, %v747
      %v779 = vpack.c.b16 %v750, %v749
      %v780 = vpack.c.b16 %v752, %v751
      %v781 = vpack.c.b16 %v754, %v753
      %v782 = vpack.c.b16 %v756, %v755
      %v783 = vpack.c.b16 %v758, %v757
      %v784 = vpack.c.b16 %v760, %v759
      %v785 = vpack.c.b16 %v762, %v761
      %v786 = vpack.c.b16 %v764, %v763
      %v787 = vpack.c.b16 %v766, %v765
      %v788 = vpack.c.b16 %v768, %v767
      %v789 = vpack.c.b16 %v770, %v769
      %v790 = vpack.c.b16 %v772, %v771
      %v791 = vpack.c.b16 %v774, %v773
      %v792 = vpack.c.b16 %v776, %v775
      %809 = vmatpush.bf16.msra.mxu0 %v784
      %810 = vmatpush.bf16.msra.mxu0 %v783
      %811 = vmatpush.bf16.msra.mxu0 %v782
      %812 = vmatpush.bf16.msra.mxu0 %v781
      %813 = vmatpush.bf16.msra.mxu0 %v780
      %814 = vmatpush.bf16.msra.mxu0 %v779
      %815 = vmatpush.bf16.msra.mxu0 %v778
      %816 = vmatpush.bf16.msra.mxu0 %v777
      %817 = vmatmul.bf16.gmra.mxu0 %v693
      %v818 = vpop.f32.mrf.mxu0
      %v819 = vadd.f32 %v639, %v818
      %v820 = vpop.f32.mrf.mxu0
      %v821 = vadd.f32 %v641, %v820
      %822 = vmatmul.bf16.gmra.mxu0 %v695
      %v823 = vpop.f32.mrf.mxu0
      %v824 = vadd.f32 %v644, %v823
      %v825 = vpop.f32.mrf.mxu0
      %v826 = vadd.f32 %v646, %v825
      %827 = vmatmul.bf16.gmra.mxu0 %v697
      %v828 = vpop.f32.mrf.mxu0
      %v829 = vadd.f32 %v649, %v828
      %v830 = vpop.f32.mrf.mxu0
      %v831 = vadd.f32 %v651, %v830
      %832 = vmatmul.bf16.gmra.mxu0 %v699
      %v833 = vpop.f32.mrf.mxu0
      %v834 = vadd.f32 %v654, %v833
      %v835 = vpop.f32.mrf.mxu0
      %v836 = vadd.f32 %v656, %v835
      %837 = vmatmul.bf16.gmra.mxu0 %v701
      %v838 = vpop.f32.mrf.mxu0
      %v839 = vadd.f32 %v659, %v838
      %v840 = vpop.f32.mrf.mxu0
      %v841 = vadd.f32 %v661, %v840
      %842 = vdwg.mxu0
      %843 = vmatpush.bf16.msra.mxu0 %v792
      %844 = vmatpush.bf16.msra.mxu0 %v791
      %845 = vmatpush.bf16.msra.mxu0 %v790
      %846 = vmatpush.bf16.msra.mxu0 %v789
      %847 = vmatpush.bf16.msra.mxu0 %v788
      %848 = vmatpush.bf16.msra.mxu0 %v787
      %849 = vmatpush.bf16.msra.mxu0 %v786
      %850 = vmatpush.bf16.msra.mxu0 %v785
      %851 = vmatmul.bf16.gmra.mxu0 %v694
      %v852 = vpop.f32.mrf.mxu0
      %v853 = vadd.f32 %v819, %v852
      %v854 = vpop.f32.mrf.mxu0
      %v855 = vadd.f32 %v821, %v854
      %856 = vmatmul.bf16.gmra.mxu0 %v696
      %v857 = vpop.f32.mrf.mxu0
      %v858 = vadd.f32 %v824, %v857
      %v859 = vpop.f32.mrf.mxu0
      %v860 = vadd.f32 %v826, %v859
      %861 = vmatmul.bf16.gmra.mxu0 %v698
      %v862 = vpop.f32.mrf.mxu0
      %v863 = vadd.f32 %v829, %v862
      %v864 = vpop.f32.mrf.mxu0
      %v865 = vadd.f32 %v831, %v864
      %866 = vmatmul.bf16.gmra.mxu0 %v700
      %v867 = vpop.f32.mrf.mxu0
      %v868 = vadd.f32 %v834, %v867
      %v869 = vpop.f32.mrf.mxu0
      %v870 = vadd.f32 %v836, %v869
      %871 = vmatmul.bf16.gmra.mxu0 %v702
      %v872 = vpop.f32.mrf.mxu0
      %v873 = vadd.f32 %v839, %v872
      %v874 = vpop.f32.mrf.mxu0
      %v875 = vadd.f32 %v841, %v874
      %876 = vdwg.mxu0
      %v877 = vld [vmem:[%s257] sm:$0xee]
      %s878 = scalar_lea.vmem %s1, 256
      %v879 = vld [vmem:[%s878] sm:$0xf]
      %v880 = vld [vmem:[%s878 + $0x4] sm:$0xf]
      %v881 = vld [vmem:[%s878 + $0x8] sm:$0xf]
      %v882 = vld [vmem:[%s878 + $0xc] sm:$0xf]
      %v883 = vld [vmem:[%s878 + $0x10] sm:$0xf]
      %v884 = vld [vmem:[%s878 + $0x14] sm:$0xf]
      %v885 = vld [vmem:[%s878 + $0x18] sm:$0xf]
      %v886 = vld [vmem:[%s878 + $0x1c] sm:$0xf]
      %v887 = vld [vmem:[%s878 + $0x20] sm:$0xf]
      %v888 = vld [vmem:[%s878 + $0x24] sm:$0xf]
      %v889 = vld [vmem:[%s878 + $0x28] sm:$0xf]
      %v890 = vld [vmem:[%s878 + $0x2c] sm:$0xf]
      %v891 = vld [vmem:[%s878 + $0x30] sm:$0xf]
      %v892 = vld [vmem:[%s878 + $0x34] sm:$0xf]
      %v893 = vld [vmem:[%s878 + $0x38] sm:$0xf]
      %v894 = vld [vmem:[%s878 + $0x3c] sm:$0xf]
      %v895 = vld [vmem:[%s878 + $0x40] sm:$0xf]
      %v896 = vld [vmem:[%s878 + $0x44] sm:$0xf]
      %v897 = vld [vmem:[%s878 + $0x48] sm:$0xf]
      %v898 = vld [vmem:[%s878 + $0x4c] sm:$0xf]
      %v899 = vld [vmem:[%s878 + $0x50] sm:$0xf]
      %v900 = vld [vmem:[%s878 + $0x54] sm:$0xf]
      %v901 = vld [vmem:[%s878 + $0x58] sm:$0xf]
      %v902 = vld [vmem:[%s878 + $0x5c] sm:$0xf]
      %v903 = vld [vmem:[%s878 + $0x60] sm:$0xf]
      %v904 = vld [vmem:[%s878 + $0x64] sm:$0xf]
      %v905 = vld [vmem:[%s878 + $0x68] sm:$0xf]
      %v906 = vld [vmem:[%s878 + $0x6c] sm:$0xf]
      %v907 = vld [vmem:[%s878 + $0x70] sm:$0xf]
      %v908 = vld [vmem:[%s878 + $0x74] sm:$0xf]
      %v909 = vld [vmem:[%s878 + $0x78] sm:$0xf]
      %v910 = vld [vmem:[%s878 + $0x7c] sm:$0xf]
      %v912 = vunpack.c.l.b16 %v877
      %v913 = vunpack.c.h.b16 %v877
      %v914 = vpack.c.b16 %v368, %v912
      %v915 = vpack.c.b16 %v369, %v913
      %vm916 = vcmask 1046528
      %v917 = vrot.slane %v914, 1
      %v918 = vrot.slane %v390, 1
      %v919 = vsel %vm916, %v917, %v918
      %v920 = vrot.slane %v915, 1
      %v921 = vrot.slane %v391, 1
      %v922 = vsel %vm916, %v920, %v921
      %v923 = vrot.slane %v392, 1
      %v924 = vsel %vm916, %v918, %v923
      %v925 = vrot.slane %v393, 1
      %v926 = vsel %vm916, %v921, %v925
      %v927 = vrot.slane %v394, 1
      %v928 = vsel %vm916, %v923, %v927
      %v929 = vrot.slane %v395, 1
      %v930 = vsel %vm916, %v925, %v929
      %v931 = vrot.slane %v396, 1
      %v932 = vsel %vm916, %v927, %v931
      %v933 = vrot.slane %v397, 1
      %v934 = vsel %vm916, %v929, %v933
      %v935 = vrot.slane %v398, 1
      %v936 = vsel %vm916, %v931, %v935
      %v937 = vrot.slane %v399, 1
      %v938 = vsel %vm916, %v933, %v937
      %v981 = vunpack.c.l.b16 %v879
      %v982 = vunpack.c.l.b16 %v880
      %v983 = vunpack.c.l.b16 %v881
      %v984 = vunpack.c.l.b16 %v882
      %v985 = vunpack.c.l.b16 %v883
      %v986 = vunpack.c.l.b16 %v884
      %v987 = vunpack.c.l.b16 %v885
      %v988 = vunpack.c.l.b16 %v886
      %v989 = vunpack.c.l.b16 %v887
      %v990 = vunpack.c.l.b16 %v888
      %v991 = vunpack.c.l.b16 %v889
      %v992 = vunpack.c.l.b16 %v890
      %v993 = vunpack.c.l.b16 %v891
      %v994 = vunpack.c.l.b16 %v892
      %v995 = vunpack.c.l.b16 %v893
      %v996 = vunpack.c.l.b16 %v894
      %v997 = vunpack.c.l.b16 %v895
      %v998 = vunpack.c.l.b16 %v896
      %v999 = vunpack.c.l.b16 %v897
      %v1000 = vunpack.c.l.b16 %v898
      %v1001 = vunpack.c.l.b16 %v899
      %v1002 = vunpack.c.l.b16 %v900
      %v1003 = vunpack.c.l.b16 %v901
      %v1004 = vunpack.c.l.b16 %v902
      %v1005 = vunpack.c.l.b16 %v903
      %v1006 = vunpack.c.l.b16 %v904
      %v1007 = vunpack.c.l.b16 %v905
      %v1008 = vunpack.c.l.b16 %v906
      %v1009 = vunpack.c.l.b16 %v907
      %v1010 = vunpack.c.l.b16 %v908
      %v1011 = vunpack.c.l.b16 %v909
      %v1012 = vunpack.c.l.b16 %v910
      %v1013 = vpack.c.b16 %v982, %v981
      %v1014 = vpack.c.b16 %v984, %v983
      %v1015 = vpack.c.b16 %v986, %v985
      %v1016 = vpack.c.b16 %v988, %v987
      %v1017 = vpack.c.b16 %v990, %v989
      %v1018 = vpack.c.b16 %v992, %v991
      %v1019 = vpack.c.b16 %v994, %v993
      %v1020 = vpack.c.b16 %v996, %v995
      %v1021 = vpack.c.b16 %v998, %v997
      %v1022 = vpack.c.b16 %v1000, %v999
      %v1023 = vpack.c.b16 %v1002, %v1001
      %v1024 = vpack.c.b16 %v1004, %v1003
      %v1025 = vpack.c.b16 %v1006, %v1005
      %v1026 = vpack.c.b16 %v1008, %v1007
      %v1027 = vpack.c.b16 %v1010, %v1009
      %v1028 = vpack.c.b16 %v1012, %v1011
      %1045 = vmatpush.bf16.msra.mxu0 %v1020
      %1046 = vmatpush.bf16.msra.mxu0 %v1019
      %1047 = vmatpush.bf16.msra.mxu0 %v1018
      %1048 = vmatpush.bf16.msra.mxu0 %v1017
      %1049 = vmatpush.bf16.msra.mxu0 %v1016
      %1050 = vmatpush.bf16.msra.mxu0 %v1015
      %1051 = vmatpush.bf16.msra.mxu0 %v1014
      %1052 = vmatpush.bf16.msra.mxu0 %v1013
      %1053 = vmatmul.bf16.gmra.mxu0 %v919
      %v1054 = vpop.f32.mrf.mxu0
      %v1055 = vadd.f32 0.0, %v1054
      %v1056 = vpop.f32.mrf.mxu0
      %v1057 = vadd.f32 0.0, %v1056
      %1058 = vmatmul.bf16.gmra.mxu0 %v924
      %v1059 = vpop.f32.mrf.mxu0
      %v1060 = vadd.f32 0.0, %v1059
      %v1061 = vpop.f32.mrf.mxu0
      %v1062 = vadd.f32 0.0, %v1061
      %1063 = vmatmul.bf16.gmra.mxu0 %v928
      %v1064 = vpop.f32.mrf.mxu0
      %v1065 = vadd.f32 0.0, %v1064
      %v1066 = vpop.f32.mrf.mxu0
      %v1067 = vadd.f32 0.0, %v1066
      %1068 = vmatmul.bf16.gmra.mxu0 %v932
      %v1069 = vpop.f32.mrf.mxu0
      %v1070 = vadd.f32 0.0, %v1069
      %v1071 = vpop.f32.mrf.mxu0
      %v1072 = vadd.f32 0.0, %v1071
      %1073 = vmatmul.bf16.gmra.mxu0 %v936
      %v1074 = vpop.f32.mrf.mxu0
      %v1075 = vadd.f32 0.0, %v1074
      %v1076 = vpop.f32.mrf.mxu0
      %v1077 = vadd.f32 0.0, %v1076
      %1078 = vdwg.mxu0
      %1079 = vmatpush.bf16.msra.mxu0 %v1028
      %1080 = vmatpush.bf16.msra.mxu0 %v1027
      %1081 = vmatpush.bf16.msra.mxu0 %v1026
      %1082 = vmatpush.bf16.msra.mxu0 %v1025
      %1083 = vmatpush.bf16.msra.mxu0 %v1024
      %1084 = vmatpush.bf16.msra.mxu0 %v1023
      %1085 = vmatpush.bf16.msra.mxu0 %v1022
      %1086 = vmatpush.bf16.msra.mxu0 %v1021
      %1087 = vmatmul.bf16.gmra.mxu0 %v922
      %v1088 = vpop.f32.mrf.mxu0
      %v1089 = vadd.f32 %v1055, %v1088
      %v1090 = vpop.f32.mrf.mxu0
      %v1091 = vadd.f32 %v1057, %v1090
      %1092 = vmatmul.bf16.gmra.mxu0 %v926
      %v1093 = vpop.f32.mrf.mxu0
      %v1094 = vadd.f32 %v1060, %v1093
      %v1095 = vpop.f32.mrf.mxu0
      %v1096 = vadd.f32 %v1062, %v1095
      %1097 = vmatmul.bf16.gmra.mxu0 %v930
      %v1098 = vpop.f32.mrf.mxu0
      %v1099 = vadd.f32 %v1065, %v1098
      %v1100 = vpop.f32.mrf.mxu0
      %v1101 = vadd.f32 %v1067, %v1100
      %1102 = vmatmul.bf16.gmra.mxu0 %v934
      %v1103 = vpop.f32.mrf.mxu0
      %v1104 = vadd.f32 %v1070, %v1103
      %v1105 = vpop.f32.mrf.mxu0
      %v1106 = vadd.f32 %v1072, %v1105
      %1107 = vmatmul.bf16.gmra.mxu0 %v938
      %v1108 = vpop.f32.mrf.mxu0
      %v1109 = vadd.f32 %v1075, %v1108
      %v1110 = vpop.f32.mrf.mxu0
      %v1111 = vadd.f32 %v1077, %v1110
      %1112 = vdwg.mxu0
      %v1113 = vadd.f32 %v853, %v1089
      %v1114 = vadd.f32 %v855, %v1091
      %v1115 = vadd.f32 %v858, %v1094
      %v1116 = vadd.f32 %v860, %v1096
      %v1117 = vadd.f32 %v863, %v1099
      %v1118 = vadd.f32 %v865, %v1101
      %v1119 = vadd.f32 %v868, %v1104
      %v1120 = vadd.f32 %v870, %v1106
      %v1121 = vadd.f32 %v873, %v1109
      %v1122 = vadd.f32 %v875, %v1111
      %v1123 = vld [vmem:[%s257 + $0x50] sm:$0x33]
      %s1124 = scalar_lea.vmem %s1, 384
      %v1125 = vld [vmem:[%s1124] sm:$0xf]
      %v1126 = vld [vmem:[%s1124 + $0x4] sm:$0xf]
      %v1127 = vld [vmem:[%s1124 + $0x8] sm:$0xf]
      %v1128 = vld [vmem:[%s1124 + $0xc] sm:$0xf]
      %v1129 = vld [vmem:[%s1124 + $0x10] sm:$0xf]
      %v1130 = vld [vmem:[%s1124 + $0x14] sm:$0xf]
      %v1131 = vld [vmem:[%s1124 + $0x18] sm:$0xf]
      %v1132 = vld [vmem:[%s1124 + $0x1c] sm:$0xf]
      %v1133 = vld [vmem:[%s1124 + $0x20] sm:$0xf]
      %v1134 = vld [vmem:[%s1124 + $0x24] sm:$0xf]
      %v1135 = vld [vmem:[%s1124 + $0x28] sm:$0xf]
      %v1136 = vld [vmem:[%s1124 + $0x2c] sm:$0xf]
      %v1137 = vld [vmem:[%s1124 + $0x30] sm:$0xf]
      %v1138 = vld [vmem:[%s1124 + $0x34] sm:$0xf]
      %v1139 = vld [vmem:[%s1124 + $0x38] sm:$0xf]
      %v1140 = vld [vmem:[%s1124 + $0x3c] sm:$0xf]
      %v1141 = vld [vmem:[%s1124 + $0x40] sm:$0xf]
      %v1142 = vld [vmem:[%s1124 + $0x44] sm:$0xf]
      %v1143 = vld [vmem:[%s1124 + $0x48] sm:$0xf]
      %v1144 = vld [vmem:[%s1124 + $0x4c] sm:$0xf]
      %v1145 = vld [vmem:[%s1124 + $0x50] sm:$0xf]
      %v1146 = vld [vmem:[%s1124 + $0x54] sm:$0xf]
      %v1147 = vld [vmem:[%s1124 + $0x58] sm:$0xf]
      %v1148 = vld [vmem:[%s1124 + $0x5c] sm:$0xf]
      %v1149 = vld [vmem:[%s1124 + $0x60] sm:$0xf]
      %v1150 = vld [vmem:[%s1124 + $0x64] sm:$0xf]
      %v1151 = vld [vmem:[%s1124 + $0x68] sm:$0xf]
      %v1152 = vld [vmem:[%s1124 + $0x6c] sm:$0xf]
      %v1153 = vld [vmem:[%s1124 + $0x70] sm:$0xf]
      %v1154 = vld [vmem:[%s1124 + $0x74] sm:$0xf]
      %v1155 = vld [vmem:[%s1124 + $0x78] sm:$0xf]
      %v1156 = vld [vmem:[%s1124 + $0x7c] sm:$0xf]
      %v1158 = vunpack.c.l.b16 %v1123
      %v1159 = vunpack.c.h.b16 %v1123
      %v1160 = vpack.c.b16 %v1158, %v1158
      %v1161 = vpack.c.b16 %v1159, %v1159
      %vm1162 = vsmask.f32 6400
      %v1164 = vshrl.u32 %v914, 16
      %v1166 = vrot.slane %v1164, 1
      %v1167 = vshll.u32 %v914, 16
      %v1169 = vrot.slane %v1167, 2
      %v1170 = vor.u32 %v1166, %v1169
      %v1171 = vrot.slane %v425, 1
      %v1172 = vrot.slane %v409, 2
      %v1173 = vor.u32 %v1171, %v1172
      %v1174 = vsel %vm1162, %v1170, %v1173
      %v1176 = vshrl.u32 %v915, 16
      %v1178 = vrot.slane %v1176, 1
      %v1179 = vshll.u32 %v915, 16
      %v1181 = vrot.slane %v1179, 2
      %v1182 = vor.u32 %v1178, %v1181
      %v1183 = vrot.slane %v433, 1
      %v1184 = vrot.slane %v421, 2
      %v1185 = vor.u32 %v1183, %v1184
      %v1186 = vsel %vm1162, %v1182, %v1185
      %v1187 = vrot.slane %v441, 1
      %v1188 = vrot.slane %v429, 2
      %v1189 = vor.u32 %v1187, %v1188
      %v1190 = vsel %vm1162, %v1173, %v1189
      %v1191 = vrot.slane %v449, 1
      %v1192 = vrot.slane %v437, 2
      %v1193 = vor.u32 %v1191, %v1192
      %v1194 = vsel %vm1162, %v1185, %v1193
      %v1195 = vrot.slane %v457, 1
      %v1196 = vrot.slane %v445, 2
      %v1197 = vor.u32 %v1195, %v1196
      %v1198 = vsel %vm1162, %v1189, %v1197
      %v1199 = vrot.slane %v465, 1
      %v1200 = vrot.slane %v453, 2
      %v1201 = vor.u32 %v1199, %v1200
      %v1202 = vsel %vm1162, %v1193, %v1201
      %v1203 = vrot.slane %v473, 1
      %v1204 = vrot.slane %v461, 2
      %v1205 = vor.u32 %v1203, %v1204
      %v1206 = vsel %vm1162, %v1197, %v1205
      %v1207 = vrot.slane %v481, 1
      %v1208 = vrot.slane %v469, 2
      %v1209 = vor.u32 %v1207, %v1208
      %v1210 = vsel %vm1162, %v1201, %v1209
      %v1212 = vshrl.u32 %v1160, 16
      %v1214 = vrot.slane %v1212, 1
      %v1215 = vshll.u32 %v1160, 16
      %v1217 = vrot.slane %v1215, 2
      %v1218 = vor.u32 %v1214, %v1217
      %v1219 = vsel %vm1162, %v1205, %v1218
      %v1221 = vshrl.u32 %v1161, 16
      %v1223 = vrot.slane %v1221, 1
      %v1224 = vshll.u32 %v1161, 16
      %v1226 = vrot.slane %v1224, 2
      %v1227 = vor.u32 %v1223, %v1226
      %v1228 = vsel %vm1162, %v1209, %v1227
      %v1271 = vunpack.c.l.b16 %v1125
      %v1272 = vunpack.c.l.b16 %v1126
      %v1273 = vunpack.c.l.b16 %v1127
      %v1274 = vunpack.c.l.b16 %v1128
      %v1275 = vunpack.c.l.b16 %v1129
      %v1276 = vunpack.c.l.b16 %v1130
      %v1277 = vunpack.c.l.b16 %v1131
      %v1278 = vunpack.c.l.b16 %v1132
      %v1279 = vunpack.c.l.b16 %v1133
      %v1280 = vunpack.c.l.b16 %v1134
      %v1281 = vunpack.c.l.b16 %v1135
      %v1282 = vunpack.c.l.b16 %v1136
      %v1283 = vunpack.c.l.b16 %v1137
      %v1284 = vunpack.c.l.b16 %v1138
      %v1285 = vunpack.c.l.b16 %v1139
      %v1286 = vunpack.c.l.b16 %v1140
      %v1287 = vunpack.c.l.b16 %v1141
      %v1288 = vunpack.c.l.b16 %v1142
      %v1289 = vunpack.c.l.b16 %v1143
      %v1290 = vunpack.c.l.b16 %v1144
      %v1291 = vunpack.c.l.b16 %v1145
      %v1292 = vunpack.c.l.b16 %v1146
      %v1293 = vunpack.c.l.b16 %v1147
      %v1294 = vunpack.c.l.b16 %v1148
      %v1295 = vunpack.c.l.b16 %v1149
      %v1296 = vunpack.c.l.b16 %v1150
      %v1297 = vunpack.c.l.b16 %v1151
      %v1298 = vunpack.c.l.b16 %v1152
      %v1299 = vunpack.c.l.b16 %v1153
      %v1300 = vunpack.c.l.b16 %v1154
      %v1301 = vunpack.c.l.b16 %v1155
      %v1302 = vunpack.c.l.b16 %v1156
      %v1303 = vpack.c.b16 %v1272, %v1271
      %v1304 = vpack.c.b16 %v1274, %v1273
      %v1305 = vpack.c.b16 %v1276, %v1275
      %v1306 = vpack.c.b16 %v1278, %v1277
      %v1307 = vpack.c.b16 %v1280, %v1279
      %v1308 = vpack.c.b16 %v1282, %v1281
      %v1309 = vpack.c.b16 %v1284, %v1283
      %v1310 = vpack.c.b16 %v1286, %v1285
      %v1311 = vpack.c.b16 %v1288, %v1287
      %v1312 = vpack.c.b16 %v1290, %v1289
      %v1313 = vpack.c.b16 %v1292, %v1291
      %v1314 = vpack.c.b16 %v1294, %v1293
      %v1315 = vpack.c.b16 %v1296, %v1295
      %v1316 = vpack.c.b16 %v1298, %v1297
      %v1317 = vpack.c.b16 %v1300, %v1299
      %v1318 = vpack.c.b16 %v1302, %v1301
      %1335 = vmatpush.bf16.msra.mxu0 %v1310
      %1336 = vmatpush.bf16.msra.mxu0 %v1309
      %1337 = vmatpush.bf16.msra.mxu0 %v1308
      %1338 = vmatpush.bf16.msra.mxu0 %v1307
      %1339 = vmatpush.bf16.msra.mxu0 %v1306
      %1340 = vmatpush.bf16.msra.mxu0 %v1305
      %1341 = vmatpush.bf16.msra.mxu0 %v1304
      %1342 = vmatpush.bf16.msra.mxu0 %v1303
      %1343 = vmatmul.bf16.gmra.mxu0 %v1174
      %v1344 = vpop.f32.mrf.mxu0
      %v1345 = vadd.f32 0.0, %v1344
      %v1346 = vpop.f32.mrf.mxu0
      %v1347 = vadd.f32 0.0, %v1346
      %1348 = vmatmul.bf16.gmra.mxu0 %v1190
      %v1349 = vpop.f32.mrf.mxu0
      %v1350 = vadd.f32 0.0, %v1349
      %v1351 = vpop.f32.mrf.mxu0
      %v1352 = vadd.f32 0.0, %v1351
      %1353 = vmatmul.bf16.gmra.mxu0 %v1198
      %v1354 = vpop.f32.mrf.mxu0
      %v1355 = vadd.f32 0.0, %v1354
      %v1356 = vpop.f32.mrf.mxu0
      %v1357 = vadd.f32 0.0, %v1356
      %1358 = vmatmul.bf16.gmra.mxu0 %v1206
      %v1359 = vpop.f32.mrf.mxu0
      %v1360 = vadd.f32 0.0, %v1359
      %v1361 = vpop.f32.mrf.mxu0
      %v1362 = vadd.f32 0.0, %v1361
      %1363 = vmatmul.bf16.gmra.mxu0 %v1219
      %v1364 = vpop.f32.mrf.mxu0
      %v1365 = vadd.f32 0.0, %v1364
      %v1366 = vpop.f32.mrf.mxu0
      %v1367 = vadd.f32 0.0, %v1366
      %1368 = vdwg.mxu0
      %1369 = vmatpush.bf16.msra.mxu0 %v1318
      %1370 = vmatpush.bf16.msra.mxu0 %v1317
      %1371 = vmatpush.bf16.msra.mxu0 %v1316
      %1372 = vmatpush.bf16.msra.mxu0 %v1315
      %1373 = vmatpush.bf16.msra.mxu0 %v1314
      %1374 = vmatpush.bf16.msra.mxu0 %v1313
      %1375 = vmatpush.bf16.msra.mxu0 %v1312
      %1376 = vmatpush.bf16.msra.mxu0 %v1311
      %1377 = vmatmul.bf16.gmra.mxu0 %v1186
      %v1378 = vpop.f32.mrf.mxu0
      %v1379 = vadd.f32 %v1345, %v1378
      %v1380 = vpop.f32.mrf.mxu0
      %v1381 = vadd.f32 %v1347, %v1380
      %1382 = vmatmul.bf16.gmra.mxu0 %v1194
      %v1383 = vpop.f32.mrf.mxu0
      %v1384 = vadd.f32 %v1350, %v1383
      %v1385 = vpop.f32.mrf.mxu0
      %v1386 = vadd.f32 %v1352, %v1385
      %1387 = vmatmul.bf16.gmra.mxu0 %v1202
      %v1388 = vpop.f32.mrf.mxu0
      %v1389 = vadd.f32 %v1355, %v1388
      %v1390 = vpop.f32.mrf.mxu0
      %v1391 = vadd.f32 %v1357, %v1390
      %1392 = vmatmul.bf16.gmra.mxu0 %v1210
      %v1393 = vpop.f32.mrf.mxu0
      %v1394 = vadd.f32 %v1360, %v1393
      %v1395 = vpop.f32.mrf.mxu0
      %v1396 = vadd.f32 %v1362, %v1395
      %1397 = vmatmul.bf16.gmra.mxu0 %v1228
      %v1398 = vpop.f32.mrf.mxu0
      %v1399 = vadd.f32 %v1365, %v1398
      %v1400 = vpop.f32.mrf.mxu0
      %v1401 = vadd.f32 %v1367, %v1400
      %1402 = vdwg.mxu0
      %v1403 = vadd.f32 %v1113, %v1379
      %v1404 = vadd.f32 %v1114, %v1381
      %v1405 = vadd.f32 %v1115, %v1384
      %v1406 = vadd.f32 %v1116, %v1386
      %v1407 = vadd.f32 %v1117, %v1389
      %v1408 = vadd.f32 %v1118, %v1391
      %v1409 = vadd.f32 %v1119, %v1394
      %v1410 = vadd.f32 %v1120, %v1396
      %v1411 = vadd.f32 %v1121, %v1399
      %v1412 = vadd.f32 %v1122, %v1401
      %v1413 = vmax.f32 %v1403, 0.0
      %v1414 = vmax.f32 %v1404, 0.0
      %v1415 = vmax.f32 %v1405, 0.0
      %v1416 = vmax.f32 %v1406, 0.0
      %v1417 = vmax.f32 %v1407, 0.0
      %v1418 = vmax.f32 %v1408, 0.0
      %v1419 = vmax.f32 %v1409, 0.0
      %v1420 = vmax.f32 %v1410, 0.0
      %v1421 = vmax.f32 %v1411, 0.0
      %v1422 = vmax.f32 %v1412, 0.0
      %v1423 = vpack.c.bf16 %v1414, %v1413
      %v1424 = vpack.c.bf16 %v1416, %v1415
      %v1425 = vpack.c.bf16 %v1418, %v1417
      %v1426 = vpack.c.bf16 %v1420, %v1419
      %v1427 = vpack.c.bf16 %v1422, %v1421
      %v1428 = vld [vmem:[%s2] sm:$0xf]
      %v1429 = vld [vmem:[%s2 + $0x4] sm:$0xf]
      %v1430 = vld [vmem:[%s2 + $0x8] sm:$0xf]
      %v1431 = vld [vmem:[%s2 + $0xc] sm:$0xf]
      %v1432 = vld [vmem:[%s2 + $0x10] sm:$0xf]
      %v1433 = vld [vmem:[%s2 + $0x14] sm:$0xf]
      %v1434 = vld [vmem:[%s2 + $0x18] sm:$0xf]
      %v1435 = vld [vmem:[%s2 + $0x1c] sm:$0xf]
      %v1436 = vld [vmem:[%s2 + $0x20] sm:$0xf]
      %v1437 = vld [vmem:[%s2 + $0x24] sm:$0xf]
      %v1438 = vld [vmem:[%s2 + $0x28] sm:$0xf]
      %v1439 = vld [vmem:[%s2 + $0x2c] sm:$0xf]
      %v1440 = vld [vmem:[%s2 + $0x30] sm:$0xf]
      %v1441 = vld [vmem:[%s2 + $0x34] sm:$0xf]
      %v1442 = vld [vmem:[%s2 + $0x38] sm:$0xf]
      %v1443 = vld [vmem:[%s2 + $0x3c] sm:$0xf]
      %v1460 = vunpack.c.l.b16 %v1428
      %v1461 = vunpack.c.l.b16 %v1429
      %v1462 = vunpack.c.l.b16 %v1430
      %v1463 = vunpack.c.l.b16 %v1431
      %v1464 = vunpack.c.l.b16 %v1432
      %v1465 = vunpack.c.l.b16 %v1433
      %v1466 = vunpack.c.l.b16 %v1434
      %v1467 = vunpack.c.l.b16 %v1435
      %v1468 = vunpack.c.l.b16 %v1436
      %v1469 = vunpack.c.l.b16 %v1437
      %v1470 = vunpack.c.l.b16 %v1438
      %v1471 = vunpack.c.l.b16 %v1439
      %v1472 = vunpack.c.l.b16 %v1440
      %v1473 = vunpack.c.l.b16 %v1441
      %v1474 = vunpack.c.l.b16 %v1442
      %v1475 = vunpack.c.l.b16 %v1443
      %v1476 = vpack.c.b16 %v1461, %v1460
      %v1477 = vpack.c.b16 %v1463, %v1462
      %v1478 = vpack.c.b16 %v1465, %v1464
      %v1479 = vpack.c.b16 %v1467, %v1466
      %v1480 = vpack.c.b16 %v1469, %v1468
      %v1481 = vpack.c.b16 %v1471, %v1470
      %v1482 = vpack.c.b16 %v1473, %v1472
      %v1483 = vpack.c.b16 %v1475, %v1474
      %1492 = vmatpush.bf16.msra.mxu0 %v1483
      %1493 = vmatpush.bf16.msra.mxu0 %v1482
      %1494 = vmatpush.bf16.msra.mxu0 %v1481
      %1495 = vmatpush.bf16.msra.mxu0 %v1480
      %1496 = vmatpush.bf16.msra.mxu0 %v1479
      %1497 = vmatpush.bf16.msra.mxu0 %v1478
      %1498 = vmatpush.bf16.msra.mxu0 %v1477
      %1499 = vmatpush.bf16.msra.mxu0 %v1476
      %1500 = vmatmul.bf16.gmra.mxu0 %v1423
      %v1501 = vpop.f32.mrf.mxu0
      %v1502 = vadd.f32 0.0, %v1501
      %v1503 = vpop.f32.mrf.mxu0
      %v1504 = vadd.f32 0.0, %v1503
      %1505 = vmatmul.bf16.gmra.mxu0 %v1424
      %v1506 = vpop.f32.mrf.mxu0
      %v1507 = vadd.f32 0.0, %v1506
      %v1508 = vpop.f32.mrf.mxu0
      %v1509 = vadd.f32 0.0, %v1508
      %1510 = vmatmul.bf16.gmra.mxu0 %v1425
      %v1511 = vpop.f32.mrf.mxu0
      %v1512 = vadd.f32 0.0, %v1511
      %v1513 = vpop.f32.mrf.mxu0
      %v1514 = vadd.f32 0.0, %v1513
      %1515 = vmatmul.bf16.gmra.mxu0 %v1426
      %v1516 = vpop.f32.mrf.mxu0
      %v1517 = vadd.f32 0.0, %v1516
      %v1518 = vpop.f32.mrf.mxu0
      %v1519 = vadd.f32 0.0, %v1518
      %1520 = vmatmul.bf16.gmra.mxu0 %v1427
      %v1521 = vpop.f32.mrf.mxu0
      %v1522 = vadd.f32 0.0, %v1521
      %v1523 = vpop.f32.mrf.mxu0
      %v1524 = vadd.f32 0.0, %v1523
      %1525 = vdwg.mxu0
      %v1526 = vmax.f32 %v1502, 0.0
      %v1527 = vmax.f32 %v1504, 0.0
      %v1528 = vmax.f32 %v1507, 0.0
      %v1529 = vmax.f32 %v1509, 0.0
      %v1530 = vmax.f32 %v1512, 0.0
      %v1531 = vmax.f32 %v1514, 0.0
      %v1532 = vmax.f32 %v1517, 0.0
      %v1533 = vmax.f32 %v1519, 0.0
      %v1534 = vmax.f32 %v1522, 0.0
      %v1535 = vmax.f32 %v1524, 0.0
      %v1536 = vpack.c.bf16 %v1527, %v1526
      %v1537 = vpack.c.bf16 %v1529, %v1528
      %v1538 = vpack.c.bf16 %v1531, %v1530
      %v1539 = vpack.c.bf16 %v1533, %v1532
      %v1540 = vpack.c.bf16 %v1535, %v1534
      %v1541 = vld [vmem:[%s3] sm:$0xf]
      %v1542 = vld [vmem:[%s3 + $0x4] sm:$0xf]
      %v1543 = vld [vmem:[%s3 + $0x8] sm:$0xf]
      %v1544 = vld [vmem:[%s3 + $0xc] sm:$0xf]
      %v1545 = vld [vmem:[%s3 + $0x10] sm:$0xf]
      %v1546 = vld [vmem:[%s3 + $0x14] sm:$0xf]
      %v1547 = vld [vmem:[%s3 + $0x18] sm:$0xf]
      %v1548 = vld [vmem:[%s3 + $0x1c] sm:$0xf]
      %v1549 = vld [vmem:[%s3 + $0x20] sm:$0xf]
      %v1550 = vld [vmem:[%s3 + $0x24] sm:$0xf]
      %v1551 = vld [vmem:[%s3 + $0x28] sm:$0xf]
      %v1552 = vld [vmem:[%s3 + $0x2c] sm:$0xf]
      %v1553 = vld [vmem:[%s3 + $0x30] sm:$0xf]
      %v1554 = vld [vmem:[%s3 + $0x34] sm:$0xf]
      %v1555 = vld [vmem:[%s3 + $0x38] sm:$0xf]
      %v1556 = vld [vmem:[%s3 + $0x3c] sm:$0xf]
      %v1573 = vunpack.c.l.b16 %v1541
      %v1574 = vunpack.c.l.b16 %v1542
      %v1575 = vunpack.c.l.b16 %v1543
      %v1576 = vunpack.c.l.b16 %v1544
      %v1577 = vunpack.c.l.b16 %v1545
      %v1578 = vunpack.c.l.b16 %v1546
      %v1579 = vunpack.c.l.b16 %v1547
      %v1580 = vunpack.c.l.b16 %v1548
      %v1581 = vunpack.c.l.b16 %v1549
      %v1582 = vunpack.c.l.b16 %v1550
      %v1583 = vunpack.c.l.b16 %v1551
      %v1584 = vunpack.c.l.b16 %v1552
      %v1585 = vunpack.c.l.b16 %v1553
      %v1586 = vunpack.c.l.b16 %v1554
      %v1587 = vunpack.c.l.b16 %v1555
      %v1588 = vunpack.c.l.b16 %v1556
      %v1589 = vpack.c.b16 %v1574, %v1573
      %v1590 = vpack.c.b16 %v1576, %v1575
      %v1591 = vpack.c.b16 %v1578, %v1577
      %v1592 = vpack.c.b16 %v1580, %v1579
      %v1593 = vpack.c.b16 %v1582, %v1581
      %v1594 = vpack.c.b16 %v1584, %v1583
      %v1595 = vpack.c.b16 %v1586, %v1585
      %v1596 = vpack.c.b16 %v1588, %v1587
      %1605 = vmatpush.bf16.msra.mxu0 %v1596
      %1606 = vmatpush.bf16.msra.mxu0 %v1595
      %1607 = vmatpush.bf16.msra.mxu0 %v1594
      %1608 = vmatpush.bf16.msra.mxu0 %v1593
      %1609 = vmatpush.bf16.msra.mxu0 %v1592
      %1610 = vmatpush.bf16.msra.mxu0 %v1591
      %1611 = vmatpush.bf16.msra.mxu0 %v1590
      %1612 = vmatpush.bf16.msra.mxu0 %v1589
      %1613 = vmatmul.bf16.gmra.mxu0 %v1536
      %v1614 = vpop.f32.mrf.mxu0
      %v1615 = vadd.f32 0.0, %v1614
      %v1616 = vpop.f32.mrf.mxu0
      %v1617 = vadd.f32 0.0, %v1616
      %1618 = vmatmul.bf16.gmra.mxu0 %v1537
      %v1619 = vpop.f32.mrf.mxu0
      %v1620 = vadd.f32 0.0, %v1619
      %v1621 = vpop.f32.mrf.mxu0
      %v1622 = vadd.f32 0.0, %v1621
      %1623 = vmatmul.bf16.gmra.mxu0 %v1538
      %v1624 = vpop.f32.mrf.mxu0
      %v1625 = vadd.f32 0.0, %v1624
      %v1626 = vpop.f32.mrf.mxu0
      %v1627 = vadd.f32 0.0, %v1626
      %1628 = vmatmul.bf16.gmra.mxu0 %v1539
      %v1629 = vpop.f32.mrf.mxu0
      %v1630 = vadd.f32 0.0, %v1629
      %v1631 = vpop.f32.mrf.mxu0
      %v1632 = vadd.f32 0.0, %v1631
      %1633 = vmatmul.bf16.gmra.mxu0 %v1540
      %v1634 = vpop.f32.mrf.mxu0
      %v1635 = vadd.f32 0.0, %v1634
      %v1636 = vpop.f32.mrf.mxu0
      %v1637 = vadd.f32 0.0, %v1636
      %1638 = vdwg.mxu0
      %v1639 = vmax.f32 %v1615, 0.0
      %v1640 = vmax.f32 %v1617, 0.0
      %v1641 = vmax.f32 %v1620, 0.0
      %v1642 = vmax.f32 %v1622, 0.0
      %v1643 = vmax.f32 %v1625, 0.0
      %v1644 = vmax.f32 %v1627, 0.0
      %v1645 = vmax.f32 %v1630, 0.0
      %v1646 = vmax.f32 %v1632, 0.0
      %v1647 = vmax.f32 %v1635, 0.0
      %v1648 = vmax.f32 %v1637, 0.0
      %v1649 = vlaneseq
      %v1650 = vshrl.u32 %v1649, 7
      %v1651 = vadd.s32 %v1650, 8
      %v1652 = vadd.s32 %v1650, 16
      %v1653 = vadd.s32 %v1650, 24
      %v1654 = vadd.s32 %v1650, 32
      %v1655 = vadd.s32 %v1650, 40
      %v1656 = vadd.s32 %v1650, 48
      %v1657 = vadd.s32 %v1650, 56
      %v1658 = vadd.s32 %v1650, 64
      %v1659 = vadd.s32 %v1650, 72
      %vm1660 = vcmp.lt.s32.totalorder %v1650, 63
      %vm1661 = vcmp.lt.s32.totalorder %v1651, 63
      %vm1662 = vcmp.lt.s32.totalorder %v1652, 63
      %vm1663 = vcmp.lt.s32.totalorder %v1653, 63
      %vm1664 = vcmp.lt.s32.totalorder %v1654, 63
      %vm1665 = vcmp.lt.s32.totalorder %v1655, 63
      %vm1666 = vcmp.lt.s32.totalorder %v1656, 63
      %vm1667 = vcmp.lt.s32.totalorder %v1657, 63
      %vm1668 = vcmp.lt.s32.totalorder %v1658, 63
      %vm1669 = vcmp.lt.s32.totalorder %v1659, 63
      %v1670 = vsel %vm1660, %v1639, 0.0
      %v1671 = vsel %vm1661, %v1640, 0.0
      %v1672 = vsel %vm1662, %v1641, 0.0
      %v1673 = vsel %vm1663, %v1642, 0.0
      %v1674 = vsel %vm1664, %v1643, 0.0
      %v1675 = vsel %vm1665, %v1644, 0.0
      %v1676 = vsel %vm1666, %v1645, 0.0
      %v1677 = vsel %vm1667, %v1646, 0.0
      %v1678 = vsel %vm1668, %v1647, 0.0
      %v1679 = vsel %vm1669, %v1648, 0.0
      %v1680 = vadd.f32 %v1670, %v1671
      %v1681 = vadd.f32 %v1680, %v1672
      %v1682 = vadd.f32 %v1681, %v1673
      %v1683 = vadd.f32 %v1682, %v1674
      %v1684 = vadd.f32 %v1683, %v1675
      %v1685 = vadd.f32 %v1684, %v1676
      %v1686 = vadd.f32 %v1685, %v1677
      %v1687 = vadd.f32 %v1686, %v1678
      %v1688 = vadd.f32 %v1687, %v1679
      %v1689 = vrot.slane %v1688, 4
      %v1690 = vadd.f32 %v1688, %v1689
      %v1691 = vrot.slane %v1690, 2
      %v1692 = vadd.f32 %v1690, %v1691
      %v1693 = vrot.slane %v1692, 1
      %v1694 = vadd.f32 %v1692, %v1693
      %1695 = vst [vmem:[%s265] sm:$0x1] %v1694
      %v1696 = vmul.f32 %v1670, %v1670
      %v1697 = vmul.f32 %v1671, %v1671
      %v1698 = vmul.f32 %v1672, %v1672
      %v1699 = vmul.f32 %v1673, %v1673
      %v1700 = vmul.f32 %v1674, %v1674
      %v1701 = vmul.f32 %v1675, %v1675
      %v1702 = vmul.f32 %v1676, %v1676
      %v1703 = vmul.f32 %v1677, %v1677
      %v1704 = vmul.f32 %v1678, %v1678
      %v1705 = vmul.f32 %v1679, %v1679
      %v1706 = vadd.f32 %v1696, %v1697
      %v1707 = vadd.f32 %v1706, %v1698
      %v1708 = vadd.f32 %v1707, %v1699
      %v1709 = vadd.f32 %v1708, %v1700
      %v1710 = vadd.f32 %v1709, %v1701
      %v1711 = vadd.f32 %v1710, %v1702
      %v1712 = vadd.f32 %v1711, %v1703
      %v1713 = vadd.f32 %v1712, %v1704
      %v1714 = vadd.f32 %v1713, %v1705
      %v1715 = vrot.slane %v1714, 4
      %v1716 = vadd.f32 %v1714, %v1715
      %v1717 = vrot.slane %v1716, 2
      %v1718 = vadd.f32 %v1716, %v1717
      %v1719 = vrot.slane %v1718, 1
      %v1720 = vadd.f32 %v1718, %v1719
      %1721 = vst [vmem:[%s268] sm:$0x1] %v1720
      %v1722 = vpack.c.bf16 %v1639, %v1639
      %v1723 = vpack.c.bf16 %v1640, %v1640
      %v1724 = vpack.c.bf16 %v1641, %v1641
      %v1725 = vpack.c.bf16 %v1642, %v1642
      %v1726 = vpack.c.bf16 %v1643, %v1643
      %v1727 = vpack.c.bf16 %v1644, %v1644
      %v1728 = vpack.c.bf16 %v1645, %v1645
      %v1729 = vpack.c.bf16 %v1646, %v1646
      %v1730 = vpack.c.bf16 %v1647, %v1647
      %v1731 = vpack.c.bf16 %v1648, %v1648
      %1732 = vst [vmem:[%s262] sm:$0xf] %v1722
      %1733 = vst [vmem:[%s262 + $0x4] sm:$0xf] %v1723
      %1734 = vst [vmem:[%s262 + $0x8] sm:$0xf] %v1724
      %1735 = vst [vmem:[%s262 + $0xc] sm:$0xf] %v1725
      %1736 = vst [vmem:[%s262 + $0x10] sm:$0xf] %v1726
      %1737 = vst [vmem:[%s262 + $0x14] sm:$0xf] %v1727
      %1738 = vst [vmem:[%s262 + $0x18] sm:$0xf] %v1728
      %1739 = vst [vmem:[%s262 + $0x1c] sm:$0xf] %v1729
      %1740 = vst [vmem:[%s262 + $0x20] sm:$0xf] %v1730
      %1741 = vst [vmem:[%s262 + $0x24] sm:$0xf] %v1731
      %p1742 = scmp.lt.s32.totalorder %s18, 1
      %s1743 = scalar_select %p1742, %s18, 1
      %s1744 = smul.addr %s1743, 10
      %s1745 = smul.addr %s1744, 4
      %s1746 = scalar_lea.vmem %s4, %s1745
      %p1747 = scmp.lt.s32.totalorder %s18, 1
      %s1748 = scalar_select %p1747, %s18, 1
      %s1749 = scalar_lea.vmem %s5, %s1748
      %p1750 = scmp.lt.s32.totalorder %s18, 1
      %s1751 = scalar_select %p1750, %s18, 1
      %s1752 = scalar_lea.vmem %s6, %s1751
      // Predicated region
      $region37: #{cnn_frontend.8} parent=35 // pred_check
        %p1753 = pneg %p125
      $region38: #{cnn_frontend.8} parent=35 // pred_check_branch
        %1755 = sbr.rel (%p1753) target = $region40
      $region39: #{cnn_frontend.8} parent=35 // pred_region
        _
      $region40: #{cnn_frontend.8} parent=35 // pred_fallthru
        _
      // Predicated region
      $region41: #{cnn_frontend.8} parent=35 // pred_check
        %p1756 = pneg %p151
      $region42: #{cnn_frontend.8} parent=35 // pred_check_branch
        %1758 = sbr.rel (%p1756) target = $region44
      $region43: #{cnn_frontend.8} parent=35 // pred_region
        _
      $region44: #{cnn_frontend.8} parent=35 // pred_fallthru
        _
      // Predicated region
      $region45: #{cnn_frontend.8} parent=35 // pred_check
        %p1759 = pneg %p177
      $region46: #{cnn_frontend.8} parent=35 // pred_check_branch
        %1761 = sbr.rel (%p1759) target = $region48
      $region47: #{cnn_frontend.8} parent=35 // pred_region
        _
      $region48: #{cnn_frontend.8} parent=35 // pred_fallthru
        _
    $region36: #{cnn_frontend.8} parent=5 // pred_fallthru
      _
    %p1762 = scmp.le.s32.totalorder 2, %s13
    // Predicated region
    $region49: #{cnn_frontend.8} parent=5 // pred_check
      %p1763 = pneg %p1762
    $region50: #{cnn_frontend.8} parent=5 // pred_check_branch
      %1765 = sbr.rel (%p1763) target = $region52
    $region51: #{cnn_frontend.8} parent=5 // pred_region
      %s1766 = ssub.s32 %s13, 2
      // Predicated region
      $region53: #{cnn_frontend.8} parent=51 // pred_check
        %p1767 = pneg %p131
      $region54: #{cnn_frontend.8} parent=51 // pred_check_branch
        %1769 = sbr.rel (%p1767) target = $region56
      $region55: #{cnn_frontend.8} parent=51 // pred_region
        %p1770 = scmp.lt.s32.totalorder %s19, 1
        %s1771 = scalar_select %p1770, %s19, 1
        %s1772 = smul.addr %s1771, 10
        %s1773 = smul.addr %s1772, 4
        %s1774 = scalar_lea.vmem %s4, %s1773
      $region56: #{cnn_frontend.8} parent=51 // pred_fallthru
        _
      // Predicated region
      $region57: #{cnn_frontend.8} parent=51 // pred_check
        %p1775 = pneg %p157
      $region58: #{cnn_frontend.8} parent=51 // pred_check_branch
        %1777 = sbr.rel (%p1775) target = $region60
      $region59: #{cnn_frontend.8} parent=51 // pred_region
        %p1778 = scmp.lt.s32.totalorder %s19, 1
        %s1779 = scalar_select %p1778, %s19, 1
        %s1780 = scalar_lea.vmem %s5, %s1779
      $region60: #{cnn_frontend.8} parent=51 // pred_fallthru
        _
      // Predicated region
      $region61: #{cnn_frontend.8} parent=51 // pred_check
        %p1781 = pneg %p183
      $region62: #{cnn_frontend.8} parent=51 // pred_check_branch
        %1783 = sbr.rel (%p1781) target = $region64
      $region63: #{cnn_frontend.8} parent=51 // pred_region
        %p1784 = scmp.lt.s32.totalorder %s19, 1
        %s1785 = scalar_select %p1784, %s19, 1
        %s1786 = scalar_lea.vmem %s6, %s1785
      $region64: #{cnn_frontend.8} parent=51 // pred_fallthru
        _
    $region52: #{cnn_frontend.8} parent=5 // pred_fallthru
      _
  $region6: #{cnn_frontend.8} parent=0 // loop_footer
    %s17 = sadd.s32 1, %s13
  $region7: #{cnn_frontend.8} parent=0 // loop_footer_branch
    %12 = sbr.rel target = $region3
  $region8: #{cnn_frontend.8} parent=0 // loop_exit
    _

// kernel: cnn_frontend.10
$region0: #{cnn_frontend.10}
  #allocation0 [shape = 'u32[]', space=smem, size = 0x4, offset = 0x4, fixed_abs, tag = 'smem constant byte address 0x4 - core index']
  #allocation1 [shape = 'u32[72,128]{1,0:T(1,128)}', space=vmem, size = 0x9000, scoped, tag = 'internal scratch']
  %s0 = inlined_call_operand.vmem [shape: bf16[2,24,512], index: 0, kind: input, shape index: {}]
  %s1 = inlined_call_operand.vmem [shape: bf16[2,512,128], index: 1, kind: input, shape index: {}]
  %s2 = inlined_call_operand.vmem [shape: f32[1,128], index: 2, kind: input, shape index: {}]
  %s3 = inlined_call_operand.vmem [shape: bf16[2,16,128], index: 3, kind: output, shape index: {0}]
  %s4 = inlined_call_operand.vmem [shape: f32[2,1,128], index: 4, kind: output, shape index: {1}]
  %s5 = inlined_call_operand.vmem [shape: f32[2,1,128], index: 5, kind: output, shape index: {2}]
  %6 = xla_tuple %s3, %s4, %s5
  %s7 = sld [smem:[#allocation0]]
  $region61: #{cnn_frontend.10} parent=0
    _
  %s9 = ssub.s32 1, %s7
  %s10 = scalar_select 0, %s9, %s7
  loop: start=0, step=1, limit=4
  $region2: #{cnn_frontend.10} parent=0 // loop_pre_header
    _
  $region3: #{cnn_frontend.10} parent=0 // loop_header
    %s12 = sphi 0, %s16
    %p13 = scmp.ge.s32.totalorder %s12, 4
    %s22 = sphi 0, %s24
    %s25 = sphi 0, %s22
    %s26 = sphi 0, %s25
    %s42 = sphi 0, %s26
    %s46 = sphi 0, %s46
    %s48 = sphi 0, %s46
    %s49 = sphi 0, %s48
    %s63 = sphi 0, %s49
    %s67 = sphi 0, %s67
    %s69 = sphi 0, %s67
    %s70 = sphi 0, %s69
    %s84 = sphi 0, %s70
    %s90 = sphi 0, %s92
    %s93 = sphi 0, %s90
    %s94 = sphi 0, %s93
    %s110 = sphi 0, %s94
    %s116 = sphi 0, %s118
    %s119 = sphi 0, %s116
    %s120 = sphi 0, %s119
    %s136 = sphi 0, %s120
    %s142 = sphi 0, %s144
    %s145 = sphi 0, %s142
    %s146 = sphi 0, %s145
    %s162 = sphi 0, %s146
  $region4: #{cnn_frontend.10} parent=0 // loop_header_branch
    %15 = sbr.rel (%p13) target = $region8
  $region5: #{cnn_frontend.10} parent=0 // loop_body
    %s17 = ssub.s32 %s12, 1
    %s18 = ssub.s32 %s12, 2
    %s19 = sadd.s32 %s12, 1
    %s20 = ssub.s32 %s12, %s19
    %p21 = scmp.eq.s32.totalorder %s20, 0
    %s23 = sadd.s32 %s22, 1
    %s24 = scalar_select %p21, %s22, %s23
    %p27 = pneg %p21
    %p28 = scmp.eq.s32.totalorder %s12, 1
    %p29 = por %p27, %p28
    %p30 = scmp.ne.s32.totalorder %s22, %s25
    %p31 = scmp.eq.s32.totalorder %s12, 0
    %p32 = por %p30, %p31
    %p33 = scmp.ne.s32.totalorder %s22, %s25
    %p34 = scmp.eq.s32.totalorder %s17, 1
    %p35 = por %p33, %p34
    %p36 = scmp.ne.s32.totalorder %s25, %s26
    %p37 = scmp.eq.s32.totalorder %s17, 0
    %p38 = por %p36, %p37
    %p39 = scmp.ne.s32.totalorder %s25, %s26
    %p40 = scmp.eq.s32.totalorder %s18, 1
    %p41 = por %p39, %p40
    %p43 = scmp.ne.s32.totalorder %s26, %s42
    %p44 = scmp.eq.s32.totalorder %s18, 0
    %p45 = por %p43, %p44
    %s47 = sadd.s32 %s46, 1
    %p50 = scmp.eq.s32.totalorder %s12, 1
    %p51 = scmp.ne.s32.totalorder %s46, %s48
    %p52 = scmp.eq.s32.totalorder %s12, 0
    %p53 = por %p51, %p52
    %p54 = scmp.ne.s32.totalorder %s46, %s48
    %p55 = scmp.eq.s32.totalorder %s17, 1
    %p56 = por %p54, %p55
    %p57 = scmp.ne.s32.totalorder %s48, %s49
    %p58 = scmp.eq.s32.totalorder %s17, 0
    %p59 = por %p57, %p58
    %p60 = scmp.ne.s32.totalorder %s48, %s49
    %p61 = scmp.eq.s32.totalorder %s18, 1
    %p62 = por %p60, %p61
    %p64 = scmp.ne.s32.totalorder %s49, %s63
    %p65 = scmp.eq.s32.totalorder %s18, 0
    %p66 = por %p64, %p65
    %s68 = sadd.s32 %s67, 1
    %p71 = scmp.eq.s32.totalorder %s12, 1
    %p72 = scmp.ne.s32.totalorder %s67, %s69
    %p73 = scmp.eq.s32.totalorder %s12, 0
    %p74 = por %p72, %p73
    %p75 = scmp.ne.s32.totalorder %s67, %s69
    %p76 = scmp.eq.s32.totalorder %s17, 1
    %p77 = por %p75, %p76
    %p78 = scmp.ne.s32.totalorder %s69, %s70
    %p79 = scmp.eq.s32.totalorder %s17, 0
    %p80 = por %p78, %p79
    %p81 = scmp.ne.s32.totalorder %s69, %s70
    %p82 = scmp.eq.s32.totalorder %s18, 1
    %p83 = por %p81, %p82
    %p85 = scmp.ne.s32.totalorder %s70, %s84
    %p86 = scmp.eq.s32.totalorder %s18, 0
    %p87 = por %p85, %p86
    %s88 = ssub.s32 %s12, %s19
    %p89 = scmp.eq.s32.totalorder %s88, 0
    %s91 = sadd.s32 %s90, 1
    %s92 = scalar_select %p89, %s90, %s91
    %p95 = pneg %p89
    %p96 = scmp.eq.s32.totalorder %s12, 1
    %p97 = por %p95, %p96
    %p98 = scmp.ne.s32.totalorder %s90, %s93
    %p99 = scmp.eq.s32.totalorder %s12, 0
    %p100 = por %p98, %p99
    %p101 = scmp.ne.s32.totalorder %s90, %s93
    %p102 = scmp.eq.s32.totalorder %s17, 1
    %p103 = por %p101, %p102
    %p104 = scmp.ne.s32.totalorder %s93, %s94
    %p105 = scmp.eq.s32.totalorder %s17, 0
    %p106 = por %p104, %p105
    %p107 = scmp.ne.s32.totalorder %s93, %s94
    %p108 = scmp.eq.s32.totalorder %s18, 1
    %p109 = por %p107, %p108
    %p111 = scmp.ne.s32.totalorder %s94, %s110
    %p112 = scmp.eq.s32.totalorder %s18, 0
    %p113 = por %p111, %p112
    %s114 = ssub.s32 %s12, %s19
    %p115 = scmp.eq.s32.totalorder %s114, 0
    %s117 = sadd.s32 %s116, 1
    %s118 = scalar_select %p115, %s116, %s117
    %p121 = pneg %p115
    %p122 = scmp.eq.s32.totalorder %s12, 1
    %p123 = por %p121, %p122
    %p124 = scmp.ne.s32.totalorder %s116, %s119
    %p125 = scmp.eq.s32.totalorder %s12, 0
    %p126 = por %p124, %p125
    %p127 = scmp.ne.s32.totalorder %s116, %s119
    %p128 = scmp.eq.s32.totalorder %s17, 1
    %p129 = por %p127, %p128
    %p130 = scmp.ne.s32.totalorder %s119, %s120
    %p131 = scmp.eq.s32.totalorder %s17, 0
    %p132 = por %p130, %p131
    %p133 = scmp.ne.s32.totalorder %s119, %s120
    %p134 = scmp.eq.s32.totalorder %s18, 1
    %p135 = por %p133, %p134
    %p137 = scmp.ne.s32.totalorder %s120, %s136
    %p138 = scmp.eq.s32.totalorder %s18, 0
    %p139 = por %p137, %p138
    %s140 = ssub.s32 %s12, %s19
    %p141 = scmp.eq.s32.totalorder %s140, 0
    %s143 = sadd.s32 %s142, 1
    %s144 = scalar_select %p141, %s142, %s143
    %p147 = pneg %p141
    %p148 = scmp.eq.s32.totalorder %s12, 1
    %p149 = por %p147, %p148
    %p150 = scmp.ne.s32.totalorder %s142, %s145
    %p151 = scmp.eq.s32.totalorder %s12, 0
    %p152 = por %p150, %p151
    %p153 = scmp.ne.s32.totalorder %s142, %s145
    %p154 = scmp.eq.s32.totalorder %s17, 1
    %p155 = por %p153, %p154
    %p156 = scmp.ne.s32.totalorder %s145, %s146
    %p157 = scmp.eq.s32.totalorder %s17, 0
    %p158 = por %p156, %p157
    %p159 = scmp.ne.s32.totalorder %s145, %s146
    %p160 = scmp.eq.s32.totalorder %s18, 1
    %p161 = por %p159, %p160
    %p163 = scmp.ne.s32.totalorder %s146, %s162
    %p164 = scmp.eq.s32.totalorder %s18, 0
    %p165 = por %p163, %p164
    %p166 = scmp.le.s32.totalorder 1, %s12
    %p167 = scmp.lt.s32.totalorder %s12, 3
    %p168 = pnand %p166, %p167
    %p169 = pneg %p168
    // Predicated region
    $region9: #{cnn_frontend.10} parent=5 // pred_check
      _
    $region10: #{cnn_frontend.10} parent=5 // pred_check_branch
      %171 = sbr.rel (%p168) target = $region12
    $region11: #{cnn_frontend.10} parent=5 // pred_region
      %s172 = ssub.s32 %s12, 1
      // Predicated region
      $region13: #{cnn_frontend.10} parent=11 // pred_check
        %p173 = pneg %p59
      $region14: #{cnn_frontend.10} parent=11 // pred_check_branch
        %175 = sbr.rel (%p173) target = $region16
      $region15: #{cnn_frontend.10} parent=11 // pred_region
        _
      $region16: #{cnn_frontend.10} parent=11 // pred_fallthru
        _
      // Predicated region
      $region17: #{cnn_frontend.10} parent=11 // pred_check
        %p176 = pneg %p80
      $region18: #{cnn_frontend.10} parent=11 // pred_check_branch
        %178 = sbr.rel (%p176) target = $region20
      $region19: #{cnn_frontend.10} parent=11 // pred_region
        _
      $region20: #{cnn_frontend.10} parent=11 // pred_fallthru
        _
    $region12: #{cnn_frontend.10} parent=5 // pred_fallthru
      _
    %p179 = scmp.lt.s32.totalorder %s12, 2
    // Predicated region
    $region21: #{cnn_frontend.10} parent=5 // pred_check
      %p180 = pneg %p179
    $region22: #{cnn_frontend.10} parent=5 // pred_check_branch
      %182 = sbr.rel (%p180) target = $region24
    $region23: #{cnn_frontend.10} parent=5 // pred_region
      // Predicated region
      $region25: #{cnn_frontend.10} parent=23 // pred_check
        %p183 = pneg %p32
      $region26: #{cnn_frontend.10} parent=23 // pred_check_branch
        %185 = sbr.rel (%p183) target = $region28
      $region27: #{cnn_frontend.10} parent=23 // pred_region
        %p186 = scmp.lt.s32.totalorder %s12, 1
        %s187 = scalar_select %p186, %s12, 1
        %s188 = smul.addr %s187, 12
        %s189 = smul.addr %s188, 4
        %s190 = scalar_lea.vmem %s0, %s189
      $region28: #{cnn_frontend.10} parent=23 // pred_fallthru
        _
    $region24: #{cnn_frontend.10} parent=5 // pred_fallthru
      _
    %p191 = scmp.le.s32.totalorder 1, %s12
    %p192 = scmp.lt.s32.totalorder %s12, 3
    %p193 = pnand %p191, %p192
    %p194 = pneg %p193
    // Predicated region
    $region29: #{cnn_frontend.10} parent=5 // pred_check
      _
    $region30: #{cnn_frontend.10} parent=5 // pred_check_branch
      %196 = sbr.rel (%p193) target = $region32
    $region31: #{cnn_frontend.10} parent=5 // pred_region
      %s197 = ssub.s32 %s12, 1
      %p198 = scmp.lt.s32.totalorder %s17, 1
      %s199 = scalar_select %p198, %s17, 1
      %s200 = smul.addr %s199, 12
      %s201 = smul.addr %s200, 4
      %s202 = scalar_lea.vmem %s0, %s201
      %p203 = pneg %p38
      %p204 = pneg %p35
      %p205 = pneg %p59
      %p206 = pneg %p56
      %p207 = pneg %p80
      %p208 = pneg %p77
      %p209 = pneg %p106
      %p210 = pneg %p103
      %p211 = scmp.lt.s32.totalorder %s17, 1
      %s212 = scalar_select %p211, %s17, 1
      %s213 = smul.addr %s212, 2
      %s214 = smul.addr %s213, 4
      %s215 = scalar_lea.vmem %s3, %s214
      %p216 = pneg %p132
      %p217 = pneg %p129
      %p218 = scmp.lt.s32.totalorder %s17, 1
      %s219 = scalar_select %p218, %s17, 1
      %s220 = scalar_lea.vmem %s4, %s219
      %p221 = pneg %p158
      %p222 = pneg %p155
      %p223 = scmp.lt.s32.totalorder %s17, 1
      %s224 = scalar_select %p223, %s17, 1
      %s225 = scalar_lea.vmem %s5, %s224
      %p226 = scmp.lt.s32.totalorder %s17, 1
      %s227 = scalar_select %p226, %s17, 1
      %s228 = smul.addr %s227, 12
      %s229 = smul.addr %s228, 4
      %s230 = scalar_lea.vmem %s0, %s229
      %p231 = scmp.lt.s32.totalorder %s17, 1
      %s232 = scalar_select %p231, %s17, 1
      %s233 = smul.addr %s232, 2
      %s234 = smul.addr %s233, 4
      %s235 = scalar_lea.vmem %s3, %s234
      %p236 = scmp.lt.s32.totalorder %s17, 1
      %s237 = scalar_select %p236, %s17, 1
      %s238 = scalar_lea.vmem %s4, %s237
      %p239 = scmp.lt.s32.totalorder %s17, 1
      %s240 = scalar_select %p239, %s17, 1
      %s241 = scalar_lea.vmem %s5, %s240
      %v242 = vld [vmem:[%s230] sm:$0xff]
      %v243 = vld [vmem:[%s230 + $0x8] sm:$0xff]
      %v244 = vld [vmem:[%s230 + $0x10] sm:$0xff]
      %v245 = vld [vmem:[%s230 + $0x18] sm:$0xff]
      %v246 = vld [vmem:[%s1] sm:$0xf]
      %v247 = vld [vmem:[%s1 + $0x4] sm:$0xf]
      %v248 = vld [vmem:[%s1 + $0x8] sm:$0xf]
      %v249 = vld [vmem:[%s1 + $0xc] sm:$0xf]
      %v250 = vld [vmem:[%s1 + $0x10] sm:$0xf]
      %v251 = vld [vmem:[%s1 + $0x14] sm:$0xf]
      %v252 = vld [vmem:[%s1 + $0x18] sm:$0xf]
      %v253 = vld [vmem:[%s1 + $0x1c] sm:$0xf]
      %v254 = vld [vmem:[%s1 + $0x20] sm:$0xf]
      %v255 = vld [vmem:[%s1 + $0x24] sm:$0xf]
      %v256 = vld [vmem:[%s1 + $0x28] sm:$0xf]
      %v257 = vld [vmem:[%s1 + $0x2c] sm:$0xf]
      %v258 = vld [vmem:[%s1 + $0x30] sm:$0xf]
      %v259 = vld [vmem:[%s1 + $0x34] sm:$0xf]
      %v260 = vld [vmem:[%s1 + $0x38] sm:$0xf]
      %v261 = vld [vmem:[%s1 + $0x3c] sm:$0xf]
      %v262 = vld [vmem:[%s1 + $0x40] sm:$0xf]
      %v263 = vld [vmem:[%s1 + $0x44] sm:$0xf]
      %v264 = vld [vmem:[%s1 + $0x48] sm:$0xf]
      %v265 = vld [vmem:[%s1 + $0x4c] sm:$0xf]
      %v266 = vld [vmem:[%s1 + $0x50] sm:$0xf]
      %v267 = vld [vmem:[%s1 + $0x54] sm:$0xf]
      %v268 = vld [vmem:[%s1 + $0x58] sm:$0xf]
      %v269 = vld [vmem:[%s1 + $0x5c] sm:$0xf]
      %v270 = vld [vmem:[%s1 + $0x60] sm:$0xf]
      %v271 = vld [vmem:[%s1 + $0x64] sm:$0xf]
      %v272 = vld [vmem:[%s1 + $0x68] sm:$0xf]
      %v273 = vld [vmem:[%s1 + $0x6c] sm:$0xf]
      %v274 = vld [vmem:[%s1 + $0x70] sm:$0xf]
      %v275 = vld [vmem:[%s1 + $0x74] sm:$0xf]
      %v276 = vld [vmem:[%s1 + $0x78] sm:$0xf]
      %v277 = vld [vmem:[%s1 + $0x7c] sm:$0xf]
      %v278 = vld [vmem:[%s1 + $0x80] sm:$0xf]
      %v279 = vld [vmem:[%s1 + $0x84] sm:$0xf]
      %v280 = vld [vmem:[%s1 + $0x88] sm:$0xf]
      %v281 = vld [vmem:[%s1 + $0x8c] sm:$0xf]
      %v282 = vld [vmem:[%s1 + $0x90] sm:$0xf]
      %v283 = vld [vmem:[%s1 + $0x94] sm:$0xf]
      %v284 = vld [vmem:[%s1 + $0x98] sm:$0xf]
      %v285 = vld [vmem:[%s1 + $0x9c] sm:$0xf]
      %v286 = vld [vmem:[%s1 + $0xa0] sm:$0xf]
      %v287 = vld [vmem:[%s1 + $0xa4] sm:$0xf]
      %v288 = vld [vmem:[%s1 + $0xa8] sm:$0xf]
      %v289 = vld [vmem:[%s1 + $0xac] sm:$0xf]
      %v290 = vld [vmem:[%s1 + $0xb0] sm:$0xf]
      %v291 = vld [vmem:[%s1 + $0xb4] sm:$0xf]
      %v292 = vld [vmem:[%s1 + $0xb8] sm:$0xf]
      %v293 = vld [vmem:[%s1 + $0xbc] sm:$0xf]
      %v294 = vld [vmem:[%s1 + $0xc0] sm:$0xf]
      %v295 = vld [vmem:[%s1 + $0xc4] sm:$0xf]
      %v296 = vld [vmem:[%s1 + $0xc8] sm:$0xf]
      %v297 = vld [vmem:[%s1 + $0xcc] sm:$0xf]
      %v298 = vld [vmem:[%s1 + $0xd0] sm:$0xf]
      %v299 = vld [vmem:[%s1 + $0xd4] sm:$0xf]
      %v300 = vld [vmem:[%s1 + $0xd8] sm:$0xf]
      %v301 = vld [vmem:[%s1 + $0xdc] sm:$0xf]
      %v302 = vld [vmem:[%s1 + $0xe0] sm:$0xf]
      %v303 = vld [vmem:[%s1 + $0xe4] sm:$0xf]
      %v304 = vld [vmem:[%s1 + $0xe8] sm:$0xf]
      %v305 = vld [vmem:[%s1 + $0xec] sm:$0xf]
      %v306 = vld [vmem:[%s1 + $0xf0] sm:$0xf]
      %v307 = vld [vmem:[%s1 + $0xf4] sm:$0xf]
      %v308 = vld [vmem:[%s1 + $0xf8] sm:$0xf]
      %v309 = vld [vmem:[%s1 + $0xfc] sm:$0xf]
      %v310 = vld [vmem:[%s230] sm:$0xff]
      %v311 = vld [vmem:[%s230 + $0x8] sm:$0xff]
      %v312 = vld [vmem:[%s230 + $0x10] sm:$0xff]
      %v313 = vld [vmem:[%s230 + $0x18] sm:$0xff]
      %v314 = vld [vmem:[%s230 + $0x20] sm:$0x11]
      %v315 = vld [vmem:[%s230 + $0x28] sm:$0x11]
      %s316 = scalar_lea.vmem %s1, 256
      %v317 = vld [vmem:[%s316] sm:$0xf]
      %v318 = vld [vmem:[%s316 + $0x4] sm:$0xf]
      %v319 = vld [vmem:[%s316 + $0x8] sm:$0xf]
      %v320 = vld [vmem:[%s316 + $0xc] sm:$0xf]
      %v321 = vld [vmem:[%s316 + $0x10] sm:$0xf]
      %v322 = vld [vmem:[%s316 + $0x14] sm:$0xf]
      %v323 = vld [vmem:[%s316 + $0x18] sm:$0xf]
      %v324 = vld [vmem:[%s316 + $0x1c] sm:$0xf]
      %v325 = vld [vmem:[%s316 + $0x20] sm:$0xf]
      %v326 = vld [vmem:[%s316 + $0x24] sm:$0xf]
      %v327 = vld [vmem:[%s316 + $0x28] sm:$0xf]
      %v328 = vld [vmem:[%s316 + $0x2c] sm:$0xf]
      %v329 = vld [vmem:[%s316 + $0x30] sm:$0xf]
      %v330 = vld [vmem:[%s316 + $0x34] sm:$0xf]
      %v331 = vld [vmem:[%s316 + $0x38] sm:$0xf]
      %v332 = vld [vmem:[%s316 + $0x3c] sm:$0xf]
      %v333 = vld [vmem:[%s316 + $0x40] sm:$0xf]
      %v334 = vld [vmem:[%s316 + $0x44] sm:$0xf]
      %v335 = vld [vmem:[%s316 + $0x48] sm:$0xf]
      %v336 = vld [vmem:[%s316 + $0x4c] sm:$0xf]
      %v337 = vld [vmem:[%s316 + $0x50] sm:$0xf]
      %v338 = vld [vmem:[%s316 + $0x54] sm:$0xf]
      %v339 = vld [vmem:[%s316 + $0x58] sm:$0xf]
      %v340 = vld [vmem:[%s316 + $0x5c] sm:$0xf]
      %v341 = vld [vmem:[%s316 + $0x60] sm:$0xf]
      %v342 = vld [vmem:[%s316 + $0x64] sm:$0xf]
      %v343 = vld [vmem:[%s316 + $0x68] sm:$0xf]
      %v344 = vld [vmem:[%s316 + $0x6c] sm:$0xf]
      %v345 = vld [vmem:[%s316 + $0x70] sm:$0xf]
      %v346 = vld [vmem:[%s316 + $0x74] sm:$0xf]
      %v347 = vld [vmem:[%s316 + $0x78] sm:$0xf]
      %v348 = vld [vmem:[%s316 + $0x7c] sm:$0xf]
      %v349 = vld [vmem:[%s316 + $0x80] sm:$0xf]
      %v350 = vld [vmem:[%s316 + $0x84] sm:$0xf]
      %v351 = vld [vmem:[%s316 + $0x88] sm:$0xf]
      %v352 = vld [vmem:[%s316 + $0x8c] sm:$0xf]
      %v353 = vld [vmem:[%s316 + $0x90] sm:$0xf]
      %v354 = vld [vmem:[%s316 + $0x94] sm:$0xf]
      %v355 = vld [vmem:[%s316 + $0x98] sm:$0xf]
      %v356 = vld [vmem:[%s316 + $0x9c] sm:$0xf]
      %v357 = vld [vmem:[%s316 + $0xa0] sm:$0xf]
      %v358 = vld [vmem:[%s316 + $0xa4] sm:$0xf]
      %v359 = vld [vmem:[%s316 + $0xa8] sm:$0xf]
      %v360 = vld [vmem:[%s316 + $0xac] sm:$0xf]
      %v361 = vld [vmem:[%s316 + $0xb0] sm:$0xf]
      %v362 = vld [vmem:[%s316 + $0xb4] sm:$0xf]
      %v363 = vld [vmem:[%s316 + $0xb8] sm:$0xf]
      %v364 = vld [vmem:[%s316 + $0xbc] sm:$0xf]
      %v365 = vld [vmem:[%s316 + $0xc0] sm:$0xf]
      %v366 = vld [vmem:[%s316 + $0xc4] sm:$0xf]
      %v367 = vld [vmem:[%s316 + $0xc8] sm:$0xf]
      %v368 = vld [vmem:[%s316 + $0xcc] sm:$0xf]
      %v369 = vld [vmem:[%s316 + $0xd0] sm:$0xf]
      %v370 = vld [vmem:[%s316 + $0xd4] sm:$0xf]
      %v371 = vld [vmem:[%s316 + $0xd8] sm:$0xf]
      %v372 = vld [vmem:[%s316 + $0xdc] sm:$0xf]
      %v373 = vld [vmem:[%s316 + $0xe0] sm:$0xf]
      %v374 = vld [vmem:[%s316 + $0xe4] sm:$0xf]
      %v375 = vld [vmem:[%s316 + $0xe8] sm:$0xf]
      %v376 = vld [vmem:[%s316 + $0xec] sm:$0xf]
      %v377 = vld [vmem:[%s316 + $0xf0] sm:$0xf]
      %v378 = vld [vmem:[%s316 + $0xf4] sm:$0xf]
      %v379 = vld [vmem:[%s316 + $0xf8] sm:$0xf]
      %v380 = vld [vmem:[%s316 + $0xfc] sm:$0xf]
      %v387 = vunpack.c.l.b16 %v310
      %v388 = vunpack.c.h.b16 %v310
      %v389 = vunpack.c.l.b16 %v311
      %v390 = vunpack.c.h.b16 %v311
      %v391 = vunpack.c.l.b16 %v312
      %v392 = vunpack.c.h.b16 %v312
      %v393 = vunpack.c.l.b16 %v313
      %v394 = vunpack.c.h.b16 %v313
      %v395 = vunpack.c.l.b16 %v314
      %v396 = vunpack.c.h.b16 %v314
      %v397 = vunpack.c.l.b16 %v315
      %v398 = vunpack.c.h.b16 %v315
      %v399 = vpack.c.b16 %v391, %v387
      %v400 = vpack.c.b16 %v392, %v388
      %v401 = vpack.c.b16 %v393, %v389
      %v402 = vpack.c.b16 %v394, %v390
      %v403 = vpack.c.b16 %v395, %v395
      %v404 = vpack.c.b16 %v396, %v396
      %v405 = vpack.c.b16 %v397, %v397
      %v406 = vpack.c.b16 %v398, %v398
      %vm407 = vsmask.f32 7424
      %v409 = vshrl.u32 %v399, 16
      %v411 = vshll.u32 %v399, 16
      %v413 = vrot.slane %v411, 1
      %v414 = vor.u32 %v409, %v413
      %v416 = vshll.u32 %v403, 16
      %v418 = vrot.slane %v416, 1
      %v419 = vsel %vm407, %v414, %v418
      %v421 = vshrl.u32 %v400, 16
      %v423 = vshll.u32 %v400, 16
      %v425 = vrot.slane %v423, 1
      %v426 = vor.u32 %v421, %v425
      %v428 = vshll.u32 %v404, 16
      %v430 = vrot.slane %v428, 1
      %v431 = vsel %vm407, %v426, %v430
      %v433 = vshrl.u32 %v401, 16
      %v435 = vshll.u32 %v401, 16
      %v437 = vrot.slane %v435, 1
      %v438 = vor.u32 %v433, %v437
      %v440 = vshll.u32 %v405, 16
      %v442 = vrot.slane %v440, 1
      %v443 = vsel %vm407, %v438, %v442
      %v445 = vshrl.u32 %v402, 16
      %v447 = vshll.u32 %v402, 16
      %v449 = vrot.slane %v447, 1
      %v450 = vor.u32 %v445, %v449
      %v452 = vshll.u32 %v406, 16
      %v454 = vrot.slane %v452, 1
      %v455 = vsel %vm407, %v450, %v454
      %v524 = vunpack.c.l.b16 %v317
      %v525 = vunpack.c.l.b16 %v318
      %v526 = vunpack.c.l.b16 %v319
      %v527 = vunpack.c.l.b16 %v320
      %v528 = vunpack.c.l.b16 %v321
      %v529 = vunpack.c.l.b16 %v322
      %v530 = vunpack.c.l.b16 %v323
      %v531 = vunpack.c.l.b16 %v324
      %v532 = vunpack.c.l.b16 %v325
      %v533 = vunpack.c.l.b16 %v326
      %v534 = vunpack.c.l.b16 %v327
      %v535 = vunpack.c.l.b16 %v328
      %v536 = vunpack.c.l.b16 %v329
      %v537 = vunpack.c.l.b16 %v330
      %v538 = vunpack.c.l.b16 %v331
      %v539 = vunpack.c.l.b16 %v332
      %v540 = vunpack.c.l.b16 %v333
      %v541 = vunpack.c.l.b16 %v334
      %v542 = vunpack.c.l.b16 %v335
      %v543 = vunpack.c.l.b16 %v336
      %v544 = vunpack.c.l.b16 %v337
      %v545 = vunpack.c.l.b16 %v338
      %v546 = vunpack.c.l.b16 %v339
      %v547 = vunpack.c.l.b16 %v340
      %v548 = vunpack.c.l.b16 %v341
      %v549 = vunpack.c.l.b16 %v342
      %v550 = vunpack.c.l.b16 %v343
      %v551 = vunpack.c.l.b16 %v344
      %v552 = vunpack.c.l.b16 %v345
      %v553 = vunpack.c.l.b16 %v346
      %v554 = vunpack.c.l.b16 %v347
      %v555 = vunpack.c.l.b16 %v348
      %v556 = vunpack.c.l.b16 %v349
      %v557 = vunpack.c.l.b16 %v350
      %v558 = vunpack.c.l.b16 %v351
      %v559 = vunpack.c.l.b16 %v352
      %v560 = vunpack.c.l.b16 %v353
      %v561 = vunpack.c.l.b16 %v354
      %v562 = vunpack.c.l.b16 %v355
      %v563 = vunpack.c.l.b16 %v356
      %v564 = vunpack.c.l.b16 %v357
      %v565 = vunpack.c.l.b16 %v358
      %v566 = vunpack.c.l.b16 %v359
      %v567 = vunpack.c.l.b16 %v360
      %v568 = vunpack.c.l.b16 %v361
      %v569 = vunpack.c.l.b16 %v362
      %v570 = vunpack.c.l.b16 %v363
      %v571 = vunpack.c.l.b16 %v364
      %v572 = vunpack.c.l.b16 %v365
      %v573 = vunpack.c.l.b16 %v366
      %v574 = vunpack.c.l.b16 %v367
      %v575 = vunpack.c.l.b16 %v368
      %v576 = vunpack.c.l.b16 %v369
      %v577 = vunpack.c.l.b16 %v370
      %v578 = vunpack.c.l.b16 %v371
      %v579 = vunpack.c.l.b16 %v372
      %v580 = vunpack.c.l.b16 %v373
      %v581 = vunpack.c.l.b16 %v374
      %v582 = vunpack.c.l.b16 %v375
      %v583 = vunpack.c.l.b16 %v376
      %v584 = vunpack.c.l.b16 %v377
      %v585 = vunpack.c.l.b16 %v378
      %v586 = vunpack.c.l.b16 %v379
      %v587 = vunpack.c.l.b16 %v380
      %v588 = vpack.c.b16 %v525, %v524
      %v589 = vpack.c.b16 %v527, %v526
      %v590 = vpack.c.b16 %v529, %v528
      %v591 = vpack.c.b16 %v531, %v530
      %v592 = vpack.c.b16 %v533, %v532
      %v593 = vpack.c.b16 %v535, %v534
      %v594 = vpack.c.b16 %v537, %v536
      %v595 = vpack.c.b16 %v539, %v538
      %v596 = vpack.c.b16 %v541, %v540
      %v597 = vpack.c.b16 %v543, %v542
      %v598 = vpack.c.b16 %v545, %v544
      %v599 = vpack.c.b16 %v547, %v546
      %v600 = vpack.c.b16 %v549, %v548
      %v601 = vpack.c.b16 %v551, %v550
      %v602 = vpack.c.b16 %v553, %v552
      %v603 = vpack.c.b16 %v555, %v554
      %v604 = vpack.c.b16 %v557, %v556
      %v605 = vpack.c.b16 %v559, %v558
      %v606 = vpack.c.b16 %v561, %v560
      %v607 = vpack.c.b16 %v563, %v562
      %v608 = vpack.c.b16 %v565, %v564
      %v609 = vpack.c.b16 %v567, %v566
      %v610 = vpack.c.b16 %v569, %v568
      %v611 = vpack.c.b16 %v571, %v570
      %v612 = vpack.c.b16 %v573, %v572
      %v613 = vpack.c.b16 %v575, %v574
      %v614 = vpack.c.b16 %v577, %v576
      %v615 = vpack.c.b16 %v579, %v578
      %v616 = vpack.c.b16 %v581, %v580
      %v617 = vpack.c.b16 %v583, %v582
      %v618 = vpack.c.b16 %v585, %v584
      %v619 = vpack.c.b16 %v587, %v586
      %652 = vmatpush.bf16.msra.mxu0 %v595
      %653 = vmatpush.bf16.msra.mxu0 %v594
      %654 = vmatpush.bf16.msra.mxu0 %v593
      %655 = vmatpush.bf16.msra.mxu0 %v592
      %656 = vmatpush.bf16.msra.mxu0 %v591
      %657 = vmatpush.bf16.msra.mxu0 %v590
      %658 = vmatpush.bf16.msra.mxu0 %v589
      %659 = vmatpush.bf16.msra.mxu0 %v588
      %660 = vmatmul.bf16.gmra.mxu0 %v419
      %v661 = vpop.f32.mrf.mxu0
      %v662 = vadd.f32 0.0, %v661
      %v663 = vpop.f32.mrf.mxu0
      %v664 = vadd.f32 0.0, %v663
      %665 = vdwg.mxu0
      %666 = vmatpush.bf16.msra.mxu0 %v603
      %667 = vmatpush.bf16.msra.mxu0 %v602
      %668 = vmatpush.bf16.msra.mxu0 %v601
      %669 = vmatpush.bf16.msra.mxu0 %v600
      %670 = vmatpush.bf16.msra.mxu0 %v599
      %671 = vmatpush.bf16.msra.mxu0 %v598
      %672 = vmatpush.bf16.msra.mxu0 %v597
      %673 = vmatpush.bf16.msra.mxu0 %v596
      %674 = vmatmul.bf16.gmra.mxu0 %v431
      %v675 = vpop.f32.mrf.mxu0
      %v676 = vadd.f32 %v662, %v675
      %v677 = vpop.f32.mrf.mxu0
      %v678 = vadd.f32 %v664, %v677
      %679 = vdwg.mxu0
      %680 = vmatpush.bf16.msra.mxu0 %v611
      %681 = vmatpush.bf16.msra.mxu0 %v610
      %682 = vmatpush.bf16.msra.mxu0 %v609
      %683 = vmatpush.bf16.msra.mxu0 %v608
      %684 = vmatpush.bf16.msra.mxu0 %v607
      %685 = vmatpush.bf16.msra.mxu0 %v606
      %686 = vmatpush.bf16.msra.mxu0 %v605
      %687 = vmatpush.bf16.msra.mxu0 %v604
      %688 = vmatmul.bf16.gmra.mxu0 %v443
      %v689 = vpop.f32.mrf.mxu0
      %v690 = vadd.f32 %v676, %v689
      %v691 = vpop.f32.mrf.mxu0
      %v692 = vadd.f32 %v678, %v691
      %693 = vdwg.mxu0
      %694 = vmatpush.bf16.msra.mxu0 %v619
      %695 = vmatpush.bf16.msra.mxu0 %v618
      %696 = vmatpush.bf16.msra.mxu0 %v617
      %697 = vmatpush.bf16.msra.mxu0 %v616
      %698 = vmatpush.bf16.msra.mxu0 %v615
      %699 = vmatpush.bf16.msra.mxu0 %v614
      %700 = vmatpush.bf16.msra.mxu0 %v613
      %701 = vmatpush.bf16.msra.mxu0 %v612
      %702 = vmatmul.bf16.gmra.mxu0 %v455
      %v703 = vpop.f32.mrf.mxu0
      %v704 = vadd.f32 %v690, %v703
      %v705 = vpop.f32.mrf.mxu0
      %v706 = vadd.f32 %v692, %v705
      %707 = vdwg.mxu0
      %v712 = vunpack.c.l.b16 %v242
      %v713 = vunpack.c.h.b16 %v242
      %v714 = vunpack.c.l.b16 %v243
      %v715 = vunpack.c.h.b16 %v243
      %v716 = vunpack.c.l.b16 %v244
      %v717 = vunpack.c.h.b16 %v244
      %v718 = vunpack.c.l.b16 %v245
      %v719 = vunpack.c.h.b16 %v245
      %v720 = vpack.c.b16 %v716, %v712
      %v721 = vpack.c.b16 %v717, %v713
      %v722 = vpack.c.b16 %v718, %v714
      %v723 = vpack.c.b16 %v719, %v715
      %v792 = vunpack.c.l.b16 %v246
      %v793 = vunpack.c.l.b16 %v247
      %v794 = vunpack.c.l.b16 %v248
      %v795 = vunpack.c.l.b16 %v249
      %v796 = vunpack.c.l.b16 %v250
      %v797 = vunpack.c.l.b16 %v251
      %v798 = vunpack.c.l.b16 %v252
      %v799 = vunpack.c.l.b16 %v253
      %v800 = vunpack.c.l.b16 %v254
      %v801 = vunpack.c.l.b16 %v255
      %v802 = vunpack.c.l.b16 %v256
      %v803 = vunpack.c.l.b16 %v257
      %v804 = vunpack.c.l.b16 %v258
      %v805 = vunpack.c.l.b16 %v259
      %v806 = vunpack.c.l.b16 %v260
      %v807 = vunpack.c.l.b16 %v261
      %v808 = vunpack.c.l.b16 %v262
      %v809 = vunpack.c.l.b16 %v263
      %v810 = vunpack.c.l.b16 %v264
      %v811 = vunpack.c.l.b16 %v265
      %v812 = vunpack.c.l.b16 %v266
      %v813 = vunpack.c.l.b16 %v267
      %v814 = vunpack.c.l.b16 %v268
      %v815 = vunpack.c.l.b16 %v269
      %v816 = vunpack.c.l.b16 %v270
      %v817 = vunpack.c.l.b16 %v271
      %v818 = vunpack.c.l.b16 %v272
      %v819 = vunpack.c.l.b16 %v273
      %v820 = vunpack.c.l.b16 %v274
      %v821 = vunpack.c.l.b16 %v275
      %v822 = vunpack.c.l.b16 %v276
      %v823 = vunpack.c.l.b16 %v277
      %v824 = vunpack.c.l.b16 %v278
      %v825 = vunpack.c.l.b16 %v279
      %v826 = vunpack.c.l.b16 %v280
      %v827 = vunpack.c.l.b16 %v281
      %v828 = vunpack.c.l.b16 %v282
      %v829 = vunpack.c.l.b16 %v283
      %v830 = vunpack.c.l.b16 %v284
      %v831 = vunpack.c.l.b16 %v285
      %v832 = vunpack.c.l.b16 %v286
      %v833 = vunpack.c.l.b16 %v287
      %v834 = vunpack.c.l.b16 %v288
      %v835 = vunpack.c.l.b16 %v289
      %v836 = vunpack.c.l.b16 %v290
      %v837 = vunpack.c.l.b16 %v291
      %v838 = vunpack.c.l.b16 %v292
      %v839 = vunpack.c.l.b16 %v293
      %v840 = vunpack.c.l.b16 %v294
      %v841 = vunpack.c.l.b16 %v295
      %v842 = vunpack.c.l.b16 %v296
      %v843 = vunpack.c.l.b16 %v297
      %v844 = vunpack.c.l.b16 %v298
      %v845 = vunpack.c.l.b16 %v299
      %v846 = vunpack.c.l.b16 %v300
      %v847 = vunpack.c.l.b16 %v301
      %v848 = vunpack.c.l.b16 %v302
      %v849 = vunpack.c.l.b16 %v303
      %v850 = vunpack.c.l.b16 %v304
      %v851 = vunpack.c.l.b16 %v305
      %v852 = vunpack.c.l.b16 %v306
      %v853 = vunpack.c.l.b16 %v307
      %v854 = vunpack.c.l.b16 %v308
      %v855 = vunpack.c.l.b16 %v309
      %v856 = vpack.c.b16 %v793, %v792
      %v857 = vpack.c.b16 %v795, %v794
      %v858 = vpack.c.b16 %v797, %v796
      %v859 = vpack.c.b16 %v799, %v798
      %v860 = vpack.c.b16 %v801, %v800
      %v861 = vpack.c.b16 %v803, %v802
      %v862 = vpack.c.b16 %v805, %v804
      %v863 = vpack.c.b16 %v807, %v806
      %v864 = vpack.c.b16 %v809, %v808
      %v865 = vpack.c.b16 %v811, %v810
      %v866 = vpack.c.b16 %v813, %v812
      %v867 = vpack.c.b16 %v815, %v814
      %v868 = vpack.c.b16 %v817, %v816
      %v869 = vpack.c.b16 %v819, %v818
      %v870 = vpack.c.b16 %v821, %v820
      %v871 = vpack.c.b16 %v823, %v822
      %v872 = vpack.c.b16 %v825, %v824
      %v873 = vpack.c.b16 %v827, %v826
      %v874 = vpack.c.b16 %v829, %v828
      %v875 = vpack.c.b16 %v831, %v830
      %v876 = vpack.c.b16 %v833, %v832
      %v877 = vpack.c.b16 %v835, %v834
      %v878 = vpack.c.b16 %v837, %v836
      %v879 = vpack.c.b16 %v839, %v838
      %v880 = vpack.c.b16 %v841, %v840
      %v881 = vpack.c.b16 %v843, %v842
      %v882 = vpack.c.b16 %v845, %v844
      %v883 = vpack.c.b16 %v847, %v846
      %v884 = vpack.c.b16 %v849, %v848
      %v885 = vpack.c.b16 %v851, %v850
      %v886 = vpack.c.b16 %v853, %v852
      %v887 = vpack.c.b16 %v855, %v854
      %920 = vmatpush.bf16.msra.mxu0 %v863
      %921 = vmatpush.bf16.msra.mxu0 %v862
      %922 = vmatpush.bf16.msra.mxu0 %v861
      %923 = vmatpush.bf16.msra.mxu0 %v860
      %924 = vmatpush.bf16.msra.mxu0 %v859
      %925 = vmatpush.bf16.msra.mxu0 %v858
      %926 = vmatpush.bf16.msra.mxu0 %v857
      %927 = vmatpush.bf16.msra.mxu0 %v856
      %928 = vmatmul.bf16.gmra.mxu0 %v720
      %v929 = vpop.f32.mrf.mxu0
      %v930 = vadd.f32 %v704, %v929
      %v931 = vpop.f32.mrf.mxu0
      %v932 = vadd.f32 %v706, %v931
      %933 = vdwg.mxu0
      %934 = vmatpush.bf16.msra.mxu0 %v871
      %935 = vmatpush.bf16.msra.mxu0 %v870
      %936 = vmatpush.bf16.msra.mxu0 %v869
      %937 = vmatpush.bf16.msra.mxu0 %v868
      %938 = vmatpush.bf16.msra.mxu0 %v867
      %939 = vmatpush.bf16.msra.mxu0 %v866
      %940 = vmatpush.bf16.msra.mxu0 %v865
      %941 = vmatpush.bf16.msra.mxu0 %v864
      %942 = vmatmul.bf16.gmra.mxu0 %v721
      %v943 = vpop.f32.mrf.mxu0
      %v944 = vadd.f32 %v930, %v943
      %v945 = vpop.f32.mrf.mxu0
      %v946 = vadd.f32 %v932, %v945
      %947 = vdwg.mxu0
      %948 = vmatpush.bf16.msra.mxu0 %v879
      %949 = vmatpush.bf16.msra.mxu0 %v878
      %950 = vmatpush.bf16.msra.mxu0 %v877
      %951 = vmatpush.bf16.msra.mxu0 %v876
      %952 = vmatpush.bf16.msra.mxu0 %v875
      %953 = vmatpush.bf16.msra.mxu0 %v874
      %954 = vmatpush.bf16.msra.mxu0 %v873
      %955 = vmatpush.bf16.msra.mxu0 %v872
      %956 = vmatmul.bf16.gmra.mxu0 %v722
      %v957 = vpop.f32.mrf.mxu0
      %v958 = vadd.f32 %v944, %v957
      %v959 = vpop.f32.mrf.mxu0
      %v960 = vadd.f32 %v946, %v959
      %961 = vdwg.mxu0
      %962 = vmatpush.bf16.msra.mxu0 %v887
      %963 = vmatpush.bf16.msra.mxu0 %v886
      %964 = vmatpush.bf16.msra.mxu0 %v885
      %965 = vmatpush.bf16.msra.mxu0 %v884
      %966 = vmatpush.bf16.msra.mxu0 %v883
      %967 = vmatpush.bf16.msra.mxu0 %v882
      %968 = vmatpush.bf16.msra.mxu0 %v881
      %969 = vmatpush.bf16.msra.mxu0 %v880
      %970 = vmatmul.bf16.gmra.mxu0 %v723
      %v971 = vpop.f32.mrf.mxu0
      %v972 = vadd.f32 %v958, %v971
      %v973 = vpop.f32.mrf.mxu0
      %v974 = vadd.f32 %v960, %v973
      %975 = vdwg.mxu0
      %v976 = vld [vmem:[%s2] sm:$0x1]
      %v978 = vperm.slane %v976, 0
      %v980 = vadd.f32 %v972, %v978
      %v981 = vadd.f32 %v974, %v978
      %v982 = vlaneseq
      %v983 = vshrl.u32 %v982, 7
      %v984 = vadd.s32 %v983, 8
      %vm985 = vcmp.lt.s32.totalorder %v983, 6
      %vm986 = vcmp.lt.s32.totalorder %v984, 6
      %v987 = vsel %vm985, %v980, 0.0
      %v988 = vsel %vm986, %v981, 0.0
      %v989 = vadd.f32 %v987, %v988
      %v990 = vrot.slane %v989, 4
      %v991 = vadd.f32 %v989, %v990
      %v992 = vrot.slane %v991, 2
      %v993 = vadd.f32 %v991, %v992
      %v994 = vrot.slane %v993, 1
      %v995 = vadd.f32 %v993, %v994
      %996 = vst [vmem:[%s238] sm:$0x1] %v995
      %v997 = vmul.f32 %v987, %v987
      %v998 = vmul.f32 %v988, %v988
      %v999 = vadd.f32 %v997, %v998
      %v1000 = vrot.slane %v999, 4
      %v1001 = vadd.f32 %v999, %v1000
      %v1002 = vrot.slane %v1001, 2
      %v1003 = vadd.f32 %v1001, %v1002
      %v1004 = vrot.slane %v1003, 1
      %v1005 = vadd.f32 %v1003, %v1004
      %1006 = vst [vmem:[%s241] sm:$0x1] %v1005
      %v1007 = vpack.c.bf16 %v980, %v980
      %v1008 = vpack.c.bf16 %v981, %v981
      %1009 = vst [vmem:[%s235] sm:$0xf] %v1007
      %1010 = vst [vmem:[%s235 + $0x4] sm:$0xf] %v1008
      %p1011 = scmp.lt.s32.totalorder %s17, 1
      %s1012 = scalar_select %p1011, %s17, 1
      %s1013 = smul.addr %s1012, 2
      %s1014 = smul.addr %s1013, 4
      %s1015 = scalar_lea.vmem %s3, %s1014
      %p1016 = scmp.lt.s32.totalorder %s17, 1
      %s1017 = scalar_select %p1016, %s17, 1
      %s1018 = scalar_lea.vmem %s4, %s1017
      %p1019 = scmp.lt.s32.totalorder %s17, 1
      %s1020 = scalar_select %p1019, %s17, 1
      %s1021 = scalar_lea.vmem %s5, %s1020
      // Predicated region
      $region33: #{cnn_frontend.10} parent=31 // pred_check
        %p1022 = pneg %p103
      $region34: #{cnn_frontend.10} parent=31 // pred_check_branch
        %1024 = sbr.rel (%p1022) target = $region36
      $region35: #{cnn_frontend.10} parent=31 // pred_region
        _
      $region36: #{cnn_frontend.10} parent=31 // pred_fallthru
        _
      // Predicated region
      $region37: #{cnn_frontend.10} parent=31 // pred_check
        %p1025 = pneg %p129
      $region38: #{cnn_frontend.10} parent=31 // pred_check_branch
        %1027 = sbr.rel (%p1025) target = $region40
      $region39: #{cnn_frontend.10} parent=31 // pred_region
        _
      $region40: #{cnn_frontend.10} parent=31 // pred_fallthru
        _
      // Predicated region
      $region41: #{cnn_frontend.10} parent=31 // pred_check
        %p1028 = pneg %p155
      $region42: #{cnn_frontend.10} parent=31 // pred_check_branch
        %1030 = sbr.rel (%p1028) target = $region44
      $region43: #{cnn_frontend.10} parent=31 // pred_region
        _
      $region44: #{cnn_frontend.10} parent=31 // pred_fallthru
        _
    $region32: #{cnn_frontend.10} parent=5 // pred_fallthru
      _
    %p1031 = scmp.le.s32.totalorder 2, %s12
    // Predicated region
    $region45: #{cnn_frontend.10} parent=5 // pred_check
      %p1032 = pneg %p1031
    $region46: #{cnn_frontend.10} parent=5 // pred_check_branch
      %1034 = sbr.rel (%p1032) target = $region48
    $region47: #{cnn_frontend.10} parent=5 // pred_region
      %s1035 = ssub.s32 %s12, 2
      // Predicated region
      $region49: #{cnn_frontend.10} parent=47 // pred_check
        %p1036 = pneg %p109
      $region50: #{cnn_frontend.10} parent=47 // pred_check_branch
        %1038 = sbr.rel (%p1036) target = $region52
      $region51: #{cnn_frontend.10} parent=47 // pred_region
        %p1039 = scmp.lt.s32.totalorder %s18, 1
        %s1040 = scalar_select %p1039, %s18, 1
        %s1041 = smul.addr %s1040, 2
        %s1042 = smul.addr %s1041, 4
        %s1043 = scalar_lea.vmem %s3, %s1042
      $region52: #{cnn_frontend.10} parent=47 // pred_fallthru
        _
      // Predicated region
      $region53: #{cnn_frontend.10} parent=47 // pred_check
        %p1044 = pneg %p135
      $region54: #{cnn_frontend.10} parent=47 // pred_check_branch
        %1046 = sbr.rel (%p1044) target = $region56
      $region55: #{cnn_frontend.10} parent=47 // pred_region
        %p1047 = scmp.lt.s32.totalorder %s18, 1
        %s1048 = scalar_select %p1047, %s18, 1
        %s1049 = scalar_lea.vmem %s4, %s1048
      $region56: #{cnn_frontend.10} parent=47 // pred_fallthru
        _
      // Predicated region
      $region57: #{cnn_frontend.10} parent=47 // pred_check
        %p1050 = pneg %p161
      $region58: #{cnn_frontend.10} parent=47 // pred_check_branch
        %1052 = sbr.rel (%p1050) target = $region60
      $region59: #{cnn_frontend.10} parent=47 // pred_region
        %p1053 = scmp.lt.s32.totalorder %s18, 1
        %s1054 = scalar_select %p1053, %s18, 1
        %s1055 = scalar_lea.vmem %s5, %s1054
      $region60: #{cnn_frontend.10} parent=47 // pred_fallthru
        _
    $region48: #{cnn_frontend.10} parent=5 // pred_fallthru
      _
  $region6: #{cnn_frontend.10} parent=0 // loop_footer
    %s16 = sadd.s32 1, %s12
  $region7: #{cnn_frontend.10} parent=0 // loop_footer_branch
    %11 = sbr.rel target = $region3
  $region8: #{cnn_frontend.10} parent=0 // loop_exit
    _

// kernel: cnn_frontend.11
$region0: #{cnn_frontend.11}
  #allocation0 [shape = 'u32[]', space=smem, size = 0x4, offset = 0x4, fixed_abs, tag = 'smem constant byte address 0x4 - core index']
  #allocation1 [shape = 'u32[72,128]{1,0:T(1,128)}', space=vmem, size = 0x9000, scoped, tag = 'internal scratch']
  %s0 = inlined_call_operand.vmem [shape: bf16[2,8,256], index: 0, kind: input, shape index: {}]
  %s1 = inlined_call_operand.vmem [shape: f32[1,128], index: 1, kind: input, shape index: {}]
  %s2 = inlined_call_operand.vmem [shape: f32[1,128], index: 2, kind: input, shape index: {}]
  %s3 = inlined_call_operand.vmem [shape: f32[2,8,128], index: 3, kind: output, shape index: {}]
  %s4 = sld [smem:[#allocation0]]
  $region45: #{cnn_frontend.11} parent=0
    _
  %s6 = ssub.s32 1, %s4
  %s7 = scalar_select 0, %s6, %s4
  loop: start=0, step=1, limit=4
  $region2: #{cnn_frontend.11} parent=0 // loop_pre_header
    _
  $region3: #{cnn_frontend.11} parent=0 // loop_header
    %s9 = sphi 0, %s13
    %p10 = scmp.ge.s32.totalorder %s9, 4
    %s19 = sphi 0, %s21
    %s22 = sphi 0, %s19
    %s23 = sphi 0, %s22
    %s39 = sphi 0, %s23
    %s43 = sphi 0, %s43
    %s45 = sphi 0, %s43
    %s46 = sphi 0, %s45
    %s60 = sphi 0, %s46
    %s64 = sphi 0, %s64
    %s66 = sphi 0, %s64
    %s67 = sphi 0, %s66
    %s81 = sphi 0, %s67
    %s87 = sphi 0, %s89
    %s90 = sphi 0, %s87
    %s91 = sphi 0, %s90
    %s107 = sphi 0, %s91
  $region4: #{cnn_frontend.11} parent=0 // loop_header_branch
    %12 = sbr.rel (%p10) target = $region8
  $region5: #{cnn_frontend.11} parent=0 // loop_body
    %s14 = ssub.s32 %s9, 1
    %s15 = ssub.s32 %s9, 2
    %s16 = sadd.s32 %s9, 1
    %s17 = ssub.s32 %s9, %s16
    %p18 = scmp.eq.s32.totalorder %s17, 0
    %s20 = sadd.s32 %s19, 1
    %s21 = scalar_select %p18, %s19, %s20
    %p24 = pneg %p18
    %p25 = scmp.eq.s32.totalorder %s9, 1
    %p26 = por %p24, %p25
    %p27 = scmp.ne.s32.totalorder %s19, %s22
    %p28 = scmp.eq.s32.totalorder %s9, 0
    %p29 = por %p27, %p28
    %p30 = scmp.ne.s32.totalorder %s19, %s22
    %p31 = scmp.eq.s32.totalorder %s14, 1
    %p32 = por %p30, %p31
    %p33 = scmp.ne.s32.totalorder %s22, %s23
    %p34 = scmp.eq.s32.totalorder %s14, 0
    %p35 = por %p33, %p34
    %p36 = scmp.ne.s32.totalorder %s22, %s23
    %p37 = scmp.eq.s32.totalorder %s15, 1
    %p38 = por %p36, %p37
    %p40 = scmp.ne.s32.totalorder %s23, %s39
    %p41 = scmp.eq.s32.totalorder %s15, 0
    %p42 = por %p40, %p41
    %s44 = sadd.s32 %s43, 1
    %p47 = scmp.eq.s32.totalorder %s9, 1
    %p48 = scmp.ne.s32.totalorder %s43, %s45
    %p49 = scmp.eq.s32.totalorder %s9, 0
    %p50 = por %p48, %p49
    %p51 = scmp.ne.s32.totalorder %s43, %s45
    %p52 = scmp.eq.s32.totalorder %s14, 1
    %p53 = por %p51, %p52
    %p54 = scmp.ne.s32.totalorder %s45, %s46
    %p55 = scmp.eq.s32.totalorder %s14, 0
    %p56 = por %p54, %p55
    %p57 = scmp.ne.s32.totalorder %s45, %s46
    %p58 = scmp.eq.s32.totalorder %s15, 1
    %p59 = por %p57, %p58
    %p61 = scmp.ne.s32.totalorder %s46, %s60
    %p62 = scmp.eq.s32.totalorder %s15, 0
    %p63 = por %p61, %p62
    %s65 = sadd.s32 %s64, 1
    %p68 = scmp.eq.s32.totalorder %s9, 1
    %p69 = scmp.ne.s32.totalorder %s64, %s66
    %p70 = scmp.eq.s32.totalorder %s9, 0
    %p71 = por %p69, %p70
    %p72 = scmp.ne.s32.totalorder %s64, %s66
    %p73 = scmp.eq.s32.totalorder %s14, 1
    %p74 = por %p72, %p73
    %p75 = scmp.ne.s32.totalorder %s66, %s67
    %p76 = scmp.eq.s32.totalorder %s14, 0
    %p77 = por %p75, %p76
    %p78 = scmp.ne.s32.totalorder %s66, %s67
    %p79 = scmp.eq.s32.totalorder %s15, 1
    %p80 = por %p78, %p79
    %p82 = scmp.ne.s32.totalorder %s67, %s81
    %p83 = scmp.eq.s32.totalorder %s15, 0
    %p84 = por %p82, %p83
    %s85 = ssub.s32 %s9, %s16
    %p86 = scmp.eq.s32.totalorder %s85, 0
    %s88 = sadd.s32 %s87, 1
    %s89 = scalar_select %p86, %s87, %s88
    %p92 = pneg %p86
    %p93 = scmp.eq.s32.totalorder %s9, 1
    %p94 = por %p92, %p93
    %p95 = scmp.ne.s32.totalorder %s87, %s90
    %p96 = scmp.eq.s32.totalorder %s9, 0
    %p97 = por %p95, %p96
    %p98 = scmp.ne.s32.totalorder %s87, %s90
    %p99 = scmp.eq.s32.totalorder %s14, 1
    %p100 = por %p98, %p99
    %p101 = scmp.ne.s32.totalorder %s90, %s91
    %p102 = scmp.eq.s32.totalorder %s14, 0
    %p103 = por %p101, %p102
    %p104 = scmp.ne.s32.totalorder %s90, %s91
    %p105 = scmp.eq.s32.totalorder %s15, 1
    %p106 = por %p104, %p105
    %p108 = scmp.ne.s32.totalorder %s91, %s107
    %p109 = scmp.eq.s32.totalorder %s15, 0
    %p110 = por %p108, %p109
    %p111 = scmp.le.s32.totalorder 1, %s9
    %p112 = scmp.lt.s32.totalorder %s9, 3
    %p113 = pnand %p111, %p112
    %p114 = pneg %p113
    // Predicated region
    $region9: #{cnn_frontend.11} parent=5 // pred_check
      _
    $region10: #{cnn_frontend.11} parent=5 // pred_check_branch
      %116 = sbr.rel (%p113) target = $region12
    $region11: #{cnn_frontend.11} parent=5 // pred_region
      %s117 = ssub.s32 %s9, 1
      // Predicated region
      $region13: #{cnn_frontend.11} parent=11 // pred_check
        %p118 = pneg %p56
      $region14: #{cnn_frontend.11} parent=11 // pred_check_branch
        %120 = sbr.rel (%p118) target = $region16
      $region15: #{cnn_frontend.11} parent=11 // pred_region
        _
      $region16: #{cnn_frontend.11} parent=11 // pred_fallthru
        _
      // Predicated region
      $region17: #{cnn_frontend.11} parent=11 // pred_check
        %p121 = pneg %p77
      $region18: #{cnn_frontend.11} parent=11 // pred_check_branch
        %123 = sbr.rel (%p121) target = $region20
      $region19: #{cnn_frontend.11} parent=11 // pred_region
        _
      $region20: #{cnn_frontend.11} parent=11 // pred_fallthru
        _
    $region12: #{cnn_frontend.11} parent=5 // pred_fallthru
      _
    %p124 = scmp.lt.s32.totalorder %s9, 2
    // Predicated region
    $region21: #{cnn_frontend.11} parent=5 // pred_check
      %p125 = pneg %p124
    $region22: #{cnn_frontend.11} parent=5 // pred_check_branch
      %127 = sbr.rel (%p125) target = $region24
    $region23: #{cnn_frontend.11} parent=5 // pred_region
      // Predicated region
      $region25: #{cnn_frontend.11} parent=23 // pred_check
        %p128 = pneg %p29
      $region26: #{cnn_frontend.11} parent=23 // pred_check_branch
        %130 = sbr.rel (%p128) target = $region28
      $region27: #{cnn_frontend.11} parent=23 // pred_region
        %p131 = scmp.lt.s32.totalorder %s9, 1
        %s132 = scalar_select %p131, %s9, 1
        %s133 = smul.addr %s132, 2
        %s134 = smul.addr %s133, 4
        %s135 = scalar_lea.vmem %s0, %s134
      $region28: #{cnn_frontend.11} parent=23 // pred_fallthru
        _
    $region24: #{cnn_frontend.11} parent=5 // pred_fallthru
      _
    %p136 = scmp.le.s32.totalorder 1, %s9
    %p137 = scmp.lt.s32.totalorder %s9, 3
    %p138 = pnand %p136, %p137
    %p139 = pneg %p138
    // Predicated region
    $region29: #{cnn_frontend.11} parent=5 // pred_check
      _
    $region30: #{cnn_frontend.11} parent=5 // pred_check_branch
      %141 = sbr.rel (%p138) target = $region32
    $region31: #{cnn_frontend.11} parent=5 // pred_region
      %s142 = ssub.s32 %s9, 1
      %p143 = scmp.lt.s32.totalorder %s14, 1
      %s144 = scalar_select %p143, %s14, 1
      %s145 = smul.addr %s144, 2
      %s146 = smul.addr %s145, 4
      %s147 = scalar_lea.vmem %s0, %s146
      %p148 = pneg %p35
      %p149 = pneg %p32
      %p150 = pneg %p56
      %p151 = pneg %p53
      %p152 = pneg %p77
      %p153 = pneg %p74
      %p154 = pneg %p103
      %p155 = pneg %p100
      %p156 = scmp.lt.s32.totalorder %s14, 1
      %s157 = scalar_select %p156, %s14, 1
      %s158 = smul.addr %s157, 8
      %s159 = scalar_lea.vmem %s3, %s158
      %p160 = scmp.lt.s32.totalorder %s14, 1
      %s161 = scalar_select %p160, %s14, 1
      %s162 = smul.addr %s161, 2
      %s163 = smul.addr %s162, 4
      %s164 = scalar_lea.vmem %s0, %s163
      %p165 = scmp.lt.s32.totalorder %s14, 1
      %s166 = scalar_select %p165, %s14, 1
      %s167 = smul.addr %s166, 8
      %s168 = scalar_lea.vmem %s3, %s167
      %v169 = vld [vmem:[%s1] sm:$0x1]
      %v170 = vld [vmem:[%s2] sm:$0x1]
      %v171 = vlaneseq
      %v172 = vshrl.u32 %v171, 7
      %v173 = vld [vmem:[%s164] sm:$0xf]
      %v174 = vunpack.c.l.bf16 %v173
      %v175 = vld [vmem:[%s164 + $0x4] sm:$0xf]
      %v176 = vunpack.c.l.bf16 %v175
      %v178 = vperm.slane %v169, 0
      %v180 = vmul.f32 %v174, %v178
      %v182 = vperm.slane %v170, 0
      %v184 = vadd.f32 %v180, %v182
      %v185 = vmax.f32 %v184, 0.0
      %v186 = vmul.f32 %v176, %v178
      %v187 = vadd.f32 %v186, %v182
      %v188 = vmax.f32 %v187, 0.0
      %v189 = vmul.u32 %v172, 2
      %vm190 = vcmp.lt.s32.totalorder %v189, 6
      %v191 = vsel %vm190, %v185, 0.0
      %v192 = vadd.s32 %v189, 1
      %vm193 = vcmp.lt.s32.totalorder %v192, 6
      %v194 = vsel %vm193, %v188, 0.0
      %v196 = vrot.slane %v191, 1
      %vm198 = vcmask 1046528
      %v199 = vsel %vm198, %v196, 0.0
      %v201 = vrot.slane %v194, 1
      %v203 = vsel %vm198, %v201, 0.0
      %v204 = vadd.f32 %v191, %v194
      %v205 = vadd.f32 %v204, %v199
      %v206 = vadd.f32 %v205, %v203
      %vm207 = vcmp.lt.s32.totalorder %v172, 2
      %v208 = vmul.f32 %v206, 0.25
      %v209 = vsel %vm207, %v208, 0.0
      %210 = vst [vmem:[%s168] sm:$0xff] %v209
      %p211 = scmp.lt.s32.totalorder %s14, 1
      %s212 = scalar_select %p211, %s14, 1
      %s213 = smul.addr %s212, 8
      %s214 = scalar_lea.vmem %s3, %s213
      // Predicated region
      $region33: #{cnn_frontend.11} parent=31 // pred_check
        %p215 = pneg %p100
      $region34: #{cnn_frontend.11} parent=31 // pred_check_branch
        %217 = sbr.rel (%p215) target = $region36
      $region35: #{cnn_frontend.11} parent=31 // pred_region
        _
      $region36: #{cnn_frontend.11} parent=31 // pred_fallthru
        _
    $region32: #{cnn_frontend.11} parent=5 // pred_fallthru
      _
    %p218 = scmp.le.s32.totalorder 2, %s9
    // Predicated region
    $region37: #{cnn_frontend.11} parent=5 // pred_check
      %p219 = pneg %p218
    $region38: #{cnn_frontend.11} parent=5 // pred_check_branch
      %221 = sbr.rel (%p219) target = $region40
    $region39: #{cnn_frontend.11} parent=5 // pred_region
      %s222 = ssub.s32 %s9, 2
      // Predicated region
      $region41: #{cnn_frontend.11} parent=39 // pred_check
        %p223 = pneg %p106
      $region42: #{cnn_frontend.11} parent=39 // pred_check_branch
        %225 = sbr.rel (%p223) target = $region44
      $region43: #{cnn_frontend.11} parent=39 // pred_region
        %p226 = scmp.lt.s32.totalorder %s15, 1
        %s227 = scalar_select %p226, %s15, 1
        %s228 = smul.addr %s227, 8
        %s229 = scalar_lea.vmem %s3, %s228
      $region44: #{cnn_frontend.11} parent=39 // pred_fallthru
        _
    $region40: #{cnn_frontend.11} parent=5 // pred_fallthru
      _
  $region6: #{cnn_frontend.11} parent=0 // loop_footer
    %s13 = sadd.s32 1, %s9
  $region7: #{cnn_frontend.11} parent=0 // loop_footer_branch
    %8 = sbr.rel target = $region3
  $region8: #{cnn_frontend.11} parent=0 // loop_exit
    _

</llo_original>
